<compile_context>
chip_gen: v5e
topology: v5e:2x2
jax: 0.10.0
libtpu: 0.0.40
codegen_flags: <defaults>
</compile_context>

<pallas_src>
import functools

import jax
import jax.numpy as jnp
from jax import lax
from jax.experimental import pallas as pl
from jax.experimental.pallas import tpu as pltpu


# --------------------------------------------------------------------------
# Fused multi-layer GRU kernel.
# Grid = (batch_tiles [parallel], time_blocks [arbitrary, sequential]).
# Block-local layout is time-major: (Tt, Bt, ...).
# --------------------------------------------------------------------------
def _fused_gru_stack_kernel(x_ref,      # (Tt, Bt, Dp)  bf16  raw inputs
                            wih0_ref,   # (Dp, 3Hp)     bf16  layer-0 input weights
                            bih0_ref,   # (1, 3Hp)      f32
                            wihr_ref,   # (Lr, Hp, 3Hp) bf16  input weights, layers 1..L-1
                            bihr_ref,   # (Lr, 1, 3Hp)  f32
                            whh_ref,    # (L, Hp, 3Hp)  bf16  recurrent weights
                            bhh_ref,    # (L, 1, 3Hp)   f32
                            out_ref,    # (Tt, Bt, Hp)  f32   last-layer outputs
                            h_ref,      # scratch (L, Bt, Hp)  f32  carried hidden state
                            hblk_ref,   # scratch (Tt, Bt, Hp) bf16 previous layer's block outputs
                            giblk_ref,  # scratch (Tt, Bt, 3Hp) f32 current layer's input proj
                            *, nlayers: int, hp: int, dp: int, tt: int, bt: int,
                            unroll: int):
    t = pl.program_id(1)

    @pl.when(t == 0)
    def _():
        # Zero initial hidden state for every layer (per batch tile).
        h_ref[...] = jnp.zeros_like(h_ref)

    g = 3 * hp

    for l in range(nlayers):
        # ---- block input projection: ONE (Tt*Bt, K) x (K, 3Hp) bf16 matmul ----
        if l == 0:
            xin = x_ref[...].reshape(tt * bt, dp)                 # bf16
            w_in, b_in = wih0_ref[...], bih0_ref[...]
        else:
            xin = hblk_ref[...].reshape(tt * bt, hp)              # bf16
            w_in, b_in = wihr_ref[l - 1], bihr_ref[l - 1]
        giblk_ref[...] = (
            jnp.dot(xin, w_in, preferred_element_type=jnp.float32) + b_in
        ).reshape(tt, bt, g)

        whh = whh_ref[l]                                          # (Hp, 3Hp) bf16
        bhh = jnp.broadcast_to(bhh_ref[l], (bt, g))               # hoisted broadcast (f32)
        last = l == nlayers - 1

        # Serial recurrence over the Tt time steps of this block.
        # Every per-step access is a dense (Bt, Hp)/(Bt, 3Hp) tile (time-major).
        def step(i, h):
            gi = giblk_ref[i]                                     # (Bt, 3Hp) f32
            gh = jnp.dot(h.astype(jnp.bfloat16), whh,
                         preferred_element_type=jnp.float32) + bhh
            r = jax.nn.sigmoid(gi[:, :hp] + gh[:, :hp])
            z = jax.nn.sigmoid(gi[:, hp:2 * hp] + gh[:, hp:2 * hp])
            n = jnp.tanh(gi[:, 2 * hp:] + r * gh[:, 2 * hp:])
            h_new = (1.0 - z) * n + z * h
            if last:
                out_ref[i] = h_new                                # direct output store
            else:
                hblk_ref[i] = h_new.astype(hblk_ref.dtype)        # bf16 for next layer's MXU
            return h_new

        h_ref[l] = lax.fori_loop(0, tt, step, h_ref[l], unroll=unroll)


# --------------------------------------------------------------------------
# Wrapper: padding / weight packing / pallas_call.
# --------------------------------------------------------------------------
def _round_up(x, m):
    return ((x + m - 1) // m) * m


def _pad_gate_cols(w, H, Hp):
    """(rows, 3H) -> (rows, 3Hp): each of the r/z/n gate blocks zero-padded to Hp."""
    rows = w.shape[0]
    w3 = w.reshape(rows, 3, H)
    w3 = jnp.pad(w3, ((0, 0), (0, 0), (0, Hp - H)))
    return w3.reshape(rows, 3 * Hp)


def encoder_rnn_forward(x_btd, params, *, tt=32, bt=None):
    """EncoderRNN.forward (GRU stack, unidirectional, batch_first).

    x_btd : (B, T, D) float input.
    params: list of per-layer dicts {'w_ih' (Din,3H), 'w_hh' (H,3H),
                                     'b_ih' (1,3H),   'b_hh' (1,3H)}.
    Returns (B, T, H) — last layer's output sequence (concat=False,
    return_last=False).
    """
    x_btd = jnp.asarray(x_btd, jnp.float32)
    B, T, D = x_btd.shape
    L = len(params)
    H = params[0]["w_hh"].shape[0]

    f32, bf16 = jnp.float32, jnp.bfloat16

    # Lane-aligned sizes.  (Note: on v6e/v7x the 256-wide MXU is only half
    # filled when Hp == 128; if H is tunable, multiples of 256 are preferred.)
    Hp = _round_up(H, 128)
    Dp = _round_up(D, 128)
    G = 3 * Hp

    # ---- tile sizes -------------------------------------------------------
    # Time block: multiple of 8 sublanes; default 32 amortizes per-grid-step
    # overhead and gives large dense DMAs.
    tt = _round_up(max(8, min(tt, _round_up(T, 8))), 8)
    Tp = _round_up(T, tt)

    # Batch tile: full sublanes (multiple of 8); prefer >=2 tiles when the
    # batch is large enough so both v7x TensorCores get work.
    Bp = _round_up(B, 8)
    if bt is None:
        bt = min(Bp, 128)
        if Bp >= 16 and Bp // bt < 2:
            bt = _round_up(Bp // 2, 8)
    bt = _round_up(min(bt, Bp), 8)
    Bp = _round_up(Bp, bt)

    # ---- activations: pad, go time-major, bf16 for the MXU stream ---------
    x = jnp.pad(x_btd, ((0, Bp - B), (0, Tp - T), (0, Dp - D)))
    x_tm = jnp.transpose(x, (1, 0, 2)).astype(bf16)               # (Tp, Bp, Dp)

    # ---- weights: per-gate lane padding, bf16 weights, f32 biases ---------
    def pad_in(w, k, kp):       # (k, 3H) -> (kp, 3Hp) bf16
        w = _pad_gate_cols(w.astype(f32), H, Hp)
        return jnp.pad(w, ((0, kp - k), (0, 0))).astype(bf16)

    def pad_bias(b):            # (*, 3H) -> (1, 3Hp) f32
        return _pad_gate_cols(b.reshape(1, 3 * H).astype(f32), H, Hp)

    w_ih0 = pad_in(params[0]["w_ih"], D, Dp)                      # (Dp, 3Hp)
    b_ih0 = pad_bias(params[0]["b_ih"])                           # (1, 3Hp)

    Lr = max(L - 1, 1)
    if L > 1:
        w_ihr = jnp.stack([pad_in(p["w_ih"], H, Hp) for p in params[1:]])
        b_ihr = jnp.stack([pad_bias(p["b_ih"]) for p in params[1:]])
    else:
        w_ihr = jnp.zeros((Lr, Hp, G), bf16)
        b_ihr = jnp.zeros((Lr, 1, G), f32)

    w_hh = jnp.stack([pad_in(p["w_hh"], H, Hp) for p in params])  # (L, Hp, 3Hp)
    b_hh = jnp.stack([pad_bias(p["b_hh"]) for p in params])       # (L, 1, 3Hp)

    unroll = min(8, tt)
    kernel = functools.partial(_fused_gru_stack_kernel, nlayers=L, hp=Hp,
                               dp=Dp, tt=tt, bt=bt, unroll=unroll)

    # ---- VMEM budget: streamed blocks (x2 buffers), weights, scratch ------
    est = 2 * (tt * bt * Dp * 2 + tt * bt * Hp * 4)               # x block + out block
    est += 2 * ((Dp + Lr * Hp + L * Hp) * G * 2 + (1 + Lr + L) * G * 4)   # weights (worst case)
    est += L * bt * Hp * 4 + tt * bt * Hp * 2 + tt * bt * G * 4   # scratch
    vmem_limit = int(min(max(2 * est, 32 * 2 ** 20), 64 * 2 ** 20))

    def run(single_buffer_weights):
        # Invariant weights never change across the grid: single-buffer them.
        wmode = dict(pipeline_mode=pl.Buffered(1)) if single_buffer_weights else {}
        grid_spec = pltpu.PrefetchScalarGridSpec(
            num_scalar_prefetch=0,
            grid=(Bp // bt, Tp // tt),
            in_specs=[
                pl.BlockSpec((tt, bt, Dp), lambda b, t: (t, b, 0)),          # x (time-major)
                pl.BlockSpec((Dp, G), lambda b, t: (0, 0), **wmode),         # W_ih layer 0
                pl.BlockSpec((1, G), lambda b, t: (0, 0), **wmode),          # b_ih layer 0
                pl.BlockSpec((Lr, Hp, G), lambda b, t: (0, 0, 0), **wmode),  # W_ih layers 1..
                pl.BlockSpec((Lr, 1, G), lambda b, t: (0, 0, 0), **wmode),   # b_ih layers 1..
                pl.BlockSpec((L, Hp, G), lambda b, t: (0, 0, 0), **wmode),   # W_hh all layers
                pl.BlockSpec((L, 1, G), lambda b, t: (0, 0, 0), **wmode),    # b_hh all layers
            ],
            out_specs=pl.BlockSpec((tt, bt, Hp), lambda b, t: (t, b, 0)),
            scratch_shapes=[
                pltpu.VMEM((L, bt, Hp), f32),     # per-layer hidden state (carried over time)
                pltpu.VMEM((tt, bt, Hp), bf16),   # previous layer's block outputs
                pltpu.VMEM((tt, bt, G), f32),     # current layer's input projection
            ],
        )
        out = pl.pallas_call(
            kernel,
            out_shape=jax.ShapeDtypeStruct((Tp, Bp, Hp), f32),
            grid_spec=grid_spec,
            compiler_params=pltpu.CompilerParams(
                # Batch tiles are independent (megacore-parallel on v7x);
                # time carries the recurrence through scratch -> "arbitrary".
                dimension_semantics=("parallel", "arbitrary"),
                vmem_limit_bytes=vmem_limit,
            ),
        )(x_tm, w_ih0, b_ih0, w_ihr, b_ihr, w_hh, b_hh)
        return jax.block_until_ready(out)

    try:
        out = run(True)
    except Exception:
        # pl.Buffered(1) (single-buffered invariant weights) not supported by
        # this JAX version — fall back to the default double-buffered specs.
        out = run(False)

    return jnp.transpose(out, (1, 0, 2))[:B, :T, :H]


# ----------------------------- reference (pure JAX) -----------------------------
def _gru_layer_ref(x_tbd, w_ih, w_hh, b_ih, b_hh):
    H = w_hh.shape[0]
    B = x_tbd.shape[1]

    def step(h, x):
        gi = x @ w_ih + b_ih
        gh = h @ w_hh + b_hh
        r = jax.nn.sigmoid(gi[:, :H] + gh[:, :H])
        z = jax.nn.sigmoid(gi[:, H:2 * H] + gh[:, H:2 * H])
        n = jnp.tanh(gi[:, 2 * H:] + r * gh[:, 2 * H:])
        h_new = (1.0 - z) * n + z * h
        return h_new, h_new

    h0 = jnp.zeros((B, H), jnp.float32)
    _, ys = jax.lax.scan(step, h0, x_tbd)
    return ys


def encoder_rnn_ref(x_btd, params):
    out = jnp.transpose(x_btd, (1, 0, 2))
    for p in params:
        out = _gru_layer_ref(out, p["w_ih"], p["w_hh"], p["b_ih"], p["b_hh"])
    return jnp.transpose(out, (1, 0, 2))


# -------------------------------------- main --------------------------------------
if __name__ == "__main__":
    # Small shapes consistent with the module: batch=2, seq=8, input=16, hidden=32.
    B, T, D, H = 2, 8, 16, 32
    NLAYERS = 2

    key = jax.random.PRNGKey(0)
    key, kx = jax.random.split(key)
    x = jax.random.normal(kx, (B, T, D), dtype=jnp.float32)

    # Deterministic parameter init mirroring EncoderRNN.reset_parameters():
    # weights ~ N(0, 0.01), biases = 0.  Weights stored transposed
    # ((D_in, 3H) / (H, 3H)) so projections are x @ W.
    params = []
    din = D
    for layer in range(NLAYERS):
        key, k1, k2 = jax.random.split(key, 3)
        params.append({
            "w_ih": 0.01 * jax.random.normal(k1, (din, 3 * H), dtype=jnp.float32),
            "w_hh": 0.01 * jax.random.normal(k2, (H, 3 * H), dtype=jnp.float32),
            "b_ih": jnp.zeros((1, 3 * H), jnp.float32),
            "b_hh": jnp.zeros((1, 3 * H), jnp.float32),
        })
        din = H  # unidirectional: next layer's input size is H

    out = jax.block_until_ready(encoder_rnn_forward(x, params))
    assert out.shape == (B, T, H), out.shape

    ref = jax.block_until_ready(encoder_rnn_ref(x, params))
    # bf16 weight/activation streams (f32 accumulation) -> slightly relaxed tolerance.
    err = float(jnp.max(jnp.abs(out - ref)))
    assert jnp.allclose(out, ref, atol=5e-3, rtol=5e-3), err

    # TODO(synk): SA (MultiheadAttention), CONV (TemporalBlock), RES skip, the
    # INFINITY/LSTM cell variants, packed sequences (input_lengths) and
    # training-mode LockedDropout are not part of the default GRU path here.
    print("KERNEL_OK")
</pallas_src>

<mosaic_0001>
module attributes {stable_mosaic.version = 11 : i64} {
  func.func @_fused_gru_stack_kernel(%arg0: i32, %arg1: i32, %arg2: memref<8x8x128xbf16, #tpu.memory_space<vmem>>, %arg3: memref<128x384xbf16, #tpu.memory_space<vmem>>, %arg4: memref<1x384xf32, #tpu.memory_space<vmem>>, %arg5: memref<1x128x384xbf16, #tpu.memory_space<vmem>>, %arg6: memref<1x1x384xf32, #tpu.memory_space<vmem>>, %arg7: memref<2x128x384xbf16, #tpu.memory_space<vmem>>, %arg8: memref<2x1x384xf32, #tpu.memory_space<vmem>>, %arg9: memref<8x8x128xf32, #tpu.memory_space<vmem>>, %arg10: memref<2x8x128xf32, #tpu.memory_space<vmem>>, %arg11: memref<8x8x128xbf16, #tpu.memory_space<vmem>>, %arg12: memref<8x8x384xf32, #tpu.memory_space<vmem>>) attributes {dimension_semantics = [#tpu.dimension_semantics<parallel>, #tpu.dimension_semantics<arbitrary>], iteration_bounds = array<i64: 1, 1>, scalar_prefetch = 0 : i64, scratch_operands = 3 : i64, tpu.core_type = #tpu.core_type<tc>, window_params = [{transform_indices = @transform_0, window_bounds = array<i64: 8, 8, 128>}, {pipeline_mode = #tpu.pipeline_mode<synchronous>, transform_indices = @transform_1, window_bounds = array<i64: 128, 384>}, {pipeline_mode = #tpu.pipeline_mode<synchronous>, transform_indices = @transform_2, window_bounds = array<i64: 1, 384>}, {pipeline_mode = #tpu.pipeline_mode<synchronous>, transform_indices = @transform_3, window_bounds = array<i64: 1, 128, 384>}, {pipeline_mode = #tpu.pipeline_mode<synchronous>, transform_indices = @transform_4, window_bounds = array<i64: 1, 1, 384>}, {pipeline_mode = #tpu.pipeline_mode<synchronous>, transform_indices = @transform_5, window_bounds = array<i64: 2, 128, 384>}, {pipeline_mode = #tpu.pipeline_mode<synchronous>, transform_indices = @transform_6, window_bounds = array<i64: 2, 1, 384>}, {transform_indices = @transform_7, window_bounds = array<i64: 8, 8, 128>}]} {
    %c0_i32 = arith.constant 0 : i32
    %0 = arith.cmpi eq, %arg1, %c0_i32 : i32
    %1 = arith.extui %0 : i1 to i32
    %c0_i32_0 = arith.constant 0 : i32
    %2 = arith.cmpi ne, %1, %c0_i32_0 : i32
    scf.if %2 {
      %cst_184 = arith.constant 0.000000e+00 : f32
      %629 = vector.broadcast %cst_184 : f32 to vector<2x8x128xf32>
      %c0_185 = arith.constant 0 : index
      %c0_186 = arith.constant 0 : index
      %c0_187 = arith.constant 0 : index
      %630 = vector.load %arg10[%c0_185, %c0_186, %c0_187] : memref<2x8x128xf32, #tpu.memory_space<vmem>>, vector<2x8x128xf32>
      tpu.vector_store %arg10[%c0_185, %c0_186, %c0_187], %629 {strides = array<i32>} : memref<2x8x128xf32, #tpu.memory_space<vmem>>, vector<2x8x128xf32>,
    } else {
    }
    %c0 = arith.constant 0 : index
    %c0_1 = arith.constant 0 : index
    %c0_2 = arith.constant 0 : index
    %3 = vector.load %arg2[%c0, %c0_1, %c0_2] : memref<8x8x128xbf16, #tpu.memory_space<vmem>>, vector<8x8x128xbf16>
    %4 = vector.shape_cast %3 : vector<8x8x128xbf16> to vector<64x128xbf16>
    %c0_3 = arith.constant 0 : index
    %c0_4 = arith.constant 0 : index
    %5 = vector.load %arg3[%c0_3, %c0_4] : memref<128x384xbf16, #tpu.memory_space<vmem>>, vector<128x384xbf16>
    %c0_5 = arith.constant 0 : index
    %c0_6 = arith.constant 0 : index
    %6 = vector.load %arg4[%c0_5, %c0_6] : memref<1x384xf32, #tpu.memory_space<vmem>>, vector<1x384xf32>
    %cst = arith.constant dense<0.000000e+00> : vector<64x384xf32>
    %7 = tpu.matmul %4, %5, %cst {dimension_numbers = #tpu.dot_dimension_numbers<[1], [0], [0], [1], [0, 0, 1, 1], [], []>} : vector<64x128xbf16>, vector<128x384xbf16>, vector<64x384xf32> -> vector<64x384xf32>
    %8 = vector.broadcast %6 : vector<1x384xf32> to vector<64x384xf32>
    %9 = arith.addf %7, %8 : vector<64x384xf32>
    %10 = vector.shape_cast %9 : vector<64x384xf32> to vector<8x8x384xf32>
    %c0_7 = arith.constant 0 : index
    %c0_8 = arith.constant 0 : index
    %c0_9 = arith.constant 0 : index
    %11 = vector.load %arg12[%c0_7, %c0_8, %c0_9] : memref<8x8x384xf32, #tpu.memory_space<vmem>>, vector<8x8x384xf32>
    tpu.vector_store %arg12[%c0_7, %c0_8, %c0_9], %10 {strides = array<i32>} : memref<8x8x384xf32, #tpu.memory_space<vmem>>, vector<8x8x384xf32>,
    %c0_10 = arith.constant 0 : index
    %c0_11 = arith.constant 0 : index
    %c0_12 = arith.constant 0 : index
    %12 = vector.load %arg7[%c0_10, %c0_11, %c0_12] : memref<2x128x384xbf16, #tpu.memory_space<vmem>>, vector<1x128x384xbf16>
    %13 = vector.shape_cast %12 : vector<1x128x384xbf16> to vector<128x384xbf16>
    %c0_13 = arith.constant 0 : index
    %c0_14 = arith.constant 0 : index
    %c0_15 = arith.constant 0 : index
    %14 = vector.load %arg8[%c0_13, %c0_14, %c0_15] : memref<2x1x384xf32, #tpu.memory_space<vmem>>, vector<1x1x384xf32>
    %15 = vector.shape_cast %14 : vector<1x1x384xf32> to vector<1x384xf32>
    %16 = vector.shape_cast %15 : vector<1x384xf32> to vector<1x384xf32>
    %17 = vector.broadcast %16 : vector<1x384xf32> to vector<8x384xf32>
    %c0_16 = arith.constant 0 : index
    %c0_17 = arith.constant 0 : index
    %c0_18 = arith.constant 0 : index
    %18 = vector.load %arg10[%c0_16, %c0_17, %c0_18] : memref<2x8x128xf32, #tpu.memory_space<vmem>>, vector<1x8x128xf32>
    %19 = vector.shape_cast %18 : vector<1x8x128xf32> to vector<8x128xf32>
    %c0_i32_19 = arith.constant 0 : i32
    %20 = arith.index_cast %c0_i32_19 : i32 to index
    %c0_20 = arith.constant 0 : index
    %c0_21 = arith.constant 0 : index
    %21 = vector.load %arg12[%20, %c0_20, %c0_21] : memref<8x8x384xf32, #tpu.memory_space<vmem>>, vector<1x8x384xf32>
    %22 = vector.shape_cast %21 : vector<1x8x384xf32> to vector<8x384xf32>
    %23 = arith.truncf %19 : vector<8x128xf32> to vector<8x128xbf16>
    %cst_22 = arith.constant dense<0.000000e+00> : vector<8x384xf32>
    %24 = tpu.matmul %23, %13, %cst_22 {dimension_numbers = #tpu.dot_dimension_numbers<[1], [0], [0], [1], [0, 0, 1, 1], [], []>} : vector<8x128xbf16>, vector<128x384xbf16>, vector<8x384xf32> -> vector<8x384xf32>
    %25 = arith.addf %24, %17 : vector<8x384xf32>
    %26 = vector.extract_strided_slice %22 {offsets = [0, 0], sizes = [8, 128], strides = [1, 1]} : vector<8x384xf32> to vector<8x128xf32>
    %27 = vector.extract_strided_slice %25 {offsets = [0, 0], sizes = [8, 128], strides = [1, 1]} : vector<8x384xf32> to vector<8x128xf32>
    %28 = arith.addf %26, %27 : vector<8x128xf32>
    %29 = arith.negf %28 : vector<8x128xf32>
    %30 = math.exp %29 : vector<8x128xf32>
    %cst_23 = arith.constant 1.000000e+00 : f32
    %31 = vector.broadcast %cst_23 : f32 to vector<8x128xf32>
    %32 = arith.addf %31, %30 : vector<8x128xf32>
    %33 = arith.divf %31, %32 : vector<8x128xf32>
    %34 = vector.extract_strided_slice %22 {offsets = [0, 128], sizes = [8, 128], strides = [1, 1]} : vector<8x384xf32> to vector<8x128xf32>
    %35 = vector.extract_strided_slice %25 {offsets = [0, 128], sizes = [8, 128], strides = [1, 1]} : vector<8x384xf32> to vector<8x128xf32>
    %36 = arith.addf %34, %35 : vector<8x128xf32>
    %37 = arith.negf %36 : vector<8x128xf32>
    %38 = math.exp %37 : vector<8x128xf32>
    %cst_24 = arith.constant 1.000000e+00 : f32
    %39 = vector.broadcast %cst_24 : f32 to vector<8x128xf32>
    %40 = arith.addf %39, %38 : vector<8x128xf32>
    %41 = arith.divf %39, %40 : vector<8x128xf32>
    %42 = vector.extract_strided_slice %22 {offsets = [0, 256], sizes = [8, 128], strides = [1, 1]} : vector<8x384xf32> to vector<8x128xf32>
    %43 = vector.extract_strided_slice %25 {offsets = [0, 256], sizes = [8, 128], strides = [1, 1]} : vector<8x384xf32> to vector<8x128xf32>
    %44 = arith.mulf %33, %43 : vector<8x128xf32>
    %45 = arith.addf %42, %44 : vector<8x128xf32>
    %46 = math.tanh %45 : vector<8x128xf32>
    %cst_25 = arith.constant 1.000000e+00 : f32
    %47 = vector.broadcast %cst_25 : f32 to vector<8x128xf32>
    %48 = arith.subf %47, %41 : vector<8x128xf32>
    %49 = arith.mulf %48, %46 : vector<8x128xf32>
    %50 = arith.mulf %41, %19 : vector<8x128xf32>
    %51 = arith.addf %49, %50 : vector<8x128xf32>
    %52 = arith.truncf %51 : vector<8x128xf32> to vector<8x128xbf16>
    %53 = arith.index_cast %c0_i32_19 : i32 to index
    %c0_26 = arith.constant 0 : index
    %c0_27 = arith.constant 0 : index
    %54 = vector.load %arg11[%53, %c0_26, %c0_27] : memref<8x8x128xbf16, #tpu.memory_space<vmem>>, vector<1x8x128xbf16>
    %55 = vector.shape_cast %54 : vector<1x8x128xbf16> to vector<8x128xbf16>
    %56 = vector.shape_cast %52 : vector<8x128xbf16> to vector<1x8x128xbf16>
    tpu.vector_store %arg11[%53, %c0_26, %c0_27], %56 {strides = array<i32>} : memref<8x8x128xbf16, #tpu.memory_space<vmem>>, vector<1x8x128xbf16>,
    %c1_i32 = arith.constant 1 : i32
    %57 = arith.index_cast %c1_i32 : i32 to index
    %c0_28 = arith.constant 0 : index
    %c0_29 = arith.constant 0 : index
    %58 = vector.load %arg12[%57, %c0_28, %c0_29] : memref<8x8x384xf32, #tpu.memory_space<vmem>>, vector<1x8x384xf32>
    %59 = vector.shape_cast %58 : vector<1x8x384xf32> to vector<8x384xf32>
    %60 = arith.truncf %51 : vector<8x128xf32> to vector<8x128xbf16>
    %cst_30 = arith.constant dense<0.000000e+00> : vector<8x384xf32>
    %61 = tpu.matmul %60, %13, %cst_30 {dimension_numbers = #tpu.dot_dimension_numbers<[1], [0], [0], [1], [0, 0, 1, 1], [], []>} : vector<8x128xbf16>, vector<128x384xbf16>, vector<8x384xf32> -> vector<8x384xf32>
    %62 = arith.addf %61, %17 : vector<8x384xf32>
    %63 = vector.extract_strided_slice %59 {offsets = [0, 0], sizes = [8, 128], strides = [1, 1]} : vector<8x384xf32> to vector<8x128xf32>
    %64 = vector.extract_strided_slice %62 {offsets = [0, 0], sizes = [8, 128], strides = [1, 1]} : vector<8x384xf32> to vector<8x128xf32>
    %65 = arith.addf %63, %64 : vector<8x128xf32>
    %66 = arith.negf %65 : vector<8x128xf32>
    %67 = math.exp %66 : vector<8x128xf32>
    %cst_31 = arith.constant 1.000000e+00 : f32
    %68 = vector.broadcast %cst_31 : f32 to vector<8x128xf32>
    %69 = arith.addf %68, %67 : vector<8x128xf32>
    %70 = arith.divf %68, %69 : vector<8x128xf32>
    %71 = vector.extract_strided_slice %59 {offsets = [0, 128], sizes = [8, 128], strides = [1, 1]} : vector<8x384xf32> to vector<8x128xf32>
    %72 = vector.extract_strided_slice %62 {offsets = [0, 128], sizes = [8, 128], strides = [1, 1]} : vector<8x384xf32> to vector<8x128xf32>
    %73 = arith.addf %71, %72 : vector<8x128xf32>
    %74 = arith.negf %73 : vector<8x128xf32>
    %75 = math.exp %74 : vector<8x128xf32>
    %cst_32 = arith.constant 1.000000e+00 : f32
    %76 = vector.broadcast %cst_32 : f32 to vector<8x128xf32>
    %77 = arith.addf %76, %75 : vector<8x128xf32>
    %78 = arith.divf %76, %77 : vector<8x128xf32>
    %79 = vector.extract_strided_slice %59 {offsets = [0, 256], sizes = [8, 128], strides = [1, 1]} : vector<8x384xf32> to vector<8x128xf32>
    %80 = vector.extract_strided_slice %62 {offsets = [0, 256], sizes = [8, 128], strides = [1, 1]} : vector<8x384xf32> to vector<8x128xf32>
    %81 = arith.mulf %70, %80 : vector<8x128xf32>
    %82 = arith.addf %79, %81 : vector<8x128xf32>
    %83 = math.tanh %82 : vector<8x128xf32>
    %cst_33 = arith.constant 1.000000e+00 : f32
    %84 = vector.broadcast %cst_33 : f32 to vector<8x128xf32>
    %85 = arith.subf %84, %78 : vector<8x128xf32>
    %86 = arith.mulf %85, %83 : vector<8x128xf32>
    %87 = arith.mulf %78, %51 : vector<8x128xf32>
    %88 = arith.addf %86, %87 : vector<8x128xf32>
    %89 = arith.truncf %88 : vector<8x128xf32> to vector<8x128xbf16>
    %90 = arith.index_cast %c1_i32 : i32 to index
    %c0_34 = arith.constant 0 : index
    %c0_35 = arith.constant 0 : index
    %91 = vector.load %arg11[%90, %c0_34, %c0_35] : memref<8x8x128xbf16, #tpu.memory_space<vmem>>, vector<1x8x128xbf16>
    %92 = vector.shape_cast %91 : vector<1x8x128xbf16> to vector<8x128xbf16>
    %93 = vector.shape_cast %89 : vector<8x128xbf16> to vector<1x8x128xbf16>
    tpu.vector_store %arg11[%90, %c0_34, %c0_35], %93 {strides = array<i32>} : memref<8x8x128xbf16, #tpu.memory_space<vmem>>, vector<1x8x128xbf16>,
    %c2_i32 = arith.constant 2 : i32
    %94 = arith.index_cast %c2_i32 : i32 to index
    %c0_36 = arith.constant 0 : index
    %c0_37 = arith.constant 0 : index
    %95 = vector.load %arg12[%94, %c0_36, %c0_37] : memref<8x8x384xf32, #tpu.memory_space<vmem>>, vector<1x8x384xf32>
    %96 = vector.shape_cast %95 : vector<1x8x384xf32> to vector<8x384xf32>
    %97 = arith.truncf %88 : vector<8x128xf32> to vector<8x128xbf16>
    %cst_38 = arith.constant dense<0.000000e+00> : vector<8x384xf32>
    %98 = tpu.matmul %97, %13, %cst_38 {dimension_numbers = #tpu.dot_dimension_numbers<[1], [0], [0], [1], [0, 0, 1, 1], [], []>} : vector<8x128xbf16>, vector<128x384xbf16>, vector<8x384xf32> -> vector<8x384xf32>
    %99 = arith.addf %98, %17 : vector<8x384xf32>
    %100 = vector.extract_strided_slice %96 {offsets = [0, 0], sizes = [8, 128], strides = [1, 1]} : vector<8x384xf32> to vector<8x128xf32>
    %101 = vector.extract_strided_slice %99 {offsets = [0, 0], sizes = [8, 128], strides = [1, 1]} : vector<8x384xf32> to vector<8x128xf32>
    %102 = arith.addf %100, %101 : vector<8x128xf32>
    %103 = arith.negf %102 : vector<8x128xf32>
    %104 = math.exp %103 : vector<8x128xf32>
    %cst_39 = arith.constant 1.000000e+00 : f32
    %105 = vector.broadcast %cst_39 : f32 to vector<8x128xf32>
    %106 = arith.addf %105, %104 : vector<8x128xf32>
    %107 = arith.divf %105, %106 : vector<8x128xf32>
    %108 = vector.extract_strided_slice %96 {offsets = [0, 128], sizes = [8, 128], strides = [1, 1]} : vector<8x384xf32> to vector<8x128xf32>
    %109 = vector.extract_strided_slice %99 {offsets = [0, 128], sizes = [8, 128], strides = [1, 1]} : vector<8x384xf32> to vector<8x128xf32>
    %110 = arith.addf %108, %109 : vector<8x128xf32>
    %111 = arith.negf %110 : vector<8x128xf32>
    %112 = math.exp %111 : vector<8x128xf32>
    %cst_40 = arith.constant 1.000000e+00 : f32
    %113 = vector.broadcast %cst_40 : f32 to vector<8x128xf32>
    %114 = arith.addf %113, %112 : vector<8x128xf32>
    %115 = arith.divf %113, %114 : vector<8x128xf32>
    %116 = vector.extract_strided_slice %96 {offsets = [0, 256], sizes = [8, 128], strides = [1, 1]} : vector<8x384xf32> to vector<8x128xf32>
    %117 = vector.extract_strided_slice %99 {offsets = [0, 256], sizes = [8, 128], strides = [1, 1]} : vector<8x384xf32> to vector<8x128xf32>
    %118 = arith.mulf %107, %117 : vector<8x128xf32>
    %119 = arith.addf %116, %118 : vector<8x128xf32>
    %120 = math.tanh %119 : vector<8x128xf32>
    %cst_41 = arith.constant 1.000000e+00 : f32
    %121 = vector.broadcast %cst_41 : f32 to vector<8x128xf32>
    %122 = arith.subf %121, %115 : vector<8x128xf32>
    %123 = arith.mulf %122, %120 : vector<8x128xf32>
    %124 = arith.mulf %115, %88 : vector<8x128xf32>
    %125 = arith.addf %123, %124 : vector<8x128xf32>
    %126 = arith.truncf %125 : vector<8x128xf32> to vector<8x128xbf16>
    %127 = arith.index_cast %c2_i32 : i32 to index
    %c0_42 = arith.constant 0 : index
    %c0_43 = arith.constant 0 : index
    %128 = vector.load %arg11[%127, %c0_42, %c0_43] : memref<8x8x128xbf16, #tpu.memory_space<vmem>>, vector<1x8x128xbf16>
    %129 = vector.shape_cast %128 : vector<1x8x128xbf16> to vector<8x128xbf16>
    %130 = vector.shape_cast %126 : vector<8x128xbf16> to vector<1x8x128xbf16>
    tpu.vector_store %arg11[%127, %c0_42, %c0_43], %130 {strides = array<i32>} : memref<8x8x128xbf16, #tpu.memory_space<vmem>>, vector<1x8x128xbf16>,
    %c3_i32 = arith.constant 3 : i32
    %131 = arith.index_cast %c3_i32 : i32 to index
    %c0_44 = arith.constant 0 : index
    %c0_45 = arith.constant 0 : index
    %132 = vector.load %arg12[%131, %c0_44, %c0_45] : memref<8x8x384xf32, #tpu.memory_space<vmem>>, vector<1x8x384xf32>
    %133 = vector.shape_cast %132 : vector<1x8x384xf32> to vector<8x384xf32>
    %134 = arith.truncf %125 : vector<8x128xf32> to vector<8x128xbf16>
    %cst_46 = arith.constant dense<0.000000e+00> : vector<8x384xf32>
    %135 = tpu.matmul %134, %13, %cst_46 {dimension_numbers = #tpu.dot_dimension_numbers<[1], [0], [0], [1], [0, 0, 1, 1], [], []>} : vector<8x128xbf16>, vector<128x384xbf16>, vector<8x384xf32> -> vector<8x384xf32>
    %136 = arith.addf %135, %17 : vector<8x384xf32>
    %137 = vector.extract_strided_slice %133 {offsets = [0, 0], sizes = [8, 128], strides = [1, 1]} : vector<8x384xf32> to vector<8x128xf32>
    %138 = vector.extract_strided_slice %136 {offsets = [0, 0], sizes = [8, 128], strides = [1, 1]} : vector<8x384xf32> to vector<8x128xf32>
    %139 = arith.addf %137, %138 : vector<8x128xf32>
    %140 = arith.negf %139 : vector<8x128xf32>
    %141 = math.exp %140 : vector<8x128xf32>
    %cst_47 = arith.constant 1.000000e+00 : f32
    %142 = vector.broadcast %cst_47 : f32 to vector<8x128xf32>
    %143 = arith.addf %142, %141 : vector<8x128xf32>
    %144 = arith.divf %142, %143 : vector<8x128xf32>
    %145 = vector.extract_strided_slice %133 {offsets = [0, 128], sizes = [8, 128], strides = [1, 1]} : vector<8x384xf32> to vector<8x128xf32>
    %146 = vector.extract_strided_slice %136 {offsets = [0, 128], sizes = [8, 128], strides = [1, 1]} : vector<8x384xf32> to vector<8x128xf32>
    %147 = arith.addf %145, %146 : vector<8x128xf32>
    %148 = arith.negf %147 : vector<8x128xf32>
    %149 = math.exp %148 : vector<8x128xf32>
    %cst_48 = arith.constant 1.000000e+00 : f32
    %150 = vector.broadcast %cst_48 : f32 to vector<8x128xf32>
    %151 = arith.addf %150, %149 : vector<8x128xf32>
    %152 = arith.divf %150, %151 : vector<8x128xf32>
    %153 = vector.extract_strided_slice %133 {offsets = [0, 256], sizes = [8, 128], strides = [1, 1]} : vector<8x384xf32> to vector<8x128xf32>
    %154 = vector.extract_strided_slice %136 {offsets = [0, 256], sizes = [8, 128], strides = [1, 1]} : vector<8x384xf32> to vector<8x128xf32>
    %155 = arith.mulf %144, %154 : vector<8x128xf32>
    %156 = arith.addf %153, %155 : vector<8x128xf32>
    %157 = math.tanh %156 : vector<8x128xf32>
    %cst_49 = arith.constant 1.000000e+00 : f32
    %158 = vector.broadcast %cst_49 : f32 to vector<8x128xf32>
    %159 = arith.subf %158, %152 : vector<8x128xf32>
    %160 = arith.mulf %159, %157 : vector<8x128xf32>
    %161 = arith.mulf %152, %125 : vector<8x128xf32>
    %162 = arith.addf %160, %161 : vector<8x128xf32>
    %163 = arith.truncf %162 : vector<8x128xf32> to vector<8x128xbf16>
    %164 = arith.index_cast %c3_i32 : i32 to index
    %c0_50 = arith.constant 0 : index
    %c0_51 = arith.constant 0 : index
    %165 = vector.load %arg11[%164, %c0_50, %c0_51] : memref<8x8x128xbf16, #tpu.memory_space<vmem>>, vector<1x8x128xbf16>
    %166 = vector.shape_cast %165 : vector<1x8x128xbf16> to vector<8x128xbf16>
    %167 = vector.shape_cast %163 : vector<8x128xbf16> to vector<1x8x128xbf16>
    tpu.vector_store %arg11[%164, %c0_50, %c0_51], %167 {strides = array<i32>} : memref<8x8x128xbf16, #tpu.memory_space<vmem>>, vector<1x8x128xbf16>,
    %c4_i32 = arith.constant 4 : i32
    %168 = arith.index_cast %c4_i32 : i32 to index
    %c0_52 = arith.constant 0 : index
    %c0_53 = arith.constant 0 : index
    %169 = vector.load %arg12[%168, %c0_52, %c0_53] : memref<8x8x384xf32, #tpu.memory_space<vmem>>, vector<1x8x384xf32>
    %170 = vector.shape_cast %169 : vector<1x8x384xf32> to vector<8x384xf32>
    %171 = arith.truncf %162 : vector<8x128xf32> to vector<8x128xbf16>
    %cst_54 = arith.constant dense<0.000000e+00> : vector<8x384xf32>
    %172 = tpu.matmul %171, %13, %cst_54 {dimension_numbers = #tpu.dot_dimension_numbers<[1], [0], [0], [1], [0, 0, 1, 1], [], []>} : vector<8x128xbf16>, vector<128x384xbf16>, vector<8x384xf32> -> vector<8x384xf32>
    %173 = arith.addf %172, %17 : vector<8x384xf32>
    %174 = vector.extract_strided_slice %170 {offsets = [0, 0], sizes = [8, 128], strides = [1, 1]} : vector<8x384xf32> to vector<8x128xf32>
    %175 = vector.extract_strided_slice %173 {offsets = [0, 0], sizes = [8, 128], strides = [1, 1]} : vector<8x384xf32> to vector<8x128xf32>
    %176 = arith.addf %174, %175 : vector<8x128xf32>
    %177 = arith.negf %176 : vector<8x128xf32>
    %178 = math.exp %177 : vector<8x128xf32>
    %cst_55 = arith.constant 1.000000e+00 : f32
    %179 = vector.broadcast %cst_55 : f32 to vector<8x128xf32>
    %180 = arith.addf %179, %178 : vector<8x128xf32>
    %181 = arith.divf %179, %180 : vector<8x128xf32>
    %182 = vector.extract_strided_slice %170 {offsets = [0, 128], sizes = [8, 128], strides = [1, 1]} : vector<8x384xf32> to vector<8x128xf32>
    %183 = vector.extract_strided_slice %173 {offsets = [0, 128], sizes = [8, 128], strides = [1, 1]} : vector<8x384xf32> to vector<8x128xf32>
    %184 = arith.addf %182, %183 : vector<8x128xf32>
    %185 = arith.negf %184 : vector<8x128xf32>
    %186 = math.exp %185 : vector<8x128xf32>
    %cst_56 = arith.constant 1.000000e+00 : f32
    %187 = vector.broadcast %cst_56 : f32 to vector<8x128xf32>
    %188 = arith.addf %187, %186 : vector<8x128xf32>
    %189 = arith.divf %187, %188 : vector<8x128xf32>
    %190 = vector.extract_strided_slice %170 {offsets = [0, 256], sizes = [8, 128], strides = [1, 1]} : vector<8x384xf32> to vector<8x128xf32>
    %191 = vector.extract_strided_slice %173 {offsets = [0, 256], sizes = [8, 128], strides = [1, 1]} : vector<8x384xf32> to vector<8x128xf32>
    %192 = arith.mulf %181, %191 : vector<8x128xf32>
    %193 = arith.addf %190, %192 : vector<8x128xf32>
    %194 = math.tanh %193 : vector<8x128xf32>
    %cst_57 = arith.constant 1.000000e+00 : f32
    %195 = vector.broadcast %cst_57 : f32 to vector<8x128xf32>
    %196 = arith.subf %195, %189 : vector<8x128xf32>
    %197 = arith.mulf %196, %194 : vector<8x128xf32>
    %198 = arith.mulf %189, %162 : vector<8x128xf32>
    %199 = arith.addf %197, %198 : vector<8x128xf32>
    %200 = arith.truncf %199 : vector<8x128xf32> to vector<8x128xbf16>
    %201 = arith.index_cast %c4_i32 : i32 to index
    %c0_58 = arith.constant 0 : index
    %c0_59 = arith.constant 0 : index
    %202 = vector.load %arg11[%201, %c0_58, %c0_59] : memref<8x8x128xbf16, #tpu.memory_space<vmem>>, vector<1x8x128xbf16>
    %203 = vector.shape_cast %202 : vector<1x8x128xbf16> to vector<8x128xbf16>
    %204 = vector.shape_cast %200 : vector<8x128xbf16> to vector<1x8x128xbf16>
    tpu.vector_store %arg11[%201, %c0_58, %c0_59], %204 {strides = array<i32>} : memref<8x8x128xbf16, #tpu.memory_space<vmem>>, vector<1x8x128xbf16>,
    %c5_i32 = arith.constant 5 : i32
    %205 = arith.index_cast %c5_i32 : i32 to index
    %c0_60 = arith.constant 0 : index
    %c0_61 = arith.constant 0 : index
    %206 = vector.load %arg12[%205, %c0_60, %c0_61] : memref<8x8x384xf32, #tpu.memory_space<vmem>>, vector<1x8x384xf32>
    %207 = vector.shape_cast %206 : vector<1x8x384xf32> to vector<8x384xf32>
    %208 = arith.truncf %199 : vector<8x128xf32> to vector<8x128xbf16>
    %cst_62 = arith.constant dense<0.000000e+00> : vector<8x384xf32>
    %209 = tpu.matmul %208, %13, %cst_62 {dimension_numbers = #tpu.dot_dimension_numbers<[1], [0], [0], [1], [0, 0, 1, 1], [], []>} : vector<8x128xbf16>, vector<128x384xbf16>, vector<8x384xf32> -> vector<8x384xf32>
    %210 = arith.addf %209, %17 : vector<8x384xf32>
    %211 = vector.extract_strided_slice %207 {offsets = [0, 0], sizes = [8, 128], strides = [1, 1]} : vector<8x384xf32> to vector<8x128xf32>
    %212 = vector.extract_strided_slice %210 {offsets = [0, 0], sizes = [8, 128], strides = [1, 1]} : vector<8x384xf32> to vector<8x128xf32>
    %213 = arith.addf %211, %212 : vector<8x128xf32>
    %214 = arith.negf %213 : vector<8x128xf32>
    %215 = math.exp %214 : vector<8x128xf32>
    %cst_63 = arith.constant 1.000000e+00 : f32
    %216 = vector.broadcast %cst_63 : f32 to vector<8x128xf32>
    %217 = arith.addf %216, %215 : vector<8x128xf32>
    %218 = arith.divf %216, %217 : vector<8x128xf32>
    %219 = vector.extract_strided_slice %207 {offsets = [0, 128], sizes = [8, 128], strides = [1, 1]} : vector<8x384xf32> to vector<8x128xf32>
    %220 = vector.extract_strided_slice %210 {offsets = [0, 128], sizes = [8, 128], strides = [1, 1]} : vector<8x384xf32> to vector<8x128xf32>
    %221 = arith.addf %219, %220 : vector<8x128xf32>
    %222 = arith.negf %221 : vector<8x128xf32>
    %223 = math.exp %222 : vector<8x128xf32>
    %cst_64 = arith.constant 1.000000e+00 : f32
    %224 = vector.broadcast %cst_64 : f32 to vector<8x128xf32>
    %225 = arith.addf %224, %223 : vector<8x128xf32>
    %226 = arith.divf %224, %225 : vector<8x128xf32>
    %227 = vector.extract_strided_slice %207 {offsets = [0, 256], sizes = [8, 128], strides = [1, 1]} : vector<8x384xf32> to vector<8x128xf32>
    %228 = vector.extract_strided_slice %210 {offsets = [0, 256], sizes = [8, 128], strides = [1, 1]} : vector<8x384xf32> to vector<8x128xf32>
    %229 = arith.mulf %218, %228 : vector<8x128xf32>
    %230 = arith.addf %227, %229 : vector<8x128xf32>
    %231 = math.tanh %230 : vector<8x128xf32>
    %cst_65 = arith.constant 1.000000e+00 : f32
    %232 = vector.broadcast %cst_65 : f32 to vector<8x128xf32>
    %233 = arith.subf %232, %226 : vector<8x128xf32>
    %234 = arith.mulf %233, %231 : vector<8x128xf32>
    %235 = arith.mulf %226, %199 : vector<8x128xf32>
    %236 = arith.addf %234, %235 : vector<8x128xf32>
    %237 = arith.truncf %236 : vector<8x128xf32> to vector<8x128xbf16>
    %238 = arith.index_cast %c5_i32 : i32 to index
    %c0_66 = arith.constant 0 : index
    %c0_67 = arith.constant 0 : index
    %239 = vector.load %arg11[%238, %c0_66, %c0_67] : memref<8x8x128xbf16, #tpu.memory_space<vmem>>, vector<1x8x128xbf16>
    %240 = vector.shape_cast %239 : vector<1x8x128xbf16> to vector<8x128xbf16>
    %241 = vector.shape_cast %237 : vector<8x128xbf16> to vector<1x8x128xbf16>
    tpu.vector_store %arg11[%238, %c0_66, %c0_67], %241 {strides = array<i32>} : memref<8x8x128xbf16, #tpu.memory_space<vmem>>, vector<1x8x128xbf16>,
    %c6_i32 = arith.constant 6 : i32
    %242 = arith.index_cast %c6_i32 : i32 to index
    %c0_68 = arith.constant 0 : index
    %c0_69 = arith.constant 0 : index
    %243 = vector.load %arg12[%242, %c0_68, %c0_69] : memref<8x8x384xf32, #tpu.memory_space<vmem>>, vector<1x8x384xf32>
    %244 = vector.shape_cast %243 : vector<1x8x384xf32> to vector<8x384xf32>
    %245 = arith.truncf %236 : vector<8x128xf32> to vector<8x128xbf16>
    %cst_70 = arith.constant dense<0.000000e+00> : vector<8x384xf32>
    %246 = tpu.matmul %245, %13, %cst_70 {dimension_numbers = #tpu.dot_dimension_numbers<[1], [0], [0], [1], [0, 0, 1, 1], [], []>} : vector<8x128xbf16>, vector<128x384xbf16>, vector<8x384xf32> -> vector<8x384xf32>
    %247 = arith.addf %246, %17 : vector<8x384xf32>
    %248 = vector.extract_strided_slice %244 {offsets = [0, 0], sizes = [8, 128], strides = [1, 1]} : vector<8x384xf32> to vector<8x128xf32>
    %249 = vector.extract_strided_slice %247 {offsets = [0, 0], sizes = [8, 128], strides = [1, 1]} : vector<8x384xf32> to vector<8x128xf32>
    %250 = arith.addf %248, %249 : vector<8x128xf32>
    %251 = arith.negf %250 : vector<8x128xf32>
    %252 = math.exp %251 : vector<8x128xf32>
    %cst_71 = arith.constant 1.000000e+00 : f32
    %253 = vector.broadcast %cst_71 : f32 to vector<8x128xf32>
    %254 = arith.addf %253, %252 : vector<8x128xf32>
    %255 = arith.divf %253, %254 : vector<8x128xf32>
    %256 = vector.extract_strided_slice %244 {offsets = [0, 128], sizes = [8, 128], strides = [1, 1]} : vector<8x384xf32> to vector<8x128xf32>
    %257 = vector.extract_strided_slice %247 {offsets = [0, 128], sizes = [8, 128], strides = [1, 1]} : vector<8x384xf32> to vector<8x128xf32>
    %258 = arith.addf %256, %257 : vector<8x128xf32>
    %259 = arith.negf %258 : vector<8x128xf32>
    %260 = math.exp %259 : vector<8x128xf32>
    %cst_72 = arith.constant 1.000000e+00 : f32
    %261 = vector.broadcast %cst_72 : f32 to vector<8x128xf32>
    %262 = arith.addf %261, %260 : vector<8x128xf32>
    %263 = arith.divf %261, %262 : vector<8x128xf32>
    %264 = vector.extract_strided_slice %244 {offsets = [0, 256], sizes = [8, 128], strides = [1, 1]} : vector<8x384xf32> to vector<8x128xf32>
    %265 = vector.extract_strided_slice %247 {offsets = [0, 256], sizes = [8, 128], strides = [1, 1]} : vector<8x384xf32> to vector<8x128xf32>
    %266 = arith.mulf %255, %265 : vector<8x128xf32>
    %267 = arith.addf %264, %266 : vector<8x128xf32>
    %268 = math.tanh %267 : vector<8x128xf32>
    %cst_73 = arith.constant 1.000000e+00 : f32
    %269 = vector.broadcast %cst_73 : f32 to vector<8x128xf32>
    %270 = arith.subf %269, %263 : vector<8x128xf32>
    %271 = arith.mulf %270, %268 : vector<8x128xf32>
    %272 = arith.mulf %263, %236 : vector<8x128xf32>
    %273 = arith.addf %271, %272 : vector<8x128xf32>
    %274 = arith.truncf %273 : vector<8x128xf32> to vector<8x128xbf16>
    %275 = arith.index_cast %c6_i32 : i32 to index
    %c0_74 = arith.constant 0 : index
    %c0_75 = arith.constant 0 : index
    %276 = vector.load %arg11[%275, %c0_74, %c0_75] : memref<8x8x128xbf16, #tpu.memory_space<vmem>>, vector<1x8x128xbf16>
    %277 = vector.shape_cast %276 : vector<1x8x128xbf16> to vector<8x128xbf16>
    %278 = vector.shape_cast %274 : vector<8x128xbf16> to vector<1x8x128xbf16>
    tpu.vector_store %arg11[%275, %c0_74, %c0_75], %278 {strides = array<i32>} : memref<8x8x128xbf16, #tpu.memory_space<vmem>>, vector<1x8x128xbf16>,
    %c7_i32 = arith.constant 7 : i32
    %279 = arith.index_cast %c7_i32 : i32 to index
    %c0_76 = arith.constant 0 : index
    %c0_77 = arith.constant 0 : index
    %280 = vector.load %arg12[%279, %c0_76, %c0_77] : memref<8x8x384xf32, #tpu.memory_space<vmem>>, vector<1x8x384xf32>
    %281 = vector.shape_cast %280 : vector<1x8x384xf32> to vector<8x384xf32>
    %282 = arith.truncf %273 : vector<8x128xf32> to vector<8x128xbf16>
    %cst_78 = arith.constant dense<0.000000e+00> : vector<8x384xf32>
    %283 = tpu.matmul %282, %13, %cst_78 {dimension_numbers = #tpu.dot_dimension_numbers<[1], [0], [0], [1], [0, 0, 1, 1], [], []>} : vector<8x128xbf16>, vector<128x384xbf16>, vector<8x384xf32> -> vector<8x384xf32>
    %284 = arith.addf %283, %17 : vector<8x384xf32>
    %285 = vector.extract_strided_slice %281 {offsets = [0, 0], sizes = [8, 128], strides = [1, 1]} : vector<8x384xf32> to vector<8x128xf32>
    %286 = vector.extract_strided_slice %284 {offsets = [0, 0], sizes = [8, 128], strides = [1, 1]} : vector<8x384xf32> to vector<8x128xf32>
    %287 = arith.addf %285, %286 : vector<8x128xf32>
    %288 = arith.negf %287 : vector<8x128xf32>
    %289 = math.exp %288 : vector<8x128xf32>
    %cst_79 = arith.constant 1.000000e+00 : f32
    %290 = vector.broadcast %cst_79 : f32 to vector<8x128xf32>
    %291 = arith.addf %290, %289 : vector<8x128xf32>
    %292 = arith.divf %290, %291 : vector<8x128xf32>
    %293 = vector.extract_strided_slice %281 {offsets = [0, 128], sizes = [8, 128], strides = [1, 1]} : vector<8x384xf32> to vector<8x128xf32>
    %294 = vector.extract_strided_slice %284 {offsets = [0, 128], sizes = [8, 128], strides = [1, 1]} : vector<8x384xf32> to vector<8x128xf32>
    %295 = arith.addf %293, %294 : vector<8x128xf32>
    %296 = arith.negf %295 : vector<8x128xf32>
    %297 = math.exp %296 : vector<8x128xf32>
    %cst_80 = arith.constant 1.000000e+00 : f32
    %298 = vector.broadcast %cst_80 : f32 to vector<8x128xf32>
    %299 = arith.addf %298, %297 : vector<8x128xf32>
    %300 = arith.divf %298, %299 : vector<8x128xf32>
    %301 = vector.extract_strided_slice %281 {offsets = [0, 256], sizes = [8, 128], strides = [1, 1]} : vector<8x384xf32> to vector<8x128xf32>
    %302 = vector.extract_strided_slice %284 {offsets = [0, 256], sizes = [8, 128], strides = [1, 1]} : vector<8x384xf32> to vector<8x128xf32>
    %303 = arith.mulf %292, %302 : vector<8x128xf32>
    %304 = arith.addf %301, %303 : vector<8x128xf32>
    %305 = math.tanh %304 : vector<8x128xf32>
    %cst_81 = arith.constant 1.000000e+00 : f32
    %306 = vector.broadcast %cst_81 : f32 to vector<8x128xf32>
    %307 = arith.subf %306, %300 : vector<8x128xf32>
    %308 = arith.mulf %307, %305 : vector<8x128xf32>
    %309 = arith.mulf %300, %273 : vector<8x128xf32>
    %310 = arith.addf %308, %309 : vector<8x128xf32>
    %311 = arith.truncf %310 : vector<8x128xf32> to vector<8x128xbf16>
    %312 = arith.index_cast %c7_i32 : i32 to index
    %c0_82 = arith.constant 0 : index
    %c0_83 = arith.constant 0 : index
    %313 = vector.load %arg11[%312, %c0_82, %c0_83] : memref<8x8x128xbf16, #tpu.memory_space<vmem>>, vector<1x8x128xbf16>
    %314 = vector.shape_cast %313 : vector<1x8x128xbf16> to vector<8x128xbf16>
    %315 = vector.shape_cast %311 : vector<8x128xbf16> to vector<1x8x128xbf16>
    tpu.vector_store %arg11[%312, %c0_82, %c0_83], %315 {strides = array<i32>} : memref<8x8x128xbf16, #tpu.memory_space<vmem>>, vector<1x8x128xbf16>,
    %c8_i32 = arith.constant 8 : i32
    %c0_84 = arith.constant 0 : index
    %c0_85 = arith.constant 0 : index
    %c0_86 = arith.constant 0 : index
    %316 = vector.load %arg10[%c0_84, %c0_85, %c0_86] : memref<2x8x128xf32, #tpu.memory_space<vmem>>, vector<1x8x128xf32>
    %317 = vector.shape_cast %316 : vector<1x8x128xf32> to vector<8x128xf32>
    %318 = vector.shape_cast %310 : vector<8x128xf32> to vector<1x8x128xf32>
    tpu.vector_store %arg10[%c0_84, %c0_85, %c0_86], %318 {strides = array<i32>} : memref<2x8x128xf32, #tpu.memory_space<vmem>>, vector<1x8x128xf32>,
    %c0_87 = arith.constant 0 : index
    %c0_88 = arith.constant 0 : index
    %c0_89 = arith.constant 0 : index
    %319 = vector.load %arg11[%c0_87, %c0_88, %c0_89] : memref<8x8x128xbf16, #tpu.memory_space<vmem>>, vector<8x8x128xbf16>
    %320 = vector.shape_cast %319 : vector<8x8x128xbf16> to vector<64x128xbf16>
    %c0_90 = arith.constant 0 : index
    %c0_91 = arith.constant 0 : index
    %c0_92 = arith.constant 0 : index
    %321 = vector.load %arg5[%c0_90, %c0_91, %c0_92] : memref<1x128x384xbf16, #tpu.memory_space<vmem>>, vector<1x128x384xbf16>
    %322 = vector.shape_cast %321 : vector<1x128x384xbf16> to vector<128x384xbf16>
    %c0_93 = arith.constant 0 : index
    %c0_94 = arith.constant 0 : index
    %c0_95 = arith.constant 0 : index
    %323 = vector.load %arg6[%c0_93, %c0_94, %c0_95] : memref<1x1x384xf32, #tpu.memory_space<vmem>>, vector<1x1x384xf32>
    %324 = vector.shape_cast %323 : vector<1x1x384xf32> to vector<1x384xf32>
    %cst_96 = arith.constant dense<0.000000e+00> : vector<64x384xf32>
    %325 = tpu.matmul %320, %322, %cst_96 {dimension_numbers = #tpu.dot_dimension_numbers<[1], [0], [0], [1], [0, 0, 1, 1], [], []>} : vector<64x128xbf16>, vector<128x384xbf16>, vector<64x384xf32> -> vector<64x384xf32>
    %326 = vector.broadcast %324 : vector<1x384xf32> to vector<64x384xf32>
    %327 = arith.addf %325, %326 : vector<64x384xf32>
    %328 = vector.shape_cast %327 : vector<64x384xf32> to vector<8x8x384xf32>
    %c0_97 = arith.constant 0 : index
    %c0_98 = arith.constant 0 : index
    %c0_99 = arith.constant 0 : index
    %329 = vector.load %arg12[%c0_97, %c0_98, %c0_99] : memref<8x8x384xf32, #tpu.memory_space<vmem>>, vector<8x8x384xf32>
    tpu.vector_store %arg12[%c0_97, %c0_98, %c0_99], %328 {strides = array<i32>} : memref<8x8x384xf32, #tpu.memory_space<vmem>>, vector<8x8x384xf32>,
    %c1 = arith.constant 1 : index
    %c0_100 = arith.constant 0 : index
    %c0_101 = arith.constant 0 : index
    %330 = vector.load %arg7[%c1, %c0_100, %c0_101] : memref<2x128x384xbf16, #tpu.memory_space<vmem>>, vector<1x128x384xbf16>
    %331 = vector.shape_cast %330 : vector<1x128x384xbf16> to vector<128x384xbf16>
    %c1_102 = arith.constant 1 : index
    %c0_103 = arith.constant 0 : index
    %c0_104 = arith.constant 0 : index
    %332 = vector.load %arg8[%c1_102, %c0_103, %c0_104] : memref<2x1x384xf32, #tpu.memory_space<vmem>>, vector<1x1x384xf32>
    %333 = vector.shape_cast %332 : vector<1x1x384xf32> to vector<1x384xf32>
    %334 = vector.shape_cast %333 : vector<1x384xf32> to vector<1x384xf32>
    %335 = vector.broadcast %334 : vector<1x384xf32> to vector<8x384xf32>
    %c1_105 = arith.constant 1 : index
    %c0_106 = arith.constant 0 : index
    %c0_107 = arith.constant 0 : index
    %336 = vector.load %arg10[%c1_105, %c0_106, %c0_107] : memref<2x8x128xf32, #tpu.memory_space<vmem>>, vector<1x8x128xf32>
    %337 = vector.shape_cast %336 : vector<1x8x128xf32> to vector<8x128xf32>
    %c0_i32_108 = arith.constant 0 : i32
    %338 = arith.index_cast %c0_i32_108 : i32 to index
    %c0_109 = arith.constant 0 : index
    %c0_110 = arith.constant 0 : index
    %339 = vector.load %arg12[%338, %c0_109, %c0_110] : memref<8x8x384xf32, #tpu.memory_space<vmem>>, vector<1x8x384xf32>
    %340 = vector.shape_cast %339 : vector<1x8x384xf32> to vector<8x384xf32>
    %341 = arith.truncf %337 : vector<8x128xf32> to vector<8x128xbf16>
    %cst_111 = arith.constant dense<0.000000e+00> : vector<8x384xf32>
    %342 = tpu.matmul %341, %331, %cst_111 {dimension_numbers = #tpu.dot_dimension_numbers<[1], [0], [0], [1], [0, 0, 1, 1], [], []>} : vector<8x128xbf16>, vector<128x384xbf16>, vector<8x384xf32> -> vector<8x384xf32>
    %343 = arith.addf %342, %335 : vector<8x384xf32>
    %344 = vector.extract_strided_slice %340 {offsets = [0, 0], sizes = [8, 128], strides = [1, 1]} : vector<8x384xf32> to vector<8x128xf32>
    %345 = vector.extract_strided_slice %343 {offsets = [0, 0], sizes = [8, 128], strides = [1, 1]} : vector<8x384xf32> to vector<8x128xf32>
    %346 = arith.addf %344, %345 : vector<8x128xf32>
    %347 = arith.negf %346 : vector<8x128xf32>
    %348 = math.exp %347 : vector<8x128xf32>
    %cst_112 = arith.constant 1.000000e+00 : f32
    %349 = vector.broadcast %cst_112 : f32 to vector<8x128xf32>
    %350 = arith.addf %349, %348 : vector<8x128xf32>
    %351 = arith.divf %349, %350 : vector<8x128xf32>
    %352 = vector.extract_strided_slice %340 {offsets = [0, 128], sizes = [8, 128], strides = [1, 1]} : vector<8x384xf32> to vector<8x128xf32>
    %353 = vector.extract_strided_slice %343 {offsets = [0, 128], sizes = [8, 128], strides = [1, 1]} : vector<8x384xf32> to vector<8x128xf32>
    %354 = arith.addf %352, %353 : vector<8x128xf32>
    %355 = arith.negf %354 : vector<8x128xf32>
    %356 = math.exp %355 : vector<8x128xf32>
    %cst_113 = arith.constant 1.000000e+00 : f32
    %357 = vector.broadcast %cst_113 : f32 to vector<8x128xf32>
    %358 = arith.addf %357, %356 : vector<8x128xf32>
    %359 = arith.divf %357, %358 : vector<8x128xf32>
    %360 = vector.extract_strided_slice %340 {offsets = [0, 256], sizes = [8, 128], strides = [1, 1]} : vector<8x384xf32> to vector<8x128xf32>
    %361 = vector.extract_strided_slice %343 {offsets = [0, 256], sizes = [8, 128], strides = [1, 1]} : vector<8x384xf32> to vector<8x128xf32>
    %362 = arith.mulf %351, %361 : vector<8x128xf32>
    %363 = arith.addf %360, %362 : vector<8x128xf32>
    %364 = math.tanh %363 : vector<8x128xf32>
    %cst_114 = arith.constant 1.000000e+00 : f32
    %365 = vector.broadcast %cst_114 : f32 to vector<8x128xf32>
    %366 = arith.subf %365, %359 : vector<8x128xf32>
    %367 = arith.mulf %366, %364 : vector<8x128xf32>
    %368 = arith.mulf %359, %337 : vector<8x128xf32>
    %369 = arith.addf %367, %368 : vector<8x128xf32>
    %370 = arith.index_cast %c0_i32_108 : i32 to index
    %c0_115 = arith.constant 0 : index
    %c0_116 = arith.constant 0 : index
    %371 = vector.load %arg9[%370, %c0_115, %c0_116] : memref<8x8x128xf32, #tpu.memory_space<vmem>>, vector<1x8x128xf32>
    %372 = vector.shape_cast %371 : vector<1x8x128xf32> to vector<8x128xf32>
    %373 = vector.shape_cast %369 : vector<8x128xf32> to vector<1x8x128xf32>
    tpu.vector_store %arg9[%370, %c0_115, %c0_116], %373 {strides = array<i32>} : memref<8x8x128xf32, #tpu.memory_space<vmem>>, vector<1x8x128xf32>,
    %c1_i32_117 = arith.constant 1 : i32
    %374 = arith.index_cast %c1_i32_117 : i32 to index
    %c0_118 = arith.constant 0 : index
    %c0_119 = arith.constant 0 : index
    %375 = vector.load %arg12[%374, %c0_118, %c0_119] : memref<8x8x384xf32, #tpu.memory_space<vmem>>, vector<1x8x384xf32>
    %376 = vector.shape_cast %375 : vector<1x8x384xf32> to vector<8x384xf32>
    %377 = arith.truncf %369 : vector<8x128xf32> to vector<8x128xbf16>
    %cst_120 = arith.constant dense<0.000000e+00> : vector<8x384xf32>
    %378 = tpu.matmul %377, %331, %cst_120 {dimension_numbers = #tpu.dot_dimension_numbers<[1], [0], [0], [1], [0, 0, 1, 1], [], []>} : vector<8x128xbf16>, vector<128x384xbf16>, vector<8x384xf32> -> vector<8x384xf32>
    %379 = arith.addf %378, %335 : vector<8x384xf32>
    %380 = vector.extract_strided_slice %376 {offsets = [0, 0], sizes = [8, 128], strides = [1, 1]} : vector<8x384xf32> to vector<8x128xf32>
    %381 = vector.extract_strided_slice %379 {offsets = [0, 0], sizes = [8, 128], strides = [1, 1]} : vector<8x384xf32> to vector<8x128xf32>
    %382 = arith.addf %380, %381 : vector<8x128xf32>
    %383 = arith.negf %382 : vector<8x128xf32>
    %384 = math.exp %383 : vector<8x128xf32>
    %cst_121 = arith.constant 1.000000e+00 : f32
    %385 = vector.broadcast %cst_121 : f32 to vector<8x128xf32>
    %386 = arith.addf %385, %384 : vector<8x128xf32>
    %387 = arith.divf %385, %386 : vector<8x128xf32>
    %388 = vector.extract_strided_slice %376 {offsets = [0, 128], sizes = [8, 128], strides = [1, 1]} : vector<8x384xf32> to vector<8x128xf32>
    %389 = vector.extract_strided_slice %379 {offsets = [0, 128], sizes = [8, 128], strides = [1, 1]} : vector<8x384xf32> to vector<8x128xf32>
    %390 = arith.addf %388, %389 : vector<8x128xf32>
    %391 = arith.negf %390 : vector<8x128xf32>
    %392 = math.exp %391 : vector<8x128xf32>
    %cst_122 = arith.constant 1.000000e+00 : f32
    %393 = vector.broadcast %cst_122 : f32 to vector<8x128xf32>
    %394 = arith.addf %393, %392 : vector<8x128xf32>
    %395 = arith.divf %393, %394 : vector<8x128xf32>
    %396 = vector.extract_strided_slice %376 {offsets = [0, 256], sizes = [8, 128], strides = [1, 1]} : vector<8x384xf32> to vector<8x128xf32>
    %397 = vector.extract_strided_slice %379 {offsets = [0, 256], sizes = [8, 128], strides = [1, 1]} : vector<8x384xf32> to vector<8x128xf32>
    %398 = arith.mulf %387, %397 : vector<8x128xf32>
    %399 = arith.addf %396, %398 : vector<8x128xf32>
    %400 = math.tanh %399 : vector<8x128xf32>
    %cst_123 = arith.constant 1.000000e+00 : f32
    %401 = vector.broadcast %cst_123 : f32 to vector<8x128xf32>
    %402 = arith.subf %401, %395 : vector<8x128xf32>
    %403 = arith.mulf %402, %400 : vector<8x128xf32>
    %404 = arith.mulf %395, %369 : vector<8x128xf32>
    %405 = arith.addf %403, %404 : vector<8x128xf32>
    %406 = arith.index_cast %c1_i32_117 : i32 to index
    %c0_124 = arith.constant 0 : index
    %c0_125 = arith.constant 0 : index
    %407 = vector.load %arg9[%406, %c0_124, %c0_125] : memref<8x8x128xf32, #tpu.memory_space<vmem>>, vector<1x8x128xf32>
    %408 = vector.shape_cast %407 : vector<1x8x128xf32> to vector<8x128xf32>
    %409 = vector.shape_cast %405 : vector<8x128xf32> to vector<1x8x128xf32>
    tpu.vector_store %arg9[%406, %c0_124, %c0_125], %409 {strides = array<i32>} : memref<8x8x128xf32, #tpu.memory_space<vmem>>, vector<1x8x128xf32>,
    %c2_i32_126 = arith.constant 2 : i32
    %410 = arith.index_cast %c2_i32_126 : i32 to index
    %c0_127 = arith.constant 0 : index
    %c0_128 = arith.constant 0 : index
    %411 = vector.load %arg12[%410, %c0_127, %c0_128] : memref<8x8x384xf32, #tpu.memory_space<vmem>>, vector<1x8x384xf32>
    %412 = vector.shape_cast %411 : vector<1x8x384xf32> to vector<8x384xf32>
    %413 = arith.truncf %405 : vector<8x128xf32> to vector<8x128xbf16>
    %cst_129 = arith.constant dense<0.000000e+00> : vector<8x384xf32>
    %414 = tpu.matmul %413, %331, %cst_129 {dimension_numbers = #tpu.dot_dimension_numbers<[1], [0], [0], [1], [0, 0, 1, 1], [], []>} : vector<8x128xbf16>, vector<128x384xbf16>, vector<8x384xf32> -> vector<8x384xf32>
    %415 = arith.addf %414, %335 : vector<8x384xf32>
    %416 = vector.extract_strided_slice %412 {offsets = [0, 0], sizes = [8, 128], strides = [1, 1]} : vector<8x384xf32> to vector<8x128xf32>
    %417 = vector.extract_strided_slice %415 {offsets = [0, 0], sizes = [8, 128], strides = [1, 1]} : vector<8x384xf32> to vector<8x128xf32>
    %418 = arith.addf %416, %417 : vector<8x128xf32>
    %419 = arith.negf %418 : vector<8x128xf32>
    %420 = math.exp %419 : vector<8x128xf32>
    %cst_130 = arith.constant 1.000000e+00 : f32
    %421 = vector.broadcast %cst_130 : f32 to vector<8x128xf32>
    %422 = arith.addf %421, %420 : vector<8x128xf32>
    %423 = arith.divf %421, %422 : vector<8x128xf32>
    %424 = vector.extract_strided_slice %412 {offsets = [0, 128], sizes = [8, 128], strides = [1, 1]} : vector<8x384xf32> to vector<8x128xf32>
    %425 = vector.extract_strided_slice %415 {offsets = [0, 128], sizes = [8, 128], strides = [1, 1]} : vector<8x384xf32> to vector<8x128xf32>
    %426 = arith.addf %424, %425 : vector<8x128xf32>
    %427 = arith.negf %426 : vector<8x128xf32>
    %428 = math.exp %427 : vector<8x128xf32>
    %cst_131 = arith.constant 1.000000e+00 : f32
    %429 = vector.broadcast %cst_131 : f32 to vector<8x128xf32>
    %430 = arith.addf %429, %428 : vector<8x128xf32>
    %431 = arith.divf %429, %430 : vector<8x128xf32>
    %432 = vector.extract_strided_slice %412 {offsets = [0, 256], sizes = [8, 128], strides = [1, 1]} : vector<8x384xf32> to vector<8x128xf32>
    %433 = vector.extract_strided_slice %415 {offsets = [0, 256], sizes = [8, 128], strides = [1, 1]} : vector<8x384xf32> to vector<8x128xf32>
    %434 = arith.mulf %423, %433 : vector<8x128xf32>
    %435 = arith.addf %432, %434 : vector<8x128xf32>
    %436 = math.tanh %435 : vector<8x128xf32>
    %cst_132 = arith.constant 1.000000e+00 : f32
    %437 = vector.broadcast %cst_132 : f32 to vector<8x128xf32>
    %438 = arith.subf %437, %431 : vector<8x128xf32>
    %439 = arith.mulf %438, %436 : vector<8x128xf32>
    %440 = arith.mulf %431, %405 : vector<8x128xf32>
    %441 = arith.addf %439, %440 : vector<8x128xf32>
    %442 = arith.index_cast %c2_i32_126 : i32 to index
    %c0_133 = arith.constant 0 : index
    %c0_134 = arith.constant 0 : index
    %443 = vector.load %arg9[%442, %c0_133, %c0_134] : memref<8x8x128xf32, #tpu.memory_space<vmem>>, vector<1x8x128xf32>
    %444 = vector.shape_cast %443 : vector<1x8x128xf32> to vector<8x128xf32>
    %445 = vector.shape_cast %441 : vector<8x128xf32> to vector<1x8x128xf32>
    tpu.vector_store %arg9[%442, %c0_133, %c0_134], %445 {strides = array<i32>} : memref<8x8x128xf32, #tpu.memory_space<vmem>>, vector<1x8x128xf32>,
    %c3_i32_135 = arith.constant 3 : i32
    %446 = arith.index_cast %c3_i32_135 : i32 to index
    %c0_136 = arith.constant 0 : index
    %c0_137 = arith.constant 0 : index
    %447 = vector.load %arg12[%446, %c0_136, %c0_137] : memref<8x8x384xf32, #tpu.memory_space<vmem>>, vector<1x8x384xf32>
    %448 = vector.shape_cast %447 : vector<1x8x384xf32> to vector<8x384xf32>
    %449 = arith.truncf %441 : vector<8x128xf32> to vector<8x128xbf16>
    %cst_138 = arith.constant dense<0.000000e+00> : vector<8x384xf32>
    %450 = tpu.matmul %449, %331, %cst_138 {dimension_numbers = #tpu.dot_dimension_numbers<[1], [0], [0], [1], [0, 0, 1, 1], [], []>} : vector<8x128xbf16>, vector<128x384xbf16>, vector<8x384xf32> -> vector<8x384xf32>
    %451 = arith.addf %450, %335 : vector<8x384xf32>
    %452 = vector.extract_strided_slice %448 {offsets = [0, 0], sizes = [8, 128], strides = [1, 1]} : vector<8x384xf32> to vector<8x128xf32>
    %453 = vector.extract_strided_slice %451 {offsets = [0, 0], sizes = [8, 128], strides = [1, 1]} : vector<8x384xf32> to vector<8x128xf32>
    %454 = arith.addf %452, %453 : vector<8x128xf32>
    %455 = arith.negf %454 : vector<8x128xf32>
    %456 = math.exp %455 : vector<8x128xf32>
    %cst_139 = arith.constant 1.000000e+00 : f32
    %457 = vector.broadcast %cst_139 : f32 to vector<8x128xf32>
    %458 = arith.addf %457, %456 : vector<8x128xf32>
    %459 = arith.divf %457, %458 : vector<8x128xf32>
    %460 = vector.extract_strided_slice %448 {offsets = [0, 128], sizes = [8, 128], strides = [1, 1]} : vector<8x384xf32> to vector<8x128xf32>
    %461 = vector.extract_strided_slice %451 {offsets = [0, 128], sizes = [8, 128], strides = [1, 1]} : vector<8x384xf32> to vector<8x128xf32>
    %462 = arith.addf %460, %461 : vector<8x128xf32>
    %463 = arith.negf %462 : vector<8x128xf32>
    %464 = math.exp %463 : vector<8x128xf32>
    %cst_140 = arith.constant 1.000000e+00 : f32
    %465 = vector.broadcast %cst_140 : f32 to vector<8x128xf32>
    %466 = arith.addf %465, %464 : vector<8x128xf32>
    %467 = arith.divf %465, %466 : vector<8x128xf32>
    %468 = vector.extract_strided_slice %448 {offsets = [0, 256], sizes = [8, 128], strides = [1, 1]} : vector<8x384xf32> to vector<8x128xf32>
    %469 = vector.extract_strided_slice %451 {offsets = [0, 256], sizes = [8, 128], strides = [1, 1]} : vector<8x384xf32> to vector<8x128xf32>
    %470 = arith.mulf %459, %469 : vector<8x128xf32>
    %471 = arith.addf %468, %470 : vector<8x128xf32>
    %472 = math.tanh %471 : vector<8x128xf32>
    %cst_141 = arith.constant 1.000000e+00 : f32
    %473 = vector.broadcast %cst_141 : f32 to vector<8x128xf32>
    %474 = arith.subf %473, %467 : vector<8x128xf32>
    %475 = arith.mulf %474, %472 : vector<8x128xf32>
    %476 = arith.mulf %467, %441 : vector<8x128xf32>
    %477 = arith.addf %475, %476 : vector<8x128xf32>
    %478 = arith.index_cast %c3_i32_135 : i32 to index
    %c0_142 = arith.constant 0 : index
    %c0_143 = arith.constant 0 : index
    %479 = vector.load %arg9[%478, %c0_142, %c0_143] : memref<8x8x128xf32, #tpu.memory_space<vmem>>, vector<1x8x128xf32>
    %480 = vector.shape_cast %479 : vector<1x8x128xf32> to vector<8x128xf32>
    %481 = vector.shape_cast %477 : vector<8x128xf32> to vector<1x8x128xf32>
    tpu.vector_store %arg9[%478, %c0_142, %c0_143], %481 {strides = array<i32>} : memref<8x8x128xf32, #tpu.memory_space<vmem>>, vector<1x8x128xf32>,
    %c4_i32_144 = arith.constant 4 : i32
    %482 = arith.index_cast %c4_i32_144 : i32 to index
    %c0_145 = arith.constant 0 : index
    %c0_146 = arith.constant 0 : index
    %483 = vector.load %arg12[%482, %c0_145, %c0_146] : memref<8x8x384xf32, #tpu.memory_space<vmem>>, vector<1x8x384xf32>
    %484 = vector.shape_cast %483 : vector<1x8x384xf32> to vector<8x384xf32>
    %485 = arith.truncf %477 : vector<8x128xf32> to vector<8x128xbf16>
    %cst_147 = arith.constant dense<0.000000e+00> : vector<8x384xf32>
    %486 = tpu.matmul %485, %331, %cst_147 {dimension_numbers = #tpu.dot_dimension_numbers<[1], [0], [0], [1], [0, 0, 1, 1], [], []>} : vector<8x128xbf16>, vector<128x384xbf16>, vector<8x384xf32> -> vector<8x384xf32>
    %487 = arith.addf %486, %335 : vector<8x384xf32>
    %488 = vector.extract_strided_slice %484 {offsets = [0, 0], sizes = [8, 128], strides = [1, 1]} : vector<8x384xf32> to vector<8x128xf32>
    %489 = vector.extract_strided_slice %487 {offsets = [0, 0], sizes = [8, 128], strides = [1, 1]} : vector<8x384xf32> to vector<8x128xf32>
    %490 = arith.addf %488, %489 : vector<8x128xf32>
    %491 = arith.negf %490 : vector<8x128xf32>
    %492 = math.exp %491 : vector<8x128xf32>
    %cst_148 = arith.constant 1.000000e+00 : f32
    %493 = vector.broadcast %cst_148 : f32 to vector<8x128xf32>
    %494 = arith.addf %493, %492 : vector<8x128xf32>
    %495 = arith.divf %493, %494 : vector<8x128xf32>
    %496 = vector.extract_strided_slice %484 {offsets = [0, 128], sizes = [8, 128], strides = [1, 1]} : vector<8x384xf32> to vector<8x128xf32>
    %497 = vector.extract_strided_slice %487 {offsets = [0, 128], sizes = [8, 128], strides = [1, 1]} : vector<8x384xf32> to vector<8x128xf32>
    %498 = arith.addf %496, %497 : vector<8x128xf32>
    %499 = arith.negf %498 : vector<8x128xf32>
    %500 = math.exp %499 : vector<8x128xf32>
    %cst_149 = arith.constant 1.000000e+00 : f32
    %501 = vector.broadcast %cst_149 : f32 to vector<8x128xf32>
    %502 = arith.addf %501, %500 : vector<8x128xf32>
    %503 = arith.divf %501, %502 : vector<8x128xf32>
    %504 = vector.extract_strided_slice %484 {offsets = [0, 256], sizes = [8, 128], strides = [1, 1]} : vector<8x384xf32> to vector<8x128xf32>
    %505 = vector.extract_strided_slice %487 {offsets = [0, 256], sizes = [8, 128], strides = [1, 1]} : vector<8x384xf32> to vector<8x128xf32>
    %506 = arith.mulf %495, %505 : vector<8x128xf32>
    %507 = arith.addf %504, %506 : vector<8x128xf32>
    %508 = math.tanh %507 : vector<8x128xf32>
    %cst_150 = arith.constant 1.000000e+00 : f32
    %509 = vector.broadcast %cst_150 : f32 to vector<8x128xf32>
    %510 = arith.subf %509, %503 : vector<8x128xf32>
    %511 = arith.mulf %510, %508 : vector<8x128xf32>
    %512 = arith.mulf %503, %477 : vector<8x128xf32>
    %513 = arith.addf %511, %512 : vector<8x128xf32>
    %514 = arith.index_cast %c4_i32_144 : i32 to index
    %c0_151 = arith.constant 0 : index
    %c0_152 = arith.constant 0 : index
    %515 = vector.load %arg9[%514, %c0_151, %c0_152] : memref<8x8x128xf32, #tpu.memory_space<vmem>>, vector<1x8x128xf32>
    %516 = vector.shape_cast %515 : vector<1x8x128xf32> to vector<8x128xf32>
    %517 = vector.shape_cast %513 : vector<8x128xf32> to vector<1x8x128xf32>
    tpu.vector_store %arg9[%514, %c0_151, %c0_152], %517 {strides = array<i32>} : memref<8x8x128xf32, #tpu.memory_space<vmem>>, vector<1x8x128xf32>,
    %c5_i32_153 = arith.constant 5 : i32
    %518 = arith.index_cast %c5_i32_153 : i32 to index
    %c0_154 = arith.constant 0 : index
    %c0_155 = arith.constant 0 : index
    %519 = vector.load %arg12[%518, %c0_154, %c0_155] : memref<8x8x384xf32, #tpu.memory_space<vmem>>, vector<1x8x384xf32>
    %520 = vector.shape_cast %519 : vector<1x8x384xf32> to vector<8x384xf32>
    %521 = arith.truncf %513 : vector<8x128xf32> to vector<8x128xbf16>
    %cst_156 = arith.constant dense<0.000000e+00> : vector<8x384xf32>
    %522 = tpu.matmul %521, %331, %cst_156 {dimension_numbers = #tpu.dot_dimension_numbers<[1], [0], [0], [1], [0, 0, 1, 1], [], []>} : vector<8x128xbf16>, vector<128x384xbf16>, vector<8x384xf32> -> vector<8x384xf32>
    %523 = arith.addf %522, %335 : vector<8x384xf32>
    %524 = vector.extract_strided_slice %520 {offsets = [0, 0], sizes = [8, 128], strides = [1, 1]} : vector<8x384xf32> to vector<8x128xf32>
    %525 = vector.extract_strided_slice %523 {offsets = [0, 0], sizes = [8, 128], strides = [1, 1]} : vector<8x384xf32> to vector<8x128xf32>
    %526 = arith.addf %524, %525 : vector<8x128xf32>
    %527 = arith.negf %526 : vector<8x128xf32>
    %528 = math.exp %527 : vector<8x128xf32>
    %cst_157 = arith.constant 1.000000e+00 : f32
    %529 = vector.broadcast %cst_157 : f32 to vector<8x128xf32>
    %530 = arith.addf %529, %528 : vector<8x128xf32>
    %531 = arith.divf %529, %530 : vector<8x128xf32>
    %532 = vector.extract_strided_slice %520 {offsets = [0, 128], sizes = [8, 128], strides = [1, 1]} : vector<8x384xf32> to vector<8x128xf32>
    %533 = vector.extract_strided_slice %523 {offsets = [0, 128], sizes = [8, 128], strides = [1, 1]} : vector<8x384xf32> to vector<8x128xf32>
    %534 = arith.addf %532, %533 : vector<8x128xf32>
    %535 = arith.negf %534 : vector<8x128xf32>
    %536 = math.exp %535 : vector<8x128xf32>
    %cst_158 = arith.constant 1.000000e+00 : f32
    %537 = vector.broadcast %cst_158 : f32 to vector<8x128xf32>
    %538 = arith.addf %537, %536 : vector<8x128xf32>
    %539 = arith.divf %537, %538 : vector<8x128xf32>
    %540 = vector.extract_strided_slice %520 {offsets = [0, 256], sizes = [8, 128], strides = [1, 1]} : vector<8x384xf32> to vector<8x128xf32>
    %541 = vector.extract_strided_slice %523 {offsets = [0, 256], sizes = [8, 128], strides = [1, 1]} : vector<8x384xf32> to vector<8x128xf32>
    %542 = arith.mulf %531, %541 : vector<8x128xf32>
    %543 = arith.addf %540, %542 : vector<8x128xf32>
    %544 = math.tanh %543 : vector<8x128xf32>
    %cst_159 = arith.constant 1.000000e+00 : f32
    %545 = vector.broadcast %cst_159 : f32 to vector<8x128xf32>
    %546 = arith.subf %545, %539 : vector<8x128xf32>
    %547 = arith.mulf %546, %544 : vector<8x128xf32>
    %548 = arith.mulf %539, %513 : vector<8x128xf32>
    %549 = arith.addf %547, %548 : vector<8x128xf32>
    %550 = arith.index_cast %c5_i32_153 : i32 to index
    %c0_160 = arith.constant 0 : index
    %c0_161 = arith.constant 0 : index
    %551 = vector.load %arg9[%550, %c0_160, %c0_161] : memref<8x8x128xf32, #tpu.memory_space<vmem>>, vector<1x8x128xf32>
    %552 = vector.shape_cast %551 : vector<1x8x128xf32> to vector<8x128xf32>
    %553 = vector.shape_cast %549 : vector<8x128xf32> to vector<1x8x128xf32>
    tpu.vector_store %arg9[%550, %c0_160, %c0_161], %553 {strides = array<i32>} : memref<8x8x128xf32, #tpu.memory_space<vmem>>, vector<1x8x128xf32>,
    %c6_i32_162 = arith.constant 6 : i32
    %554 = arith.index_cast %c6_i32_162 : i32 to index
    %c0_163 = arith.constant 0 : index
    %c0_164 = arith.constant 0 : index
    %555 = vector.load %arg12[%554, %c0_163, %c0_164] : memref<8x8x384xf32, #tpu.memory_space<vmem>>, vector<1x8x384xf32>
    %556 = vector.shape_cast %555 : vector<1x8x384xf32> to vector<8x384xf32>
    %557 = arith.truncf %549 : vector<8x128xf32> to vector<8x128xbf16>
    %cst_165 = arith.constant dense<0.000000e+00> : vector<8x384xf32>
    %558 = tpu.matmul %557, %331, %cst_165 {dimension_numbers = #tpu.dot_dimension_numbers<[1], [0], [0], [1], [0, 0, 1, 1], [], []>} : vector<8x128xbf16>, vector<128x384xbf16>, vector<8x384xf32> -> vector<8x384xf32>
    %559 = arith.addf %558, %335 : vector<8x384xf32>
    %560 = vector.extract_strided_slice %556 {offsets = [0, 0], sizes = [8, 128], strides = [1, 1]} : vector<8x384xf32> to vector<8x128xf32>
    %561 = vector.extract_strided_slice %559 {offsets = [0, 0], sizes = [8, 128], strides = [1, 1]} : vector<8x384xf32> to vector<8x128xf32>
    %562 = arith.addf %560, %561 : vector<8x128xf32>
    %563 = arith.negf %562 : vector<8x128xf32>
    %564 = math.exp %563 : vector<8x128xf32>
    %cst_166 = arith.constant 1.000000e+00 : f32
    %565 = vector.broadcast %cst_166 : f32 to vector<8x128xf32>
    %566 = arith.addf %565, %564 : vector<8x128xf32>
    %567 = arith.divf %565, %566 : vector<8x128xf32>
    %568 = vector.extract_strided_slice %556 {offsets = [0, 128], sizes = [8, 128], strides = [1, 1]} : vector<8x384xf32> to vector<8x128xf32>
    %569 = vector.extract_strided_slice %559 {offsets = [0, 128], sizes = [8, 128], strides = [1, 1]} : vector<8x384xf32> to vector<8x128xf32>
    %570 = arith.addf %568, %569 : vector<8x128xf32>
    %571 = arith.negf %570 : vector<8x128xf32>
    %572 = math.exp %571 : vector<8x128xf32>
    %cst_167 = arith.constant 1.000000e+00 : f32
    %573 = vector.broadcast %cst_167 : f32 to vector<8x128xf32>
    %574 = arith.addf %573, %572 : vector<8x128xf32>
    %575 = arith.divf %573, %574 : vector<8x128xf32>
    %576 = vector.extract_strided_slice %556 {offsets = [0, 256], sizes = [8, 128], strides = [1, 1]} : vector<8x384xf32> to vector<8x128xf32>
    %577 = vector.extract_strided_slice %559 {offsets = [0, 256], sizes = [8, 128], strides = [1, 1]} : vector<8x384xf32> to vector<8x128xf32>
    %578 = arith.mulf %567, %577 : vector<8x128xf32>
    %579 = arith.addf %576, %578 : vector<8x128xf32>
    %580 = math.tanh %579 : vector<8x128xf32>
    %cst_168 = arith.constant 1.000000e+00 : f32
    %581 = vector.broadcast %cst_168 : f32 to vector<8x128xf32>
    %582 = arith.subf %581, %575 : vector<8x128xf32>
    %583 = arith.mulf %582, %580 : vector<8x128xf32>
    %584 = arith.mulf %575, %549 : vector<8x128xf32>
    %585 = arith.addf %583, %584 : vector<8x128xf32>
    %586 = arith.index_cast %c6_i32_162 : i32 to index
    %c0_169 = arith.constant 0 : index
    %c0_170 = arith.constant 0 : index
    %587 = vector.load %arg9[%586, %c0_169, %c0_170] : memref<8x8x128xf32, #tpu.memory_space<vmem>>, vector<1x8x128xf32>
    %588 = vector.shape_cast %587 : vector<1x8x128xf32> to vector<8x128xf32>
    %589 = vector.shape_cast %585 : vector<8x128xf32> to vector<1x8x128xf32>
    tpu.vector_store %arg9[%586, %c0_169, %c0_170], %589 {strides = array<i32>} : memref<8x8x128xf32, #tpu.memory_space<vmem>>, vector<1x8x128xf32>,
    %c7_i32_171 = arith.constant 7 : i32
    %590 = arith.index_cast %c7_i32_171 : i32 to index
    %c0_172 = arith.constant 0 : index
    %c0_173 = arith.constant 0 : index
    %591 = vector.load %arg12[%590, %c0_172, %c0_173] : memref<8x8x384xf32, #tpu.memory_space<vmem>>, vector<1x8x384xf32>
    %592 = vector.shape_cast %591 : vector<1x8x384xf32> to vector<8x384xf32>
    %593 = arith.truncf %585 : vector<8x128xf32> to vector<8x128xbf16>
    %cst_174 = arith.constant dense<0.000000e+00> : vector<8x384xf32>
    %594 = tpu.matmul %593, %331, %cst_174 {dimension_numbers = #tpu.dot_dimension_numbers<[1], [0], [0], [1], [0, 0, 1, 1], [], []>} : vector<8x128xbf16>, vector<128x384xbf16>, vector<8x384xf32> -> vector<8x384xf32>
    %595 = arith.addf %594, %335 : vector<8x384xf32>
    %596 = vector.extract_strided_slice %592 {offsets = [0, 0], sizes = [8, 128], strides = [1, 1]} : vector<8x384xf32> to vector<8x128xf32>
    %597 = vector.extract_strided_slice %595 {offsets = [0, 0], sizes = [8, 128], strides = [1, 1]} : vector<8x384xf32> to vector<8x128xf32>
    %598 = arith.addf %596, %597 : vector<8x128xf32>
    %599 = arith.negf %598 : vector<8x128xf32>
    %600 = math.exp %599 : vector<8x128xf32>
    %cst_175 = arith.constant 1.000000e+00 : f32
    %601 = vector.broadcast %cst_175 : f32 to vector<8x128xf32>
    %602 = arith.addf %601, %600 : vector<8x128xf32>
    %603 = arith.divf %601, %602 : vector<8x128xf32>
    %604 = vector.extract_strided_slice %592 {offsets = [0, 128], sizes = [8, 128], strides = [1, 1]} : vector<8x384xf32> to vector<8x128xf32>
    %605 = vector.extract_strided_slice %595 {offsets = [0, 128], sizes = [8, 128], strides = [1, 1]} : vector<8x384xf32> to vector<8x128xf32>
    %606 = arith.addf %604, %605 : vector<8x128xf32>
    %607 = arith.negf %606 : vector<8x128xf32>
    %608 = math.exp %607 : vector<8x128xf32>
    %cst_176 = arith.constant 1.000000e+00 : f32
    %609 = vector.broadcast %cst_176 : f32 to vector<8x128xf32>
    %610 = arith.addf %609, %608 : vector<8x128xf32>
    %611 = arith.divf %609, %610 : vector<8x128xf32>
    %612 = vector.extract_strided_slice %592 {offsets = [0, 256], sizes = [8, 128], strides = [1, 1]} : vector<8x384xf32> to vector<8x128xf32>
    %613 = vector.extract_strided_slice %595 {offsets = [0, 256], sizes = [8, 128], strides = [1, 1]} : vector<8x384xf32> to vector<8x128xf32>
    %614 = arith.mulf %603, %613 : vector<8x128xf32>
    %615 = arith.addf %612, %614 : vector<8x128xf32>
    %616 = math.tanh %615 : vector<8x128xf32>
    %cst_177 = arith.constant 1.000000e+00 : f32
    %617 = vector.broadcast %cst_177 : f32 to vector<8x128xf32>
    %618 = arith.subf %617, %611 : vector<8x128xf32>
    %619 = arith.mulf %618, %616 : vector<8x128xf32>
    %620 = arith.mulf %611, %585 : vector<8x128xf32>
    %621 = arith.addf %619, %620 : vector<8x128xf32>
    %622 = arith.index_cast %c7_i32_171 : i32 to index
    %c0_178 = arith.constant 0 : index
    %c0_179 = arith.constant 0 : index
    %623 = vector.load %arg9[%622, %c0_178, %c0_179] : memref<8x8x128xf32, #tpu.memory_space<vmem>>, vector<1x8x128xf32>
    %624 = vector.shape_cast %623 : vector<1x8x128xf32> to vector<8x128xf32>
    %625 = vector.shape_cast %621 : vector<8x128xf32> to vector<1x8x128xf32>
    tpu.vector_store %arg9[%622, %c0_178, %c0_179], %625 {strides = array<i32>} : memref<8x8x128xf32, #tpu.memory_space<vmem>>, vector<1x8x128xf32>,
    %c8_i32_180 = arith.constant 8 : i32
    %c1_181 = arith.constant 1 : index
    %c0_182 = arith.constant 0 : index
    %c0_183 = arith.constant 0 : index
    %626 = vector.load %arg10[%c1_181, %c0_182, %c0_183] : memref<2x8x128xf32, #tpu.memory_space<vmem>>, vector<1x8x128xf32>
    %627 = vector.shape_cast %626 : vector<1x8x128xf32> to vector<8x128xf32>
    %628 = vector.shape_cast %621 : vector<8x128xf32> to vector<1x8x128xf32>
    tpu.vector_store %arg10[%c1_181, %c0_182, %c0_183], %628 {strides = array<i32>} : memref<2x8x128xf32, #tpu.memory_space<vmem>>, vector<1x8x128xf32>,
    return
  }
  func.func @transform_0(%arg0: i32, %arg1: i32) -> (i32, i32, i32) {
    %c0_i32 = arith.constant 0 : i32
    %c0_i32_0 = arith.constant 0 : i32
    return %arg1, %arg0, %c0_i32 : i32, i32, i32
  }
  func.func @transform_1(%arg0: i32, %arg1: i32) -> (i32, i32) {
    %c0_i32 = arith.constant 0 : i32
    %c0_i32_0 = arith.constant 0 : i32
    %c0_i32_1 = arith.constant 0 : i32
    return %c0_i32, %c0_i32_0 : i32, i32
  }
  func.func @transform_2(%arg0: i32, %arg1: i32) -> (i32, i32) {
    %c0_i32 = arith.constant 0 : i32
    %c0_i32_0 = arith.constant 0 : i32
    %c0_i32_1 = arith.constant 0 : i32
    return %c0_i32, %c0_i32_0 : i32, i32
  }
  func.func @transform_3(%arg0: i32, %arg1: i32) -> (i32, i32, i32) {
    %c0_i32 = arith.constant 0 : i32
    %c0_i32_0 = arith.constant 0 : i32
    %c0_i32_1 = arith.constant 0 : i32
    %c0_i32_2 = arith.constant 0 : i32
    return %c0_i32, %c0_i32_0, %c0_i32_1 : i32, i32, i32
  }
  func.func @transform_4(%arg0: i32, %arg1: i32) -> (i32, i32, i32) {
    %c0_i32 = arith.constant 0 : i32
    %c0_i32_0 = arith.constant 0 : i32
    %c0_i32_1 = arith.constant 0 : i32
    %c0_i32_2 = arith.constant 0 : i32
    return %c0_i32, %c0_i32_0, %c0_i32_1 : i32, i32, i32
  }
  func.func @transform_5(%arg0: i32, %arg1: i32) -> (i32, i32, i32) {
    %c0_i32 = arith.constant 0 : i32
    %c0_i32_0 = arith.constant 0 : i32
    %c0_i32_1 = arith.constant 0 : i32
    %c0_i32_2 = arith.constant 0 : i32
    return %c0_i32, %c0_i32_0, %c0_i32_1 : i32, i32, i32
  }
  func.func @transform_6(%arg0: i32, %arg1: i32) -> (i32, i32, i32) {
    %c0_i32 = arith.constant 0 : i32
    %c0_i32_0 = arith.constant 0 : i32
    %c0_i32_1 = arith.constant 0 : i32
    %c0_i32_2 = arith.constant 0 : i32
    return %c0_i32, %c0_i32_0, %c0_i32_1 : i32, i32, i32
  }
  func.func @transform_7(%arg0: i32, %arg1: i32) -> (i32, i32, i32) {
    %c0_i32 = arith.constant 0 : i32
    %c0_i32_0 = arith.constant 0 : i32
    return %arg1, %arg0, %c0_i32 : i32, i32, i32
  }
}

module attributes {stable_mosaic.version = 11 : i64} {
  func.func @_fused_gru_stack_kernel(%arg0: i32, %arg1: i32, %arg2: memref<8x8x128xbf16, #tpu.memory_space<vmem>>, %arg3: memref<128x384xbf16, #tpu.memory_space<vmem>>, %arg4: memref<1x384xf32, #tpu.memory_space<vmem>>, %arg5: memref<1x128x384xbf16, #tpu.memory_space<vmem>>, %arg6: memref<1x1x384xf32, #tpu.memory_space<vmem>>, %arg7: memref<2x128x384xbf16, #tpu.memory_space<vmem>>, %arg8: memref<2x1x384xf32, #tpu.memory_space<vmem>>, %arg9: memref<8x8x128xf32, #tpu.memory_space<vmem>>, %arg10: memref<2x8x128xf32, #tpu.memory_space<vmem>>, %arg11: memref<8x8x128xbf16, #tpu.memory_space<vmem>>, %arg12: memref<8x8x384xf32, #tpu.memory_space<vmem>>) attributes {dimension_semantics = [#tpu.dimension_semantics<parallel>, #tpu.dimension_semantics<arbitrary>], iteration_bounds = array<i64: 1, 1>, scalar_prefetch = 0 : i64, scratch_operands = 3 : i64, tpu.core_type = #tpu.core_type<tc>, window_params = [{transform_indices = @transform_0, window_bounds = array<i64: 8, 8, 128>}, {pipeline_mode = #tpu.pipeline_mode<synchronous>, transform_indices = @transform_1, window_bounds = array<i64: 128, 384>}, {pipeline_mode = #tpu.pipeline_mode<synchronous>, transform_indices = @transform_2, window_bounds = array<i64: 1, 384>}, {pipeline_mode = #tpu.pipeline_mode<synchronous>, transform_indices = @transform_3, window_bounds = array<i64: 1, 128, 384>}, {pipeline_mode = #tpu.pipeline_mode<synchronous>, transform_indices = @transform_4, window_bounds = array<i64: 1, 1, 384>}, {pipeline_mode = #tpu.pipeline_mode<synchronous>, transform_indices = @transform_5, window_bounds = array<i64: 2, 128, 384>}, {pipeline_mode = #tpu.pipeline_mode<synchronous>, transform_indices = @transform_6, window_bounds = array<i64: 2, 1, 384>}, {transform_indices = @transform_7, window_bounds = array<i64: 8, 8, 128>}]} {
    %c0_i32 = arith.constant 0 : i32
    %0 = arith.cmpi eq, %arg1, %c0_i32 : i32
    %1 = arith.extui %0 : i1 to i32
    %c0_i32_0 = arith.constant 0 : i32
    %2 = arith.cmpi ne, %1, %c0_i32_0 : i32
    scf.if %2 {
      %cst_184 = arith.constant 0.000000e+00 : f32
      %629 = vector.broadcast %cst_184 : f32 to vector<2x8x128xf32>
      %c0_185 = arith.constant 0 : index
      %c0_186 = arith.constant 0 : index
      %c0_187 = arith.constant 0 : index
      %630 = vector.load %arg10[%c0_185, %c0_186, %c0_187] : memref<2x8x128xf32, #tpu.memory_space<vmem>>, vector<2x8x128xf32>
      tpu.vector_store %arg10[%c0_185, %c0_186, %c0_187], %629 {strides = array<i32>} : memref<2x8x128xf32, #tpu.memory_space<vmem>>, vector<2x8x128xf32>,
    } else {
    }
    %c0 = arith.constant 0 : index
    %c0_1 = arith.constant 0 : index
    %c0_2 = arith.constant 0 : index
    %3 = vector.load %arg2[%c0, %c0_1, %c0_2] : memref<8x8x128xbf16, #tpu.memory_space<vmem>>, vector<8x8x128xbf16>
    %4 = vector.shape_cast %3 : vector<8x8x128xbf16> to vector<64x128xbf16>
    %c0_3 = arith.constant 0 : index
    %c0_4 = arith.constant 0 : index
    %5 = vector.load %arg3[%c0_3, %c0_4] : memref<128x384xbf16, #tpu.memory_space<vmem>>, vector<128x384xbf16>
    %c0_5 = arith.constant 0 : index
    %c0_6 = arith.constant 0 : index
    %6 = vector.load %arg4[%c0_5, %c0_6] : memref<1x384xf32, #tpu.memory_space<vmem>>, vector<1x384xf32>
    %cst = arith.constant dense<0.000000e+00> : vector<64x384xf32>
    %7 = tpu.matmul %4, %5, %cst {dimension_numbers = #tpu.dot_dimension_numbers<[1], [0], [0], [1], [0, 0, 1, 1], [], []>} : vector<64x128xbf16>, vector<128x384xbf16>, vector<64x384xf32> -> vector<64x384xf32>
    %8 = vector.broadcast %6 : vector<1x384xf32> to vector<64x384xf32>
    %9 = arith.addf %7, %8 : vector<64x384xf32>
    %10 = vector.shape_cast %9 : vector<64x384xf32> to vector<8x8x384xf32>
    %c0_7 = arith.constant 0 : index
    %c0_8 = arith.constant 0 : index
    %c0_9 = arith.constant 0 : index
    %11 = vector.load %arg12[%c0_7, %c0_8, %c0_9] : memref<8x8x384xf32, #tpu.memory_space<vmem>>, vector<8x8x384xf32>
    tpu.vector_store %arg12[%c0_7, %c0_8, %c0_9], %10 {strides = array<i32>} : memref<8x8x384xf32, #tpu.memory_space<vmem>>, vector<8x8x384xf32>,
    %c0_10 = arith.constant 0 : index
    %c0_11 = arith.constant 0 : index
    %c0_12 = arith.constant 0 : index
    %12 = vector.load %arg7[%c0_10, %c0_11, %c0_12] : memref<2x128x384xbf16, #tpu.memory_space<vmem>>, vector<1x128x384xbf16>
    %13 = vector.shape_cast %12 : vector<1x128x384xbf16> to vector<128x384xbf16>
    %c0_13 = arith.constant 0 : index
    %c0_14 = arith.constant 0 : index
    %c0_15 = arith.constant 0 : index
    %14 = vector.load %arg8[%c0_13, %c0_14, %c0_15] : memref<2x1x384xf32, #tpu.memory_space<vmem>>, vector<1x1x384xf32>
    %15 = vector.shape_cast %14 : vector<1x1x384xf32> to vector<1x384xf32>
    %16 = vector.shape_cast %15 : vector<1x384xf32> to vector<1x384xf32>
    %17 = vector.broadcast %16 : vector<1x384xf32> to vector<8x384xf32>
    %c0_16 = arith.constant 0 : index
    %c0_17 = arith.constant 0 : index
    %c0_18 = arith.constant 0 : index
    %18 = vector.load %arg10[%c0_16, %c0_17, %c0_18] : memref<2x8x128xf32, #tpu.memory_space<vmem>>, vector<1x8x128xf32>
    %19 = vector.shape_cast %18 : vector<1x8x128xf32> to vector<8x128xf32>
    %c0_i32_19 = arith.constant 0 : i32
    %20 = arith.index_cast %c0_i32_19 : i32 to index
    %c0_20 = arith.constant 0 : index
    %c0_21 = arith.constant 0 : index
    %21 = vector.load %arg12[%20, %c0_20, %c0_21] : memref<8x8x384xf32, #tpu.memory_space<vmem>>, vector<1x8x384xf32>
    %22 = vector.shape_cast %21 : vector<1x8x384xf32> to vector<8x384xf32>
    %23 = arith.truncf %19 : vector<8x128xf32> to vector<8x128xbf16>
    %cst_22 = arith.constant dense<0.000000e+00> : vector<8x384xf32>
    %24 = tpu.matmul %23, %13, %cst_22 {dimension_numbers = #tpu.dot_dimension_numbers<[1], [0], [0], [1], [0, 0, 1, 1], [], []>} : vector<8x128xbf16>, vector<128x384xbf16>, vector<8x384xf32> -> vector<8x384xf32>
    %25 = arith.addf %24, %17 : vector<8x384xf32>
    %26 = vector.extract_strided_slice %22 {offsets = [0, 0], sizes = [8, 128], strides = [1, 1]} : vector<8x384xf32> to vector<8x128xf32>
    %27 = vector.extract_strided_slice %25 {offsets = [0, 0], sizes = [8, 128], strides = [1, 1]} : vector<8x384xf32> to vector<8x128xf32>
    %28 = arith.addf %26, %27 : vector<8x128xf32>
    %29 = arith.negf %28 : vector<8x128xf32>
    %30 = math.exp %29 : vector<8x128xf32>
    %cst_23 = arith.constant 1.000000e+00 : f32
    %31 = vector.broadcast %cst_23 : f32 to vector<8x128xf32>
    %32 = arith.addf %31, %30 : vector<8x128xf32>
    %33 = arith.divf %31, %32 : vector<8x128xf32>
    %34 = vector.extract_strided_slice %22 {offsets = [0, 128], sizes = [8, 128], strides = [1, 1]} : vector<8x384xf32> to vector<8x128xf32>
    %35 = vector.extract_strided_slice %25 {offsets = [0, 128], sizes = [8, 128], strides = [1, 1]} : vector<8x384xf32> to vector<8x128xf32>
    %36 = arith.addf %34, %35 : vector<8x128xf32>
    %37 = arith.negf %36 : vector<8x128xf32>
    %38 = math.exp %37 : vector<8x128xf32>
    %cst_24 = arith.constant 1.000000e+00 : f32
    %39 = vector.broadcast %cst_24 : f32 to vector<8x128xf32>
    %40 = arith.addf %39, %38 : vector<8x128xf32>
    %41 = arith.divf %39, %40 : vector<8x128xf32>
    %42 = vector.extract_strided_slice %22 {offsets = [0, 256], sizes = [8, 128], strides = [1, 1]} : vector<8x384xf32> to vector<8x128xf32>
    %43 = vector.extract_strided_slice %25 {offsets = [0, 256], sizes = [8, 128], strides = [1, 1]} : vector<8x384xf32> to vector<8x128xf32>
    %44 = arith.mulf %33, %43 : vector<8x128xf32>
    %45 = arith.addf %42, %44 : vector<8x128xf32>
    %46 = math.tanh %45 : vector<8x128xf32>
    %cst_25 = arith.constant 1.000000e+00 : f32
    %47 = vector.broadcast %cst_25 : f32 to vector<8x128xf32>
    %48 = arith.subf %47, %41 : vector<8x128xf32>
    %49 = arith.mulf %48, %46 : vector<8x128xf32>
    %50 = arith.mulf %41, %19 : vector<8x128xf32>
    %51 = arith.addf %49, %50 : vector<8x128xf32>
    %52 = arith.truncf %51 : vector<8x128xf32> to vector<8x128xbf16>
    %53 = arith.index_cast %c0_i32_19 : i32 to index
    %c0_26 = arith.constant 0 : index
    %c0_27 = arith.constant 0 : index
    %54 = vector.load %arg11[%53, %c0_26, %c0_27] : memref<8x8x128xbf16, #tpu.memory_space<vmem>>, vector<1x8x128xbf16>
    %55 = vector.shape_cast %54 : vector<1x8x128xbf16> to vector<8x128xbf16>
    %56 = vector.shape_cast %52 : vector<8x128xbf16> to vector<1x8x128xbf16>
    tpu.vector_store %arg11[%53, %c0_26, %c0_27], %56 {strides = array<i32>} : memref<8x8x128xbf16, #tpu.memory_space<vmem>>, vector<1x8x128xbf16>,
    %c1_i32 = arith.constant 1 : i32
    %57 = arith.index_cast %c1_i32 : i32 to index
    %c0_28 = arith.constant 0 : index
    %c0_29 = arith.constant 0 : index
    %58 = vector.load %arg12[%57, %c0_28, %c0_29] : memref<8x8x384xf32, #tpu.memory_space<vmem>>, vector<1x8x384xf32>
    %59 = vector.shape_cast %58 : vector<1x8x384xf32> to vector<8x384xf32>
    %60 = arith.truncf %51 : vector<8x128xf32> to vector<8x128xbf16>
    %cst_30 = arith.constant dense<0.000000e+00> : vector<8x384xf32>
    %61 = tpu.matmul %60, %13, %cst_30 {dimension_numbers = #tpu.dot_dimension_numbers<[1], [0], [0], [1], [0, 0, 1, 1], [], []>} : vector<8x128xbf16>, vector<128x384xbf16>, vector<8x384xf32> -> vector<8x384xf32>
    %62 = arith.addf %61, %17 : vector<8x384xf32>
    %63 = vector.extract_strided_slice %59 {offsets = [0, 0], sizes = [8, 128], strides = [1, 1]} : vector<8x384xf32> to vector<8x128xf32>
    %64 = vector.extract_strided_slice %62 {offsets = [0, 0], sizes = [8, 128], strides = [1, 1]} : vector<8x384xf32> to vector<8x128xf32>
    %65 = arith.addf %63, %64 : vector<8x128xf32>
    %66 = arith.negf %65 : vector<8x128xf32>
    %67 = math.exp %66 : vector<8x128xf32>
    %cst_31 = arith.constant 1.000000e+00 : f32
    %68 = vector.broadcast %cst_31 : f32 to vector<8x128xf32>
    %69 = arith.addf %68, %67 : vector<8x128xf32>
    %70 = arith.divf %68, %69 : vector<8x128xf32>
    %71 = vector.extract_strided_slice %59 {offsets = [0, 128], sizes = [8, 128], strides = [1, 1]} : vector<8x384xf32> to vector<8x128xf32>
    %72 = vector.extract_strided_slice %62 {offsets = [0, 128], sizes = [8, 128], strides = [1, 1]} : vector<8x384xf32> to vector<8x128xf32>
    %73 = arith.addf %71, %72 : vector<8x128xf32>
    %74 = arith.negf %73 : vector<8x128xf32>
    %75 = math.exp %74 : vector<8x128xf32>
    %cst_32 = arith.constant 1.000000e+00 : f32
    %76 = vector.broadcast %cst_32 : f32 to vector<8x128xf32>
    %77 = arith.addf %76, %75 : vector<8x128xf32>
    %78 = arith.divf %76, %77 : vector<8x128xf32>
    %79 = vector.extract_strided_slice %59 {offsets = [0, 256], sizes = [8, 128], strides = [1, 1]} : vector<8x384xf32> to vector<8x128xf32>
    %80 = vector.extract_strided_slice %62 {offsets = [0, 256], sizes = [8, 128], strides = [1, 1]} : vector<8x384xf32> to vector<8x128xf32>
    %81 = arith.mulf %70, %80 : vector<8x128xf32>
    %82 = arith.addf %79, %81 : vector<8x128xf32>
    %83 = math.tanh %82 : vector<8x128xf32>
    %cst_33 = arith.constant 1.000000e+00 : f32
    %84 = vector.broadcast %cst_33 : f32 to vector<8x128xf32>
    %85 = arith.subf %84, %78 : vector<8x128xf32>
    %86 = arith.mulf %85, %83 : vector<8x128xf32>
    %87 = arith.mulf %78, %51 : vector<8x128xf32>
    %88 = arith.addf %86, %87 : vector<8x128xf32>
    %89 = arith.truncf %88 : vector<8x128xf32> to vector<8x128xbf16>
    %90 = arith.index_cast %c1_i32 : i32 to index
    %c0_34 = arith.constant 0 : index
    %c0_35 = arith.constant 0 : index
    %91 = vector.load %arg11[%90, %c0_34, %c0_35] : memref<8x8x128xbf16, #tpu.memory_space<vmem>>, vector<1x8x128xbf16>
    %92 = vector.shape_cast %91 : vector<1x8x128xbf16> to vector<8x128xbf16>
    %93 = vector.shape_cast %89 : vector<8x128xbf16> to vector<1x8x128xbf16>
    tpu.vector_store %arg11[%90, %c0_34, %c0_35], %93 {strides = array<i32>} : memref<8x8x128xbf16, #tpu.memory_space<vmem>>, vector<1x8x128xbf16>,
    %c2_i32 = arith.constant 2 : i32
    %94 = arith.index_cast %c2_i32 : i32 to index
    %c0_36 = arith.constant 0 : index
    %c0_37 = arith.constant 0 : index
    %95 = vector.load %arg12[%94, %c0_36, %c0_37] : memref<8x8x384xf32, #tpu.memory_space<vmem>>, vector<1x8x384xf32>
    %96 = vector.shape_cast %95 : vector<1x8x384xf32> to vector<8x384xf32>
    %97 = arith.truncf %88 : vector<8x128xf32> to vector<8x128xbf16>
    %cst_38 = arith.constant dense<0.000000e+00> : vector<8x384xf32>
    %98 = tpu.matmul %97, %13, %cst_38 {dimension_numbers = #tpu.dot_dimension_numbers<[1], [0], [0], [1], [0, 0, 1, 1], [], []>} : vector<8x128xbf16>, vector<128x384xbf16>, vector<8x384xf32> -> vector<8x384xf32>
    %99 = arith.addf %98, %17 : vector<8x384xf32>
    %100 = vector.extract_strided_slice %96 {offsets = [0, 0], sizes = [8, 128], strides = [1, 1]} : vector<8x384xf32> to vector<8x128xf32>
    %101 = vector.extract_strided_slice %99 {offsets = [0, 0], sizes = [8, 128], strides = [1, 1]} : vector<8x384xf32> to vector<8x128xf32>
    %102 = arith.addf %100, %101 : vector<8x128xf32>
    %103 = arith.negf %102 : vector<8x128xf32>
    %104 = math.exp %103 : vector<8x128xf32>
    %cst_39 = arith.constant 1.000000e+00 : f32
    %105 = vector.broadcast %cst_39 : f32 to vector<8x128xf32>
    %106 = arith.addf %105, %104 : vector<8x128xf32>
    %107 = arith.divf %105, %106 : vector<8x128xf32>
    %108 = vector.extract_strided_slice %96 {offsets = [0, 128], sizes = [8, 128], strides = [1, 1]} : vector<8x384xf32> to vector<8x128xf32>
    %109 = vector.extract_strided_slice %99 {offsets = [0, 128], sizes = [8, 128], strides = [1, 1]} : vector<8x384xf32> to vector<8x128xf32>
    %110 = arith.addf %108, %109 : vector<8x128xf32>
    %111 = arith.negf %110 : vector<8x128xf32>
    %112 = math.exp %111 : vector<8x128xf32>
    %cst_40 = arith.constant 1.000000e+00 : f32
    %113 = vector.broadcast %cst_40 : f32 to vector<8x128xf32>
    %114 = arith.addf %113, %112 : vector<8x128xf32>
    %115 = arith.divf %113, %114 : vector<8x128xf32>
    %116 = vector.extract_strided_slice %96 {offsets = [0, 256], sizes = [8, 128], strides = [1, 1]} : vector<8x384xf32> to vector<8x128xf32>
    %117 = vector.extract_strided_slice %99 {offsets = [0, 256], sizes = [8, 128], strides = [1, 1]} : vector<8x384xf32> to vector<8x128xf32>
    %118 = arith.mulf %107, %117 : vector<8x128xf32>
    %119 = arith.addf %116, %118 : vector<8x128xf32>
    %120 = math.tanh %119 : vector<8x128xf32>
    %cst_41 = arith.constant 1.000000e+00 : f32
    %121 = vector.broadcast %cst_41 : f32 to vector<8x128xf32>
    %122 = arith.subf %121, %115 : vector<8x128xf32>
    %123 = arith.mulf %122, %120 : vector<8x128xf32>
    %124 = arith.mulf %115, %88 : vector<8x128xf32>
    %125 = arith.addf %123, %124 : vector<8x128xf32>
    %126 = arith.truncf %125 : vector<8x128xf32> to vector<8x128xbf16>
    %127 = arith.index_cast %c2_i32 : i32 to index
    %c0_42 = arith.constant 0 : index
    %c0_43 = arith.constant 0 : index
    %128 = vector.load %arg11[%127, %c0_42, %c0_43] : memref<8x8x128xbf16, #tpu.memory_space<vmem>>, vector<1x8x128xbf16>
    %129 = vector.shape_cast %128 : vector<1x8x128xbf16> to vector<8x128xbf16>
    %130 = vector.shape_cast %126 : vector<8x128xbf16> to vector<1x8x128xbf16>
    tpu.vector_store %arg11[%127, %c0_42, %c0_43], %130 {strides = array<i32>} : memref<8x8x128xbf16, #tpu.memory_space<vmem>>, vector<1x8x128xbf16>,
    %c3_i32 = arith.constant 3 : i32
    %131 = arith.index_cast %c3_i32 : i32 to index
    %c0_44 = arith.constant 0 : index
    %c0_45 = arith.constant 0 : index
    %132 = vector.load %arg12[%131, %c0_44, %c0_45] : memref<8x8x384xf32, #tpu.memory_space<vmem>>, vector<1x8x384xf32>
    %133 = vector.shape_cast %132 : vector<1x8x384xf32> to vector<8x384xf32>
    %134 = arith.truncf %125 : vector<8x128xf32> to vector<8x128xbf16>
    %cst_46 = arith.constant dense<0.000000e+00> : vector<8x384xf32>
    %135 = tpu.matmul %134, %13, %cst_46 {dimension_numbers = #tpu.dot_dimension_numbers<[1], [0], [0], [1], [0, 0, 1, 1], [], []>} : vector<8x128xbf16>, vector<128x384xbf16>, vector<8x384xf32> -> vector<8x384xf32>
    %136 = arith.addf %135, %17 : vector<8x384xf32>
    %137 = vector.extract_strided_slice %133 {offsets = [0, 0], sizes = [8, 128], strides = [1, 1]} : vector<8x384xf32> to vector<8x128xf32>
    %138 = vector.extract_strided_slice %136 {offsets = [0, 0], sizes = [8, 128], strides = [1, 1]} : vector<8x384xf32> to vector<8x128xf32>
    %139 = arith.addf %137, %138 : vector<8x128xf32>
    %140 = arith.negf %139 : vector<8x128xf32>
    %141 = math.exp %140 : vector<8x128xf32>
    %cst_47 = arith.constant 1.000000e+00 : f32
    %142 = vector.broadcast %cst_47 : f32 to vector<8x128xf32>
    %143 = arith.addf %142, %141 : vector<8x128xf32>
    %144 = arith.divf %142, %143 : vector<8x128xf32>
    %145 = vector.extract_strided_slice %133 {offsets = [0, 128], sizes = [8, 128], strides = [1, 1]} : vector<8x384xf32> to vector<8x128xf32>
    %146 = vector.extract_strided_slice %136 {offsets = [0, 128], sizes = [8, 128], strides = [1, 1]} : vector<8x384xf32> to vector<8x128xf32>
    %147 = arith.addf %145, %146 : vector<8x128xf32>
    %148 = arith.negf %147 : vector<8x128xf32>
    %149 = math.exp %148 : vector<8x128xf32>
    %cst_48 = arith.constant 1.000000e+00 : f32
    %150 = vector.broadcast %cst_48 : f32 to vector<8x128xf32>
    %151 = arith.addf %150, %149 : vector<8x128xf32>
    %152 = arith.divf %150, %151 : vector<8x128xf32>
    %153 = vector.extract_strided_slice %133 {offsets = [0, 256], sizes = [8, 128], strides = [1, 1]} : vector<8x384xf32> to vector<8x128xf32>
    %154 = vector.extract_strided_slice %136 {offsets = [0, 256], sizes = [8, 128], strides = [1, 1]} : vector<8x384xf32> to vector<8x128xf32>
    %155 = arith.mulf %144, %154 : vector<8x128xf32>
    %156 = arith.addf %153, %155 : vector<8x128xf32>
    %157 = math.tanh %156 : vector<8x128xf32>
    %cst_49 = arith.constant 1.000000e+00 : f32
    %158 = vector.broadcast %cst_49 : f32 to vector<8x128xf32>
    %159 = arith.subf %158, %152 : vector<8x128xf32>
    %160 = arith.mulf %159, %157 : vector<8x128xf32>
    %161 = arith.mulf %152, %125 : vector<8x128xf32>
    %162 = arith.addf %160, %161 : vector<8x128xf32>
    %163 = arith.truncf %162 : vector<8x128xf32> to vector<8x128xbf16>
    %164 = arith.index_cast %c3_i32 : i32 to index
    %c0_50 = arith.constant 0 : index
    %c0_51 = arith.constant 0 : index
    %165 = vector.load %arg11[%164, %c0_50, %c0_51] : memref<8x8x128xbf16, #tpu.memory_space<vmem>>, vector<1x8x128xbf16>
    %166 = vector.shape_cast %165 : vector<1x8x128xbf16> to vector<8x128xbf16>
    %167 = vector.shape_cast %163 : vector<8x128xbf16> to vector<1x8x128xbf16>
    tpu.vector_store %arg11[%164, %c0_50, %c0_51], %167 {strides = array<i32>} : memref<8x8x128xbf16, #tpu.memory_space<vmem>>, vector<1x8x128xbf16>,
    %c4_i32 = arith.constant 4 : i32
    %168 = arith.index_cast %c4_i32 : i32 to index
    %c0_52 = arith.constant 0 : index
    %c0_53 = arith.constant 0 : index
    %169 = vector.load %arg12[%168, %c0_52, %c0_53] : memref<8x8x384xf32, #tpu.memory_space<vmem>>, vector<1x8x384xf32>
    %170 = vector.shape_cast %169 : vector<1x8x384xf32> to vector<8x384xf32>
    %171 = arith.truncf %162 : vector<8x128xf32> to vector<8x128xbf16>
    %cst_54 = arith.constant dense<0.000000e+00> : vector<8x384xf32>
    %172 = tpu.matmul %171, %13, %cst_54 {dimension_numbers = #tpu.dot_dimension_numbers<[1], [0], [0], [1], [0, 0, 1, 1], [], []>} : vector<8x128xbf16>, vector<128x384xbf16>, vector<8x384xf32> -> vector<8x384xf32>
    %173 = arith.addf %172, %17 : vector<8x384xf32>
    %174 = vector.extract_strided_slice %170 {offsets = [0, 0], sizes = [8, 128], strides = [1, 1]} : vector<8x384xf32> to vector<8x128xf32>
    %175 = vector.extract_strided_slice %173 {offsets = [0, 0], sizes = [8, 128], strides = [1, 1]} : vector<8x384xf32> to vector<8x128xf32>
    %176 = arith.addf %174, %175 : vector<8x128xf32>
    %177 = arith.negf %176 : vector<8x128xf32>
    %178 = math.exp %177 : vector<8x128xf32>
    %cst_55 = arith.constant 1.000000e+00 : f32
    %179 = vector.broadcast %cst_55 : f32 to vector<8x128xf32>
    %180 = arith.addf %179, %178 : vector<8x128xf32>
    %181 = arith.divf %179, %180 : vector<8x128xf32>
    %182 = vector.extract_strided_slice %170 {offsets = [0, 128], sizes = [8, 128], strides = [1, 1]} : vector<8x384xf32> to vector<8x128xf32>
    %183 = vector.extract_strided_slice %173 {offsets = [0, 128], sizes = [8, 128], strides = [1, 1]} : vector<8x384xf32> to vector<8x128xf32>
    %184 = arith.addf %182, %183 : vector<8x128xf32>
    %185 = arith.negf %184 : vector<8x128xf32>
    %186 = math.exp %185 : vector<8x128xf32>
    %cst_56 = arith.constant 1.000000e+00 : f32
    %187 = vector.broadcast %cst_56 : f32 to vector<8x128xf32>
    %188 = arith.addf %187, %186 : vector<8x128xf32>
    %189 = arith.divf %187, %188 : vector<8x128xf32>
    %190 = vector.extract_strided_slice %170 {offsets = [0, 256], sizes = [8, 128], strides = [1, 1]} : vector<8x384xf32> to vector<8x128xf32>
    %191 = vector.extract_strided_slice %173 {offsets = [0, 256], sizes = [8, 128], strides = [1, 1]} : vector<8x384xf32> to vector<8x128xf32>
    %192 = arith.mulf %181, %191 : vector<8x128xf32>
    %193 = arith.addf %190, %192 : vector<8x128xf32>
    %194 = math.tanh %193 : vector<8x128xf32>
    %cst_57 = arith.constant 1.000000e+00 : f32
    %195 = vector.broadcast %cst_57 : f32 to vector<8x128xf32>
    %196 = arith.subf %195, %189 : vector<8x128xf32>
    %197 = arith.mulf %196, %194 : vector<8x128xf32>
    %198 = arith.mulf %189, %162 : vector<8x128xf32>
    %199 = arith.addf %197, %198 : vector<8x128xf32>
    %200 = arith.truncf %199 : vector<8x128xf32> to vector<8x128xbf16>
    %201 = arith.index_cast %c4_i32 : i32 to index
    %c0_58 = arith.constant 0 : index
    %c0_59 = arith.constant 0 : index
    %202 = vector.load %arg11[%201, %c0_58, %c0_59] : memref<8x8x128xbf16, #tpu.memory_space<vmem>>, vector<1x8x128xbf16>
    %203 = vector.shape_cast %202 : vector<1x8x128xbf16> to vector<8x128xbf16>
    %204 = vector.shape_cast %200 : vector<8x128xbf16> to vector<1x8x128xbf16>
    tpu.vector_store %arg11[%201, %c0_58, %c0_59], %204 {strides = array<i32>} : memref<8x8x128xbf16, #tpu.memory_space<vmem>>, vector<1x8x128xbf16>,
    %c5_i32 = arith.constant 5 : i32
    %205 = arith.index_cast %c5_i32 : i32 to index
    %c0_60 = arith.constant 0 : index
    %c0_61 = arith.constant 0 : index
    %206 = vector.load %arg12[%205, %c0_60, %c0_61] : memref<8x8x384xf32, #tpu.memory_space<vmem>>, vector<1x8x384xf32>
    %207 = vector.shape_cast %206 : vector<1x8x384xf32> to vector<8x384xf32>
    %208 = arith.truncf %199 : vector<8x128xf32> to vector<8x128xbf16>
    %cst_62 = arith.constant dense<0.000000e+00> : vector<8x384xf32>
    %209 = tpu.matmul %208, %13, %cst_62 {dimension_numbers = #tpu.dot_dimension_numbers<[1], [0], [0], [1], [0, 0, 1, 1], [], []>} : vector<8x128xbf16>, vector<128x384xbf16>, vector<8x384xf32> -> vector<8x384xf32>
    %210 = arith.addf %209, %17 : vector<8x384xf32>
    %211 = vector.extract_strided_slice %207 {offsets = [0, 0], sizes = [8, 128], strides = [1, 1]} : vector<8x384xf32> to vector<8x128xf32>
    %212 = vector.extract_strided_slice %210 {offsets = [0, 0], sizes = [8, 128], strides = [1, 1]} : vector<8x384xf32> to vector<8x128xf32>
    %213 = arith.addf %211, %212 : vector<8x128xf32>
    %214 = arith.negf %213 : vector<8x128xf32>
    %215 = math.exp %214 : vector<8x128xf32>
    %cst_63 = arith.constant 1.000000e+00 : f32
    %216 = vector.broadcast %cst_63 : f32 to vector<8x128xf32>
    %217 = arith.addf %216, %215 : vector<8x128xf32>
    %218 = arith.divf %216, %217 : vector<8x128xf32>
    %219 = vector.extract_strided_slice %207 {offsets = [0, 128], sizes = [8, 128], strides = [1, 1]} : vector<8x384xf32> to vector<8x128xf32>
    %220 = vector.extract_strided_slice %210 {offsets = [0, 128], sizes = [8, 128], strides = [1, 1]} : vector<8x384xf32> to vector<8x128xf32>
    %221 = arith.addf %219, %220 : vector<8x128xf32>
    %222 = arith.negf %221 : vector<8x128xf32>
    %223 = math.exp %222 : vector<8x128xf32>
    %cst_64 = arith.constant 1.000000e+00 : f32
    %224 = vector.broadcast %cst_64 : f32 to vector<8x128xf32>
    %225 = arith.addf %224, %223 : vector<8x128xf32>
    %226 = arith.divf %224, %225 : vector<8x128xf32>
    %227 = vector.extract_strided_slice %207 {offsets = [0, 256], sizes = [8, 128], strides = [1, 1]} : vector<8x384xf32> to vector<8x128xf32>
    %228 = vector.extract_strided_slice %210 {offsets = [0, 256], sizes = [8, 128], strides = [1, 1]} : vector<8x384xf32> to vector<8x128xf32>
    %229 = arith.mulf %218, %228 : vector<8x128xf32>
    %230 = arith.addf %227, %229 : vector<8x128xf32>
    %231 = math.tanh %230 : vector<8x128xf32>
    %cst_65 = arith.constant 1.000000e+00 : f32
    %232 = vector.broadcast %cst_65 : f32 to vector<8x128xf32>
    %233 = arith.subf %232, %226 : vector<8x128xf32>
    %234 = arith.mulf %233, %231 : vector<8x128xf32>
    %235 = arith.mulf %226, %199 : vector<8x128xf32>
    %236 = arith.addf %234, %235 : vector<8x128xf32>
    %237 = arith.truncf %236 : vector<8x128xf32> to vector<8x128xbf16>
    %238 = arith.index_cast %c5_i32 : i32 to index
    %c0_66 = arith.constant 0 : index
    %c0_67 = arith.constant 0 : index
    %239 = vector.load %arg11[%238, %c0_66, %c0_67] : memref<8x8x128xbf16, #tpu.memory_space<vmem>>, vector<1x8x128xbf16>
    %240 = vector.shape_cast %239 : vector<1x8x128xbf16> to vector<8x128xbf16>
    %241 = vector.shape_cast %237 : vector<8x128xbf16> to vector<1x8x128xbf16>
    tpu.vector_store %arg11[%238, %c0_66, %c0_67], %241 {strides = array<i32>} : memref<8x8x128xbf16, #tpu.memory_space<vmem>>, vector<1x8x128xbf16>,
    %c6_i32 = arith.constant 6 : i32
    %242 = arith.index_cast %c6_i32 : i32 to index
    %c0_68 = arith.constant 0 : index
    %c0_69 = arith.constant 0 : index
    %243 = vector.load %arg12[%242, %c0_68, %c0_69] : memref<8x8x384xf32, #tpu.memory_space<vmem>>, vector<1x8x384xf32>
    %244 = vector.shape_cast %243 : vector<1x8x384xf32> to vector<8x384xf32>
    %245 = arith.truncf %236 : vector<8x128xf32> to vector<8x128xbf16>
    %cst_70 = arith.constant dense<0.000000e+00> : vector<8x384xf32>
    %246 = tpu.matmul %245, %13, %cst_70 {dimension_numbers = #tpu.dot_dimension_numbers<[1], [0], [0], [1], [0, 0, 1, 1], [], []>} : vector<8x128xbf16>, vector<128x384xbf16>, vector<8x384xf32> -> vector<8x384xf32>
    %247 = arith.addf %246, %17 : vector<8x384xf32>
    %248 = vector.extract_strided_slice %244 {offsets = [0, 0], sizes = [8, 128], strides = [1, 1]} : vector<8x384xf32> to vector<8x128xf32>
    %249 = vector.extract_strided_slice %247 {offsets = [0, 0], sizes = [8, 128], strides = [1, 1]} : vector<8x384xf32> to vector<8x128xf32>
    %250 = arith.addf %248, %249 : vector<8x128xf32>
    %251 = arith.negf %250 : vector<8x128xf32>
    %252 = math.exp %251 : vector<8x128xf32>
    %cst_71 = arith.constant 1.000000e+00 : f32
    %253 = vector.broadcast %cst_71 : f32 to vector<8x128xf32>
    %254 = arith.addf %253, %252 : vector<8x128xf32>
    %255 = arith.divf %253, %254 : vector<8x128xf32>
    %256 = vector.extract_strided_slice %244 {offsets = [0, 128], sizes = [8, 128], strides = [1, 1]} : vector<8x384xf32> to vector<8x128xf32>
    %257 = vector.extract_strided_slice %247 {offsets = [0, 128], sizes = [8, 128], strides = [1, 1]} : vector<8x384xf32> to vector<8x128xf32>
    %258 = arith.addf %256, %257 : vector<8x128xf32>
    %259 = arith.negf %258 : vector<8x128xf32>
    %260 = math.exp %259 : vector<8x128xf32>
    %cst_72 = arith.constant 1.000000e+00 : f32
    %261 = vector.broadcast %cst_72 : f32 to vector<8x128xf32>
    %262 = arith.addf %261, %260 : vector<8x128xf32>
    %263 = arith.divf %261, %262 : vector<8x128xf32>
    %264 = vector.extract_strided_slice %244 {offsets = [0, 256], sizes = [8, 128], strides = [1, 1]} : vector<8x384xf32> to vector<8x128xf32>
    %265 = vector.extract_strided_slice %247 {offsets = [0, 256], sizes = [8, 128], strides = [1, 1]} : vector<8x384xf32> to vector<8x128xf32>
    %266 = arith.mulf %255, %265 : vector<8x128xf32>
    %267 = arith.addf %264, %266 : vector<8x128xf32>
    %268 = math.tanh %267 : vector<8x128xf32>
    %cst_73 = arith.constant 1.000000e+00 : f32
    %269 = vector.broadcast %cst_73 : f32 to vector<8x128xf32>
    %270 = arith.subf %269, %263 : vector<8x128xf32>
    %271 = arith.mulf %270, %268 : vector<8x128xf32>
    %272 = arith.mulf %263, %236 : vector<8x128xf32>
    %273 = arith.addf %271, %272 : vector<8x128xf32>
    %274 = arith.truncf %273 : vector<8x128xf32> to vector<8x128xbf16>
    %275 = arith.index_cast %c6_i32 : i32 to index
    %c0_74 = arith.constant 0 : index
    %c0_75 = arith.constant 0 : index
    %276 = vector.load %arg11[%275, %c0_74, %c0_75] : memref<8x8x128xbf16, #tpu.memory_space<vmem>>, vector<1x8x128xbf16>
    %277 = vector.shape_cast %276 : vector<1x8x128xbf16> to vector<8x128xbf16>
    %278 = vector.shape_cast %274 : vector<8x128xbf16> to vector<1x8x128xbf16>
    tpu.vector_store %arg11[%275, %c0_74, %c0_75], %278 {strides = array<i32>} : memref<8x8x128xbf16, #tpu.memory_space<vmem>>, vector<1x8x128xbf16>,
    %c7_i32 = arith.constant 7 : i32
    %279 = arith.index_cast %c7_i32 : i32 to index
    %c0_76 = arith.constant 0 : index
    %c0_77 = arith.constant 0 : index
    %280 = vector.load %arg12[%279, %c0_76, %c0_77] : memref<8x8x384xf32, #tpu.memory_space<vmem>>, vector<1x8x384xf32>
    %281 = vector.shape_cast %280 : vector<1x8x384xf32> to vector<8x384xf32>
    %282 = arith.truncf %273 : vector<8x128xf32> to vector<8x128xbf16>
    %cst_78 = arith.constant dense<0.000000e+00> : vector<8x384xf32>
    %283 = tpu.matmul %282, %13, %cst_78 {dimension_numbers = #tpu.dot_dimension_numbers<[1], [0], [0], [1], [0, 0, 1, 1], [], []>} : vector<8x128xbf16>, vector<128x384xbf16>, vector<8x384xf32> -> vector<8x384xf32>
    %284 = arith.addf %283, %17 : vector<8x384xf32>
    %285 = vector.extract_strided_slice %281 {offsets = [0, 0], sizes = [8, 128], strides = [1, 1]} : vector<8x384xf32> to vector<8x128xf32>
    %286 = vector.extract_strided_slice %284 {offsets = [0, 0], sizes = [8, 128], strides = [1, 1]} : vector<8x384xf32> to vector<8x128xf32>
    %287 = arith.addf %285, %286 : vector<8x128xf32>
    %288 = arith.negf %287 : vector<8x128xf32>
    %289 = math.exp %288 : vector<8x128xf32>
    %cst_79 = arith.constant 1.000000e+00 : f32
    %290 = vector.broadcast %cst_79 : f32 to vector<8x128xf32>
    %291 = arith.addf %290, %289 : vector<8x128xf32>
    %292 = arith.divf %290, %291 : vector<8x128xf32>
    %293 = vector.extract_strided_slice %281 {offsets = [0, 128], sizes = [8, 128], strides = [1, 1]} : vector<8x384xf32> to vector<8x128xf32>
    %294 = vector.extract_strided_slice %284 {offsets = [0, 128], sizes = [8, 128], strides = [1, 1]} : vector<8x384xf32> to vector<8x128xf32>
    %295 = arith.addf %293, %294 : vector<8x128xf32>
    %296 = arith.negf %295 : vector<8x128xf32>
    %297 = math.exp %296 : vector<8x128xf32>
    %cst_80 = arith.constant 1.000000e+00 : f32
    %298 = vector.broadcast %cst_80 : f32 to vector<8x128xf32>
    %299 = arith.addf %298, %297 : vector<8x128xf32>
    %300 = arith.divf %298, %299 : vector<8x128xf32>
    %301 = vector.extract_strided_slice %281 {offsets = [0, 256], sizes = [8, 128], strides = [1, 1]} : vector<8x384xf32> to vector<8x128xf32>
    %302 = vector.extract_strided_slice %284 {offsets = [0, 256], sizes = [8, 128], strides = [1, 1]} : vector<8x384xf32> to vector<8x128xf32>
    %303 = arith.mulf %292, %302 : vector<8x128xf32>
    %304 = arith.addf %301, %303 : vector<8x128xf32>
    %305 = math.tanh %304 : vector<8x128xf32>
    %cst_81 = arith.constant 1.000000e+00 : f32
    %306 = vector.broadcast %cst_81 : f32 to vector<8x128xf32>
    %307 = arith.subf %306, %300 : vector<8x128xf32>
    %308 = arith.mulf %307, %305 : vector<8x128xf32>
    %309 = arith.mulf %300, %273 : vector<8x128xf32>
    %310 = arith.addf %308, %309 : vector<8x128xf32>
    %311 = arith.truncf %310 : vector<8x128xf32> to vector<8x128xbf16>
    %312 = arith.index_cast %c7_i32 : i32 to index
    %c0_82 = arith.constant 0 : index
    %c0_83 = arith.constant 0 : index
    %313 = vector.load %arg11[%312, %c0_82, %c0_83] : memref<8x8x128xbf16, #tpu.memory_space<vmem>>, vector<1x8x128xbf16>
    %314 = vector.shape_cast %313 : vector<1x8x128xbf16> to vector<8x128xbf16>
    %315 = vector.shape_cast %311 : vector<8x128xbf16> to vector<1x8x128xbf16>
    tpu.vector_store %arg11[%312, %c0_82, %c0_83], %315 {strides = array<i32>} : memref<8x8x128xbf16, #tpu.memory_space<vmem>>, vector<1x8x128xbf16>,
    %c8_i32 = arith.constant 8 : i32
    %c0_84 = arith.constant 0 : index
    %c0_85 = arith.constant 0 : index
    %c0_86 = arith.constant 0 : index
    %316 = vector.load %arg10[%c0_84, %c0_85, %c0_86] : memref<2x8x128xf32, #tpu.memory_space<vmem>>, vector<1x8x128xf32>
    %317 = vector.shape_cast %316 : vector<1x8x128xf32> to vector<8x128xf32>
    %318 = vector.shape_cast %310 : vector<8x128xf32> to vector<1x8x128xf32>
    tpu.vector_store %arg10[%c0_84, %c0_85, %c0_86], %318 {strides = array<i32>} : memref<2x8x128xf32, #tpu.memory_space<vmem>>, vector<1x8x128xf32>,
    %c0_87 = arith.constant 0 : index
    %c0_88 = arith.constant 0 : index
    %c0_89 = arith.constant 0 : index
    %319 = vector.load %arg11[%c0_87, %c0_88, %c0_89] : memref<8x8x128xbf16, #tpu.memory_space<vmem>>, vector<8x8x128xbf16>
    %320 = vector.shape_cast %319 : vector<8x8x128xbf16> to vector<64x128xbf16>
    %c0_90 = arith.constant 0 : index
    %c0_91 = arith.constant 0 : index
    %c0_92 = arith.constant 0 : index
    %321 = vector.load %arg5[%c0_90, %c0_91, %c0_92] : memref<1x128x384xbf16, #tpu.memory_space<vmem>>, vector<1x128x384xbf16>
    %322 = vector.shape_cast %321 : vector<1x128x384xbf16> to vector<128x384xbf16>
    %c0_93 = arith.constant 0 : index
    %c0_94 = arith.constant 0 : index
    %c0_95 = arith.constant 0 : index
    %323 = vector.load %arg6[%c0_93, %c0_94, %c0_95] : memref<1x1x384xf32, #tpu.memory_space<vmem>>, vector<1x1x384xf32>
    %324 = vector.shape_cast %323 : vector<1x1x384xf32> to vector<1x384xf32>
    %cst_96 = arith.constant dense<0.000000e+00> : vector<64x384xf32>
    %325 = tpu.matmul %320, %322, %cst_96 {dimension_numbers = #tpu.dot_dimension_numbers<[1], [0], [0], [1], [0, 0, 1, 1], [], []>} : vector<64x128xbf16>, vector<128x384xbf16>, vector<64x384xf32> -> vector<64x384xf32>
    %326 = vector.broadcast %324 : vector<1x384xf32> to vector<64x384xf32>
    %327 = arith.addf %325, %326 : vector<64x384xf32>
    %328 = vector.shape_cast %327 : vector<64x384xf32> to vector<8x8x384xf32>
    %c0_97 = arith.constant 0 : index
    %c0_98 = arith.constant 0 : index
    %c0_99 = arith.constant 0 : index
    %329 = vector.load %arg12[%c0_97, %c0_98, %c0_99] : memref<8x8x384xf32, #tpu.memory_space<vmem>>, vector<8x8x384xf32>
    tpu.vector_store %arg12[%c0_97, %c0_98, %c0_99], %328 {strides = array<i32>} : memref<8x8x384xf32, #tpu.memory_space<vmem>>, vector<8x8x384xf32>,
    %c1 = arith.constant 1 : index
    %c0_100 = arith.constant 0 : index
    %c0_101 = arith.constant 0 : index
    %330 = vector.load %arg7[%c1, %c0_100, %c0_101] : memref<2x128x384xbf16, #tpu.memory_space<vmem>>, vector<1x128x384xbf16>
    %331 = vector.shape_cast %330 : vector<1x128x384xbf16> to vector<128x384xbf16>
    %c1_102 = arith.constant 1 : index
    %c0_103 = arith.constant 0 : index
    %c0_104 = arith.constant 0 : index
    %332 = vector.load %arg8[%c1_102, %c0_103, %c0_104] : memref<2x1x384xf32, #tpu.memory_space<vmem>>, vector<1x1x384xf32>
    %333 = vector.shape_cast %332 : vector<1x1x384xf32> to vector<1x384xf32>
    %334 = vector.shape_cast %333 : vector<1x384xf32> to vector<1x384xf32>
    %335 = vector.broadcast %334 : vector<1x384xf32> to vector<8x384xf32>
    %c1_105 = arith.constant 1 : index
    %c0_106 = arith.constant 0 : index
    %c0_107 = arith.constant 0 : index
    %336 = vector.load %arg10[%c1_105, %c0_106, %c0_107] : memref<2x8x128xf32, #tpu.memory_space<vmem>>, vector<1x8x128xf32>
    %337 = vector.shape_cast %336 : vector<1x8x128xf32> to vector<8x128xf32>
    %c0_i32_108 = arith.constant 0 : i32
    %338 = arith.index_cast %c0_i32_108 : i32 to index
    %c0_109 = arith.constant 0 : index
    %c0_110 = arith.constant 0 : index
    %339 = vector.load %arg12[%338, %c0_109, %c0_110] : memref<8x8x384xf32, #tpu.memory_space<vmem>>, vector<1x8x384xf32>
    %340 = vector.shape_cast %339 : vector<1x8x384xf32> to vector<8x384xf32>
    %341 = arith.truncf %337 : vector<8x128xf32> to vector<8x128xbf16>
    %cst_111 = arith.constant dense<0.000000e+00> : vector<8x384xf32>
    %342 = tpu.matmul %341, %331, %cst_111 {dimension_numbers = #tpu.dot_dimension_numbers<[1], [0], [0], [1], [0, 0, 1, 1], [], []>} : vector<8x128xbf16>, vector<128x384xbf16>, vector<8x384xf32> -> vector<8x384xf32>
    %343 = arith.addf %342, %335 : vector<8x384xf32>
    %344 = vector.extract_strided_slice %340 {offsets = [0, 0], sizes = [8, 128], strides = [1, 1]} : vector<8x384xf32> to vector<8x128xf32>
    %345 = vector.extract_strided_slice %343 {offsets = [0, 0], sizes = [8, 128], strides = [1, 1]} : vector<8x384xf32> to vector<8x128xf32>
    %346 = arith.addf %344, %345 : vector<8x128xf32>
    %347 = arith.negf %346 : vector<8x128xf32>
    %348 = math.exp %347 : vector<8x128xf32>
    %cst_112 = arith.constant 1.000000e+00 : f32
    %349 = vector.broadcast %cst_112 : f32 to vector<8x128xf32>
    %350 = arith.addf %349, %348 : vector<8x128xf32>
    %351 = arith.divf %349, %350 : vector<8x128xf32>
    %352 = vector.extract_strided_slice %340 {offsets = [0, 128], sizes = [8, 128], strides = [1, 1]} : vector<8x384xf32> to vector<8x128xf32>
    %353 = vector.extract_strided_slice %343 {offsets = [0, 128], sizes = [8, 128], strides = [1, 1]} : vector<8x384xf32> to vector<8x128xf32>
    %354 = arith.addf %352, %353 : vector<8x128xf32>
    %355 = arith.negf %354 : vector<8x128xf32>
    %356 = math.exp %355 : vector<8x128xf32>
    %cst_113 = arith.constant 1.000000e+00 : f32
    %357 = vector.broadcast %cst_113 : f32 to vector<8x128xf32>
    %358 = arith.addf %357, %356 : vector<8x128xf32>
    %359 = arith.divf %357, %358 : vector<8x128xf32>
    %360 = vector.extract_strided_slice %340 {offsets = [0, 256], sizes = [8, 128], strides = [1, 1]} : vector<8x384xf32> to vector<8x128xf32>
    %361 = vector.extract_strided_slice %343 {offsets = [0, 256], sizes = [8, 128], strides = [1, 1]} : vector<8x384xf32> to vector<8x128xf32>
    %362 = arith.mulf %351, %361 : vector<8x128xf32>
    %363 = arith.addf %360, %362 : vector<8x128xf32>
    %364 = math.tanh %363 : vector<8x128xf32>
    %cst_114 = arith.constant 1.000000e+00 : f32
    %365 = vector.broadcast %cst_114 : f32 to vector<8x128xf32>
    %366 = arith.subf %365, %359 : vector<8x128xf32>
    %367 = arith.mulf %366, %364 : vector<8x128xf32>
    %368 = arith.mulf %359, %337 : vector<8x128xf32>
    %369 = arith.addf %367, %368 : vector<8x128xf32>
    %370 = arith.index_cast %c0_i32_108 : i32 to index
    %c0_115 = arith.constant 0 : index
    %c0_116 = arith.constant 0 : index
    %371 = vector.load %arg9[%370, %c0_115, %c0_116] : memref<8x8x128xf32, #tpu.memory_space<vmem>>, vector<1x8x128xf32>
    %372 = vector.shape_cast %371 : vector<1x8x128xf32> to vector<8x128xf32>
    %373 = vector.shape_cast %369 : vector<8x128xf32> to vector<1x8x128xf32>
    tpu.vector_store %arg9[%370, %c0_115, %c0_116], %373 {strides = array<i32>} : memref<8x8x128xf32, #tpu.memory_space<vmem>>, vector<1x8x128xf32>,
    %c1_i32_117 = arith.constant 1 : i32
    %374 = arith.index_cast %c1_i32_117 : i32 to index
    %c0_118 = arith.constant 0 : index
    %c0_119 = arith.constant 0 : index
    %375 = vector.load %arg12[%374, %c0_118, %c0_119] : memref<8x8x384xf32, #tpu.memory_space<vmem>>, vector<1x8x384xf32>
    %376 = vector.shape_cast %375 : vector<1x8x384xf32> to vector<8x384xf32>
    %377 = arith.truncf %369 : vector<8x128xf32> to vector<8x128xbf16>
    %cst_120 = arith.constant dense<0.000000e+00> : vector<8x384xf32>
    %378 = tpu.matmul %377, %331, %cst_120 {dimension_numbers = #tpu.dot_dimension_numbers<[1], [0], [0], [1], [0, 0, 1, 1], [], []>} : vector<8x128xbf16>, vector<128x384xbf16>, vector<8x384xf32> -> vector<8x384xf32>
    %379 = arith.addf %378, %335 : vector<8x384xf32>
    %380 = vector.extract_strided_slice %376 {offsets = [0, 0], sizes = [8, 128], strides = [1, 1]} : vector<8x384xf32> to vector<8x128xf32>
    %381 = vector.extract_strided_slice %379 {offsets = [0, 0], sizes = [8, 128], strides = [1, 1]} : vector<8x384xf32> to vector<8x128xf32>
    %382 = arith.addf %380, %381 : vector<8x128xf32>
    %383 = arith.negf %382 : vector<8x128xf32>
    %384 = math.exp %383 : vector<8x128xf32>
    %cst_121 = arith.constant 1.000000e+00 : f32
    %385 = vector.broadcast %cst_121 : f32 to vector<8x128xf32>
    %386 = arith.addf %385, %384 : vector<8x128xf32>
    %387 = arith.divf %385, %386 : vector<8x128xf32>
    %388 = vector.extract_strided_slice %376 {offsets = [0, 128], sizes = [8, 128], strides = [1, 1]} : vector<8x384xf32> to vector<8x128xf32>
    %389 = vector.extract_strided_slice %379 {offsets = [0, 128], sizes = [8, 128], strides = [1, 1]} : vector<8x384xf32> to vector<8x128xf32>
    %390 = arith.addf %388, %389 : vector<8x128xf32>
    %391 = arith.negf %390 : vector<8x128xf32>
    %392 = math.exp %391 : vector<8x128xf32>
    %cst_122 = arith.constant 1.000000e+00 : f32
    %393 = vector.broadcast %cst_122 : f32 to vector<8x128xf32>
    %394 = arith.addf %393, %392 : vector<8x128xf32>
    %395 = arith.divf %393, %394 : vector<8x128xf32>
    %396 = vector.extract_strided_slice %376 {offsets = [0, 256], sizes = [8, 128], strides = [1, 1]} : vector<8x384xf32> to vector<8x128xf32>
    %397 = vector.extract_strided_slice %379 {offsets = [0, 256], sizes = [8, 128], strides = [1, 1]} : vector<8x384xf32> to vector<8x128xf32>
    %398 = arith.mulf %387, %397 : vector<8x128xf32>
    %399 = arith.addf %396, %398 : vector<8x128xf32>
    %400 = math.tanh %399 : vector<8x128xf32>
    %cst_123 = arith.constant 1.000000e+00 : f32
    %401 = vector.broadcast %cst_123 : f32 to vector<8x128xf32>
    %402 = arith.subf %401, %395 : vector<8x128xf32>
    %403 = arith.mulf %402, %400 : vector<8x128xf32>
    %404 = arith.mulf %395, %369 : vector<8x128xf32>
    %405 = arith.addf %403, %404 : vector<8x128xf32>
    %406 = arith.index_cast %c1_i32_117 : i32 to index
    %c0_124 = arith.constant 0 : index
    %c0_125 = arith.constant 0 : index
    %407 = vector.load %arg9[%406, %c0_124, %c0_125] : memref<8x8x128xf32, #tpu.memory_space<vmem>>, vector<1x8x128xf32>
    %408 = vector.shape_cast %407 : vector<1x8x128xf32> to vector<8x128xf32>
    %409 = vector.shape_cast %405 : vector<8x128xf32> to vector<1x8x128xf32>
    tpu.vector_store %arg9[%406, %c0_124, %c0_125], %409 {strides = array<i32>} : memref<8x8x128xf32, #tpu.memory_space<vmem>>, vector<1x8x128xf32>,
    %c2_i32_126 = arith.constant 2 : i32
    %410 = arith.index_cast %c2_i32_126 : i32 to index
    %c0_127 = arith.constant 0 : index
    %c0_128 = arith.constant 0 : index
    %411 = vector.load %arg12[%410, %c0_127, %c0_128] : memref<8x8x384xf32, #tpu.memory_space<vmem>>, vector<1x8x384xf32>
    %412 = vector.shape_cast %411 : vector<1x8x384xf32> to vector<8x384xf32>
    %413 = arith.truncf %405 : vector<8x128xf32> to vector<8x128xbf16>
    %cst_129 = arith.constant dense<0.000000e+00> : vector<8x384xf32>
    %414 = tpu.matmul %413, %331, %cst_129 {dimension_numbers = #tpu.dot_dimension_numbers<[1], [0], [0], [1], [0, 0, 1, 1], [], []>} : vector<8x128xbf16>, vector<128x384xbf16>, vector<8x384xf32> -> vector<8x384xf32>
    %415 = arith.addf %414, %335 : vector<8x384xf32>
    %416 = vector.extract_strided_slice %412 {offsets = [0, 0], sizes = [8, 128], strides = [1, 1]} : vector<8x384xf32> to vector<8x128xf32>
    %417 = vector.extract_strided_slice %415 {offsets = [0, 0], sizes = [8, 128], strides = [1, 1]} : vector<8x384xf32> to vector<8x128xf32>
    %418 = arith.addf %416, %417 : vector<8x128xf32>
    %419 = arith.negf %418 : vector<8x128xf32>
    %420 = math.exp %419 : vector<8x128xf32>
    %cst_130 = arith.constant 1.000000e+00 : f32
    %421 = vector.broadcast %cst_130 : f32 to vector<8x128xf32>
    %422 = arith.addf %421, %420 : vector<8x128xf32>
    %423 = arith.divf %421, %422 : vector<8x128xf32>
    %424 = vector.extract_strided_slice %412 {offsets = [0, 128], sizes = [8, 128], strides = [1, 1]} : vector<8x384xf32> to vector<8x128xf32>
    %425 = vector.extract_strided_slice %415 {offsets = [0, 128], sizes = [8, 128], strides = [1, 1]} : vector<8x384xf32> to vector<8x128xf32>
    %426 = arith.addf %424, %425 : vector<8x128xf32>
    %427 = arith.negf %426 : vector<8x128xf32>
    %428 = math.exp %427 : vector<8x128xf32>
    %cst_131 = arith.constant 1.000000e+00 : f32
    %429 = vector.broadcast %cst_131 : f32 to vector<8x128xf32>
    %430 = arith.addf %429, %428 : vector<8x128xf32>
    %431 = arith.divf %429, %430 : vector<8x128xf32>
    %432 = vector.extract_strided_slice %412 {offsets = [0, 256], sizes = [8, 128], strides = [1, 1]} : vector<8x384xf32> to vector<8x128xf32>
    %433 = vector.extract_strided_slice %415 {offsets = [0, 256], sizes = [8, 128], strides = [1, 1]} : vector<8x384xf32> to vector<8x128xf32>
    %434 = arith.mulf %423, %433 : vector<8x128xf32>
    %435 = arith.addf %432, %434 : vector<8x128xf32>
    %436 = math.tanh %435 : vector<8x128xf32>
    %cst_132 = arith.constant 1.000000e+00 : f32
    %437 = vector.broadcast %cst_132 : f32 to vector<8x128xf32>
    %438 = arith.subf %437, %431 : vector<8x128xf32>
    %439 = arith.mulf %438, %436 : vector<8x128xf32>
    %440 = arith.mulf %431, %405 : vector<8x128xf32>
    %441 = arith.addf %439, %440 : vector<8x128xf32>
    %442 = arith.index_cast %c2_i32_126 : i32 to index
    %c0_133 = arith.constant 0 : index
    %c0_134 = arith.constant 0 : index
    %443 = vector.load %arg9[%442, %c0_133, %c0_134] : memref<8x8x128xf32, #tpu.memory_space<vmem>>, vector<1x8x128xf32>
    %444 = vector.shape_cast %443 : vector<1x8x128xf32> to vector<8x128xf32>
    %445 = vector.shape_cast %441 : vector<8x128xf32> to vector<1x8x128xf32>
    tpu.vector_store %arg9[%442, %c0_133, %c0_134], %445 {strides = array<i32>} : memref<8x8x128xf32, #tpu.memory_space<vmem>>, vector<1x8x128xf32>,
    %c3_i32_135 = arith.constant 3 : i32
    %446 = arith.index_cast %c3_i32_135 : i32 to index
    %c0_136 = arith.constant 0 : index
    %c0_137 = arith.constant 0 : index
    %447 = vector.load %arg12[%446, %c0_136, %c0_137] : memref<8x8x384xf32, #tpu.memory_space<vmem>>, vector<1x8x384xf32>
    %448 = vector.shape_cast %447 : vector<1x8x384xf32> to vector<8x384xf32>
    %449 = arith.truncf %441 : vector<8x128xf32> to vector<8x128xbf16>
    %cst_138 = arith.constant dense<0.000000e+00> : vector<8x384xf32>
    %450 = tpu.matmul %449, %331, %cst_138 {dimension_numbers = #tpu.dot_dimension_numbers<[1], [0], [0], [1], [0, 0, 1, 1], [], []>} : vector<8x128xbf16>, vector<128x384xbf16>, vector<8x384xf32> -> vector<8x384xf32>
    %451 = arith.addf %450, %335 : vector<8x384xf32>
    %452 = vector.extract_strided_slice %448 {offsets = [0, 0], sizes = [8, 128], strides = [1, 1]} : vector<8x384xf32> to vector<8x128xf32>
    %453 = vector.extract_strided_slice %451 {offsets = [0, 0], sizes = [8, 128], strides = [1, 1]} : vector<8x384xf32> to vector<8x128xf32>
    %454 = arith.addf %452, %453 : vector<8x128xf32>
    %455 = arith.negf %454 : vector<8x128xf32>
    %456 = math.exp %455 : vector<8x128xf32>
    %cst_139 = arith.constant 1.000000e+00 : f32
    %457 = vector.broadcast %cst_139 : f32 to vector<8x128xf32>
    %458 = arith.addf %457, %456 : vector<8x128xf32>
    %459 = arith.divf %457, %458 : vector<8x128xf32>
    %460 = vector.extract_strided_slice %448 {offsets = [0, 128], sizes = [8, 128], strides = [1, 1]} : vector<8x384xf32> to vector<8x128xf32>
    %461 = vector.extract_strided_slice %451 {offsets = [0, 128], sizes = [8, 128], strides = [1, 1]} : vector<8x384xf32> to vector<8x128xf32>
    %462 = arith.addf %460, %461 : vector<8x128xf32>
    %463 = arith.negf %462 : vector<8x128xf32>
    %464 = math.exp %463 : vector<8x128xf32>
    %cst_140 = arith.constant 1.000000e+00 : f32
    %465 = vector.broadcast %cst_140 : f32 to vector<8x128xf32>
    %466 = arith.addf %465, %464 : vector<8x128xf32>
    %467 = arith.divf %465, %466 : vector<8x128xf32>
    %468 = vector.extract_strided_slice %448 {offsets = [0, 256], sizes = [8, 128], strides = [1, 1]} : vector<8x384xf32> to vector<8x128xf32>
    %469 = vector.extract_strided_slice %451 {offsets = [0, 256], sizes = [8, 128], strides = [1, 1]} : vector<8x384xf32> to vector<8x128xf32>
    %470 = arith.mulf %459, %469 : vector<8x128xf32>
    %471 = arith.addf %468, %470 : vector<8x128xf32>
    %472 = math.tanh %471 : vector<8x128xf32>
    %cst_141 = arith.constant 1.000000e+00 : f32
    %473 = vector.broadcast %cst_141 : f32 to vector<8x128xf32>
    %474 = arith.subf %473, %467 : vector<8x128xf32>
    %475 = arith.mulf %474, %472 : vector<8x128xf32>
    %476 = arith.mulf %467, %441 : vector<8x128xf32>
    %477 = arith.addf %475, %476 : vector<8x128xf32>
    %478 = arith.index_cast %c3_i32_135 : i32 to index
    %c0_142 = arith.constant 0 : index
    %c0_143 = arith.constant 0 : index
    %479 = vector.load %arg9[%478, %c0_142, %c0_143] : memref<8x8x128xf32, #tpu.memory_space<vmem>>, vector<1x8x128xf32>
    %480 = vector.shape_cast %479 : vector<1x8x128xf32> to vector<8x128xf32>
    %481 = vector.shape_cast %477 : vector<8x128xf32> to vector<1x8x128xf32>
    tpu.vector_store %arg9[%478, %c0_142, %c0_143], %481 {strides = array<i32>} : memref<8x8x128xf32, #tpu.memory_space<vmem>>, vector<1x8x128xf32>,
    %c4_i32_144 = arith.constant 4 : i32
    %482 = arith.index_cast %c4_i32_144 : i32 to index
    %c0_145 = arith.constant 0 : index
    %c0_146 = arith.constant 0 : index
    %483 = vector.load %arg12[%482, %c0_145, %c0_146] : memref<8x8x384xf32, #tpu.memory_space<vmem>>, vector<1x8x384xf32>
    %484 = vector.shape_cast %483 : vector<1x8x384xf32> to vector<8x384xf32>
    %485 = arith.truncf %477 : vector<8x128xf32> to vector<8x128xbf16>
    %cst_147 = arith.constant dense<0.000000e+00> : vector<8x384xf32>
    %486 = tpu.matmul %485, %331, %cst_147 {dimension_numbers = #tpu.dot_dimension_numbers<[1], [0], [0], [1], [0, 0, 1, 1], [], []>} : vector<8x128xbf16>, vector<128x384xbf16>, vector<8x384xf32> -> vector<8x384xf32>
    %487 = arith.addf %486, %335 : vector<8x384xf32>
    %488 = vector.extract_strided_slice %484 {offsets = [0, 0], sizes = [8, 128], strides = [1, 1]} : vector<8x384xf32> to vector<8x128xf32>
    %489 = vector.extract_strided_slice %487 {offsets = [0, 0], sizes = [8, 128], strides = [1, 1]} : vector<8x384xf32> to vector<8x128xf32>
    %490 = arith.addf %488, %489 : vector<8x128xf32>
    %491 = arith.negf %490 : vector<8x128xf32>
    %492 = math.exp %491 : vector<8x128xf32>
    %cst_148 = arith.constant 1.000000e+00 : f32
    %493 = vector.broadcast %cst_148 : f32 to vector<8x128xf32>
    %494 = arith.addf %493, %492 : vector<8x128xf32>
    %495 = arith.divf %493, %494 : vector<8x128xf32>
    %496 = vector.extract_strided_slice %484 {offsets = [0, 128], sizes = [8, 128], strides = [1, 1]} : vector<8x384xf32> to vector<8x128xf32>
    %497 = vector.extract_strided_slice %487 {offsets = [0, 128], sizes = [8, 128], strides = [1, 1]} : vector<8x384xf32> to vector<8x128xf32>
    %498 = arith.addf %496, %497 : vector<8x128xf32>
    %499 = arith.negf %498 : vector<8x128xf32>
    %500 = math.exp %499 : vector<8x128xf32>
    %cst_149 = arith.constant 1.000000e+00 : f32
    %501 = vector.broadcast %cst_149 : f32 to vector<8x128xf32>
    %502 = arith.addf %501, %500 : vector<8x128xf32>
    %503 = arith.divf %501, %502 : vector<8x128xf32>
    %504 = vector.extract_strided_slice %484 {offsets = [0, 256], sizes = [8, 128], strides = [1, 1]} : vector<8x384xf32> to vector<8x128xf32>
    %505 = vector.extract_strided_slice %487 {offsets = [0, 256], sizes = [8, 128], strides = [1, 1]} : vector<8x384xf32> to vector<8x128xf32>
    %506 = arith.mulf %495, %505 : vector<8x128xf32>
    %507 = arith.addf %504, %506 : vector<8x128xf32>
    %508 = math.tanh %507 : vector<8x128xf32>
    %cst_150 = arith.constant 1.000000e+00 : f32
    %509 = vector.broadcast %cst_150 : f32 to vector<8x128xf32>
    %510 = arith.subf %509, %503 : vector<8x128xf32>
    %511 = arith.mulf %510, %508 : vector<8x128xf32>
    %512 = arith.mulf %503, %477 : vector<8x128xf32>
    %513 = arith.addf %511, %512 : vector<8x128xf32>
    %514 = arith.index_cast %c4_i32_144 : i32 to index
    %c0_151 = arith.constant 0 : index
    %c0_152 = arith.constant 0 : index
    %515 = vector.load %arg9[%514, %c0_151, %c0_152] : memref<8x8x128xf32, #tpu.memory_space<vmem>>, vector<1x8x128xf32>
    %516 = vector.shape_cast %515 : vector<1x8x128xf32> to vector<8x128xf32>
    %517 = vector.shape_cast %513 : vector<8x128xf32> to vector<1x8x128xf32>
    tpu.vector_store %arg9[%514, %c0_151, %c0_152], %517 {strides = array<i32>} : memref<8x8x128xf32, #tpu.memory_space<vmem>>, vector<1x8x128xf32>,
    %c5_i32_153 = arith.constant 5 : i32
    %518 = arith.index_cast %c5_i32_153 : i32 to index
    %c0_154 = arith.constant 0 : index
    %c0_155 = arith.constant 0 : index
    %519 = vector.load %arg12[%518, %c0_154, %c0_155] : memref<8x8x384xf32, #tpu.memory_space<vmem>>, vector<1x8x384xf32>
    %520 = vector.shape_cast %519 : vector<1x8x384xf32> to vector<8x384xf32>
    %521 = arith.truncf %513 : vector<8x128xf32> to vector<8x128xbf16>
    %cst_156 = arith.constant dense<0.000000e+00> : vector<8x384xf32>
    %522 = tpu.matmul %521, %331, %cst_156 {dimension_numbers = #tpu.dot_dimension_numbers<[1], [0], [0], [1], [0, 0, 1, 1], [], []>} : vector<8x128xbf16>, vector<128x384xbf16>, vector<8x384xf32> -> vector<8x384xf32>
    %523 = arith.addf %522, %335 : vector<8x384xf32>
    %524 = vector.extract_strided_slice %520 {offsets = [0, 0], sizes = [8, 128], strides = [1, 1]} : vector<8x384xf32> to vector<8x128xf32>
    %525 = vector.extract_strided_slice %523 {offsets = [0, 0], sizes = [8, 128], strides = [1, 1]} : vector<8x384xf32> to vector<8x128xf32>
    %526 = arith.addf %524, %525 : vector<8x128xf32>
    %527 = arith.negf %526 : vector<8x128xf32>
    %528 = math.exp %527 : vector<8x128xf32>
    %cst_157 = arith.constant 1.000000e+00 : f32
    %529 = vector.broadcast %cst_157 : f32 to vector<8x128xf32>
    %530 = arith.addf %529, %528 : vector<8x128xf32>
    %531 = arith.divf %529, %530 : vector<8x128xf32>
    %532 = vector.extract_strided_slice %520 {offsets = [0, 128], sizes = [8, 128], strides = [1, 1]} : vector<8x384xf32> to vector<8x128xf32>
    %533 = vector.extract_strided_slice %523 {offsets = [0, 128], sizes = [8, 128], strides = [1, 1]} : vector<8x384xf32> to vector<8x128xf32>
    %534 = arith.addf %532, %533 : vector<8x128xf32>
    %535 = arith.negf %534 : vector<8x128xf32>
    %536 = math.exp %535 : vector<8x128xf32>
    %cst_158 = arith.constant 1.000000e+00 : f32
    %537 = vector.broadcast %cst_158 : f32 to vector<8x128xf32>
    %538 = arith.addf %537, %536 : vector<8x128xf32>
    %539 = arith.divf %537, %538 : vector<8x128xf32>
    %540 = vector.extract_strided_slice %520 {offsets = [0, 256], sizes = [8, 128], strides = [1, 1]} : vector<8x384xf32> to vector<8x128xf32>
    %541 = vector.extract_strided_slice %523 {offsets = [0, 256], sizes = [8, 128], strides = [1, 1]} : vector<8x384xf32> to vector<8x128xf32>
    %542 = arith.mulf %531, %541 : vector<8x128xf32>
    %543 = arith.addf %540, %542 : vector<8x128xf32>
    %544 = math.tanh %543 : vector<8x128xf32>
    %cst_159 = arith.constant 1.000000e+00 : f32
    %545 = vector.broadcast %cst_159 : f32 to vector<8x128xf32>
    %546 = arith.subf %545, %539 : vector<8x128xf32>
    %547 = arith.mulf %546, %544 : vector<8x128xf32>
    %548 = arith.mulf %539, %513 : vector<8x128xf32>
    %549 = arith.addf %547, %548 : vector<8x128xf32>
    %550 = arith.index_cast %c5_i32_153 : i32 to index
    %c0_160 = arith.constant 0 : index
    %c0_161 = arith.constant 0 : index
    %551 = vector.load %arg9[%550, %c0_160, %c0_161] : memref<8x8x128xf32, #tpu.memory_space<vmem>>, vector<1x8x128xf32>
    %552 = vector.shape_cast %551 : vector<1x8x128xf32> to vector<8x128xf32>
    %553 = vector.shape_cast %549 : vector<8x128xf32> to vector<1x8x128xf32>
    tpu.vector_store %arg9[%550, %c0_160, %c0_161], %553 {strides = array<i32>} : memref<8x8x128xf32, #tpu.memory_space<vmem>>, vector<1x8x128xf32>,
    %c6_i32_162 = arith.constant 6 : i32
    %554 = arith.index_cast %c6_i32_162 : i32 to index
    %c0_163 = arith.constant 0 : index
    %c0_164 = arith.constant 0 : index
    %555 = vector.load %arg12[%554, %c0_163, %c0_164] : memref<8x8x384xf32, #tpu.memory_space<vmem>>, vector<1x8x384xf32>
    %556 = vector.shape_cast %555 : vector<1x8x384xf32> to vector<8x384xf32>
    %557 = arith.truncf %549 : vector<8x128xf32> to vector<8x128xbf16>
    %cst_165 = arith.constant dense<0.000000e+00> : vector<8x384xf32>
    %558 = tpu.matmul %557, %331, %cst_165 {dimension_numbers = #tpu.dot_dimension_numbers<[1], [0], [0], [1], [0, 0, 1, 1], [], []>} : vector<8x128xbf16>, vector<128x384xbf16>, vector<8x384xf32> -> vector<8x384xf32>
    %559 = arith.addf %558, %335 : vector<8x384xf32>
    %560 = vector.extract_strided_slice %556 {offsets = [0, 0], sizes = [8, 128], strides = [1, 1]} : vector<8x384xf32> to vector<8x128xf32>
    %561 = vector.extract_strided_slice %559 {offsets = [0, 0], sizes = [8, 128], strides = [1, 1]} : vector<8x384xf32> to vector<8x128xf32>
    %562 = arith.addf %560, %561 : vector<8x128xf32>
    %563 = arith.negf %562 : vector<8x128xf32>
    %564 = math.exp %563 : vector<8x128xf32>
    %cst_166 = arith.constant 1.000000e+00 : f32
    %565 = vector.broadcast %cst_166 : f32 to vector<8x128xf32>
    %566 = arith.addf %565, %564 : vector<8x128xf32>
    %567 = arith.divf %565, %566 : vector<8x128xf32>
    %568 = vector.extract_strided_slice %556 {offsets = [0, 128], sizes = [8, 128], strides = [1, 1]} : vector<8x384xf32> to vector<8x128xf32>
    %569 = vector.extract_strided_slice %559 {offsets = [0, 128], sizes = [8, 128], strides = [1, 1]} : vector<8x384xf32> to vector<8x128xf32>
    %570 = arith.addf %568, %569 : vector<8x128xf32>
    %571 = arith.negf %570 : vector<8x128xf32>
    %572 = math.exp %571 : vector<8x128xf32>
    %cst_167 = arith.constant 1.000000e+00 : f32
    %573 = vector.broadcast %cst_167 : f32 to vector<8x128xf32>
    %574 = arith.addf %573, %572 : vector<8x128xf32>
    %575 = arith.divf %573, %574 : vector<8x128xf32>
    %576 = vector.extract_strided_slice %556 {offsets = [0, 256], sizes = [8, 128], strides = [1, 1]} : vector<8x384xf32> to vector<8x128xf32>
    %577 = vector.extract_strided_slice %559 {offsets = [0, 256], sizes = [8, 128], strides = [1, 1]} : vector<8x384xf32> to vector<8x128xf32>
    %578 = arith.mulf %567, %577 : vector<8x128xf32>
    %579 = arith.addf %576, %578 : vector<8x128xf32>
    %580 = math.tanh %579 : vector<8x128xf32>
    %cst_168 = arith.constant 1.000000e+00 : f32
    %581 = vector.broadcast %cst_168 : f32 to vector<8x128xf32>
    %582 = arith.subf %581, %575 : vector<8x128xf32>
    %583 = arith.mulf %582, %580 : vector<8x128xf32>
    %584 = arith.mulf %575, %549 : vector<8x128xf32>
    %585 = arith.addf %583, %584 : vector<8x128xf32>
    %586 = arith.index_cast %c6_i32_162 : i32 to index
    %c0_169 = arith.constant 0 : index
    %c0_170 = arith.constant 0 : index
    %587 = vector.load %arg9[%586, %c0_169, %c0_170] : memref<8x8x128xf32, #tpu.memory_space<vmem>>, vector<1x8x128xf32>
    %588 = vector.shape_cast %587 : vector<1x8x128xf32> to vector<8x128xf32>
    %589 = vector.shape_cast %585 : vector<8x128xf32> to vector<1x8x128xf32>
    tpu.vector_store %arg9[%586, %c0_169, %c0_170], %589 {strides = array<i32>} : memref<8x8x128xf32, #tpu.memory_space<vmem>>, vector<1x8x128xf32>,
    %c7_i32_171 = arith.constant 7 : i32
    %590 = arith.index_cast %c7_i32_171 : i32 to index
    %c0_172 = arith.constant 0 : index
    %c0_173 = arith.constant 0 : index
    %591 = vector.load %arg12[%590, %c0_172, %c0_173] : memref<8x8x384xf32, #tpu.memory_space<vmem>>, vector<1x8x384xf32>
    %592 = vector.shape_cast %591 : vector<1x8x384xf32> to vector<8x384xf32>
    %593 = arith.truncf %585 : vector<8x128xf32> to vector<8x128xbf16>
    %cst_174 = arith.constant dense<0.000000e+00> : vector<8x384xf32>
    %594 = tpu.matmul %593, %331, %cst_174 {dimension_numbers = #tpu.dot_dimension_numbers<[1], [0], [0], [1], [0, 0, 1, 1], [], []>} : vector<8x128xbf16>, vector<128x384xbf16>, vector<8x384xf32> -> vector<8x384xf32>
    %595 = arith.addf %594, %335 : vector<8x384xf32>
    %596 = vector.extract_strided_slice %592 {offsets = [0, 0], sizes = [8, 128], strides = [1, 1]} : vector<8x384xf32> to vector<8x128xf32>
    %597 = vector.extract_strided_slice %595 {offsets = [0, 0], sizes = [8, 128], strides = [1, 1]} : vector<8x384xf32> to vector<8x128xf32>
    %598 = arith.addf %596, %597 : vector<8x128xf32>
    %599 = arith.negf %598 : vector<8x128xf32>
    %600 = math.exp %599 : vector<8x128xf32>
    %cst_175 = arith.constant 1.000000e+00 : f32
    %601 = vector.broadcast %cst_175 : f32 to vector<8x128xf32>
    %602 = arith.addf %601, %600 : vector<8x128xf32>
    %603 = arith.divf %601, %602 : vector<8x128xf32>
    %604 = vector.extract_strided_slice %592 {offsets = [0, 128], sizes = [8, 128], strides = [1, 1]} : vector<8x384xf32> to vector<8x128xf32>
    %605 = vector.extract_strided_slice %595 {offsets = [0, 128], sizes = [8, 128], strides = [1, 1]} : vector<8x384xf32> to vector<8x128xf32>
    %606 = arith.addf %604, %605 : vector<8x128xf32>
    %607 = arith.negf %606 : vector<8x128xf32>
    %608 = math.exp %607 : vector<8x128xf32>
    %cst_176 = arith.constant 1.000000e+00 : f32
    %609 = vector.broadcast %cst_176 : f32 to vector<8x128xf32>
    %610 = arith.addf %609, %608 : vector<8x128xf32>
    %611 = arith.divf %609, %610 : vector<8x128xf32>
    %612 = vector.extract_strided_slice %592 {offsets = [0, 256], sizes = [8, 128], strides = [1, 1]} : vector<8x384xf32> to vector<8x128xf32>
    %613 = vector.extract_strided_slice %595 {offsets = [0, 256], sizes = [8, 128], strides = [1, 1]} : vector<8x384xf32> to vector<8x128xf32>
    %614 = arith.mulf %603, %613 : vector<8x128xf32>
    %615 = arith.addf %612, %614 : vector<8x128xf32>
    %616 = math.tanh %615 : vector<8x128xf32>
    %cst_177 = arith.constant 1.000000e+00 : f32
    %617 = vector.broadcast %cst_177 : f32 to vector<8x128xf32>
    %618 = arith.subf %617, %611 : vector<8x128xf32>
    %619 = arith.mulf %618, %616 : vector<8x128xf32>
    %620 = arith.mulf %611, %585 : vector<8x128xf32>
    %621 = arith.addf %619, %620 : vector<8x128xf32>
    %622 = arith.index_cast %c7_i32_171 : i32 to index
    %c0_178 = arith.constant 0 : index
    %c0_179 = arith.constant 0 : index
    %623 = vector.load %arg9[%622, %c0_178, %c0_179] : memref<8x8x128xf32, #tpu.memory_space<vmem>>, vector<1x8x128xf32>
    %624 = vector.shape_cast %623 : vector<1x8x128xf32> to vector<8x128xf32>
    %625 = vector.shape_cast %621 : vector<8x128xf32> to vector<1x8x128xf32>
    tpu.vector_store %arg9[%622, %c0_178, %c0_179], %625 {strides = array<i32>} : memref<8x8x128xf32, #tpu.memory_space<vmem>>, vector<1x8x128xf32>,
    %c8_i32_180 = arith.constant 8 : i32
    %c1_181 = arith.constant 1 : index
    %c0_182 = arith.constant 0 : index
    %c0_183 = arith.constant 0 : index
    %626 = vector.load %arg10[%c1_181, %c0_182, %c0_183] : memref<2x8x128xf32, #tpu.memory_space<vmem>>, vector<1x8x128xf32>
    %627 = vector.shape_cast %626 : vector<1x8x128xf32> to vector<8x128xf32>
    %628 = vector.shape_cast %621 : vector<8x128xf32> to vector<1x8x128xf32>
    tpu.vector_store %arg10[%c1_181, %c0_182, %c0_183], %628 {strides = array<i32>} : memref<2x8x128xf32, #tpu.memory_space<vmem>>, vector<1x8x128xf32>,
    return
  }
  func.func @transform_0(%arg0: i32, %arg1: i32) -> (i32, i32, i32) {
    %c0_i32 = arith.constant 0 : i32
    %c0_i32_0 = arith.constant 0 : i32
    return %arg1, %arg0, %c0_i32 : i32, i32, i32
  }
  func.func @transform_1(%arg0: i32, %arg1: i32) -> (i32, i32) {
    %c0_i32 = arith.constant 0 : i32
    %c0_i32_0 = arith.constant 0 : i32
    %c0_i32_1 = arith.constant 0 : i32
    return %c0_i32, %c0_i32_0 : i32, i32
  }
  func.func @transform_2(%arg0: i32, %arg1: i32) -> (i32, i32) {
    %c0_i32 = arith.constant 0 : i32
    %c0_i32_0 = arith.constant 0 : i32
    %c0_i32_1 = arith.constant 0 : i32
    return %c0_i32, %c0_i32_0 : i32, i32
  }
  func.func @transform_3(%arg0: i32, %arg1: i32) -> (i32, i32, i32) {
    %c0_i32 = arith.constant 0 : i32
    %c0_i32_0 = arith.constant 0 : i32
    %c0_i32_1 = arith.constant 0 : i32
    %c0_i32_2 = arith.constant 0 : i32
    return %c0_i32, %c0_i32_0, %c0_i32_1 : i32, i32, i32
  }
  func.func @transform_4(%arg0: i32, %arg1: i32) -> (i32, i32, i32) {
    %c0_i32 = arith.constant 0 : i32
    %c0_i32_0 = arith.constant 0 : i32
    %c0_i32_1 = arith.constant 0 : i32
    %c0_i32_2 = arith.constant 0 : i32
    return %c0_i32, %c0_i32_0, %c0_i32_1 : i32, i32, i32
  }
  func.func @transform_5(%arg0: i32, %arg1: i32) -> (i32, i32, i32) {
    %c0_i32 = arith.constant 0 : i32
    %c0_i32_0 = arith.constant 0 : i32
    %c0_i32_1 = arith.constant 0 : i32
    %c0_i32_2 = arith.constant 0 : i32
    return %c0_i32, %c0_i32_0, %c0_i32_1 : i32, i32, i32
  }
  func.func @transform_6(%arg0: i32, %arg1: i32) -> (i32, i32, i32) {
    %c0_i32 = arith.constant 0 : i32
    %c0_i32_0 = arith.constant 0 : i32
    %c0_i32_1 = arith.constant 0 : i32
    %c0_i32_2 = arith.constant 0 : i32
    return %c0_i32, %c0_i32_0, %c0_i32_1 : i32, i32, i32
  }
  func.func @transform_7(%arg0: i32, %arg1: i32) -> (i32, i32, i32) {
    %c0_i32 = arith.constant 0 : i32
    %c0_i32_0 = arith.constant 0 : i32
    return %arg1, %arg0, %c0_i32 : i32, i32, i32
  }
}

</mosaic_0001>

<llo_original>
// kernel: tpu_custom_call.1
$region0: #{tpu_custom_call.1}
  #allocation0 [shape = 'u32[]', space=smem, size = 0x4, offset = 0x4, fixed_abs, tag = 'smem constant byte address 0x4 - core index']
  #allocation1 [shape = 'u32[72,128]{1,0:T(1,128)}', space=vmem, size = 0x9000, scoped, tag = 'internal scratch']
  #allocation2 [shape = 'f32[2,8,128]{2,1,0:T(8,128)}', space=vmem, size = 0x2000, scoped, tag = 'scratch operand']
  #allocation3 [shape = 'bf16[8,8,128]{2,1,0:T(8,128)(2,1)}', space=vmem, size = 0x4000, scoped, tag = 'scratch operand']
  #allocation4 [shape = 'f32[8,8,384]{2,1,0:T(8,128)}', space=vmem, size = 0x18000, scoped, tag = 'scratch operand']
  %s0 = inlined_call_operand.hbm [shape: bf16[8,8,128], index: 0, kind: input, shape index: {}]
  %s1 = inlined_call_operand.hbm [shape: bf16[128,384], index: 1, kind: input, shape index: {}]
  %s2 = inlined_call_operand.hbm [shape: f32[1,384], index: 2, kind: input, shape index: {}]
  %s3 = inlined_call_operand.hbm [shape: bf16[1,128,384], index: 3, kind: input, shape index: {}]
  %s4 = inlined_call_operand.vmem [shape: f32[1,1,384], index: 4, kind: input, shape index: {}]
  %s5 = inlined_call_operand.hbm [shape: bf16[2,128,384], index: 5, kind: input, shape index: {}]
  %s6 = inlined_call_operand.hbm [shape: f32[2,1,384], index: 6, kind: input, shape index: {}]
  %s7 = inlined_call_operand.hbm [shape: f32[8,8,128], index: 7, kind: output, shape index: {}]
  %s8 = sld [smem:[#allocation0]]
  $region66: #{tpu_custom_call.1} parent=0
    _
  %s10 = ssub.s32 1, %s8
  %s11 = scalar_select 0, %s10, %s8
  $region1: #{tpu_custom_call.1} parent=0
    #allocation5 [shape = 'u8[16384]{0}', space=vmem, size = 0x4000, scoped, tag = 'input window, operand 0, single buffered']
    #allocation6 [shape = 's32[1]{0}', space=sflag, size = 0x4, scoped, tag = 'scoped memory for tpu_custom_call.1']
    #allocation7 [shape = 's32[1]{0}', space=sflag, size = 0x4, scoped, tag = 'scoped memory for tpu_custom_call.1']
    #allocation8 [shape = 'u8[98304]{0}', space=vmem, size = 0x18000, scoped, tag = 'input window, operand 1, single buffered']
    #allocation9 [shape = 's32[1]{0}', space=sflag, size = 0x4, scoped, tag = 'scoped memory for tpu_custom_call.1']
    #allocation10 [shape = 'u8[1536]{0}', space=vmem, size = 0x800, scoped, tag = 'input window, operand 2, single buffered']
    #allocation11 [shape = 'u8[98304]{0}', space=vmem, size = 0x18000, scoped, tag = 'input window, operand 3, single buffered']
    #allocation12 [shape = 's32[1]{0}', space=sflag, size = 0x4, scoped, tag = 'scoped memory for tpu_custom_call.1']
    #allocation13 [shape = 'u8[196608]{0}', space=vmem, size = 0x30000, scoped, tag = 'input window, operand 5, single buffered']
    #allocation14 [shape = 'u8[3072]{0}', space=vmem, size = 0xc00, scoped, tag = 'input window, operand 6, single buffered']
    #allocation15 [shape = 's32[1]{0}', space=sflag, size = 0x4, scoped, tag = 'scoped memory for tpu_custom_call.1']
    #allocation16 [shape = 'u8[32768]{0}', space=vmem, size = 0x8000, scoped, tag = 'output window, operand 0, single buffered']
    %12 = vsyncpa [#allocation6], 0
    %13 = vsyncpa [#allocation9], 0
    %14 = vsyncpa [#allocation12], 0
    %15 = vsyncpa [#allocation15], 0
    %16 = vsyncpa [#allocation7], 0
    // Predicated region
    $region2: #{tpu_custom_call.1} parent=1 // pred_check
      _
    $region3: #{tpu_custom_call.1} parent=1 // pred_check_branch
      %18 = sbr.rel (0) target = $region5
    $region4: #{tpu_custom_call.1} parent=1 // pred_region
      %20 = vsyncadd [#allocation6], 0
      %s21 = sshll.u32 %s0, 4
      %s22 = int_to_ptr.hbm [resolvable:$true] %s21
      %s23 = sshll.u32 [#allocation5], 4
      %s24 = int_to_ptr.vmem [resolvable:$true] %s23
      %29 = dma.hbm_to_vmem [thread:$0]  %s22, 512, %s24, [#allocation6], 64, 64, 4
    $region5: #{tpu_custom_call.1} parent=1 // pred_fallthru
      _
    // Predicated region
    $region6: #{tpu_custom_call.1} parent=1 // pred_check
      _
    $region7: #{tpu_custom_call.1} parent=1 // pred_check_branch
      %31 = sbr.rel (0) target = $region9
    $region8: #{tpu_custom_call.1} parent=1 // pred_region
      %33 = vsyncadd [#allocation9], 0
      %s34 = sshll.u32 %s1, 4
      %s35 = int_to_ptr.hbm [resolvable:$true] %s34
      %s36 = sshll.u32 [#allocation8], 4
      %s37 = int_to_ptr.vmem [resolvable:$true] %s36
      %42 = dma.hbm_to_vmem [thread:$0]  %s35, 3072, %s37, [#allocation9], 192, 192, 12
    $region9: #{tpu_custom_call.1} parent=1 // pred_fallthru
      _
    // Predicated region
    $region10: #{tpu_custom_call.1} parent=1 // pred_check
      _
    $region11: #{tpu_custom_call.1} parent=1 // pred_check_branch
      %44 = sbr.rel (0) target = $region13
    $region12: #{tpu_custom_call.1} parent=1 // pred_region
      %46 = vsyncadd [#allocation9], 0
      %s48 = sshll.u32 %s2, 4
      %s49 = int_to_ptr.hbm [resolvable:$true] %s48
      %s50 = sshll.u32 [#allocation10], 4
      %s51 = int_to_ptr.vmem [resolvable:$true] %s50
      %53 = dma.hbm_to_vmem [thread:$0]  %s49, 48, %s51, [#allocation9]
    $region13: #{tpu_custom_call.1} parent=1 // pred_fallthru
      _
    // Predicated region
    $region14: #{tpu_custom_call.1} parent=1 // pred_check
      _
    $region15: #{tpu_custom_call.1} parent=1 // pred_check_branch
      %55 = sbr.rel (0) target = $region17
    $region16: #{tpu_custom_call.1} parent=1 // pred_region
      %57 = vsyncadd [#allocation12], 0
      %s58 = sshll.u32 %s3, 4
      %s59 = int_to_ptr.hbm [resolvable:$true] %s58
      %s60 = sshll.u32 [#allocation11], 4
      %s61 = int_to_ptr.vmem [resolvable:$true] %s60
      %66 = dma.hbm_to_vmem [thread:$0]  %s59, 3072, %s61, [#allocation12], 192, 192, 12
    $region17: #{tpu_custom_call.1} parent=1 // pred_fallthru
      _
    // Predicated region
    $region18: #{tpu_custom_call.1} parent=1 // pred_check
      _
    $region19: #{tpu_custom_call.1} parent=1 // pred_check_branch
      %68 = sbr.rel (0) target = $region21
    $region20: #{tpu_custom_call.1} parent=1 // pred_region
      _
    $region21: #{tpu_custom_call.1} parent=1 // pred_fallthru
      _
    // Predicated region
    $region22: #{tpu_custom_call.1} parent=1 // pred_check
      _
    $region23: #{tpu_custom_call.1} parent=1 // pred_check_branch
      %70 = sbr.rel (0) target = $region25
    $region24: #{tpu_custom_call.1} parent=1 // pred_region
      %72 = vsyncadd [#allocation12], 0
      %s73 = sshll.u32 %s5, 4
      %s74 = int_to_ptr.hbm [resolvable:$true] %s73
      %s75 = sshll.u32 [#allocation13], 4
      %s76 = int_to_ptr.vmem [resolvable:$true] %s75
      %81 = dma.hbm_to_vmem [thread:$0]  %s74, 6144, %s76, [#allocation12], 192, 192, 12
    $region25: #{tpu_custom_call.1} parent=1 // pred_fallthru
      _
    // Predicated region
    $region26: #{tpu_custom_call.1} parent=1 // pred_check
      _
    $region27: #{tpu_custom_call.1} parent=1 // pred_check_branch
      %83 = sbr.rel (0) target = $region29
    $region28: #{tpu_custom_call.1} parent=1 // pred_region
      %85 = vsyncadd [#allocation15], 0
      %s86 = sshll.u32 %s6, 4
      %s87 = int_to_ptr.hbm [resolvable:$true] %s86
      %s88 = sshll.u32 [#allocation14], 4
      %s89 = int_to_ptr.vmem [resolvable:$true] %s88
      %94 = dma.hbm_to_vmem [thread:$0]  %s87, 96, %s89, [#allocation15], 48, 48, 3
    $region29: #{tpu_custom_call.1} parent=1 // pred_fallthru
      _
    // Predicated region
    $region30: #{tpu_custom_call.1} parent=1 // pred_check
      _
    $region31: #{tpu_custom_call.1} parent=1 // pred_check_branch
      %96 = sbr.rel (0) target = $region33
    $region32: #{tpu_custom_call.1} parent=1 // pred_region
      %98 = dma.done [#allocation6], 512
    $region33: #{tpu_custom_call.1} parent=1 // pred_fallthru
      _
    // Predicated region
    $region34: #{tpu_custom_call.1} parent=1 // pred_check
      _
    $region35: #{tpu_custom_call.1} parent=1 // pred_check_branch
      %100 = sbr.rel (0) target = $region37
    $region36: #{tpu_custom_call.1} parent=1 // pred_region
      %102 = dma.done [#allocation9], 3072
    $region37: #{tpu_custom_call.1} parent=1 // pred_fallthru
      _
    // Predicated region
    $region38: #{tpu_custom_call.1} parent=1 // pred_check
      _
    $region39: #{tpu_custom_call.1} parent=1 // pred_check_branch
      %104 = sbr.rel (0) target = $region41
    $region40: #{tpu_custom_call.1} parent=1 // pred_region
      %106 = dma.done [#allocation9], 48
    $region41: #{tpu_custom_call.1} parent=1 // pred_fallthru
      _
    // Predicated region
    $region42: #{tpu_custom_call.1} parent=1 // pred_check
      _
    $region43: #{tpu_custom_call.1} parent=1 // pred_check_branch
      %108 = sbr.rel (0) target = $region45
    $region44: #{tpu_custom_call.1} parent=1 // pred_region
      %110 = dma.done [#allocation12], 3072
    $region45: #{tpu_custom_call.1} parent=1 // pred_fallthru
      _
    // Predicated region
    $region46: #{tpu_custom_call.1} parent=1 // pred_check
      _
    $region47: #{tpu_custom_call.1} parent=1 // pred_check_branch
      %112 = sbr.rel (0) target = $region49
    $region48: #{tpu_custom_call.1} parent=1 // pred_region
      %114 = dma.done [#allocation12], 6144
    $region49: #{tpu_custom_call.1} parent=1 // pred_fallthru
      _
    // Predicated region
    $region50: #{tpu_custom_call.1} parent=1 // pred_check
      _
    $region51: #{tpu_custom_call.1} parent=1 // pred_check_branch
      %116 = sbr.rel (0) target = $region53
    $region52: #{tpu_custom_call.1} parent=1 // pred_region
      %118 = dma.done [#allocation15], 96
    $region53: #{tpu_custom_call.1} parent=1 // pred_fallthru
      _
    %p119 = scmp.eq.s32.totalorder 0, 0
    // Predicated region
    $region54: #{tpu_custom_call.1} parent=1 // pred_check
      %p120 = pneg %p119
    $region55: #{tpu_custom_call.1} parent=1 // pred_check_branch
      %122 = sbr.rel (%p120) target = $region57
    $region56: #{tpu_custom_call.1} parent=1 // pred_region
      %123 = vst [vmem:[#allocation2] sm:$0xff] 0.0
      %124 = vst [vmem:[#allocation2 + $0x8] sm:$0xff] 0.0
    $region57: #{tpu_custom_call.1} parent=1 // pred_fallthru
      _
    %v125 = vld [vmem:[#allocation5] sm:$0xf]
    %v126 = vld [vmem:[#allocation5 + $0x4] sm:$0xf]
    %v127 = vld [vmem:[#allocation5 + $0x8] sm:$0xf]
    %v128 = vld [vmem:[#allocation5 + $0xc] sm:$0xf]
    %v129 = vld [vmem:[#allocation5 + $0x10] sm:$0xf]
    %v130 = vld [vmem:[#allocation5 + $0x14] sm:$0xf]
    %v131 = vld [vmem:[#allocation5 + $0x18] sm:$0xf]
    %v132 = vld [vmem:[#allocation5 + $0x1c] sm:$0xf]
    %v133 = vld [vmem:[#allocation8] sm:$0xff]
    %v134 = vld [vmem:[#allocation8 + $0x8] sm:$0xf]
    %v135 = vld [vmem:[#allocation8 + $0xc] sm:$0xff]
    %v136 = vld [vmem:[#allocation8 + $0x14] sm:$0xf]
    %v137 = vld [vmem:[#allocation8 + $0x18] sm:$0xff]
    %v138 = vld [vmem:[#allocation8 + $0x20] sm:$0xf]
    %v139 = vld [vmem:[#allocation8 + $0x24] sm:$0xff]
    %v140 = vld [vmem:[#allocation8 + $0x2c] sm:$0xf]
    %v141 = vld [vmem:[#allocation8 + $0x30] sm:$0xff]
    %v142 = vld [vmem:[#allocation8 + $0x38] sm:$0xf]
    %v143 = vld [vmem:[#allocation8 + $0x3c] sm:$0xff]
    %v144 = vld [vmem:[#allocation8 + $0x44] sm:$0xf]
    %v145 = vld [vmem:[#allocation8 + $0x48] sm:$0xff]
    %v146 = vld [vmem:[#allocation8 + $0x50] sm:$0xf]
    %v147 = vld [vmem:[#allocation8 + $0x54] sm:$0xff]
    %v148 = vld [vmem:[#allocation8 + $0x5c] sm:$0xf]
    %v149 = vld [vmem:[#allocation8 + $0x60] sm:$0xff]
    %v150 = vld [vmem:[#allocation8 + $0x68] sm:$0xf]
    %v151 = vld [vmem:[#allocation8 + $0x6c] sm:$0xff]
    %v152 = vld [vmem:[#allocation8 + $0x74] sm:$0xf]
    %v153 = vld [vmem:[#allocation8 + $0x78] sm:$0xff]
    %v154 = vld [vmem:[#allocation8 + $0x80] sm:$0xf]
    %v155 = vld [vmem:[#allocation8 + $0x84] sm:$0xff]
    %v156 = vld [vmem:[#allocation8 + $0x8c] sm:$0xf]
    %v157 = vld [vmem:[#allocation8 + $0x90] sm:$0xff]
    %v158 = vld [vmem:[#allocation8 + $0x98] sm:$0xf]
    %v159 = vld [vmem:[#allocation8 + $0x9c] sm:$0xff]
    %v160 = vld [vmem:[#allocation8 + $0xa4] sm:$0xf]
    %v161 = vld [vmem:[#allocation8 + $0xa8] sm:$0xff]
    %v162 = vld [vmem:[#allocation8 + $0xb0] sm:$0xf]
    %v163 = vld [vmem:[#allocation8 + $0xb4] sm:$0xff]
    %v164 = vld [vmem:[#allocation8 + $0xbc] sm:$0xf]
    %v165 = vld [vmem:[#allocation10] sm:$0x7]
    %v167 = vperm.slane %v165, 0
    %v168 = vperm.slane %v165, 1
    %v169 = vperm.slane %v165, 2
    %v181 = vunpack.c.l.b16 %v125
    %v182 = vunpack.c.l.b16 %v126
    %v183 = vunpack.c.l.b16 %v127
    %v184 = vunpack.c.l.b16 %v128
    %v185 = vunpack.c.l.b16 %v129
    %v186 = vunpack.c.l.b16 %v130
    %v187 = vunpack.c.l.b16 %v131
    %v188 = vunpack.c.l.b16 %v132
    %v189 = vpack.c.b16 %v182, %v181
    %v190 = vpack.c.b16 %v184, %v183
    %v191 = vpack.c.b16 %v186, %v185
    %v192 = vpack.c.b16 %v188, %v187
    %v229 = vunpack.c.l.b16 %v133
    %v230 = vunpack.c.h.b16 %v133
    %v231 = vunpack.c.l.b16 %v134
    %v232 = vunpack.c.l.b16 %v135
    %v233 = vunpack.c.h.b16 %v135
    %v234 = vunpack.c.l.b16 %v136
    %v235 = vunpack.c.l.b16 %v137
    %v236 = vunpack.c.h.b16 %v137
    %v237 = vunpack.c.l.b16 %v138
    %v238 = vunpack.c.l.b16 %v139
    %v239 = vunpack.c.h.b16 %v139
    %v240 = vunpack.c.l.b16 %v140
    %v241 = vunpack.c.l.b16 %v141
    %v242 = vunpack.c.h.b16 %v141
    %v243 = vunpack.c.l.b16 %v142
    %v244 = vunpack.c.l.b16 %v143
    %v245 = vunpack.c.h.b16 %v143
    %v246 = vunpack.c.l.b16 %v144
    %v247 = vunpack.c.l.b16 %v145
    %v248 = vunpack.c.h.b16 %v145
    %v249 = vunpack.c.l.b16 %v146
    %v250 = vunpack.c.l.b16 %v147
    %v251 = vunpack.c.h.b16 %v147
    %v252 = vunpack.c.l.b16 %v148
    %v253 = vunpack.c.l.b16 %v149
    %v254 = vunpack.c.h.b16 %v149
    %v255 = vunpack.c.l.b16 %v150
    %v256 = vunpack.c.l.b16 %v151
    %v257 = vunpack.c.h.b16 %v151
    %v258 = vunpack.c.l.b16 %v152
    %v259 = vunpack.c.l.b16 %v153
    %v260 = vunpack.c.h.b16 %v153
    %v261 = vunpack.c.l.b16 %v154
    %v262 = vunpack.c.l.b16 %v155
    %v263 = vunpack.c.h.b16 %v155
    %v264 = vunpack.c.l.b16 %v156
    %v265 = vunpack.c.l.b16 %v157
    %v266 = vunpack.c.h.b16 %v157
    %v267 = vunpack.c.l.b16 %v158
    %v268 = vunpack.c.l.b16 %v159
    %v269 = vunpack.c.h.b16 %v159
    %v270 = vunpack.c.l.b16 %v160
    %v271 = vunpack.c.l.b16 %v161
    %v272 = vunpack.c.h.b16 %v161
    %v273 = vunpack.c.l.b16 %v162
    %v274 = vunpack.c.l.b16 %v163
    %v275 = vunpack.c.h.b16 %v163
    %v276 = vunpack.c.l.b16 %v164
    %v277 = vpack.c.b16 %v232, %v229
    %v278 = vpack.c.b16 %v233, %v230
    %v279 = vpack.c.b16 %v234, %v231
    %v280 = vpack.c.b16 %v238, %v235
    %v281 = vpack.c.b16 %v239, %v236
    %v282 = vpack.c.b16 %v240, %v237
    %v283 = vpack.c.b16 %v244, %v241
    %v284 = vpack.c.b16 %v245, %v242
    %v285 = vpack.c.b16 %v246, %v243
    %v286 = vpack.c.b16 %v250, %v247
    %v287 = vpack.c.b16 %v251, %v248
    %v288 = vpack.c.b16 %v252, %v249
    %v289 = vpack.c.b16 %v256, %v253
    %v290 = vpack.c.b16 %v257, %v254
    %v291 = vpack.c.b16 %v258, %v255
    %v292 = vpack.c.b16 %v262, %v259
    %v293 = vpack.c.b16 %v263, %v260
    %v294 = vpack.c.b16 %v264, %v261
    %v295 = vpack.c.b16 %v268, %v265
    %v296 = vpack.c.b16 %v269, %v266
    %v297 = vpack.c.b16 %v270, %v267
    %v298 = vpack.c.b16 %v274, %v271
    %v299 = vpack.c.b16 %v275, %v272
    %v300 = vpack.c.b16 %v276, %v273
    %325 = vmatpush.bf16.msra.mxu0 %v298
    %326 = vmatpush.bf16.msra.mxu0 %v295
    %327 = vmatpush.bf16.msra.mxu0 %v292
    %328 = vmatpush.bf16.msra.mxu0 %v289
    %329 = vmatpush.bf16.msra.mxu0 %v286
    %330 = vmatpush.bf16.msra.mxu0 %v283
    %331 = vmatpush.bf16.msra.mxu0 %v280
    %332 = vmatpush.bf16.msra.mxu0 %v277
    %333 = vmatmul.bf16.gmra.mxu0 %v189
    %v334 = vpop.f32.mrf.mxu0
    %v335 = vadd.f32 %v167, %v334
    %v336 = vpop.f32.mrf.mxu0
    %v337 = vadd.f32 %v167, %v336
    %338 = vmatmul.bf16.gmra.mxu0 %v190
    %v339 = vpop.f32.mrf.mxu0
    %v340 = vadd.f32 %v167, %v339
    %v341 = vpop.f32.mrf.mxu0
    %v342 = vadd.f32 %v167, %v341
    %343 = vmatmul.bf16.gmra.mxu0 %v191
    %v344 = vpop.f32.mrf.mxu0
    %v345 = vadd.f32 %v167, %v344
    %v346 = vpop.f32.mrf.mxu0
    %v347 = vadd.f32 %v167, %v346
    %348 = vmatmul.bf16.gmra.mxu0 %v192
    %v349 = vpop.f32.mrf.mxu0
    %v350 = vadd.f32 %v167, %v349
    %v351 = vpop.f32.mrf.mxu0
    %v352 = vadd.f32 %v167, %v351
    %353 = vdwg.mxu0
    %354 = vmatpush.bf16.msra.mxu0 %v299
    %355 = vmatpush.bf16.msra.mxu0 %v296
    %356 = vmatpush.bf16.msra.mxu0 %v293
    %357 = vmatpush.bf16.msra.mxu0 %v290
    %358 = vmatpush.bf16.msra.mxu0 %v287
    %359 = vmatpush.bf16.msra.mxu0 %v284
    %360 = vmatpush.bf16.msra.mxu0 %v281
    %361 = vmatpush.bf16.msra.mxu0 %v278
    %362 = vmatmul.bf16.gmra.mxu0 %v189
    %v363 = vpop.f32.mrf.mxu0
    %v364 = vadd.f32 %v168, %v363
    %v365 = vpop.f32.mrf.mxu0
    %v366 = vadd.f32 %v168, %v365
    %367 = vmatmul.bf16.gmra.mxu0 %v190
    %v368 = vpop.f32.mrf.mxu0
    %v369 = vadd.f32 %v168, %v368
    %v370 = vpop.f32.mrf.mxu0
    %v371 = vadd.f32 %v168, %v370
    %372 = vmatmul.bf16.gmra.mxu0 %v191
    %v373 = vpop.f32.mrf.mxu0
    %v374 = vadd.f32 %v168, %v373
    %v375 = vpop.f32.mrf.mxu0
    %v376 = vadd.f32 %v168, %v375
    %377 = vmatmul.bf16.gmra.mxu0 %v192
    %v378 = vpop.f32.mrf.mxu0
    %v379 = vadd.f32 %v168, %v378
    %v380 = vpop.f32.mrf.mxu0
    %v381 = vadd.f32 %v168, %v380
    %382 = vdwg.mxu0
    %383 = vmatpush.bf16.msra.mxu0 %v300
    %384 = vmatpush.bf16.msra.mxu0 %v297
    %385 = vmatpush.bf16.msra.mxu0 %v294
    %386 = vmatpush.bf16.msra.mxu0 %v291
    %387 = vmatpush.bf16.msra.mxu0 %v288
    %388 = vmatpush.bf16.msra.mxu0 %v285
    %389 = vmatpush.bf16.msra.mxu0 %v282
    %390 = vmatpush.bf16.msra.mxu0 %v279
    %391 = vmatmul.bf16.gmra.mxu0 %v189
    %v392 = vpop.f32.mrf.mxu0
    %v393 = vadd.f32 %v169, %v392
    %v394 = vpop.f32.mrf.mxu0
    %v395 = vadd.f32 %v169, %v394
    %396 = vmatmul.bf16.gmra.mxu0 %v190
    %v397 = vpop.f32.mrf.mxu0
    %v398 = vadd.f32 %v169, %v397
    %v399 = vpop.f32.mrf.mxu0
    %v400 = vadd.f32 %v169, %v399
    %401 = vmatmul.bf16.gmra.mxu0 %v191
    %v402 = vpop.f32.mrf.mxu0
    %v403 = vadd.f32 %v169, %v402
    %v404 = vpop.f32.mrf.mxu0
    %v405 = vadd.f32 %v169, %v404
    %406 = vmatmul.bf16.gmra.mxu0 %v192
    %v407 = vpop.f32.mrf.mxu0
    %v408 = vadd.f32 %v169, %v407
    %v409 = vpop.f32.mrf.mxu0
    %v410 = vadd.f32 %v169, %v409
    %411 = vdwg.mxu0
    %412 = vst [vmem:[#allocation4] sm:$0xff] %v335
    %413 = vst [vmem:[#allocation4 + $0x8] sm:$0xff] %v364
    %414 = vst [vmem:[#allocation4 + $0x10] sm:$0xff] %v393
    %415 = vst [vmem:[#allocation4 + $0x18] sm:$0xff] %v337
    %416 = vst [vmem:[#allocation4 + $0x20] sm:$0xff] %v366
    %417 = vst [vmem:[#allocation4 + $0x28] sm:$0xff] %v395
    %418 = vst [vmem:[#allocation4 + $0x30] sm:$0xff] %v340
    %419 = vst [vmem:[#allocation4 + $0x38] sm:$0xff] %v369
    %420 = vst [vmem:[#allocation4 + $0x40] sm:$0xff] %v398
    %421 = vst [vmem:[#allocation4 + $0x48] sm:$0xff] %v342
    %422 = vst [vmem:[#allocation4 + $0x50] sm:$0xff] %v371
    %423 = vst [vmem:[#allocation4 + $0x58] sm:$0xff] %v400
    %424 = vst [vmem:[#allocation4 + $0x60] sm:$0xff] %v345
    %425 = vst [vmem:[#allocation4 + $0x68] sm:$0xff] %v374
    %426 = vst [vmem:[#allocation4 + $0x70] sm:$0xff] %v403
    %427 = vst [vmem:[#allocation4 + $0x78] sm:$0xff] %v347
    %428 = vst [vmem:[#allocation4 + $0x80] sm:$0xff] %v376
    %429 = vst [vmem:[#allocation4 + $0x88] sm:$0xff] %v405
    %430 = vst [vmem:[#allocation4 + $0x90] sm:$0xff] %v350
    %431 = vst [vmem:[#allocation4 + $0x98] sm:$0xff] %v379
    %432 = vst [vmem:[#allocation4 + $0xa0] sm:$0xff] %v408
    %433 = vst [vmem:[#allocation4 + $0xa8] sm:$0xff] %v352
    %434 = vst [vmem:[#allocation4 + $0xb0] sm:$0xff] %v381
    %435 = vst [vmem:[#allocation4 + $0xb8] sm:$0xff] %v410
    %v436 = vld [vmem:[#allocation13] sm:$0xff]
    %v437 = vld [vmem:[#allocation13 + $0x8] sm:$0xf]
    %v438 = vld [vmem:[#allocation13 + $0xc] sm:$0xff]
    %v439 = vld [vmem:[#allocation13 + $0x14] sm:$0xf]
    %v440 = vld [vmem:[#allocation13 + $0x18] sm:$0xff]
    %v441 = vld [vmem:[#allocation13 + $0x20] sm:$0xf]
    %v442 = vld [vmem:[#allocation13 + $0x24] sm:$0xff]
    %v443 = vld [vmem:[#allocation13 + $0x2c] sm:$0xf]
    %v444 = vld [vmem:[#allocation13 + $0x30] sm:$0xff]
    %v445 = vld [vmem:[#allocation13 + $0x38] sm:$0xf]
    %v446 = vld [vmem:[#allocation13 + $0x3c] sm:$0xff]
    %v447 = vld [vmem:[#allocation13 + $0x44] sm:$0xf]
    %v448 = vld [vmem:[#allocation13 + $0x48] sm:$0xff]
    %v449 = vld [vmem:[#allocation13 + $0x50] sm:$0xf]
    %v450 = vld [vmem:[#allocation13 + $0x54] sm:$0xff]
    %v451 = vld [vmem:[#allocation13 + $0x5c] sm:$0xf]
    %v452 = vld [vmem:[#allocation13 + $0x60] sm:$0xff]
    %v453 = vld [vmem:[#allocation13 + $0x68] sm:$0xf]
    %v454 = vld [vmem:[#allocation13 + $0x6c] sm:$0xff]
    %v455 = vld [vmem:[#allocation13 + $0x74] sm:$0xf]
    %v456 = vld [vmem:[#allocation13 + $0x78] sm:$0xff]
    %v457 = vld [vmem:[#allocation13 + $0x80] sm:$0xf]
    %v458 = vld [vmem:[#allocation13 + $0x84] sm:$0xff]
    %v459 = vld [vmem:[#allocation13 + $0x8c] sm:$0xf]
    %v460 = vld [vmem:[#allocation13 + $0x90] sm:$0xff]
    %v461 = vld [vmem:[#allocation13 + $0x98] sm:$0xf]
    %v462 = vld [vmem:[#allocation13 + $0x9c] sm:$0xff]
    %v463 = vld [vmem:[#allocation13 + $0xa4] sm:$0xf]
    %v464 = vld [vmem:[#allocation13 + $0xa8] sm:$0xff]
    %v465 = vld [vmem:[#allocation13 + $0xb0] sm:$0xf]
    %v466 = vld [vmem:[#allocation13 + $0xb4] sm:$0xff]
    %v467 = vld [vmem:[#allocation13 + $0xbc] sm:$0xf]
    %v468 = vld [vmem:[#allocation14] sm:$0x7]
    %v470 = vperm.slane %v468, 0
    %v471 = vperm.slane %v468, 1
    %v472 = vperm.slane %v468, 2
    %v476 = vld [vmem:[#allocation2] sm:$0xff]
    %v477 = vld [vmem:[#allocation4] sm:$0xff]
    %v478 = vld [vmem:[#allocation4 + $0x8] sm:$0xff]
    %v479 = vld [vmem:[#allocation4 + $0x10] sm:$0xff]
    %v480 = vpack.c.bf16 %v476, %v476
    %v513 = vunpack.c.l.b16 %v436
    %v514 = vunpack.c.h.b16 %v436
    %v515 = vunpack.c.l.b16 %v437
    %v516 = vunpack.c.l.b16 %v438
    %v517 = vunpack.c.h.b16 %v438
    %v518 = vunpack.c.l.b16 %v439
    %v519 = vunpack.c.l.b16 %v440
    %v520 = vunpack.c.h.b16 %v440
    %v521 = vunpack.c.l.b16 %v441
    %v522 = vunpack.c.l.b16 %v442
    %v523 = vunpack.c.h.b16 %v442
    %v524 = vunpack.c.l.b16 %v443
    %v525 = vunpack.c.l.b16 %v444
    %v526 = vunpack.c.h.b16 %v444
    %v527 = vunpack.c.l.b16 %v445
    %v528 = vunpack.c.l.b16 %v446
    %v529 = vunpack.c.h.b16 %v446
    %v530 = vunpack.c.l.b16 %v447
    %v531 = vunpack.c.l.b16 %v448
    %v532 = vunpack.c.h.b16 %v448
    %v533 = vunpack.c.l.b16 %v449
    %v534 = vunpack.c.l.b16 %v450
    %v535 = vunpack.c.h.b16 %v450
    %v536 = vunpack.c.l.b16 %v451
    %v537 = vunpack.c.l.b16 %v452
    %v538 = vunpack.c.h.b16 %v452
    %v539 = vunpack.c.l.b16 %v453
    %v540 = vunpack.c.l.b16 %v454
    %v541 = vunpack.c.h.b16 %v454
    %v542 = vunpack.c.l.b16 %v455
    %v543 = vunpack.c.l.b16 %v456
    %v544 = vunpack.c.h.b16 %v456
    %v545 = vunpack.c.l.b16 %v457
    %v546 = vunpack.c.l.b16 %v458
    %v547 = vunpack.c.h.b16 %v458
    %v548 = vunpack.c.l.b16 %v459
    %v549 = vunpack.c.l.b16 %v460
    %v550 = vunpack.c.h.b16 %v460
    %v551 = vunpack.c.l.b16 %v461
    %v552 = vunpack.c.l.b16 %v462
    %v553 = vunpack.c.h.b16 %v462
    %v554 = vunpack.c.l.b16 %v463
    %v555 = vunpack.c.l.b16 %v464
    %v556 = vunpack.c.h.b16 %v464
    %v557 = vunpack.c.l.b16 %v465
    %v558 = vunpack.c.l.b16 %v466
    %v559 = vunpack.c.h.b16 %v466
    %v560 = vunpack.c.l.b16 %v467
    %v561 = vpack.c.b16 %v516, %v513
    %v562 = vpack.c.b16 %v517, %v514
    %v563 = vpack.c.b16 %v518, %v515
    %v564 = vpack.c.b16 %v522, %v519
    %v565 = vpack.c.b16 %v523, %v520
    %v566 = vpack.c.b16 %v524, %v521
    %v567 = vpack.c.b16 %v528, %v525
    %v568 = vpack.c.b16 %v529, %v526
    %v569 = vpack.c.b16 %v530, %v527
    %v570 = vpack.c.b16 %v534, %v531
    %v571 = vpack.c.b16 %v535, %v532
    %v572 = vpack.c.b16 %v536, %v533
    %v573 = vpack.c.b16 %v540, %v537
    %v574 = vpack.c.b16 %v541, %v538
    %v575 = vpack.c.b16 %v542, %v539
    %v576 = vpack.c.b16 %v546, %v543
    %v577 = vpack.c.b16 %v547, %v544
    %v578 = vpack.c.b16 %v548, %v545
    %v579 = vpack.c.b16 %v552, %v549
    %v580 = vpack.c.b16 %v553, %v550
    %v581 = vpack.c.b16 %v554, %v551
    %v582 = vpack.c.b16 %v558, %v555
    %v583 = vpack.c.b16 %v559, %v556
    %v584 = vpack.c.b16 %v560, %v557
    %609 = vmatpush.bf16.msra.mxu0 %v582
    %610 = vmatpush.bf16.msra.mxu0 %v579
    %611 = vmatpush.bf16.msra.mxu0 %v576
    %612 = vmatpush.bf16.msra.mxu0 %v573
    %613 = vmatpush.bf16.msra.mxu0 %v570
    %614 = vmatpush.bf16.msra.mxu0 %v567
    %615 = vmatpush.bf16.msra.mxu0 %v564
    %616 = vmatpush.bf16.msra.mxu0 %v561
    %617 = vmatmul.bf16.gmra.mxu0 %v480
    %v618 = vpop.f32.mrf.mxu0
    %v619 = vadd.f32 %v470, %v618
    %v620 = vpop.f32.mrf.mxu0
    %621 = vdwg.mxu0
    %622 = vmatpush.bf16.msra.mxu0 %v583
    %623 = vmatpush.bf16.msra.mxu0 %v580
    %624 = vmatpush.bf16.msra.mxu0 %v577
    %625 = vmatpush.bf16.msra.mxu0 %v574
    %626 = vmatpush.bf16.msra.mxu0 %v571
    %627 = vmatpush.bf16.msra.mxu0 %v568
    %628 = vmatpush.bf16.msra.mxu0 %v565
    %629 = vmatpush.bf16.msra.mxu0 %v562
    %630 = vmatmul.bf16.gmra.mxu0 %v480
    %v631 = vpop.f32.mrf.mxu0
    %v632 = vadd.f32 %v471, %v631
    %v633 = vpop.f32.mrf.mxu0
    %634 = vdwg.mxu0
    %635 = vmatpush.bf16.msra.mxu0 %v584
    %636 = vmatpush.bf16.msra.mxu0 %v581
    %637 = vmatpush.bf16.msra.mxu0 %v578
    %638 = vmatpush.bf16.msra.mxu0 %v575
    %639 = vmatpush.bf16.msra.mxu0 %v572
    %640 = vmatpush.bf16.msra.mxu0 %v569
    %641 = vmatpush.bf16.msra.mxu0 %v566
    %642 = vmatpush.bf16.msra.mxu0 %v563
    %643 = vmatmul.bf16.gmra.mxu0 %v480
    %v644 = vpop.f32.mrf.mxu0
    %v645 = vadd.f32 %v472, %v644
    %v646 = vpop.f32.mrf.mxu0
    %647 = vdwg.mxu0
    %v648 = vadd.f32 %v477, %v619
    %v649 = vxor.u32 %v648, 2147483648
    %v650 = vmul.f32 %v649, 1.442695
    %v651 = vpow.pop %v650
    %v652 = vadd.f32 %v651, 1.0
    %v653 = vrcp.pop %v652
    %v654 = vmul.f32 %v652, %v653
    %v655 = vsub.f32 1.0, %v654
    %v656 = vmul.f32 %v653, %v655
    %v657 = vadd.f32 %v653, %v656
    %vm658 = vweird.f32 %v652
    %vm659 = vweird.f32 %v653
    %vm660 = vmor %vm658, %vm659
    %v661 = vsel %vm660, %v653, %v657
    %v662 = vand.u32 2147483647, %v652
    %vm663 = vcmp.eq.f32.partialorder %v662, 8.507059e+37
    %v664 = vand.u32 %v652, 2147483648
    %v665 = vor.u32 1.1754944e-38, %v664
    %v666 = vsel %vm663, %v665, %v661
    %v667 = vmul.f32 1.0, %v666
    %v668 = vadd.f32 %v478, %v632
    %v669 = vxor.u32 %v668, 2147483648
    %v670 = vmul.f32 %v669, 1.442695
    %v671 = vpow.pop %v670
    %v672 = vadd.f32 %v671, 1.0
    %v673 = vrcp.pop %v672
    %v674 = vmul.f32 %v672, %v673
    %v675 = vsub.f32 1.0, %v674
    %v676 = vmul.f32 %v673, %v675
    %v677 = vadd.f32 %v673, %v676
    %vm678 = vweird.f32 %v672
    %vm679 = vweird.f32 %v673
    %vm680 = vmor %vm678, %vm679
    %v681 = vsel %vm680, %v673, %v677
    %v682 = vand.u32 2147483647, %v672
    %vm683 = vcmp.eq.f32.partialorder %v682, 8.507059e+37
    %v684 = vand.u32 %v672, 2147483648
    %v685 = vor.u32 1.1754944e-38, %v684
    %v686 = vsel %vm683, %v685, %v681
    %v687 = vmul.f32 1.0, %v686
    %v688 = vmul.f32 %v667, %v645
    %v689 = vadd.f32 %v479, %v688
    %v690 = vtanh.pop %v689
    %v691 = vsub.f32 1.0, %v687
    %v692 = vmul.f32 %v691, %v690
    %v693 = vmul.f32 %v687, %v476
    %v694 = vadd.f32 %v692, %v693
    %v695 = vpack.c.bf16 %v694, %v694
    %696 = vst [vmem:[#allocation3] sm:$0xf] %v695
    %s697 = scalar_lea.vmem [#allocation4], 24
    %v698 = vld [vmem:[%s697] sm:$0xff]
    %v699 = vld [vmem:[%s697 + $0x8] sm:$0xff]
    %v700 = vld [vmem:[%s697 + $0x10] sm:$0xff]
    %701 = vmatpush.bf16.msra.mxu0 %v582
    %702 = vmatpush.bf16.msra.mxu0 %v579
    %703 = vmatpush.bf16.msra.mxu0 %v576
    %704 = vmatpush.bf16.msra.mxu0 %v573
    %705 = vmatpush.bf16.msra.mxu0 %v570
    %706 = vmatpush.bf16.msra.mxu0 %v567
    %707 = vmatpush.bf16.msra.mxu0 %v564
    %708 = vmatpush.bf16.msra.mxu0 %v561
    %709 = vmatmul.bf16.gmra.mxu0 %v695
    %v710 = vpop.f32.mrf.mxu0
    %v711 = vadd.f32 %v470, %v710
    %v712 = vpop.f32.mrf.mxu0
    %713 = vdwg.mxu0
    %714 = vmatpush.bf16.msra.mxu0 %v583
    %715 = vmatpush.bf16.msra.mxu0 %v580
    %716 = vmatpush.bf16.msra.mxu0 %v577
    %717 = vmatpush.bf16.msra.mxu0 %v574
    %718 = vmatpush.bf16.msra.mxu0 %v571
    %719 = vmatpush.bf16.msra.mxu0 %v568
    %720 = vmatpush.bf16.msra.mxu0 %v565
    %721 = vmatpush.bf16.msra.mxu0 %v562
    %722 = vmatmul.bf16.gmra.mxu0 %v695
    %v723 = vpop.f32.mrf.mxu0
    %v724 = vadd.f32 %v471, %v723
    %v725 = vpop.f32.mrf.mxu0
    %726 = vdwg.mxu0
    %727 = vmatpush.bf16.msra.mxu0 %v584
    %728 = vmatpush.bf16.msra.mxu0 %v581
    %729 = vmatpush.bf16.msra.mxu0 %v578
    %730 = vmatpush.bf16.msra.mxu0 %v575
    %731 = vmatpush.bf16.msra.mxu0 %v572
    %732 = vmatpush.bf16.msra.mxu0 %v569
    %733 = vmatpush.bf16.msra.mxu0 %v566
    %734 = vmatpush.bf16.msra.mxu0 %v563
    %735 = vmatmul.bf16.gmra.mxu0 %v695
    %v736 = vpop.f32.mrf.mxu0
    %v737 = vadd.f32 %v472, %v736
    %v738 = vpop.f32.mrf.mxu0
    %739 = vdwg.mxu0
    %v740 = vadd.f32 %v698, %v711
    %v741 = vxor.u32 %v740, 2147483648
    %v742 = vmul.f32 %v741, 1.442695
    %v743 = vpow.pop %v742
    %v744 = vadd.f32 %v743, 1.0
    %v745 = vrcp.pop %v744
    %v746 = vmul.f32 %v744, %v745
    %v747 = vsub.f32 1.0, %v746
    %v748 = vmul.f32 %v745, %v747
    %v749 = vadd.f32 %v745, %v748
    %vm750 = vweird.f32 %v744
    %vm751 = vweird.f32 %v745
    %vm752 = vmor %vm750, %vm751
    %v753 = vsel %vm752, %v745, %v749
    %v754 = vand.u32 2147483647, %v744
    %vm755 = vcmp.eq.f32.partialorder %v754, 8.507059e+37
    %v756 = vand.u32 %v744, 2147483648
    %v757 = vor.u32 1.1754944e-38, %v756
    %v758 = vsel %vm755, %v757, %v753
    %v759 = vmul.f32 1.0, %v758
    %v760 = vadd.f32 %v699, %v724
    %v761 = vxor.u32 %v760, 2147483648
    %v762 = vmul.f32 %v761, 1.442695
    %v763 = vpow.pop %v762
    %v764 = vadd.f32 %v763, 1.0
    %v765 = vrcp.pop %v764
    %v766 = vmul.f32 %v764, %v765
    %v767 = vsub.f32 1.0, %v766
    %v768 = vmul.f32 %v765, %v767
    %v769 = vadd.f32 %v765, %v768
    %vm770 = vweird.f32 %v764
    %vm771 = vweird.f32 %v765
    %vm772 = vmor %vm770, %vm771
    %v773 = vsel %vm772, %v765, %v769
    %v774 = vand.u32 2147483647, %v764
    %vm775 = vcmp.eq.f32.partialorder %v774, 8.507059e+37
    %v776 = vand.u32 %v764, 2147483648
    %v777 = vor.u32 1.1754944e-38, %v776
    %v778 = vsel %vm775, %v777, %v773
    %v779 = vmul.f32 1.0, %v778
    %v780 = vmul.f32 %v759, %v737
    %v781 = vadd.f32 %v700, %v780
    %v782 = vtanh.pop %v781
    %v783 = vsub.f32 1.0, %v779
    %v784 = vmul.f32 %v783, %v782
    %v785 = vmul.f32 %v779, %v694
    %v786 = vadd.f32 %v784, %v785
    %v787 = vpack.c.bf16 %v786, %v786
    %s788 = scalar_lea.vmem [#allocation3], 4
    %789 = vst [vmem:[%s788] sm:$0xf] %v787
    %s790 = scalar_lea.vmem [#allocation4], 48
    %v791 = vld [vmem:[%s790] sm:$0xff]
    %v792 = vld [vmem:[%s790 + $0x8] sm:$0xff]
    %v793 = vld [vmem:[%s790 + $0x10] sm:$0xff]
    %794 = vmatpush.bf16.msra.mxu0 %v582
    %795 = vmatpush.bf16.msra.mxu0 %v579
    %796 = vmatpush.bf16.msra.mxu0 %v576
    %797 = vmatpush.bf16.msra.mxu0 %v573
    %798 = vmatpush.bf16.msra.mxu0 %v570
    %799 = vmatpush.bf16.msra.mxu0 %v567
    %800 = vmatpush.bf16.msra.mxu0 %v564
    %801 = vmatpush.bf16.msra.mxu0 %v561
    %802 = vmatmul.bf16.gmra.mxu0 %v787
    %v803 = vpop.f32.mrf.mxu0
    %v804 = vadd.f32 %v470, %v803
    %v805 = vpop.f32.mrf.mxu0
    %806 = vdwg.mxu0
    %807 = vmatpush.bf16.msra.mxu0 %v583
    %808 = vmatpush.bf16.msra.mxu0 %v580
    %809 = vmatpush.bf16.msra.mxu0 %v577
    %810 = vmatpush.bf16.msra.mxu0 %v574
    %811 = vmatpush.bf16.msra.mxu0 %v571
    %812 = vmatpush.bf16.msra.mxu0 %v568
    %813 = vmatpush.bf16.msra.mxu0 %v565
    %814 = vmatpush.bf16.msra.mxu0 %v562
    %815 = vmatmul.bf16.gmra.mxu0 %v787
    %v816 = vpop.f32.mrf.mxu0
    %v817 = vadd.f32 %v471, %v816
    %v818 = vpop.f32.mrf.mxu0
    %819 = vdwg.mxu0
    %820 = vmatpush.bf16.msra.mxu0 %v584
    %821 = vmatpush.bf16.msra.mxu0 %v581
    %822 = vmatpush.bf16.msra.mxu0 %v578
    %823 = vmatpush.bf16.msra.mxu0 %v575
    %824 = vmatpush.bf16.msra.mxu0 %v572
    %825 = vmatpush.bf16.msra.mxu0 %v569
    %826 = vmatpush.bf16.msra.mxu0 %v566
    %827 = vmatpush.bf16.msra.mxu0 %v563
    %828 = vmatmul.bf16.gmra.mxu0 %v787
    %v829 = vpop.f32.mrf.mxu0
    %v830 = vadd.f32 %v472, %v829
    %v831 = vpop.f32.mrf.mxu0
    %832 = vdwg.mxu0
    %v833 = vadd.f32 %v791, %v804
    %v834 = vxor.u32 %v833, 2147483648
    %v835 = vmul.f32 %v834, 1.442695
    %v836 = vpow.pop %v835
    %v837 = vadd.f32 %v836, 1.0
    %v838 = vrcp.pop %v837
    %v839 = vmul.f32 %v837, %v838
    %v840 = vsub.f32 1.0, %v839
    %v841 = vmul.f32 %v838, %v840
    %v842 = vadd.f32 %v838, %v841
    %vm843 = vweird.f32 %v837
    %vm844 = vweird.f32 %v838
    %vm845 = vmor %vm843, %vm844
    %v846 = vsel %vm845, %v838, %v842
    %v847 = vand.u32 2147483647, %v837
    %vm848 = vcmp.eq.f32.partialorder %v847, 8.507059e+37
    %v849 = vand.u32 %v837, 2147483648
    %v850 = vor.u32 1.1754944e-38, %v849
    %v851 = vsel %vm848, %v850, %v846
    %v852 = vmul.f32 1.0, %v851
    %v853 = vadd.f32 %v792, %v817
    %v854 = vxor.u32 %v853, 2147483648
    %v855 = vmul.f32 %v854, 1.442695
    %v856 = vpow.pop %v855
    %v857 = vadd.f32 %v856, 1.0
    %v858 = vrcp.pop %v857
    %v859 = vmul.f32 %v857, %v858
    %v860 = vsub.f32 1.0, %v859
    %v861 = vmul.f32 %v858, %v860
    %v862 = vadd.f32 %v858, %v861
    %vm863 = vweird.f32 %v857
    %vm864 = vweird.f32 %v858
    %vm865 = vmor %vm863, %vm864
    %v866 = vsel %vm865, %v858, %v862
    %v867 = vand.u32 2147483647, %v857
    %vm868 = vcmp.eq.f32.partialorder %v867, 8.507059e+37
    %v869 = vand.u32 %v857, 2147483648
    %v870 = vor.u32 1.1754944e-38, %v869
    %v871 = vsel %vm868, %v870, %v866
    %v872 = vmul.f32 1.0, %v871
    %v873 = vmul.f32 %v852, %v830
    %v874 = vadd.f32 %v793, %v873
    %v875 = vtanh.pop %v874
    %v876 = vsub.f32 1.0, %v872
    %v877 = vmul.f32 %v876, %v875
    %v878 = vmul.f32 %v872, %v786
    %v879 = vadd.f32 %v877, %v878
    %v880 = vpack.c.bf16 %v879, %v879
    %s881 = scalar_lea.vmem [#allocation3], 8
    %882 = vst [vmem:[%s881] sm:$0xf] %v880
    %s883 = scalar_lea.vmem [#allocation4], 72
    %v884 = vld [vmem:[%s883] sm:$0xff]
    %v885 = vld [vmem:[%s883 + $0x8] sm:$0xff]
    %v886 = vld [vmem:[%s883 + $0x10] sm:$0xff]
    %887 = vmatpush.bf16.msra.mxu0 %v582
    %888 = vmatpush.bf16.msra.mxu0 %v579
    %889 = vmatpush.bf16.msra.mxu0 %v576
    %890 = vmatpush.bf16.msra.mxu0 %v573
    %891 = vmatpush.bf16.msra.mxu0 %v570
    %892 = vmatpush.bf16.msra.mxu0 %v567
    %893 = vmatpush.bf16.msra.mxu0 %v564
    %894 = vmatpush.bf16.msra.mxu0 %v561
    %895 = vmatmul.bf16.gmra.mxu0 %v880
    %v896 = vpop.f32.mrf.mxu0
    %v897 = vadd.f32 %v470, %v896
    %v898 = vpop.f32.mrf.mxu0
    %899 = vdwg.mxu0
    %900 = vmatpush.bf16.msra.mxu0 %v583
    %901 = vmatpush.bf16.msra.mxu0 %v580
    %902 = vmatpush.bf16.msra.mxu0 %v577
    %903 = vmatpush.bf16.msra.mxu0 %v574
    %904 = vmatpush.bf16.msra.mxu0 %v571
    %905 = vmatpush.bf16.msra.mxu0 %v568
    %906 = vmatpush.bf16.msra.mxu0 %v565
    %907 = vmatpush.bf16.msra.mxu0 %v562
    %908 = vmatmul.bf16.gmra.mxu0 %v880
    %v909 = vpop.f32.mrf.mxu0
    %v910 = vadd.f32 %v471, %v909
    %v911 = vpop.f32.mrf.mxu0
    %912 = vdwg.mxu0
    %913 = vmatpush.bf16.msra.mxu0 %v584
    %914 = vmatpush.bf16.msra.mxu0 %v581
    %915 = vmatpush.bf16.msra.mxu0 %v578
    %916 = vmatpush.bf16.msra.mxu0 %v575
    %917 = vmatpush.bf16.msra.mxu0 %v572
    %918 = vmatpush.bf16.msra.mxu0 %v569
    %919 = vmatpush.bf16.msra.mxu0 %v566
    %920 = vmatpush.bf16.msra.mxu0 %v563
    %921 = vmatmul.bf16.gmra.mxu0 %v880
    %v922 = vpop.f32.mrf.mxu0
    %v923 = vadd.f32 %v472, %v922
    %v924 = vpop.f32.mrf.mxu0
    %925 = vdwg.mxu0
    %v926 = vadd.f32 %v884, %v897
    %v927 = vxor.u32 %v926, 2147483648
    %v928 = vmul.f32 %v927, 1.442695
    %v929 = vpow.pop %v928
    %v930 = vadd.f32 %v929, 1.0
    %v931 = vrcp.pop %v930
    %v932 = vmul.f32 %v930, %v931
    %v933 = vsub.f32 1.0, %v932
    %v934 = vmul.f32 %v931, %v933
    %v935 = vadd.f32 %v931, %v934
    %vm936 = vweird.f32 %v930
    %vm937 = vweird.f32 %v931
    %vm938 = vmor %vm936, %vm937
    %v939 = vsel %vm938, %v931, %v935
    %v940 = vand.u32 2147483647, %v930
    %vm941 = vcmp.eq.f32.partialorder %v940, 8.507059e+37
    %v942 = vand.u32 %v930, 2147483648
    %v943 = vor.u32 1.1754944e-38, %v942
    %v944 = vsel %vm941, %v943, %v939
    %v945 = vmul.f32 1.0, %v944
    %v946 = vadd.f32 %v885, %v910
    %v947 = vxor.u32 %v946, 2147483648
    %v948 = vmul.f32 %v947, 1.442695
    %v949 = vpow.pop %v948
    %v950 = vadd.f32 %v949, 1.0
    %v951 = vrcp.pop %v950
    %v952 = vmul.f32 %v950, %v951
    %v953 = vsub.f32 1.0, %v952
    %v954 = vmul.f32 %v951, %v953
    %v955 = vadd.f32 %v951, %v954
    %vm956 = vweird.f32 %v950
    %vm957 = vweird.f32 %v951
    %vm958 = vmor %vm956, %vm957
    %v959 = vsel %vm958, %v951, %v955
    %v960 = vand.u32 2147483647, %v950
    %vm961 = vcmp.eq.f32.partialorder %v960, 8.507059e+37
    %v962 = vand.u32 %v950, 2147483648
    %v963 = vor.u32 1.1754944e-38, %v962
    %v964 = vsel %vm961, %v963, %v959
    %v965 = vmul.f32 1.0, %v964
    %v966 = vmul.f32 %v945, %v923
    %v967 = vadd.f32 %v886, %v966
    %v968 = vtanh.pop %v967
    %v969 = vsub.f32 1.0, %v965
    %v970 = vmul.f32 %v969, %v968
    %v971 = vmul.f32 %v965, %v879
    %v972 = vadd.f32 %v970, %v971
    %v973 = vpack.c.bf16 %v972, %v972
    %s974 = scalar_lea.vmem [#allocation3], 12
    %975 = vst [vmem:[%s974] sm:$0xf] %v973
    %s976 = scalar_lea.vmem [#allocation4], 96
    %v977 = vld [vmem:[%s976] sm:$0xff]
    %v978 = vld [vmem:[%s976 + $0x8] sm:$0xff]
    %v979 = vld [vmem:[%s976 + $0x10] sm:$0xff]
    %980 = vmatpush.bf16.msra.mxu0 %v582
    %981 = vmatpush.bf16.msra.mxu0 %v579
    %982 = vmatpush.bf16.msra.mxu0 %v576
    %983 = vmatpush.bf16.msra.mxu0 %v573
    %984 = vmatpush.bf16.msra.mxu0 %v570
    %985 = vmatpush.bf16.msra.mxu0 %v567
    %986 = vmatpush.bf16.msra.mxu0 %v564
    %987 = vmatpush.bf16.msra.mxu0 %v561
    %988 = vmatmul.bf16.gmra.mxu0 %v973
    %v989 = vpop.f32.mrf.mxu0
    %v990 = vadd.f32 %v470, %v989
    %v991 = vpop.f32.mrf.mxu0
    %992 = vdwg.mxu0
    %993 = vmatpush.bf16.msra.mxu0 %v583
    %994 = vmatpush.bf16.msra.mxu0 %v580
    %995 = vmatpush.bf16.msra.mxu0 %v577
    %996 = vmatpush.bf16.msra.mxu0 %v574
    %997 = vmatpush.bf16.msra.mxu0 %v571
    %998 = vmatpush.bf16.msra.mxu0 %v568
    %999 = vmatpush.bf16.msra.mxu0 %v565
    %1000 = vmatpush.bf16.msra.mxu0 %v562
    %1001 = vmatmul.bf16.gmra.mxu0 %v973
    %v1002 = vpop.f32.mrf.mxu0
    %v1003 = vadd.f32 %v471, %v1002
    %v1004 = vpop.f32.mrf.mxu0
    %1005 = vdwg.mxu0
    %1006 = vmatpush.bf16.msra.mxu0 %v584
    %1007 = vmatpush.bf16.msra.mxu0 %v581
    %1008 = vmatpush.bf16.msra.mxu0 %v578
    %1009 = vmatpush.bf16.msra.mxu0 %v575
    %1010 = vmatpush.bf16.msra.mxu0 %v572
    %1011 = vmatpush.bf16.msra.mxu0 %v569
    %1012 = vmatpush.bf16.msra.mxu0 %v566
    %1013 = vmatpush.bf16.msra.mxu0 %v563
    %1014 = vmatmul.bf16.gmra.mxu0 %v973
    %v1015 = vpop.f32.mrf.mxu0
    %v1016 = vadd.f32 %v472, %v1015
    %v1017 = vpop.f32.mrf.mxu0
    %1018 = vdwg.mxu0
    %v1019 = vadd.f32 %v977, %v990
    %v1020 = vxor.u32 %v1019, 2147483648
    %v1021 = vmul.f32 %v1020, 1.442695
    %v1022 = vpow.pop %v1021
    %v1023 = vadd.f32 %v1022, 1.0
    %v1024 = vrcp.pop %v1023
    %v1025 = vmul.f32 %v1023, %v1024
    %v1026 = vsub.f32 1.0, %v1025
    %v1027 = vmul.f32 %v1024, %v1026
    %v1028 = vadd.f32 %v1024, %v1027
    %vm1029 = vweird.f32 %v1023
    %vm1030 = vweird.f32 %v1024
    %vm1031 = vmor %vm1029, %vm1030
    %v1032 = vsel %vm1031, %v1024, %v1028
    %v1033 = vand.u32 2147483647, %v1023
    %vm1034 = vcmp.eq.f32.partialorder %v1033, 8.507059e+37
    %v1035 = vand.u32 %v1023, 2147483648
    %v1036 = vor.u32 1.1754944e-38, %v1035
    %v1037 = vsel %vm1034, %v1036, %v1032
    %v1038 = vmul.f32 1.0, %v1037
    %v1039 = vadd.f32 %v978, %v1003
    %v1040 = vxor.u32 %v1039, 2147483648
    %v1041 = vmul.f32 %v1040, 1.442695
    %v1042 = vpow.pop %v1041
    %v1043 = vadd.f32 %v1042, 1.0
    %v1044 = vrcp.pop %v1043
    %v1045 = vmul.f32 %v1043, %v1044
    %v1046 = vsub.f32 1.0, %v1045
    %v1047 = vmul.f32 %v1044, %v1046
    %v1048 = vadd.f32 %v1044, %v1047
    %vm1049 = vweird.f32 %v1043
    %vm1050 = vweird.f32 %v1044
    %vm1051 = vmor %vm1049, %vm1050
    %v1052 = vsel %vm1051, %v1044, %v1048
    %v1053 = vand.u32 2147483647, %v1043
    %vm1054 = vcmp.eq.f32.partialorder %v1053, 8.507059e+37
    %v1055 = vand.u32 %v1043, 2147483648
    %v1056 = vor.u32 1.1754944e-38, %v1055
    %v1057 = vsel %vm1054, %v1056, %v1052
    %v1058 = vmul.f32 1.0, %v1057
    %v1059 = vmul.f32 %v1038, %v1016
    %v1060 = vadd.f32 %v979, %v1059
    %v1061 = vtanh.pop %v1060
    %v1062 = vsub.f32 1.0, %v1058
    %v1063 = vmul.f32 %v1062, %v1061
    %v1064 = vmul.f32 %v1058, %v972
    %v1065 = vadd.f32 %v1063, %v1064
    %v1066 = vpack.c.bf16 %v1065, %v1065
    %s1067 = scalar_lea.vmem [#allocation3], 16
    %1068 = vst [vmem:[%s1067] sm:$0xf] %v1066
    %s1069 = scalar_lea.vmem [#allocation4], 120
    %v1070 = vld [vmem:[%s1069] sm:$0xff]
    %v1071 = vld [vmem:[%s1069 + $0x8] sm:$0xff]
    %v1072 = vld [vmem:[%s1069 + $0x10] sm:$0xff]
    %1073 = vmatpush.bf16.msra.mxu0 %v582
    %1074 = vmatpush.bf16.msra.mxu0 %v579
    %1075 = vmatpush.bf16.msra.mxu0 %v576
    %1076 = vmatpush.bf16.msra.mxu0 %v573
    %1077 = vmatpush.bf16.msra.mxu0 %v570
    %1078 = vmatpush.bf16.msra.mxu0 %v567
    %1079 = vmatpush.bf16.msra.mxu0 %v564
    %1080 = vmatpush.bf16.msra.mxu0 %v561
    %1081 = vmatmul.bf16.gmra.mxu0 %v1066
    %v1082 = vpop.f32.mrf.mxu0
    %v1083 = vadd.f32 %v470, %v1082
    %v1084 = vpop.f32.mrf.mxu0
    %1085 = vdwg.mxu0
    %1086 = vmatpush.bf16.msra.mxu0 %v583
    %1087 = vmatpush.bf16.msra.mxu0 %v580
    %1088 = vmatpush.bf16.msra.mxu0 %v577
    %1089 = vmatpush.bf16.msra.mxu0 %v574
    %1090 = vmatpush.bf16.msra.mxu0 %v571
    %1091 = vmatpush.bf16.msra.mxu0 %v568
    %1092 = vmatpush.bf16.msra.mxu0 %v565
    %1093 = vmatpush.bf16.msra.mxu0 %v562
    %1094 = vmatmul.bf16.gmra.mxu0 %v1066
    %v1095 = vpop.f32.mrf.mxu0
    %v1096 = vadd.f32 %v471, %v1095
    %v1097 = vpop.f32.mrf.mxu0
    %1098 = vdwg.mxu0
    %1099 = vmatpush.bf16.msra.mxu0 %v584
    %1100 = vmatpush.bf16.msra.mxu0 %v581
    %1101 = vmatpush.bf16.msra.mxu0 %v578
    %1102 = vmatpush.bf16.msra.mxu0 %v575
    %1103 = vmatpush.bf16.msra.mxu0 %v572
    %1104 = vmatpush.bf16.msra.mxu0 %v569
    %1105 = vmatpush.bf16.msra.mxu0 %v566
    %1106 = vmatpush.bf16.msra.mxu0 %v563
    %1107 = vmatmul.bf16.gmra.mxu0 %v1066
    %v1108 = vpop.f32.mrf.mxu0
    %v1109 = vadd.f32 %v472, %v1108
    %v1110 = vpop.f32.mrf.mxu0
    %1111 = vdwg.mxu0
    %v1112 = vadd.f32 %v1070, %v1083
    %v1113 = vxor.u32 %v1112, 2147483648
    %v1114 = vmul.f32 %v1113, 1.442695
    %v1115 = vpow.pop %v1114
    %v1116 = vadd.f32 %v1115, 1.0
    %v1117 = vrcp.pop %v1116
    %v1118 = vmul.f32 %v1116, %v1117
    %v1119 = vsub.f32 1.0, %v1118
    %v1120 = vmul.f32 %v1117, %v1119
    %v1121 = vadd.f32 %v1117, %v1120
    %vm1122 = vweird.f32 %v1116
    %vm1123 = vweird.f32 %v1117
    %vm1124 = vmor %vm1122, %vm1123
    %v1125 = vsel %vm1124, %v1117, %v1121
    %v1126 = vand.u32 2147483647, %v1116
    %vm1127 = vcmp.eq.f32.partialorder %v1126, 8.507059e+37
    %v1128 = vand.u32 %v1116, 2147483648
    %v1129 = vor.u32 1.1754944e-38, %v1128
    %v1130 = vsel %vm1127, %v1129, %v1125
    %v1131 = vmul.f32 1.0, %v1130
    %v1132 = vadd.f32 %v1071, %v1096
    %v1133 = vxor.u32 %v1132, 2147483648
    %v1134 = vmul.f32 %v1133, 1.442695
    %v1135 = vpow.pop %v1134
    %v1136 = vadd.f32 %v1135, 1.0
    %v1137 = vrcp.pop %v1136
    %v1138 = vmul.f32 %v1136, %v1137
    %v1139 = vsub.f32 1.0, %v1138
    %v1140 = vmul.f32 %v1137, %v1139
    %v1141 = vadd.f32 %v1137, %v1140
    %vm1142 = vweird.f32 %v1136
    %vm1143 = vweird.f32 %v1137
    %vm1144 = vmor %vm1142, %vm1143
    %v1145 = vsel %vm1144, %v1137, %v1141
    %v1146 = vand.u32 2147483647, %v1136
    %vm1147 = vcmp.eq.f32.partialorder %v1146, 8.507059e+37
    %v1148 = vand.u32 %v1136, 2147483648
    %v1149 = vor.u32 1.1754944e-38, %v1148
    %v1150 = vsel %vm1147, %v1149, %v1145
    %v1151 = vmul.f32 1.0, %v1150
    %v1152 = vmul.f32 %v1131, %v1109
    %v1153 = vadd.f32 %v1072, %v1152
    %v1154 = vtanh.pop %v1153
    %v1155 = vsub.f32 1.0, %v1151
    %v1156 = vmul.f32 %v1155, %v1154
    %v1157 = vmul.f32 %v1151, %v1065
    %v1158 = vadd.f32 %v1156, %v1157
    %v1159 = vpack.c.bf16 %v1158, %v1158
    %s1160 = scalar_lea.vmem [#allocation3], 20
    %1161 = vst [vmem:[%s1160] sm:$0xf] %v1159
    %s1162 = scalar_lea.vmem [#allocation4], 144
    %v1163 = vld [vmem:[%s1162] sm:$0xff]
    %v1164 = vld [vmem:[%s1162 + $0x8] sm:$0xff]
    %v1165 = vld [vmem:[%s1162 + $0x10] sm:$0xff]
    %1166 = vmatpush.bf16.msra.mxu0 %v582
    %1167 = vmatpush.bf16.msra.mxu0 %v579
    %1168 = vmatpush.bf16.msra.mxu0 %v576
    %1169 = vmatpush.bf16.msra.mxu0 %v573
    %1170 = vmatpush.bf16.msra.mxu0 %v570
    %1171 = vmatpush.bf16.msra.mxu0 %v567
    %1172 = vmatpush.bf16.msra.mxu0 %v564
    %1173 = vmatpush.bf16.msra.mxu0 %v561
    %1174 = vmatmul.bf16.gmra.mxu0 %v1159
    %v1175 = vpop.f32.mrf.mxu0
    %v1176 = vadd.f32 %v470, %v1175
    %v1177 = vpop.f32.mrf.mxu0
    %1178 = vdwg.mxu0
    %1179 = vmatpush.bf16.msra.mxu0 %v583
    %1180 = vmatpush.bf16.msra.mxu0 %v580
    %1181 = vmatpush.bf16.msra.mxu0 %v577
    %1182 = vmatpush.bf16.msra.mxu0 %v574
    %1183 = vmatpush.bf16.msra.mxu0 %v571
    %1184 = vmatpush.bf16.msra.mxu0 %v568
    %1185 = vmatpush.bf16.msra.mxu0 %v565
    %1186 = vmatpush.bf16.msra.mxu0 %v562
    %1187 = vmatmul.bf16.gmra.mxu0 %v1159
    %v1188 = vpop.f32.mrf.mxu0
    %v1189 = vadd.f32 %v471, %v1188
    %v1190 = vpop.f32.mrf.mxu0
    %1191 = vdwg.mxu0
    %1192 = vmatpush.bf16.msra.mxu0 %v584
    %1193 = vmatpush.bf16.msra.mxu0 %v581
    %1194 = vmatpush.bf16.msra.mxu0 %v578
    %1195 = vmatpush.bf16.msra.mxu0 %v575
    %1196 = vmatpush.bf16.msra.mxu0 %v572
    %1197 = vmatpush.bf16.msra.mxu0 %v569
    %1198 = vmatpush.bf16.msra.mxu0 %v566
    %1199 = vmatpush.bf16.msra.mxu0 %v563
    %1200 = vmatmul.bf16.gmra.mxu0 %v1159
    %v1201 = vpop.f32.mrf.mxu0
    %v1202 = vadd.f32 %v472, %v1201
    %v1203 = vpop.f32.mrf.mxu0
    %1204 = vdwg.mxu0
    %v1205 = vadd.f32 %v1163, %v1176
    %v1206 = vxor.u32 %v1205, 2147483648
    %v1207 = vmul.f32 %v1206, 1.442695
    %v1208 = vpow.pop %v1207
    %v1209 = vadd.f32 %v1208, 1.0
    %v1210 = vrcp.pop %v1209
    %v1211 = vmul.f32 %v1209, %v1210
    %v1212 = vsub.f32 1.0, %v1211
    %v1213 = vmul.f32 %v1210, %v1212
    %v1214 = vadd.f32 %v1210, %v1213
    %vm1215 = vweird.f32 %v1209
    %vm1216 = vweird.f32 %v1210
    %vm1217 = vmor %vm1215, %vm1216
    %v1218 = vsel %vm1217, %v1210, %v1214
    %v1219 = vand.u32 2147483647, %v1209
    %vm1220 = vcmp.eq.f32.partialorder %v1219, 8.507059e+37
    %v1221 = vand.u32 %v1209, 2147483648
    %v1222 = vor.u32 1.1754944e-38, %v1221
    %v1223 = vsel %vm1220, %v1222, %v1218
    %v1224 = vmul.f32 1.0, %v1223
    %v1225 = vadd.f32 %v1164, %v1189
    %v1226 = vxor.u32 %v1225, 2147483648
    %v1227 = vmul.f32 %v1226, 1.442695
    %v1228 = vpow.pop %v1227
    %v1229 = vadd.f32 %v1228, 1.0
    %v1230 = vrcp.pop %v1229
    %v1231 = vmul.f32 %v1229, %v1230
    %v1232 = vsub.f32 1.0, %v1231
    %v1233 = vmul.f32 %v1230, %v1232
    %v1234 = vadd.f32 %v1230, %v1233
    %vm1235 = vweird.f32 %v1229
    %vm1236 = vweird.f32 %v1230
    %vm1237 = vmor %vm1235, %vm1236
    %v1238 = vsel %vm1237, %v1230, %v1234
    %v1239 = vand.u32 2147483647, %v1229
    %vm1240 = vcmp.eq.f32.partialorder %v1239, 8.507059e+37
    %v1241 = vand.u32 %v1229, 2147483648
    %v1242 = vor.u32 1.1754944e-38, %v1241
    %v1243 = vsel %vm1240, %v1242, %v1238
    %v1244 = vmul.f32 1.0, %v1243
    %v1245 = vmul.f32 %v1224, %v1202
    %v1246 = vadd.f32 %v1165, %v1245
    %v1247 = vtanh.pop %v1246
    %v1248 = vsub.f32 1.0, %v1244
    %v1249 = vmul.f32 %v1248, %v1247
    %v1250 = vmul.f32 %v1244, %v1158
    %v1251 = vadd.f32 %v1249, %v1250
    %v1252 = vpack.c.bf16 %v1251, %v1251
    %s1253 = scalar_lea.vmem [#allocation3], 24
    %1254 = vst [vmem:[%s1253] sm:$0xf] %v1252
    %s1255 = scalar_lea.vmem [#allocation4], 168
    %v1256 = vld [vmem:[%s1255] sm:$0xff]
    %v1257 = vld [vmem:[%s1255 + $0x8] sm:$0xff]
    %v1258 = vld [vmem:[%s1255 + $0x10] sm:$0xff]
    %1259 = vmatpush.bf16.msra.mxu0 %v582
    %1260 = vmatpush.bf16.msra.mxu0 %v579
    %1261 = vmatpush.bf16.msra.mxu0 %v576
    %1262 = vmatpush.bf16.msra.mxu0 %v573
    %1263 = vmatpush.bf16.msra.mxu0 %v570
    %1264 = vmatpush.bf16.msra.mxu0 %v567
    %1265 = vmatpush.bf16.msra.mxu0 %v564
    %1266 = vmatpush.bf16.msra.mxu0 %v561
    %1267 = vmatmul.bf16.gmra.mxu0 %v1252
    %v1268 = vpop.f32.mrf.mxu0
    %v1269 = vadd.f32 %v470, %v1268
    %v1270 = vpop.f32.mrf.mxu0
    %1271 = vdwg.mxu0
    %1272 = vmatpush.bf16.msra.mxu0 %v583
    %1273 = vmatpush.bf16.msra.mxu0 %v580
    %1274 = vmatpush.bf16.msra.mxu0 %v577
    %1275 = vmatpush.bf16.msra.mxu0 %v574
    %1276 = vmatpush.bf16.msra.mxu0 %v571
    %1277 = vmatpush.bf16.msra.mxu0 %v568
    %1278 = vmatpush.bf16.msra.mxu0 %v565
    %1279 = vmatpush.bf16.msra.mxu0 %v562
    %1280 = vmatmul.bf16.gmra.mxu0 %v1252
    %v1281 = vpop.f32.mrf.mxu0
    %v1282 = vadd.f32 %v471, %v1281
    %v1283 = vpop.f32.mrf.mxu0
    %1284 = vdwg.mxu0
    %1285 = vmatpush.bf16.msra.mxu0 %v584
    %1286 = vmatpush.bf16.msra.mxu0 %v581
    %1287 = vmatpush.bf16.msra.mxu0 %v578
    %1288 = vmatpush.bf16.msra.mxu0 %v575
    %1289 = vmatpush.bf16.msra.mxu0 %v572
    %1290 = vmatpush.bf16.msra.mxu0 %v569
    %1291 = vmatpush.bf16.msra.mxu0 %v566
    %1292 = vmatpush.bf16.msra.mxu0 %v563
    %1293 = vmatmul.bf16.gmra.mxu0 %v1252
    %v1294 = vpop.f32.mrf.mxu0
    %v1295 = vadd.f32 %v472, %v1294
    %v1296 = vpop.f32.mrf.mxu0
    %1297 = vdwg.mxu0
    %v1298 = vadd.f32 %v1256, %v1269
    %v1299 = vxor.u32 %v1298, 2147483648
    %v1300 = vmul.f32 %v1299, 1.442695
    %v1301 = vpow.pop %v1300
    %v1302 = vadd.f32 %v1301, 1.0
    %v1303 = vrcp.pop %v1302
    %v1304 = vmul.f32 %v1302, %v1303
    %v1305 = vsub.f32 1.0, %v1304
    %v1306 = vmul.f32 %v1303, %v1305
    %v1307 = vadd.f32 %v1303, %v1306
    %vm1308 = vweird.f32 %v1302
    %vm1309 = vweird.f32 %v1303
    %vm1310 = vmor %vm1308, %vm1309
    %v1311 = vsel %vm1310, %v1303, %v1307
    %v1312 = vand.u32 2147483647, %v1302
    %vm1313 = vcmp.eq.f32.partialorder %v1312, 8.507059e+37
    %v1314 = vand.u32 %v1302, 2147483648
    %v1315 = vor.u32 1.1754944e-38, %v1314
    %v1316 = vsel %vm1313, %v1315, %v1311
    %v1317 = vmul.f32 1.0, %v1316
    %v1318 = vadd.f32 %v1257, %v1282
    %v1319 = vxor.u32 %v1318, 2147483648
    %v1320 = vmul.f32 %v1319, 1.442695
    %v1321 = vpow.pop %v1320
    %v1322 = vadd.f32 %v1321, 1.0
    %v1323 = vrcp.pop %v1322
    %v1324 = vmul.f32 %v1322, %v1323
    %v1325 = vsub.f32 1.0, %v1324
    %v1326 = vmul.f32 %v1323, %v1325
    %v1327 = vadd.f32 %v1323, %v1326
    %vm1328 = vweird.f32 %v1322
    %vm1329 = vweird.f32 %v1323
    %vm1330 = vmor %vm1328, %vm1329
    %v1331 = vsel %vm1330, %v1323, %v1327
    %v1332 = vand.u32 2147483647, %v1322
    %vm1333 = vcmp.eq.f32.partialorder %v1332, 8.507059e+37
    %v1334 = vand.u32 %v1322, 2147483648
    %v1335 = vor.u32 1.1754944e-38, %v1334
    %v1336 = vsel %vm1333, %v1335, %v1331
    %v1337 = vmul.f32 1.0, %v1336
    %v1338 = vmul.f32 %v1317, %v1295
    %v1339 = vadd.f32 %v1258, %v1338
    %v1340 = vtanh.pop %v1339
    %v1341 = vsub.f32 1.0, %v1337
    %v1342 = vmul.f32 %v1341, %v1340
    %v1343 = vmul.f32 %v1337, %v1251
    %v1344 = vadd.f32 %v1342, %v1343
    %v1345 = vpack.c.bf16 %v1344, %v1344
    %s1346 = scalar_lea.vmem [#allocation3], 28
    %1347 = vst [vmem:[%s1346] sm:$0xf] %v1345
    %1348 = vst [vmem:[#allocation2] sm:$0xff] %v1344
    %v1349 = vld [vmem:[#allocation3] sm:$0xf]
    %v1350 = vld [vmem:[#allocation3 + $0x4] sm:$0xf]
    %v1351 = vld [vmem:[#allocation3 + $0x8] sm:$0xf]
    %v1352 = vld [vmem:[#allocation3 + $0xc] sm:$0xf]
    %v1353 = vld [vmem:[#allocation3 + $0x10] sm:$0xf]
    %v1354 = vld [vmem:[#allocation3 + $0x14] sm:$0xf]
    %v1355 = vld [vmem:[#allocation3 + $0x18] sm:$0xf]
    %v1356 = vld [vmem:[#allocation3 + $0x1c] sm:$0xf]
    %v1357 = vld [vmem:[#allocation11] sm:$0xff]
    %v1358 = vld [vmem:[#allocation11 + $0x8] sm:$0xf]
    %v1359 = vld [vmem:[#allocation11 + $0xc] sm:$0xff]
    %v1360 = vld [vmem:[#allocation11 + $0x14] sm:$0xf]
    %v1361 = vld [vmem:[#allocation11 + $0x18] sm:$0xff]
    %v1362 = vld [vmem:[#allocation11 + $0x20] sm:$0xf]
    %v1363 = vld [vmem:[#allocation11 + $0x24] sm:$0xff]
    %v1364 = vld [vmem:[#allocation11 + $0x2c] sm:$0xf]
    %v1365 = vld [vmem:[#allocation11 + $0x30] sm:$0xff]
    %v1366 = vld [vmem:[#allocation11 + $0x38] sm:$0xf]
    %v1367 = vld [vmem:[#allocation11 + $0x3c] sm:$0xff]
    %v1368 = vld [vmem:[#allocation11 + $0x44] sm:$0xf]
    %v1369 = vld [vmem:[#allocation11 + $0x48] sm:$0xff]
    %v1370 = vld [vmem:[#allocation11 + $0x50] sm:$0xf]
    %v1371 = vld [vmem:[#allocation11 + $0x54] sm:$0xff]
    %v1372 = vld [vmem:[#allocation11 + $0x5c] sm:$0xf]
    %v1373 = vld [vmem:[#allocation11 + $0x60] sm:$0xff]
    %v1374 = vld [vmem:[#allocation11 + $0x68] sm:$0xf]
    %v1375 = vld [vmem:[#allocation11 + $0x6c] sm:$0xff]
    %v1376 = vld [vmem:[#allocation11 + $0x74] sm:$0xf]
    %v1377 = vld [vmem:[#allocation11 + $0x78] sm:$0xff]
    %v1378 = vld [vmem:[#allocation11 + $0x80] sm:$0xf]
    %v1379 = vld [vmem:[#allocation11 + $0x84] sm:$0xff]
    %v1380 = vld [vmem:[#allocation11 + $0x8c] sm:$0xf]
    %v1381 = vld [vmem:[#allocation11 + $0x90] sm:$0xff]
    %v1382 = vld [vmem:[#allocation11 + $0x98] sm:$0xf]
    %v1383 = vld [vmem:[#allocation11 + $0x9c] sm:$0xff]
    %v1384 = vld [vmem:[#allocation11 + $0xa4] sm:$0xf]
    %v1385 = vld [vmem:[#allocation11 + $0xa8] sm:$0xff]
    %v1386 = vld [vmem:[#allocation11 + $0xb0] sm:$0xf]
    %v1387 = vld [vmem:[#allocation11 + $0xb4] sm:$0xff]
    %v1388 = vld [vmem:[#allocation11 + $0xbc] sm:$0xf]
    %v1389 = vld [vmem:[%s4] sm:$0x7]
    %v1391 = vperm.slane %v1389, 0
    %v1392 = vperm.slane %v1389, 1
    %v1393 = vperm.slane %v1389, 2
    %v1405 = vunpack.c.l.b16 %v1349
    %v1406 = vunpack.c.l.b16 %v1350
    %v1407 = vunpack.c.l.b16 %v1351
    %v1408 = vunpack.c.l.b16 %v1352
    %v1409 = vunpack.c.l.b16 %v1353
    %v1410 = vunpack.c.l.b16 %v1354
    %v1411 = vunpack.c.l.b16 %v1355
    %v1412 = vunpack.c.l.b16 %v1356
    %v1413 = vpack.c.b16 %v1406, %v1405
    %v1414 = vpack.c.b16 %v1408, %v1407
    %v1415 = vpack.c.b16 %v1410, %v1409
    %v1416 = vpack.c.b16 %v1412, %v1411
    %v1453 = vunpack.c.l.b16 %v1357
    %v1454 = vunpack.c.h.b16 %v1357
    %v1455 = vunpack.c.l.b16 %v1358
    %v1456 = vunpack.c.l.b16 %v1359
    %v1457 = vunpack.c.h.b16 %v1359
    %v1458 = vunpack.c.l.b16 %v1360
    %v1459 = vunpack.c.l.b16 %v1361
    %v1460 = vunpack.c.h.b16 %v1361
    %v1461 = vunpack.c.l.b16 %v1362
    %v1462 = vunpack.c.l.b16 %v1363
    %v1463 = vunpack.c.h.b16 %v1363
    %v1464 = vunpack.c.l.b16 %v1364
    %v1465 = vunpack.c.l.b16 %v1365
    %v1466 = vunpack.c.h.b16 %v1365
    %v1467 = vunpack.c.l.b16 %v1366
    %v1468 = vunpack.c.l.b16 %v1367
    %v1469 = vunpack.c.h.b16 %v1367
    %v1470 = vunpack.c.l.b16 %v1368
    %v1471 = vunpack.c.l.b16 %v1369
    %v1472 = vunpack.c.h.b16 %v1369
    %v1473 = vunpack.c.l.b16 %v1370
    %v1474 = vunpack.c.l.b16 %v1371
    %v1475 = vunpack.c.h.b16 %v1371
    %v1476 = vunpack.c.l.b16 %v1372
    %v1477 = vunpack.c.l.b16 %v1373
    %v1478 = vunpack.c.h.b16 %v1373
    %v1479 = vunpack.c.l.b16 %v1374
    %v1480 = vunpack.c.l.b16 %v1375
    %v1481 = vunpack.c.h.b16 %v1375
    %v1482 = vunpack.c.l.b16 %v1376
    %v1483 = vunpack.c.l.b16 %v1377
    %v1484 = vunpack.c.h.b16 %v1377
    %v1485 = vunpack.c.l.b16 %v1378
    %v1486 = vunpack.c.l.b16 %v1379
    %v1487 = vunpack.c.h.b16 %v1379
    %v1488 = vunpack.c.l.b16 %v1380
    %v1489 = vunpack.c.l.b16 %v1381
    %v1490 = vunpack.c.h.b16 %v1381
    %v1491 = vunpack.c.l.b16 %v1382
    %v1492 = vunpack.c.l.b16 %v1383
    %v1493 = vunpack.c.h.b16 %v1383
    %v1494 = vunpack.c.l.b16 %v1384
    %v1495 = vunpack.c.l.b16 %v1385
    %v1496 = vunpack.c.h.b16 %v1385
    %v1497 = vunpack.c.l.b16 %v1386
    %v1498 = vunpack.c.l.b16 %v1387
    %v1499 = vunpack.c.h.b16 %v1387
    %v1500 = vunpack.c.l.b16 %v1388
    %v1501 = vpack.c.b16 %v1456, %v1453
    %v1502 = vpack.c.b16 %v1457, %v1454
    %v1503 = vpack.c.b16 %v1458, %v1455
    %v1504 = vpack.c.b16 %v1462, %v1459
    %v1505 = vpack.c.b16 %v1463, %v1460
    %v1506 = vpack.c.b16 %v1464, %v1461
    %v1507 = vpack.c.b16 %v1468, %v1465
    %v1508 = vpack.c.b16 %v1469, %v1466
    %v1509 = vpack.c.b16 %v1470, %v1467
    %v1510 = vpack.c.b16 %v1474, %v1471
    %v1511 = vpack.c.b16 %v1475, %v1472
    %v1512 = vpack.c.b16 %v1476, %v1473
    %v1513 = vpack.c.b16 %v1480, %v1477
    %v1514 = vpack.c.b16 %v1481, %v1478
    %v1515 = vpack.c.b16 %v1482, %v1479
    %v1516 = vpack.c.b16 %v1486, %v1483
    %v1517 = vpack.c.b16 %v1487, %v1484
    %v1518 = vpack.c.b16 %v1488, %v1485
    %v1519 = vpack.c.b16 %v1492, %v1489
    %v1520 = vpack.c.b16 %v1493, %v1490
    %v1521 = vpack.c.b16 %v1494, %v1491
    %v1522 = vpack.c.b16 %v1498, %v1495
    %v1523 = vpack.c.b16 %v1499, %v1496
    %v1524 = vpack.c.b16 %v1500, %v1497
    %1549 = vmatpush.bf16.msra.mxu0 %v1522
    %1550 = vmatpush.bf16.msra.mxu0 %v1519
    %1551 = vmatpush.bf16.msra.mxu0 %v1516
    %1552 = vmatpush.bf16.msra.mxu0 %v1513
    %1553 = vmatpush.bf16.msra.mxu0 %v1510
    %1554 = vmatpush.bf16.msra.mxu0 %v1507
    %1555 = vmatpush.bf16.msra.mxu0 %v1504
    %1556 = vmatpush.bf16.msra.mxu0 %v1501
    %1557 = vmatmul.bf16.gmra.mxu0 %v1413
    %v1558 = vpop.f32.mrf.mxu0
    %v1559 = vadd.f32 %v1391, %v1558
    %v1560 = vpop.f32.mrf.mxu0
    %v1561 = vadd.f32 %v1391, %v1560
    %1562 = vmatmul.bf16.gmra.mxu0 %v1414
    %v1563 = vpop.f32.mrf.mxu0
    %v1564 = vadd.f32 %v1391, %v1563
    %v1565 = vpop.f32.mrf.mxu0
    %v1566 = vadd.f32 %v1391, %v1565
    %1567 = vmatmul.bf16.gmra.mxu0 %v1415
    %v1568 = vpop.f32.mrf.mxu0
    %v1569 = vadd.f32 %v1391, %v1568
    %v1570 = vpop.f32.mrf.mxu0
    %v1571 = vadd.f32 %v1391, %v1570
    %1572 = vmatmul.bf16.gmra.mxu0 %v1416
    %v1573 = vpop.f32.mrf.mxu0
    %v1574 = vadd.f32 %v1391, %v1573
    %v1575 = vpop.f32.mrf.mxu0
    %v1576 = vadd.f32 %v1391, %v1575
    %1577 = vdwg.mxu0
    %1578 = vmatpush.bf16.msra.mxu0 %v1523
    %1579 = vmatpush.bf16.msra.mxu0 %v1520
    %1580 = vmatpush.bf16.msra.mxu0 %v1517
    %1581 = vmatpush.bf16.msra.mxu0 %v1514
    %1582 = vmatpush.bf16.msra.mxu0 %v1511
    %1583 = vmatpush.bf16.msra.mxu0 %v1508
    %1584 = vmatpush.bf16.msra.mxu0 %v1505
    %1585 = vmatpush.bf16.msra.mxu0 %v1502
    %1586 = vmatmul.bf16.gmra.mxu0 %v1413
    %v1587 = vpop.f32.mrf.mxu0
    %v1588 = vadd.f32 %v1392, %v1587
    %v1589 = vpop.f32.mrf.mxu0
    %v1590 = vadd.f32 %v1392, %v1589
    %1591 = vmatmul.bf16.gmra.mxu0 %v1414
    %v1592 = vpop.f32.mrf.mxu0
    %v1593 = vadd.f32 %v1392, %v1592
    %v1594 = vpop.f32.mrf.mxu0
    %v1595 = vadd.f32 %v1392, %v1594
    %1596 = vmatmul.bf16.gmra.mxu0 %v1415
    %v1597 = vpop.f32.mrf.mxu0
    %v1598 = vadd.f32 %v1392, %v1597
    %v1599 = vpop.f32.mrf.mxu0
    %v1600 = vadd.f32 %v1392, %v1599
    %1601 = vmatmul.bf16.gmra.mxu0 %v1416
    %v1602 = vpop.f32.mrf.mxu0
    %v1603 = vadd.f32 %v1392, %v1602
    %v1604 = vpop.f32.mrf.mxu0
    %v1605 = vadd.f32 %v1392, %v1604
    %1606 = vdwg.mxu0
    %1607 = vmatpush.bf16.msra.mxu0 %v1524
    %1608 = vmatpush.bf16.msra.mxu0 %v1521
    %1609 = vmatpush.bf16.msra.mxu0 %v1518
    %1610 = vmatpush.bf16.msra.mxu0 %v1515
    %1611 = vmatpush.bf16.msra.mxu0 %v1512
    %1612 = vmatpush.bf16.msra.mxu0 %v1509
    %1613 = vmatpush.bf16.msra.mxu0 %v1506
    %1614 = vmatpush.bf16.msra.mxu0 %v1503
    %1615 = vmatmul.bf16.gmra.mxu0 %v1413
    %v1616 = vpop.f32.mrf.mxu0
    %v1617 = vadd.f32 %v1393, %v1616
    %v1618 = vpop.f32.mrf.mxu0
    %v1619 = vadd.f32 %v1393, %v1618
    %1620 = vmatmul.bf16.gmra.mxu0 %v1414
    %v1621 = vpop.f32.mrf.mxu0
    %v1622 = vadd.f32 %v1393, %v1621
    %v1623 = vpop.f32.mrf.mxu0
    %v1624 = vadd.f32 %v1393, %v1623
    %1625 = vmatmul.bf16.gmra.mxu0 %v1415
    %v1626 = vpop.f32.mrf.mxu0
    %v1627 = vadd.f32 %v1393, %v1626
    %v1628 = vpop.f32.mrf.mxu0
    %v1629 = vadd.f32 %v1393, %v1628
    %1630 = vmatmul.bf16.gmra.mxu0 %v1416
    %v1631 = vpop.f32.mrf.mxu0
    %v1632 = vadd.f32 %v1393, %v1631
    %v1633 = vpop.f32.mrf.mxu0
    %v1634 = vadd.f32 %v1393, %v1633
    %1635 = vdwg.mxu0
    %1636 = vst [vmem:[#allocation4] sm:$0xff] %v1559
    %1637 = vst [vmem:[#allocation4 + $0x8] sm:$0xff] %v1588
    %1638 = vst [vmem:[#allocation4 + $0x10] sm:$0xff] %v1617
    %1639 = vst [vmem:[#allocation4 + $0x18] sm:$0xff] %v1561
    %1640 = vst [vmem:[#allocation4 + $0x20] sm:$0xff] %v1590
    %1641 = vst [vmem:[#allocation4 + $0x28] sm:$0xff] %v1619
    %1642 = vst [vmem:[#allocation4 + $0x30] sm:$0xff] %v1564
    %1643 = vst [vmem:[#allocation4 + $0x38] sm:$0xff] %v1593
    %1644 = vst [vmem:[#allocation4 + $0x40] sm:$0xff] %v1622
    %1645 = vst [vmem:[#allocation4 + $0x48] sm:$0xff] %v1566
    %1646 = vst [vmem:[#allocation4 + $0x50] sm:$0xff] %v1595
    %1647 = vst [vmem:[#allocation4 + $0x58] sm:$0xff] %v1624
    %1648 = vst [vmem:[#allocation4 + $0x60] sm:$0xff] %v1569
    %1649 = vst [vmem:[#allocation4 + $0x68] sm:$0xff] %v1598
    %1650 = vst [vmem:[#allocation4 + $0x70] sm:$0xff] %v1627
    %1651 = vst [vmem:[#allocation4 + $0x78] sm:$0xff] %v1571
    %1652 = vst [vmem:[#allocation4 + $0x80] sm:$0xff] %v1600
    %1653 = vst [vmem:[#allocation4 + $0x88] sm:$0xff] %v1629
    %1654 = vst [vmem:[#allocation4 + $0x90] sm:$0xff] %v1574
    %1655 = vst [vmem:[#allocation4 + $0x98] sm:$0xff] %v1603
    %1656 = vst [vmem:[#allocation4 + $0xa0] sm:$0xff] %v1632
    %1657 = vst [vmem:[#allocation4 + $0xa8] sm:$0xff] %v1576
    %1658 = vst [vmem:[#allocation4 + $0xb0] sm:$0xff] %v1605
    %1659 = vst [vmem:[#allocation4 + $0xb8] sm:$0xff] %v1634
    %s1660 = scalar_lea.vmem [#allocation13], 192
    %v1661 = vld [vmem:[%s1660] sm:$0xff]
    %v1662 = vld [vmem:[%s1660 + $0x8] sm:$0xf]
    %v1663 = vld [vmem:[%s1660 + $0xc] sm:$0xff]
    %v1664 = vld [vmem:[%s1660 + $0x14] sm:$0xf]
    %v1665 = vld [vmem:[%s1660 + $0x18] sm:$0xff]
    %v1666 = vld [vmem:[%s1660 + $0x20] sm:$0xf]
    %v1667 = vld [vmem:[%s1660 + $0x24] sm:$0xff]
    %v1668 = vld [vmem:[%s1660 + $0x2c] sm:$0xf]
    %v1669 = vld [vmem:[%s1660 + $0x30] sm:$0xff]
    %v1670 = vld [vmem:[%s1660 + $0x38] sm:$0xf]
    %v1671 = vld [vmem:[%s1660 + $0x3c] sm:$0xff]
    %v1672 = vld [vmem:[%s1660 + $0x44] sm:$0xf]
    %v1673 = vld [vmem:[%s1660 + $0x48] sm:$0xff]
    %v1674 = vld [vmem:[%s1660 + $0x50] sm:$0xf]
    %v1675 = vld [vmem:[%s1660 + $0x54] sm:$0xff]
    %v1676 = vld [vmem:[%s1660 + $0x5c] sm:$0xf]
    %v1677 = vld [vmem:[%s1660 + $0x60] sm:$0xff]
    %v1678 = vld [vmem:[%s1660 + $0x68] sm:$0xf]
    %v1679 = vld [vmem:[%s1660 + $0x6c] sm:$0xff]
    %v1680 = vld [vmem:[%s1660 + $0x74] sm:$0xf]
    %v1681 = vld [vmem:[%s1660 + $0x78] sm:$0xff]
    %v1682 = vld [vmem:[%s1660 + $0x80] sm:$0xf]
    %v1683 = vld [vmem:[%s1660 + $0x84] sm:$0xff]
    %v1684 = vld [vmem:[%s1660 + $0x8c] sm:$0xf]
    %v1685 = vld [vmem:[%s1660 + $0x90] sm:$0xff]
    %v1686 = vld [vmem:[%s1660 + $0x98] sm:$0xf]
    %v1687 = vld [vmem:[%s1660 + $0x9c] sm:$0xff]
    %v1688 = vld [vmem:[%s1660 + $0xa4] sm:$0xf]
    %v1689 = vld [vmem:[%s1660 + $0xa8] sm:$0xff]
    %v1690 = vld [vmem:[%s1660 + $0xb0] sm:$0xf]
    %v1691 = vld [vmem:[%s1660 + $0xb4] sm:$0xff]
    %v1692 = vld [vmem:[%s1660 + $0xbc] sm:$0xf]
    %s1693 = scalar_lea.vmem [#allocation14], 3
    %v1694 = vld [vmem:[%s1693] sm:$0x7]
    %v1696 = vperm.slane %v1694, 0
    %v1697 = vperm.slane %v1694, 1
    %v1698 = vperm.slane %v1694, 2
    %s1702 = scalar_lea.vmem [#allocation2], 8
    %v1703 = vld [vmem:[%s1702] sm:$0xff]
    %v1704 = vld [vmem:[#allocation4] sm:$0xff]
    %v1705 = vld [vmem:[#allocation4 + $0x8] sm:$0xff]
    %v1706 = vld [vmem:[#allocation4 + $0x10] sm:$0xff]
    %v1707 = vpack.c.bf16 %v1703, %v1703
    %v1740 = vunpack.c.l.b16 %v1661
    %v1741 = vunpack.c.h.b16 %v1661
    %v1742 = vunpack.c.l.b16 %v1662
    %v1743 = vunpack.c.l.b16 %v1663
    %v1744 = vunpack.c.h.b16 %v1663
    %v1745 = vunpack.c.l.b16 %v1664
    %v1746 = vunpack.c.l.b16 %v1665
    %v1747 = vunpack.c.h.b16 %v1665
    %v1748 = vunpack.c.l.b16 %v1666
    %v1749 = vunpack.c.l.b16 %v1667
    %v1750 = vunpack.c.h.b16 %v1667
    %v1751 = vunpack.c.l.b16 %v1668
    %v1752 = vunpack.c.l.b16 %v1669
    %v1753 = vunpack.c.h.b16 %v1669
    %v1754 = vunpack.c.l.b16 %v1670
    %v1755 = vunpack.c.l.b16 %v1671
    %v1756 = vunpack.c.h.b16 %v1671
    %v1757 = vunpack.c.l.b16 %v1672
    %v1758 = vunpack.c.l.b16 %v1673
    %v1759 = vunpack.c.h.b16 %v1673
    %v1760 = vunpack.c.l.b16 %v1674
    %v1761 = vunpack.c.l.b16 %v1675
    %v1762 = vunpack.c.h.b16 %v1675
    %v1763 = vunpack.c.l.b16 %v1676
    %v1764 = vunpack.c.l.b16 %v1677
    %v1765 = vunpack.c.h.b16 %v1677
    %v1766 = vunpack.c.l.b16 %v1678
    %v1767 = vunpack.c.l.b16 %v1679
    %v1768 = vunpack.c.h.b16 %v1679
    %v1769 = vunpack.c.l.b16 %v1680
    %v1770 = vunpack.c.l.b16 %v1681
    %v1771 = vunpack.c.h.b16 %v1681
    %v1772 = vunpack.c.l.b16 %v1682
    %v1773 = vunpack.c.l.b16 %v1683
    %v1774 = vunpack.c.h.b16 %v1683
    %v1775 = vunpack.c.l.b16 %v1684
    %v1776 = vunpack.c.l.b16 %v1685
    %v1777 = vunpack.c.h.b16 %v1685
    %v1778 = vunpack.c.l.b16 %v1686
    %v1779 = vunpack.c.l.b16 %v1687
    %v1780 = vunpack.c.h.b16 %v1687
    %v1781 = vunpack.c.l.b16 %v1688
    %v1782 = vunpack.c.l.b16 %v1689
    %v1783 = vunpack.c.h.b16 %v1689
    %v1784 = vunpack.c.l.b16 %v1690
    %v1785 = vunpack.c.l.b16 %v1691
    %v1786 = vunpack.c.h.b16 %v1691
    %v1787 = vunpack.c.l.b16 %v1692
    %v1788 = vpack.c.b16 %v1743, %v1740
    %v1789 = vpack.c.b16 %v1744, %v1741
    %v1790 = vpack.c.b16 %v1745, %v1742
    %v1791 = vpack.c.b16 %v1749, %v1746
    %v1792 = vpack.c.b16 %v1750, %v1747
    %v1793 = vpack.c.b16 %v1751, %v1748
    %v1794 = vpack.c.b16 %v1755, %v1752
    %v1795 = vpack.c.b16 %v1756, %v1753
    %v1796 = vpack.c.b16 %v1757, %v1754
    %v1797 = vpack.c.b16 %v1761, %v1758
    %v1798 = vpack.c.b16 %v1762, %v1759
    %v1799 = vpack.c.b16 %v1763, %v1760
    %v1800 = vpack.c.b16 %v1767, %v1764
    %v1801 = vpack.c.b16 %v1768, %v1765
    %v1802 = vpack.c.b16 %v1769, %v1766
    %v1803 = vpack.c.b16 %v1773, %v1770
    %v1804 = vpack.c.b16 %v1774, %v1771
    %v1805 = vpack.c.b16 %v1775, %v1772
    %v1806 = vpack.c.b16 %v1779, %v1776
    %v1807 = vpack.c.b16 %v1780, %v1777
    %v1808 = vpack.c.b16 %v1781, %v1778
    %v1809 = vpack.c.b16 %v1785, %v1782
    %v1810 = vpack.c.b16 %v1786, %v1783
    %v1811 = vpack.c.b16 %v1787, %v1784
    %1836 = vmatpush.bf16.msra.mxu0 %v1809
    %1837 = vmatpush.bf16.msra.mxu0 %v1806
    %1838 = vmatpush.bf16.msra.mxu0 %v1803
    %1839 = vmatpush.bf16.msra.mxu0 %v1800
    %1840 = vmatpush.bf16.msra.mxu0 %v1797
    %1841 = vmatpush.bf16.msra.mxu0 %v1794
    %1842 = vmatpush.bf16.msra.mxu0 %v1791
    %1843 = vmatpush.bf16.msra.mxu0 %v1788
    %1844 = vmatmul.bf16.gmra.mxu0 %v1707
    %v1845 = vpop.f32.mrf.mxu0
    %v1846 = vadd.f32 %v1696, %v1845
    %v1847 = vpop.f32.mrf.mxu0
    %1848 = vdwg.mxu0
    %1849 = vmatpush.bf16.msra.mxu0 %v1810
    %1850 = vmatpush.bf16.msra.mxu0 %v1807
    %1851 = vmatpush.bf16.msra.mxu0 %v1804
    %1852 = vmatpush.bf16.msra.mxu0 %v1801
    %1853 = vmatpush.bf16.msra.mxu0 %v1798
    %1854 = vmatpush.bf16.msra.mxu0 %v1795
    %1855 = vmatpush.bf16.msra.mxu0 %v1792
    %1856 = vmatpush.bf16.msra.mxu0 %v1789
    %1857 = vmatmul.bf16.gmra.mxu0 %v1707
    %v1858 = vpop.f32.mrf.mxu0
    %v1859 = vadd.f32 %v1697, %v1858
    %v1860 = vpop.f32.mrf.mxu0
    %1861 = vdwg.mxu0
    %1862 = vmatpush.bf16.msra.mxu0 %v1811
    %1863 = vmatpush.bf16.msra.mxu0 %v1808
    %1864 = vmatpush.bf16.msra.mxu0 %v1805
    %1865 = vmatpush.bf16.msra.mxu0 %v1802
    %1866 = vmatpush.bf16.msra.mxu0 %v1799
    %1867 = vmatpush.bf16.msra.mxu0 %v1796
    %1868 = vmatpush.bf16.msra.mxu0 %v1793
    %1869 = vmatpush.bf16.msra.mxu0 %v1790
    %1870 = vmatmul.bf16.gmra.mxu0 %v1707
    %v1871 = vpop.f32.mrf.mxu0
    %v1872 = vadd.f32 %v1698, %v1871
    %v1873 = vpop.f32.mrf.mxu0
    %1874 = vdwg.mxu0
    %v1875 = vadd.f32 %v1704, %v1846
    %v1876 = vxor.u32 %v1875, 2147483648
    %v1877 = vmul.f32 %v1876, 1.442695
    %v1878 = vpow.pop %v1877
    %v1879 = vadd.f32 %v1878, 1.0
    %v1880 = vrcp.pop %v1879
    %v1881 = vmul.f32 %v1879, %v1880
    %v1882 = vsub.f32 1.0, %v1881
    %v1883 = vmul.f32 %v1880, %v1882
    %v1884 = vadd.f32 %v1880, %v1883
    %vm1885 = vweird.f32 %v1879
    %vm1886 = vweird.f32 %v1880
    %vm1887 = vmor %vm1885, %vm1886
    %v1888 = vsel %vm1887, %v1880, %v1884
    %v1889 = vand.u32 2147483647, %v1879
    %vm1890 = vcmp.eq.f32.partialorder %v1889, 8.507059e+37
    %v1891 = vand.u32 %v1879, 2147483648
    %v1892 = vor.u32 1.1754944e-38, %v1891
    %v1893 = vsel %vm1890, %v1892, %v1888
    %v1894 = vmul.f32 1.0, %v1893
    %v1895 = vadd.f32 %v1705, %v1859
    %v1896 = vxor.u32 %v1895, 2147483648
    %v1897 = vmul.f32 %v1896, 1.442695
    %v1898 = vpow.pop %v1897
    %v1899 = vadd.f32 %v1898, 1.0
    %v1900 = vrcp.pop %v1899
    %v1901 = vmul.f32 %v1899, %v1900
    %v1902 = vsub.f32 1.0, %v1901
    %v1903 = vmul.f32 %v1900, %v1902
    %v1904 = vadd.f32 %v1900, %v1903
    %vm1905 = vweird.f32 %v1899
    %vm1906 = vweird.f32 %v1900
    %vm1907 = vmor %vm1905, %vm1906
    %v1908 = vsel %vm1907, %v1900, %v1904
    %v1909 = vand.u32 2147483647, %v1899
    %vm1910 = vcmp.eq.f32.partialorder %v1909, 8.507059e+37
    %v1911 = vand.u32 %v1899, 2147483648
    %v1912 = vor.u32 1.1754944e-38, %v1911
    %v1913 = vsel %vm1910, %v1912, %v1908
    %v1914 = vmul.f32 1.0, %v1913
    %v1915 = vmul.f32 %v1894, %v1872
    %v1916 = vadd.f32 %v1706, %v1915
    %v1917 = vtanh.pop %v1916
    %v1918 = vsub.f32 1.0, %v1914
    %v1919 = vmul.f32 %v1918, %v1917
    %v1920 = vmul.f32 %v1914, %v1703
    %v1921 = vadd.f32 %v1919, %v1920
    %1922 = vst [vmem:[#allocation16] sm:$0xff] %v1921
    %v1923 = vld [vmem:[%s697] sm:$0xff]
    %v1924 = vld [vmem:[%s697 + $0x8] sm:$0xff]
    %v1925 = vld [vmem:[%s697 + $0x10] sm:$0xff]
    %v1926 = vpack.c.bf16 %v1921, %v1921
    %1927 = vmatpush.bf16.msra.mxu0 %v1809
    %1928 = vmatpush.bf16.msra.mxu0 %v1806
    %1929 = vmatpush.bf16.msra.mxu0 %v1803
    %1930 = vmatpush.bf16.msra.mxu0 %v1800
    %1931 = vmatpush.bf16.msra.mxu0 %v1797
    %1932 = vmatpush.bf16.msra.mxu0 %v1794
    %1933 = vmatpush.bf16.msra.mxu0 %v1791
    %1934 = vmatpush.bf16.msra.mxu0 %v1788
    %1935 = vmatmul.bf16.gmra.mxu0 %v1926
    %v1936 = vpop.f32.mrf.mxu0
    %v1937 = vadd.f32 %v1696, %v1936
    %v1938 = vpop.f32.mrf.mxu0
    %1939 = vdwg.mxu0
    %1940 = vmatpush.bf16.msra.mxu0 %v1810
    %1941 = vmatpush.bf16.msra.mxu0 %v1807
    %1942 = vmatpush.bf16.msra.mxu0 %v1804
    %1943 = vmatpush.bf16.msra.mxu0 %v1801
    %1944 = vmatpush.bf16.msra.mxu0 %v1798
    %1945 = vmatpush.bf16.msra.mxu0 %v1795
    %1946 = vmatpush.bf16.msra.mxu0 %v1792
    %1947 = vmatpush.bf16.msra.mxu0 %v1789
    %1948 = vmatmul.bf16.gmra.mxu0 %v1926
    %v1949 = vpop.f32.mrf.mxu0
    %v1950 = vadd.f32 %v1697, %v1949
    %v1951 = vpop.f32.mrf.mxu0
    %1952 = vdwg.mxu0
    %1953 = vmatpush.bf16.msra.mxu0 %v1811
    %1954 = vmatpush.bf16.msra.mxu0 %v1808
    %1955 = vmatpush.bf16.msra.mxu0 %v1805
    %1956 = vmatpush.bf16.msra.mxu0 %v1802
    %1957 = vmatpush.bf16.msra.mxu0 %v1799
    %1958 = vmatpush.bf16.msra.mxu0 %v1796
    %1959 = vmatpush.bf16.msra.mxu0 %v1793
    %1960 = vmatpush.bf16.msra.mxu0 %v1790
    %1961 = vmatmul.bf16.gmra.mxu0 %v1926
    %v1962 = vpop.f32.mrf.mxu0
    %v1963 = vadd.f32 %v1698, %v1962
    %v1964 = vpop.f32.mrf.mxu0
    %1965 = vdwg.mxu0
    %v1966 = vadd.f32 %v1923, %v1937
    %v1967 = vxor.u32 %v1966, 2147483648
    %v1968 = vmul.f32 %v1967, 1.442695
    %v1969 = vpow.pop %v1968
    %v1970 = vadd.f32 %v1969, 1.0
    %v1971 = vrcp.pop %v1970
    %v1972 = vmul.f32 %v1970, %v1971
    %v1973 = vsub.f32 1.0, %v1972
    %v1974 = vmul.f32 %v1971, %v1973
    %v1975 = vadd.f32 %v1971, %v1974
    %vm1976 = vweird.f32 %v1970
    %vm1977 = vweird.f32 %v1971
    %vm1978 = vmor %vm1976, %vm1977
    %v1979 = vsel %vm1978, %v1971, %v1975
    %v1980 = vand.u32 2147483647, %v1970
    %vm1981 = vcmp.eq.f32.partialorder %v1980, 8.507059e+37
    %v1982 = vand.u32 %v1970, 2147483648
    %v1983 = vor.u32 1.1754944e-38, %v1982
    %v1984 = vsel %vm1981, %v1983, %v1979
    %v1985 = vmul.f32 1.0, %v1984
    %v1986 = vadd.f32 %v1924, %v1950
    %v1987 = vxor.u32 %v1986, 2147483648
    %v1988 = vmul.f32 %v1987, 1.442695
    %v1989 = vpow.pop %v1988
    %v1990 = vadd.f32 %v1989, 1.0
    %v1991 = vrcp.pop %v1990
    %v1992 = vmul.f32 %v1990, %v1991
    %v1993 = vsub.f32 1.0, %v1992
    %v1994 = vmul.f32 %v1991, %v1993
    %v1995 = vadd.f32 %v1991, %v1994
    %vm1996 = vweird.f32 %v1990
    %vm1997 = vweird.f32 %v1991
    %vm1998 = vmor %vm1996, %vm1997
    %v1999 = vsel %vm1998, %v1991, %v1995
    %v2000 = vand.u32 2147483647, %v1990
    %vm2001 = vcmp.eq.f32.partialorder %v2000, 8.507059e+37
    %v2002 = vand.u32 %v1990, 2147483648
    %v2003 = vor.u32 1.1754944e-38, %v2002
    %v2004 = vsel %vm2001, %v2003, %v1999
    %v2005 = vmul.f32 1.0, %v2004
    %v2006 = vmul.f32 %v1985, %v1963
    %v2007 = vadd.f32 %v1925, %v2006
    %v2008 = vtanh.pop %v2007
    %v2009 = vsub.f32 1.0, %v2005
    %v2010 = vmul.f32 %v2009, %v2008
    %v2011 = vmul.f32 %v2005, %v1921
    %v2012 = vadd.f32 %v2010, %v2011
    %s2013 = scalar_lea.vmem [#allocation16], 8
    %2014 = vst [vmem:[%s2013] sm:$0xff] %v2012
    %v2015 = vld [vmem:[%s790] sm:$0xff]
    %v2016 = vld [vmem:[%s790 + $0x8] sm:$0xff]
    %v2017 = vld [vmem:[%s790 + $0x10] sm:$0xff]
    %v2018 = vpack.c.bf16 %v2012, %v2012
    %2019 = vmatpush.bf16.msra.mxu0 %v1809
    %2020 = vmatpush.bf16.msra.mxu0 %v1806
    %2021 = vmatpush.bf16.msra.mxu0 %v1803
    %2022 = vmatpush.bf16.msra.mxu0 %v1800
    %2023 = vmatpush.bf16.msra.mxu0 %v1797
    %2024 = vmatpush.bf16.msra.mxu0 %v1794
    %2025 = vmatpush.bf16.msra.mxu0 %v1791
    %2026 = vmatpush.bf16.msra.mxu0 %v1788
    %2027 = vmatmul.bf16.gmra.mxu0 %v2018
    %v2028 = vpop.f32.mrf.mxu0
    %v2029 = vadd.f32 %v1696, %v2028
    %v2030 = vpop.f32.mrf.mxu0
    %2031 = vdwg.mxu0
    %2032 = vmatpush.bf16.msra.mxu0 %v1810
    %2033 = vmatpush.bf16.msra.mxu0 %v1807
    %2034 = vmatpush.bf16.msra.mxu0 %v1804
    %2035 = vmatpush.bf16.msra.mxu0 %v1801
    %2036 = vmatpush.bf16.msra.mxu0 %v1798
    %2037 = vmatpush.bf16.msra.mxu0 %v1795
    %2038 = vmatpush.bf16.msra.mxu0 %v1792
    %2039 = vmatpush.bf16.msra.mxu0 %v1789
    %2040 = vmatmul.bf16.gmra.mxu0 %v2018
    %v2041 = vpop.f32.mrf.mxu0
    %v2042 = vadd.f32 %v1697, %v2041
    %v2043 = vpop.f32.mrf.mxu0
    %2044 = vdwg.mxu0
    %2045 = vmatpush.bf16.msra.mxu0 %v1811
    %2046 = vmatpush.bf16.msra.mxu0 %v1808
    %2047 = vmatpush.bf16.msra.mxu0 %v1805
    %2048 = vmatpush.bf16.msra.mxu0 %v1802
    %2049 = vmatpush.bf16.msra.mxu0 %v1799
    %2050 = vmatpush.bf16.msra.mxu0 %v1796
    %2051 = vmatpush.bf16.msra.mxu0 %v1793
    %2052 = vmatpush.bf16.msra.mxu0 %v1790
    %2053 = vmatmul.bf16.gmra.mxu0 %v2018
    %v2054 = vpop.f32.mrf.mxu0
    %v2055 = vadd.f32 %v1698, %v2054
    %v2056 = vpop.f32.mrf.mxu0
    %2057 = vdwg.mxu0
    %v2058 = vadd.f32 %v2015, %v2029
    %v2059 = vxor.u32 %v2058, 2147483648
    %v2060 = vmul.f32 %v2059, 1.442695
    %v2061 = vpow.pop %v2060
    %v2062 = vadd.f32 %v2061, 1.0
    %v2063 = vrcp.pop %v2062
    %v2064 = vmul.f32 %v2062, %v2063
    %v2065 = vsub.f32 1.0, %v2064
    %v2066 = vmul.f32 %v2063, %v2065
    %v2067 = vadd.f32 %v2063, %v2066
    %vm2068 = vweird.f32 %v2062
    %vm2069 = vweird.f32 %v2063
    %vm2070 = vmor %vm2068, %vm2069
    %v2071 = vsel %vm2070, %v2063, %v2067
    %v2072 = vand.u32 2147483647, %v2062
    %vm2073 = vcmp.eq.f32.partialorder %v2072, 8.507059e+37
    %v2074 = vand.u32 %v2062, 2147483648
    %v2075 = vor.u32 1.1754944e-38, %v2074
    %v2076 = vsel %vm2073, %v2075, %v2071
    %v2077 = vmul.f32 1.0, %v2076
    %v2078 = vadd.f32 %v2016, %v2042
    %v2079 = vxor.u32 %v2078, 2147483648
    %v2080 = vmul.f32 %v2079, 1.442695
    %v2081 = vpow.pop %v2080
    %v2082 = vadd.f32 %v2081, 1.0
    %v2083 = vrcp.pop %v2082
    %v2084 = vmul.f32 %v2082, %v2083
    %v2085 = vsub.f32 1.0, %v2084
    %v2086 = vmul.f32 %v2083, %v2085
    %v2087 = vadd.f32 %v2083, %v2086
    %vm2088 = vweird.f32 %v2082
    %vm2089 = vweird.f32 %v2083
    %vm2090 = vmor %vm2088, %vm2089
    %v2091 = vsel %vm2090, %v2083, %v2087
    %v2092 = vand.u32 2147483647, %v2082
    %vm2093 = vcmp.eq.f32.partialorder %v2092, 8.507059e+37
    %v2094 = vand.u32 %v2082, 2147483648
    %v2095 = vor.u32 1.1754944e-38, %v2094
    %v2096 = vsel %vm2093, %v2095, %v2091
    %v2097 = vmul.f32 1.0, %v2096
    %v2098 = vmul.f32 %v2077, %v2055
    %v2099 = vadd.f32 %v2017, %v2098
    %v2100 = vtanh.pop %v2099
    %v2101 = vsub.f32 1.0, %v2097
    %v2102 = vmul.f32 %v2101, %v2100
    %v2103 = vmul.f32 %v2097, %v2012
    %v2104 = vadd.f32 %v2102, %v2103
    %s2105 = scalar_lea.vmem [#allocation16], 16
    %2106 = vst [vmem:[%s2105] sm:$0xff] %v2104
    %v2107 = vld [vmem:[%s883] sm:$0xff]
    %v2108 = vld [vmem:[%s883 + $0x8] sm:$0xff]
    %v2109 = vld [vmem:[%s883 + $0x10] sm:$0xff]
    %v2110 = vpack.c.bf16 %v2104, %v2104
    %2111 = vmatpush.bf16.msra.mxu0 %v1809
    %2112 = vmatpush.bf16.msra.mxu0 %v1806
    %2113 = vmatpush.bf16.msra.mxu0 %v1803
    %2114 = vmatpush.bf16.msra.mxu0 %v1800
    %2115 = vmatpush.bf16.msra.mxu0 %v1797
    %2116 = vmatpush.bf16.msra.mxu0 %v1794
    %2117 = vmatpush.bf16.msra.mxu0 %v1791
    %2118 = vmatpush.bf16.msra.mxu0 %v1788
    %2119 = vmatmul.bf16.gmra.mxu0 %v2110
    %v2120 = vpop.f32.mrf.mxu0
    %v2121 = vadd.f32 %v1696, %v2120
    %v2122 = vpop.f32.mrf.mxu0
    %2123 = vdwg.mxu0
    %2124 = vmatpush.bf16.msra.mxu0 %v1810
    %2125 = vmatpush.bf16.msra.mxu0 %v1807
    %2126 = vmatpush.bf16.msra.mxu0 %v1804
    %2127 = vmatpush.bf16.msra.mxu0 %v1801
    %2128 = vmatpush.bf16.msra.mxu0 %v1798
    %2129 = vmatpush.bf16.msra.mxu0 %v1795
    %2130 = vmatpush.bf16.msra.mxu0 %v1792
    %2131 = vmatpush.bf16.msra.mxu0 %v1789
    %2132 = vmatmul.bf16.gmra.mxu0 %v2110
    %v2133 = vpop.f32.mrf.mxu0
    %v2134 = vadd.f32 %v1697, %v2133
    %v2135 = vpop.f32.mrf.mxu0
    %2136 = vdwg.mxu0
    %2137 = vmatpush.bf16.msra.mxu0 %v1811
    %2138 = vmatpush.bf16.msra.mxu0 %v1808
    %2139 = vmatpush.bf16.msra.mxu0 %v1805
    %2140 = vmatpush.bf16.msra.mxu0 %v1802
    %2141 = vmatpush.bf16.msra.mxu0 %v1799
    %2142 = vmatpush.bf16.msra.mxu0 %v1796
    %2143 = vmatpush.bf16.msra.mxu0 %v1793
    %2144 = vmatpush.bf16.msra.mxu0 %v1790
    %2145 = vmatmul.bf16.gmra.mxu0 %v2110
    %v2146 = vpop.f32.mrf.mxu0
    %v2147 = vadd.f32 %v1698, %v2146
    %v2148 = vpop.f32.mrf.mxu0
    %2149 = vdwg.mxu0
    %v2150 = vadd.f32 %v2107, %v2121
    %v2151 = vxor.u32 %v2150, 2147483648
    %v2152 = vmul.f32 %v2151, 1.442695
    %v2153 = vpow.pop %v2152
    %v2154 = vadd.f32 %v2153, 1.0
    %v2155 = vrcp.pop %v2154
    %v2156 = vmul.f32 %v2154, %v2155
    %v2157 = vsub.f32 1.0, %v2156
    %v2158 = vmul.f32 %v2155, %v2157
    %v2159 = vadd.f32 %v2155, %v2158
    %vm2160 = vweird.f32 %v2154
    %vm2161 = vweird.f32 %v2155
    %vm2162 = vmor %vm2160, %vm2161
    %v2163 = vsel %vm2162, %v2155, %v2159
    %v2164 = vand.u32 2147483647, %v2154
    %vm2165 = vcmp.eq.f32.partialorder %v2164, 8.507059e+37
    %v2166 = vand.u32 %v2154, 2147483648
    %v2167 = vor.u32 1.1754944e-38, %v2166
    %v2168 = vsel %vm2165, %v2167, %v2163
    %v2169 = vmul.f32 1.0, %v2168
    %v2170 = vadd.f32 %v2108, %v2134
    %v2171 = vxor.u32 %v2170, 2147483648
    %v2172 = vmul.f32 %v2171, 1.442695
    %v2173 = vpow.pop %v2172
    %v2174 = vadd.f32 %v2173, 1.0
    %v2175 = vrcp.pop %v2174
    %v2176 = vmul.f32 %v2174, %v2175
    %v2177 = vsub.f32 1.0, %v2176
    %v2178 = vmul.f32 %v2175, %v2177
    %v2179 = vadd.f32 %v2175, %v2178
    %vm2180 = vweird.f32 %v2174
    %vm2181 = vweird.f32 %v2175
    %vm2182 = vmor %vm2180, %vm2181
    %v2183 = vsel %vm2182, %v2175, %v2179
    %v2184 = vand.u32 2147483647, %v2174
    %vm2185 = vcmp.eq.f32.partialorder %v2184, 8.507059e+37
    %v2186 = vand.u32 %v2174, 2147483648
    %v2187 = vor.u32 1.1754944e-38, %v2186
    %v2188 = vsel %vm2185, %v2187, %v2183
    %v2189 = vmul.f32 1.0, %v2188
    %v2190 = vmul.f32 %v2169, %v2147
    %v2191 = vadd.f32 %v2109, %v2190
    %v2192 = vtanh.pop %v2191
    %v2193 = vsub.f32 1.0, %v2189
    %v2194 = vmul.f32 %v2193, %v2192
    %v2195 = vmul.f32 %v2189, %v2104
    %v2196 = vadd.f32 %v2194, %v2195
    %s2197 = scalar_lea.vmem [#allocation16], 24
    %2198 = vst [vmem:[%s2197] sm:$0xff] %v2196
    %v2199 = vld [vmem:[%s976] sm:$0xff]
    %v2200 = vld [vmem:[%s976 + $0x8] sm:$0xff]
    %v2201 = vld [vmem:[%s976 + $0x10] sm:$0xff]
    %v2202 = vpack.c.bf16 %v2196, %v2196
    %2203 = vmatpush.bf16.msra.mxu0 %v1809
    %2204 = vmatpush.bf16.msra.mxu0 %v1806
    %2205 = vmatpush.bf16.msra.mxu0 %v1803
    %2206 = vmatpush.bf16.msra.mxu0 %v1800
    %2207 = vmatpush.bf16.msra.mxu0 %v1797
    %2208 = vmatpush.bf16.msra.mxu0 %v1794
    %2209 = vmatpush.bf16.msra.mxu0 %v1791
    %2210 = vmatpush.bf16.msra.mxu0 %v1788
    %2211 = vmatmul.bf16.gmra.mxu0 %v2202
    %v2212 = vpop.f32.mrf.mxu0
    %v2213 = vadd.f32 %v1696, %v2212
    %v2214 = vpop.f32.mrf.mxu0
    %2215 = vdwg.mxu0
    %2216 = vmatpush.bf16.msra.mxu0 %v1810
    %2217 = vmatpush.bf16.msra.mxu0 %v1807
    %2218 = vmatpush.bf16.msra.mxu0 %v1804
    %2219 = vmatpush.bf16.msra.mxu0 %v1801
    %2220 = vmatpush.bf16.msra.mxu0 %v1798
    %2221 = vmatpush.bf16.msra.mxu0 %v1795
    %2222 = vmatpush.bf16.msra.mxu0 %v1792
    %2223 = vmatpush.bf16.msra.mxu0 %v1789
    %2224 = vmatmul.bf16.gmra.mxu0 %v2202
    %v2225 = vpop.f32.mrf.mxu0
    %v2226 = vadd.f32 %v1697, %v2225
    %v2227 = vpop.f32.mrf.mxu0
    %2228 = vdwg.mxu0
    %2229 = vmatpush.bf16.msra.mxu0 %v1811
    %2230 = vmatpush.bf16.msra.mxu0 %v1808
    %2231 = vmatpush.bf16.msra.mxu0 %v1805
    %2232 = vmatpush.bf16.msra.mxu0 %v1802
    %2233 = vmatpush.bf16.msra.mxu0 %v1799
    %2234 = vmatpush.bf16.msra.mxu0 %v1796
    %2235 = vmatpush.bf16.msra.mxu0 %v1793
    %2236 = vmatpush.bf16.msra.mxu0 %v1790
    %2237 = vmatmul.bf16.gmra.mxu0 %v2202
    %v2238 = vpop.f32.mrf.mxu0
    %v2239 = vadd.f32 %v1698, %v2238
    %v2240 = vpop.f32.mrf.mxu0
    %2241 = vdwg.mxu0
    %v2242 = vadd.f32 %v2199, %v2213
    %v2243 = vxor.u32 %v2242, 2147483648
    %v2244 = vmul.f32 %v2243, 1.442695
    %v2245 = vpow.pop %v2244
    %v2246 = vadd.f32 %v2245, 1.0
    %v2247 = vrcp.pop %v2246
    %v2248 = vmul.f32 %v2246, %v2247
    %v2249 = vsub.f32 1.0, %v2248
    %v2250 = vmul.f32 %v2247, %v2249
    %v2251 = vadd.f32 %v2247, %v2250
    %vm2252 = vweird.f32 %v2246
    %vm2253 = vweird.f32 %v2247
    %vm2254 = vmor %vm2252, %vm2253
    %v2255 = vsel %vm2254, %v2247, %v2251
    %v2256 = vand.u32 2147483647, %v2246
    %vm2257 = vcmp.eq.f32.partialorder %v2256, 8.507059e+37
    %v2258 = vand.u32 %v2246, 2147483648
    %v2259 = vor.u32 1.1754944e-38, %v2258
    %v2260 = vsel %vm2257, %v2259, %v2255
    %v2261 = vmul.f32 1.0, %v2260
    %v2262 = vadd.f32 %v2200, %v2226
    %v2263 = vxor.u32 %v2262, 2147483648
    %v2264 = vmul.f32 %v2263, 1.442695
    %v2265 = vpow.pop %v2264
    %v2266 = vadd.f32 %v2265, 1.0
    %v2267 = vrcp.pop %v2266
    %v2268 = vmul.f32 %v2266, %v2267
    %v2269 = vsub.f32 1.0, %v2268
    %v2270 = vmul.f32 %v2267, %v2269
    %v2271 = vadd.f32 %v2267, %v2270
    %vm2272 = vweird.f32 %v2266
    %vm2273 = vweird.f32 %v2267
    %vm2274 = vmor %vm2272, %vm2273
    %v2275 = vsel %vm2274, %v2267, %v2271
    %v2276 = vand.u32 2147483647, %v2266
    %vm2277 = vcmp.eq.f32.partialorder %v2276, 8.507059e+37
    %v2278 = vand.u32 %v2266, 2147483648
    %v2279 = vor.u32 1.1754944e-38, %v2278
    %v2280 = vsel %vm2277, %v2279, %v2275
    %v2281 = vmul.f32 1.0, %v2280
    %v2282 = vmul.f32 %v2261, %v2239
    %v2283 = vadd.f32 %v2201, %v2282
    %v2284 = vtanh.pop %v2283
    %v2285 = vsub.f32 1.0, %v2281
    %v2286 = vmul.f32 %v2285, %v2284
    %v2287 = vmul.f32 %v2281, %v2196
    %v2288 = vadd.f32 %v2286, %v2287
    %s2289 = scalar_lea.vmem [#allocation16], 32
    %2290 = vst [vmem:[%s2289] sm:$0xff] %v2288
    %v2291 = vld [vmem:[%s1069] sm:$0xff]
    %v2292 = vld [vmem:[%s1069 + $0x8] sm:$0xff]
    %v2293 = vld [vmem:[%s1069 + $0x10] sm:$0xff]
    %v2294 = vpack.c.bf16 %v2288, %v2288
    %2295 = vmatpush.bf16.msra.mxu0 %v1809
    %2296 = vmatpush.bf16.msra.mxu0 %v1806
    %2297 = vmatpush.bf16.msra.mxu0 %v1803
    %2298 = vmatpush.bf16.msra.mxu0 %v1800
    %2299 = vmatpush.bf16.msra.mxu0 %v1797
    %2300 = vmatpush.bf16.msra.mxu0 %v1794
    %2301 = vmatpush.bf16.msra.mxu0 %v1791
    %2302 = vmatpush.bf16.msra.mxu0 %v1788
    %2303 = vmatmul.bf16.gmra.mxu0 %v2294
    %v2304 = vpop.f32.mrf.mxu0
    %v2305 = vadd.f32 %v1696, %v2304
    %v2306 = vpop.f32.mrf.mxu0
    %2307 = vdwg.mxu0
    %2308 = vmatpush.bf16.msra.mxu0 %v1810
    %2309 = vmatpush.bf16.msra.mxu0 %v1807
    %2310 = vmatpush.bf16.msra.mxu0 %v1804
    %2311 = vmatpush.bf16.msra.mxu0 %v1801
    %2312 = vmatpush.bf16.msra.mxu0 %v1798
    %2313 = vmatpush.bf16.msra.mxu0 %v1795
    %2314 = vmatpush.bf16.msra.mxu0 %v1792
    %2315 = vmatpush.bf16.msra.mxu0 %v1789
    %2316 = vmatmul.bf16.gmra.mxu0 %v2294
    %v2317 = vpop.f32.mrf.mxu0
    %v2318 = vadd.f32 %v1697, %v2317
    %v2319 = vpop.f32.mrf.mxu0
    %2320 = vdwg.mxu0
    %2321 = vmatpush.bf16.msra.mxu0 %v1811
    %2322 = vmatpush.bf16.msra.mxu0 %v1808
    %2323 = vmatpush.bf16.msra.mxu0 %v1805
    %2324 = vmatpush.bf16.msra.mxu0 %v1802
    %2325 = vmatpush.bf16.msra.mxu0 %v1799
    %2326 = vmatpush.bf16.msra.mxu0 %v1796
    %2327 = vmatpush.bf16.msra.mxu0 %v1793
    %2328 = vmatpush.bf16.msra.mxu0 %v1790
    %2329 = vmatmul.bf16.gmra.mxu0 %v2294
    %v2330 = vpop.f32.mrf.mxu0
    %v2331 = vadd.f32 %v1698, %v2330
    %v2332 = vpop.f32.mrf.mxu0
    %2333 = vdwg.mxu0
    %v2334 = vadd.f32 %v2291, %v2305
    %v2335 = vxor.u32 %v2334, 2147483648
    %v2336 = vmul.f32 %v2335, 1.442695
    %v2337 = vpow.pop %v2336
    %v2338 = vadd.f32 %v2337, 1.0
    %v2339 = vrcp.pop %v2338
    %v2340 = vmul.f32 %v2338, %v2339
    %v2341 = vsub.f32 1.0, %v2340
    %v2342 = vmul.f32 %v2339, %v2341
    %v2343 = vadd.f32 %v2339, %v2342
    %vm2344 = vweird.f32 %v2338
    %vm2345 = vweird.f32 %v2339
    %vm2346 = vmor %vm2344, %vm2345
    %v2347 = vsel %vm2346, %v2339, %v2343
    %v2348 = vand.u32 2147483647, %v2338
    %vm2349 = vcmp.eq.f32.partialorder %v2348, 8.507059e+37
    %v2350 = vand.u32 %v2338, 2147483648
    %v2351 = vor.u32 1.1754944e-38, %v2350
    %v2352 = vsel %vm2349, %v2351, %v2347
    %v2353 = vmul.f32 1.0, %v2352
    %v2354 = vadd.f32 %v2292, %v2318
    %v2355 = vxor.u32 %v2354, 2147483648
    %v2356 = vmul.f32 %v2355, 1.442695
    %v2357 = vpow.pop %v2356
    %v2358 = vadd.f32 %v2357, 1.0
    %v2359 = vrcp.pop %v2358
    %v2360 = vmul.f32 %v2358, %v2359
    %v2361 = vsub.f32 1.0, %v2360
    %v2362 = vmul.f32 %v2359, %v2361
    %v2363 = vadd.f32 %v2359, %v2362
    %vm2364 = vweird.f32 %v2358
    %vm2365 = vweird.f32 %v2359
    %vm2366 = vmor %vm2364, %vm2365
    %v2367 = vsel %vm2366, %v2359, %v2363
    %v2368 = vand.u32 2147483647, %v2358
    %vm2369 = vcmp.eq.f32.partialorder %v2368, 8.507059e+37
    %v2370 = vand.u32 %v2358, 2147483648
    %v2371 = vor.u32 1.1754944e-38, %v2370
    %v2372 = vsel %vm2369, %v2371, %v2367
    %v2373 = vmul.f32 1.0, %v2372
    %v2374 = vmul.f32 %v2353, %v2331
    %v2375 = vadd.f32 %v2293, %v2374
    %v2376 = vtanh.pop %v2375
    %v2377 = vsub.f32 1.0, %v2373
    %v2378 = vmul.f32 %v2377, %v2376
    %v2379 = vmul.f32 %v2373, %v2288
    %v2380 = vadd.f32 %v2378, %v2379
    %s2381 = scalar_lea.vmem [#allocation16], 40
    %2382 = vst [vmem:[%s2381] sm:$0xff] %v2380
    %v2383 = vld [vmem:[%s1162] sm:$0xff]
    %v2384 = vld [vmem:[%s1162 + $0x8] sm:$0xff]
    %v2385 = vld [vmem:[%s1162 + $0x10] sm:$0xff]
    %v2386 = vpack.c.bf16 %v2380, %v2380
    %2387 = vmatpush.bf16.msra.mxu0 %v1809
    %2388 = vmatpush.bf16.msra.mxu0 %v1806
    %2389 = vmatpush.bf16.msra.mxu0 %v1803
    %2390 = vmatpush.bf16.msra.mxu0 %v1800
    %2391 = vmatpush.bf16.msra.mxu0 %v1797
    %2392 = vmatpush.bf16.msra.mxu0 %v1794
    %2393 = vmatpush.bf16.msra.mxu0 %v1791
    %2394 = vmatpush.bf16.msra.mxu0 %v1788
    %2395 = vmatmul.bf16.gmra.mxu0 %v2386
    %v2396 = vpop.f32.mrf.mxu0
    %v2397 = vadd.f32 %v1696, %v2396
    %v2398 = vpop.f32.mrf.mxu0
    %2399 = vdwg.mxu0
    %2400 = vmatpush.bf16.msra.mxu0 %v1810
    %2401 = vmatpush.bf16.msra.mxu0 %v1807
    %2402 = vmatpush.bf16.msra.mxu0 %v1804
    %2403 = vmatpush.bf16.msra.mxu0 %v1801
    %2404 = vmatpush.bf16.msra.mxu0 %v1798
    %2405 = vmatpush.bf16.msra.mxu0 %v1795
    %2406 = vmatpush.bf16.msra.mxu0 %v1792
    %2407 = vmatpush.bf16.msra.mxu0 %v1789
    %2408 = vmatmul.bf16.gmra.mxu0 %v2386
    %v2409 = vpop.f32.mrf.mxu0
    %v2410 = vadd.f32 %v1697, %v2409
    %v2411 = vpop.f32.mrf.mxu0
    %2412 = vdwg.mxu0
    %2413 = vmatpush.bf16.msra.mxu0 %v1811
    %2414 = vmatpush.bf16.msra.mxu0 %v1808
    %2415 = vmatpush.bf16.msra.mxu0 %v1805
    %2416 = vmatpush.bf16.msra.mxu0 %v1802
    %2417 = vmatpush.bf16.msra.mxu0 %v1799
    %2418 = vmatpush.bf16.msra.mxu0 %v1796
    %2419 = vmatpush.bf16.msra.mxu0 %v1793
    %2420 = vmatpush.bf16.msra.mxu0 %v1790
    %2421 = vmatmul.bf16.gmra.mxu0 %v2386
    %v2422 = vpop.f32.mrf.mxu0
    %v2423 = vadd.f32 %v1698, %v2422
    %v2424 = vpop.f32.mrf.mxu0
    %2425 = vdwg.mxu0
    %v2426 = vadd.f32 %v2383, %v2397
    %v2427 = vxor.u32 %v2426, 2147483648
    %v2428 = vmul.f32 %v2427, 1.442695
    %v2429 = vpow.pop %v2428
    %v2430 = vadd.f32 %v2429, 1.0
    %v2431 = vrcp.pop %v2430
    %v2432 = vmul.f32 %v2430, %v2431
    %v2433 = vsub.f32 1.0, %v2432
    %v2434 = vmul.f32 %v2431, %v2433
    %v2435 = vadd.f32 %v2431, %v2434
    %vm2436 = vweird.f32 %v2430
    %vm2437 = vweird.f32 %v2431
    %vm2438 = vmor %vm2436, %vm2437
    %v2439 = vsel %vm2438, %v2431, %v2435
    %v2440 = vand.u32 2147483647, %v2430
    %vm2441 = vcmp.eq.f32.partialorder %v2440, 8.507059e+37
    %v2442 = vand.u32 %v2430, 2147483648
    %v2443 = vor.u32 1.1754944e-38, %v2442
    %v2444 = vsel %vm2441, %v2443, %v2439
    %v2445 = vmul.f32 1.0, %v2444
    %v2446 = vadd.f32 %v2384, %v2410
    %v2447 = vxor.u32 %v2446, 2147483648
    %v2448 = vmul.f32 %v2447, 1.442695
    %v2449 = vpow.pop %v2448
    %v2450 = vadd.f32 %v2449, 1.0
    %v2451 = vrcp.pop %v2450
    %v2452 = vmul.f32 %v2450, %v2451
    %v2453 = vsub.f32 1.0, %v2452
    %v2454 = vmul.f32 %v2451, %v2453
    %v2455 = vadd.f32 %v2451, %v2454
    %vm2456 = vweird.f32 %v2450
    %vm2457 = vweird.f32 %v2451
    %vm2458 = vmor %vm2456, %vm2457
    %v2459 = vsel %vm2458, %v2451, %v2455
    %v2460 = vand.u32 2147483647, %v2450
    %vm2461 = vcmp.eq.f32.partialorder %v2460, 8.507059e+37
    %v2462 = vand.u32 %v2450, 2147483648
    %v2463 = vor.u32 1.1754944e-38, %v2462
    %v2464 = vsel %vm2461, %v2463, %v2459
    %v2465 = vmul.f32 1.0, %v2464
    %v2466 = vmul.f32 %v2445, %v2423
    %v2467 = vadd.f32 %v2385, %v2466
    %v2468 = vtanh.pop %v2467
    %v2469 = vsub.f32 1.0, %v2465
    %v2470 = vmul.f32 %v2469, %v2468
    %v2471 = vmul.f32 %v2465, %v2380
    %v2472 = vadd.f32 %v2470, %v2471
    %s2473 = scalar_lea.vmem [#allocation16], 48
    %2474 = vst [vmem:[%s2473] sm:$0xff] %v2472
    %v2475 = vld [vmem:[%s1255] sm:$0xff]
    %v2476 = vld [vmem:[%s1255 + $0x8] sm:$0xff]
    %v2477 = vld [vmem:[%s1255 + $0x10] sm:$0xff]
    %v2478 = vpack.c.bf16 %v2472, %v2472
    %2479 = vmatpush.bf16.msra.mxu0 %v1809
    %2480 = vmatpush.bf16.msra.mxu0 %v1806
    %2481 = vmatpush.bf16.msra.mxu0 %v1803
    %2482 = vmatpush.bf16.msra.mxu0 %v1800
    %2483 = vmatpush.bf16.msra.mxu0 %v1797
    %2484 = vmatpush.bf16.msra.mxu0 %v1794
    %2485 = vmatpush.bf16.msra.mxu0 %v1791
    %2486 = vmatpush.bf16.msra.mxu0 %v1788
    %2487 = vmatmul.bf16.gmra.mxu0 %v2478
    %v2488 = vpop.f32.mrf.mxu0
    %v2489 = vadd.f32 %v1696, %v2488
    %v2490 = vpop.f32.mrf.mxu0
    %2491 = vdwg.mxu0
    %2492 = vmatpush.bf16.msra.mxu0 %v1810
    %2493 = vmatpush.bf16.msra.mxu0 %v1807
    %2494 = vmatpush.bf16.msra.mxu0 %v1804
    %2495 = vmatpush.bf16.msra.mxu0 %v1801
    %2496 = vmatpush.bf16.msra.mxu0 %v1798
    %2497 = vmatpush.bf16.msra.mxu0 %v1795
    %2498 = vmatpush.bf16.msra.mxu0 %v1792
    %2499 = vmatpush.bf16.msra.mxu0 %v1789
    %2500 = vmatmul.bf16.gmra.mxu0 %v2478
    %v2501 = vpop.f32.mrf.mxu0
    %v2502 = vadd.f32 %v1697, %v2501
    %v2503 = vpop.f32.mrf.mxu0
    %2504 = vdwg.mxu0
    %2505 = vmatpush.bf16.msra.mxu0 %v1811
    %2506 = vmatpush.bf16.msra.mxu0 %v1808
    %2507 = vmatpush.bf16.msra.mxu0 %v1805
    %2508 = vmatpush.bf16.msra.mxu0 %v1802
    %2509 = vmatpush.bf16.msra.mxu0 %v1799
    %2510 = vmatpush.bf16.msra.mxu0 %v1796
    %2511 = vmatpush.bf16.msra.mxu0 %v1793
    %2512 = vmatpush.bf16.msra.mxu0 %v1790
    %2513 = vmatmul.bf16.gmra.mxu0 %v2478
    %v2514 = vpop.f32.mrf.mxu0
    %v2515 = vadd.f32 %v1698, %v2514
    %v2516 = vpop.f32.mrf.mxu0
    %2517 = vdwg.mxu0
    %v2518 = vadd.f32 %v2475, %v2489
    %v2519 = vxor.u32 %v2518, 2147483648
    %v2520 = vmul.f32 %v2519, 1.442695
    %v2521 = vpow.pop %v2520
    %v2522 = vadd.f32 %v2521, 1.0
    %v2523 = vrcp.pop %v2522
    %v2524 = vmul.f32 %v2522, %v2523
    %v2525 = vsub.f32 1.0, %v2524
    %v2526 = vmul.f32 %v2523, %v2525
    %v2527 = vadd.f32 %v2523, %v2526
    %vm2528 = vweird.f32 %v2522
    %vm2529 = vweird.f32 %v2523
    %vm2530 = vmor %vm2528, %vm2529
    %v2531 = vsel %vm2530, %v2523, %v2527
    %v2532 = vand.u32 2147483647, %v2522
    %vm2533 = vcmp.eq.f32.partialorder %v2532, 8.507059e+37
    %v2534 = vand.u32 %v2522, 2147483648
    %v2535 = vor.u32 1.1754944e-38, %v2534
    %v2536 = vsel %vm2533, %v2535, %v2531
    %v2537 = vmul.f32 1.0, %v2536
    %v2538 = vadd.f32 %v2476, %v2502
    %v2539 = vxor.u32 %v2538, 2147483648
    %v2540 = vmul.f32 %v2539, 1.442695
    %v2541 = vpow.pop %v2540
    %v2542 = vadd.f32 %v2541, 1.0
    %v2543 = vrcp.pop %v2542
    %v2544 = vmul.f32 %v2542, %v2543
    %v2545 = vsub.f32 1.0, %v2544
    %v2546 = vmul.f32 %v2543, %v2545
    %v2547 = vadd.f32 %v2543, %v2546
    %vm2548 = vweird.f32 %v2542
    %vm2549 = vweird.f32 %v2543
    %vm2550 = vmor %vm2548, %vm2549
    %v2551 = vsel %vm2550, %v2543, %v2547
    %v2552 = vand.u32 2147483647, %v2542
    %vm2553 = vcmp.eq.f32.partialorder %v2552, 8.507059e+37
    %v2554 = vand.u32 %v2542, 2147483648
    %v2555 = vor.u32 1.1754944e-38, %v2554
    %v2556 = vsel %vm2553, %v2555, %v2551
    %v2557 = vmul.f32 1.0, %v2556
    %v2558 = vmul.f32 %v2537, %v2515
    %v2559 = vadd.f32 %v2477, %v2558
    %v2560 = vtanh.pop %v2559
    %v2561 = vsub.f32 1.0, %v2557
    %v2562 = vmul.f32 %v2561, %v2560
    %v2563 = vmul.f32 %v2557, %v2472
    %v2564 = vadd.f32 %v2562, %v2563
    %s2565 = scalar_lea.vmem [#allocation16], 56
    %2566 = vst [vmem:[%s2565] sm:$0xff] %v2564
    %2567 = vst [vmem:[%s1702] sm:$0xff] %v2564
    // Predicated region
    $region58: #{tpu_custom_call.1} parent=1 // pred_check
      _
    $region59: #{tpu_custom_call.1} parent=1 // pred_check_branch
      %2569 = sbr.rel (0) target = $region61
    $region60: #{tpu_custom_call.1} parent=1 // pred_region
      %2571 = vsyncadd [#allocation7], 0
      %s2572 = sshll.u32 [#allocation16], 4
      %s2573 = int_to_ptr.vmem [resolvable:$true] %s2572
      %s2574 = sshll.u32 %s7, 4
      %s2575 = int_to_ptr.hbm [resolvable:$true] %s2574
      %2580 = dma.vmem_to_hbm [thread:$0]  %s2573, 1024, %s2575, [#allocation7], 128, 128, 8
    $region61: #{tpu_custom_call.1} parent=1 // pred_fallthru
      _
    // Predicated region
    $region62: #{tpu_custom_call.1} parent=1 // pred_check
      _
    $region63: #{tpu_custom_call.1} parent=1 // pred_check_branch
      %2582 = sbr.rel (0) target = $region65
    $region64: #{tpu_custom_call.1} parent=1 // pred_region
      %2584 = dma.done [#allocation7], 1024
    $region65: #{tpu_custom_call.1} parent=1 // pred_fallthru
      _
    %2585 = vsyncpa [#allocation6], 1
    %2586 = vsyncpa [#allocation9], 1
    %2587 = vsyncpa [#allocation12], 1
    %2588 = vsyncpa [#allocation15], 1
    %2589 = vsyncpa [#allocation7], 1

// kernel: tpu_custom_call.1
$region0: #{tpu_custom_call.1}
  #allocation0 [shape = 'u32[]', space=smem, size = 0x4, offset = 0x4, fixed_abs, tag = 'smem constant byte address 0x4 - core index']
  #allocation1 [shape = 'u32[72,128]{1,0:T(1,128)}', space=vmem, size = 0x9000, scoped, tag = 'internal scratch']
  #allocation2 [shape = 'f32[2,8,128]{2,1,0:T(8,128)}', space=vmem, size = 0x2000, scoped, tag = 'scratch operand']
  #allocation3 [shape = 'bf16[8,8,128]{2,1,0:T(8,128)(2,1)}', space=vmem, size = 0x4000, scoped, tag = 'scratch operand']
  #allocation4 [shape = 'f32[8,8,384]{2,1,0:T(8,128)}', space=vmem, size = 0x18000, scoped, tag = 'scratch operand']
  %s0 = inlined_call_operand.hbm [shape: bf16[8,8,128], index: 0, kind: input, shape index: {}]
  %s1 = inlined_call_operand.hbm [shape: bf16[128,384], index: 1, kind: input, shape index: {}]
  %s2 = inlined_call_operand.hbm [shape: f32[1,384], index: 2, kind: input, shape index: {}]
  %s3 = inlined_call_operand.hbm [shape: bf16[1,128,384], index: 3, kind: input, shape index: {}]
  %s4 = inlined_call_operand.vmem [shape: f32[1,1,384], index: 4, kind: input, shape index: {}]
  %s5 = inlined_call_operand.hbm [shape: bf16[2,128,384], index: 5, kind: input, shape index: {}]
  %s6 = inlined_call_operand.hbm [shape: f32[2,1,384], index: 6, kind: input, shape index: {}]
  %s7 = inlined_call_operand.hbm [shape: f32[8,8,128], index: 7, kind: output, shape index: {}]
  %s8 = sld [smem:[#allocation0]]
  $region66: #{tpu_custom_call.1} parent=0
    _
  %s10 = ssub.s32 1, %s8
  %s11 = scalar_select 0, %s10, %s8
  $region1: #{tpu_custom_call.1} parent=0
    #allocation5 [shape = 'u8[16384]{0}', space=vmem, size = 0x4000, scoped, tag = 'input window, operand 0, single buffered']
    #allocation6 [shape = 's32[1]{0}', space=sflag, size = 0x4, scoped, tag = 'scoped memory for tpu_custom_call.1']
    #allocation7 [shape = 's32[1]{0}', space=sflag, size = 0x4, scoped, tag = 'scoped memory for tpu_custom_call.1']
    #allocation8 [shape = 'u8[98304]{0}', space=vmem, size = 0x18000, scoped, tag = 'input window, operand 1, single buffered']
    #allocation9 [shape = 's32[1]{0}', space=sflag, size = 0x4, scoped, tag = 'scoped memory for tpu_custom_call.1']
    #allocation10 [shape = 'u8[1536]{0}', space=vmem, size = 0x800, scoped, tag = 'input window, operand 2, single buffered']
    #allocation11 [shape = 'u8[98304]{0}', space=vmem, size = 0x18000, scoped, tag = 'input window, operand 3, single buffered']
    #allocation12 [shape = 's32[1]{0}', space=sflag, size = 0x4, scoped, tag = 'scoped memory for tpu_custom_call.1']
    #allocation13 [shape = 'u8[196608]{0}', space=vmem, size = 0x30000, scoped, tag = 'input window, operand 5, single buffered']
    #allocation14 [shape = 'u8[3072]{0}', space=vmem, size = 0xc00, scoped, tag = 'input window, operand 6, single buffered']
    #allocation15 [shape = 's32[1]{0}', space=sflag, size = 0x4, scoped, tag = 'scoped memory for tpu_custom_call.1']
    #allocation16 [shape = 'u8[32768]{0}', space=vmem, size = 0x8000, scoped, tag = 'output window, operand 0, single buffered']
    %12 = vsyncpa [#allocation6], 0
    %13 = vsyncpa [#allocation9], 0
    %14 = vsyncpa [#allocation12], 0
    %15 = vsyncpa [#allocation15], 0
    %16 = vsyncpa [#allocation7], 0
    // Predicated region
    $region2: #{tpu_custom_call.1} parent=1 // pred_check
      _
    $region3: #{tpu_custom_call.1} parent=1 // pred_check_branch
      %18 = sbr.rel (0) target = $region5
    $region4: #{tpu_custom_call.1} parent=1 // pred_region
      %20 = vsyncadd [#allocation6], 0
      %s21 = sshll.u32 %s0, 4
      %s22 = int_to_ptr.hbm [resolvable:$true] %s21
      %s23 = sshll.u32 [#allocation5], 4
      %s24 = int_to_ptr.vmem [resolvable:$true] %s23
      %29 = dma.hbm_to_vmem [thread:$0]  %s22, 512, %s24, [#allocation6], 64, 64, 4
    $region5: #{tpu_custom_call.1} parent=1 // pred_fallthru
      _
    // Predicated region
    $region6: #{tpu_custom_call.1} parent=1 // pred_check
      _
    $region7: #{tpu_custom_call.1} parent=1 // pred_check_branch
      %31 = sbr.rel (0) target = $region9
    $region8: #{tpu_custom_call.1} parent=1 // pred_region
      %33 = vsyncadd [#allocation9], 0
      %s34 = sshll.u32 %s1, 4
      %s35 = int_to_ptr.hbm [resolvable:$true] %s34
      %s36 = sshll.u32 [#allocation8], 4
      %s37 = int_to_ptr.vmem [resolvable:$true] %s36
      %42 = dma.hbm_to_vmem [thread:$0]  %s35, 3072, %s37, [#allocation9], 192, 192, 12
    $region9: #{tpu_custom_call.1} parent=1 // pred_fallthru
      _
    // Predicated region
    $region10: #{tpu_custom_call.1} parent=1 // pred_check
      _
    $region11: #{tpu_custom_call.1} parent=1 // pred_check_branch
      %44 = sbr.rel (0) target = $region13
    $region12: #{tpu_custom_call.1} parent=1 // pred_region
      %46 = vsyncadd [#allocation9], 0
      %s48 = sshll.u32 %s2, 4
      %s49 = int_to_ptr.hbm [resolvable:$true] %s48
      %s50 = sshll.u32 [#allocation10], 4
      %s51 = int_to_ptr.vmem [resolvable:$true] %s50
      %53 = dma.hbm_to_vmem [thread:$0]  %s49, 48, %s51, [#allocation9]
    $region13: #{tpu_custom_call.1} parent=1 // pred_fallthru
      _
    // Predicated region
    $region14: #{tpu_custom_call.1} parent=1 // pred_check
      _
    $region15: #{tpu_custom_call.1} parent=1 // pred_check_branch
      %55 = sbr.rel (0) target = $region17
    $region16: #{tpu_custom_call.1} parent=1 // pred_region
      %57 = vsyncadd [#allocation12], 0
      %s58 = sshll.u32 %s3, 4
      %s59 = int_to_ptr.hbm [resolvable:$true] %s58
      %s60 = sshll.u32 [#allocation11], 4
      %s61 = int_to_ptr.vmem [resolvable:$true] %s60
      %66 = dma.hbm_to_vmem [thread:$0]  %s59, 3072, %s61, [#allocation12], 192, 192, 12
    $region17: #{tpu_custom_call.1} parent=1 // pred_fallthru
      _
    // Predicated region
    $region18: #{tpu_custom_call.1} parent=1 // pred_check
      _
    $region19: #{tpu_custom_call.1} parent=1 // pred_check_branch
      %68 = sbr.rel (0) target = $region21
    $region20: #{tpu_custom_call.1} parent=1 // pred_region
      _
    $region21: #{tpu_custom_call.1} parent=1 // pred_fallthru
      _
    // Predicated region
    $region22: #{tpu_custom_call.1} parent=1 // pred_check
      _
    $region23: #{tpu_custom_call.1} parent=1 // pred_check_branch
      %70 = sbr.rel (0) target = $region25
    $region24: #{tpu_custom_call.1} parent=1 // pred_region
      %72 = vsyncadd [#allocation12], 0
      %s73 = sshll.u32 %s5, 4
      %s74 = int_to_ptr.hbm [resolvable:$true] %s73
      %s75 = sshll.u32 [#allocation13], 4
      %s76 = int_to_ptr.vmem [resolvable:$true] %s75
      %81 = dma.hbm_to_vmem [thread:$0]  %s74, 6144, %s76, [#allocation12], 192, 192, 12
    $region25: #{tpu_custom_call.1} parent=1 // pred_fallthru
      _
    // Predicated region
    $region26: #{tpu_custom_call.1} parent=1 // pred_check
      _
    $region27: #{tpu_custom_call.1} parent=1 // pred_check_branch
      %83 = sbr.rel (0) target = $region29
    $region28: #{tpu_custom_call.1} parent=1 // pred_region
      %85 = vsyncadd [#allocation15], 0
      %s86 = sshll.u32 %s6, 4
      %s87 = int_to_ptr.hbm [resolvable:$true] %s86
      %s88 = sshll.u32 [#allocation14], 4
      %s89 = int_to_ptr.vmem [resolvable:$true] %s88
      %94 = dma.hbm_to_vmem [thread:$0]  %s87, 96, %s89, [#allocation15], 48, 48, 3
    $region29: #{tpu_custom_call.1} parent=1 // pred_fallthru
      _
    // Predicated region
    $region30: #{tpu_custom_call.1} parent=1 // pred_check
      _
    $region31: #{tpu_custom_call.1} parent=1 // pred_check_branch
      %96 = sbr.rel (0) target = $region33
    $region32: #{tpu_custom_call.1} parent=1 // pred_region
      %98 = dma.done [#allocation6], 512
    $region33: #{tpu_custom_call.1} parent=1 // pred_fallthru
      _
    // Predicated region
    $region34: #{tpu_custom_call.1} parent=1 // pred_check
      _
    $region35: #{tpu_custom_call.1} parent=1 // pred_check_branch
      %100 = sbr.rel (0) target = $region37
    $region36: #{tpu_custom_call.1} parent=1 // pred_region
      %102 = dma.done [#allocation9], 3072
    $region37: #{tpu_custom_call.1} parent=1 // pred_fallthru
      _
    // Predicated region
    $region38: #{tpu_custom_call.1} parent=1 // pred_check
      _
    $region39: #{tpu_custom_call.1} parent=1 // pred_check_branch
      %104 = sbr.rel (0) target = $region41
    $region40: #{tpu_custom_call.1} parent=1 // pred_region
      %106 = dma.done [#allocation9], 48
    $region41: #{tpu_custom_call.1} parent=1 // pred_fallthru
      _
    // Predicated region
    $region42: #{tpu_custom_call.1} parent=1 // pred_check
      _
    $region43: #{tpu_custom_call.1} parent=1 // pred_check_branch
      %108 = sbr.rel (0) target = $region45
    $region44: #{tpu_custom_call.1} parent=1 // pred_region
      %110 = dma.done [#allocation12], 3072
    $region45: #{tpu_custom_call.1} parent=1 // pred_fallthru
      _
    // Predicated region
    $region46: #{tpu_custom_call.1} parent=1 // pred_check
      _
    $region47: #{tpu_custom_call.1} parent=1 // pred_check_branch
      %112 = sbr.rel (0) target = $region49
    $region48: #{tpu_custom_call.1} parent=1 // pred_region
      %114 = dma.done [#allocation12], 6144
    $region49: #{tpu_custom_call.1} parent=1 // pred_fallthru
      _
    // Predicated region
    $region50: #{tpu_custom_call.1} parent=1 // pred_check
      _
    $region51: #{tpu_custom_call.1} parent=1 // pred_check_branch
      %116 = sbr.rel (0) target = $region53
    $region52: #{tpu_custom_call.1} parent=1 // pred_region
      %118 = dma.done [#allocation15], 96
    $region53: #{tpu_custom_call.1} parent=1 // pred_fallthru
      _
    %p119 = scmp.eq.s32.totalorder 0, 0
    // Predicated region
    $region54: #{tpu_custom_call.1} parent=1 // pred_check
      %p120 = pneg %p119
    $region55: #{tpu_custom_call.1} parent=1 // pred_check_branch
      %122 = sbr.rel (%p120) target = $region57
    $region56: #{tpu_custom_call.1} parent=1 // pred_region
      %123 = vst [vmem:[#allocation2] sm:$0xff] 0.0
      %124 = vst [vmem:[#allocation2 + $0x8] sm:$0xff] 0.0
    $region57: #{tpu_custom_call.1} parent=1 // pred_fallthru
      _
    %v125 = vld [vmem:[#allocation5] sm:$0xf]
    %v126 = vld [vmem:[#allocation5 + $0x4] sm:$0xf]
    %v127 = vld [vmem:[#allocation5 + $0x8] sm:$0xf]
    %v128 = vld [vmem:[#allocation5 + $0xc] sm:$0xf]
    %v129 = vld [vmem:[#allocation5 + $0x10] sm:$0xf]
    %v130 = vld [vmem:[#allocation5 + $0x14] sm:$0xf]
    %v131 = vld [vmem:[#allocation5 + $0x18] sm:$0xf]
    %v132 = vld [vmem:[#allocation5 + $0x1c] sm:$0xf]
    %v133 = vld [vmem:[#allocation8] sm:$0xff]
    %v134 = vld [vmem:[#allocation8 + $0x8] sm:$0xf]
    %v135 = vld [vmem:[#allocation8 + $0xc] sm:$0xff]
    %v136 = vld [vmem:[#allocation8 + $0x14] sm:$0xf]
    %v137 = vld [vmem:[#allocation8 + $0x18] sm:$0xff]
    %v138 = vld [vmem:[#allocation8 + $0x20] sm:$0xf]
    %v139 = vld [vmem:[#allocation8 + $0x24] sm:$0xff]
    %v140 = vld [vmem:[#allocation8 + $0x2c] sm:$0xf]
    %v141 = vld [vmem:[#allocation8 + $0x30] sm:$0xff]
    %v142 = vld [vmem:[#allocation8 + $0x38] sm:$0xf]
    %v143 = vld [vmem:[#allocation8 + $0x3c] sm:$0xff]
    %v144 = vld [vmem:[#allocation8 + $0x44] sm:$0xf]
    %v145 = vld [vmem:[#allocation8 + $0x48] sm:$0xff]
    %v146 = vld [vmem:[#allocation8 + $0x50] sm:$0xf]
    %v147 = vld [vmem:[#allocation8 + $0x54] sm:$0xff]
    %v148 = vld [vmem:[#allocation8 + $0x5c] sm:$0xf]
    %v149 = vld [vmem:[#allocation8 + $0x60] sm:$0xff]
    %v150 = vld [vmem:[#allocation8 + $0x68] sm:$0xf]
    %v151 = vld [vmem:[#allocation8 + $0x6c] sm:$0xff]
    %v152 = vld [vmem:[#allocation8 + $0x74] sm:$0xf]
    %v153 = vld [vmem:[#allocation8 + $0x78] sm:$0xff]
    %v154 = vld [vmem:[#allocation8 + $0x80] sm:$0xf]
    %v155 = vld [vmem:[#allocation8 + $0x84] sm:$0xff]
    %v156 = vld [vmem:[#allocation8 + $0x8c] sm:$0xf]
    %v157 = vld [vmem:[#allocation8 + $0x90] sm:$0xff]
    %v158 = vld [vmem:[#allocation8 + $0x98] sm:$0xf]
    %v159 = vld [vmem:[#allocation8 + $0x9c] sm:$0xff]
    %v160 = vld [vmem:[#allocation8 + $0xa4] sm:$0xf]
    %v161 = vld [vmem:[#allocation8 + $0xa8] sm:$0xff]
    %v162 = vld [vmem:[#allocation8 + $0xb0] sm:$0xf]
    %v163 = vld [vmem:[#allocation8 + $0xb4] sm:$0xff]
    %v164 = vld [vmem:[#allocation8 + $0xbc] sm:$0xf]
    %v165 = vld [vmem:[#allocation10] sm:$0x7]
    %v167 = vperm.slane %v165, 0
    %v168 = vperm.slane %v165, 1
    %v169 = vperm.slane %v165, 2
    %v181 = vunpack.c.l.b16 %v125
    %v182 = vunpack.c.l.b16 %v126
    %v183 = vunpack.c.l.b16 %v127
    %v184 = vunpack.c.l.b16 %v128
    %v185 = vunpack.c.l.b16 %v129
    %v186 = vunpack.c.l.b16 %v130
    %v187 = vunpack.c.l.b16 %v131
    %v188 = vunpack.c.l.b16 %v132
    %v189 = vpack.c.b16 %v182, %v181
    %v190 = vpack.c.b16 %v184, %v183
    %v191 = vpack.c.b16 %v186, %v185
    %v192 = vpack.c.b16 %v188, %v187
    %v229 = vunpack.c.l.b16 %v133
    %v230 = vunpack.c.h.b16 %v133
    %v231 = vunpack.c.l.b16 %v134
    %v232 = vunpack.c.l.b16 %v135
    %v233 = vunpack.c.h.b16 %v135
    %v234 = vunpack.c.l.b16 %v136
    %v235 = vunpack.c.l.b16 %v137
    %v236 = vunpack.c.h.b16 %v137
    %v237 = vunpack.c.l.b16 %v138
    %v238 = vunpack.c.l.b16 %v139
    %v239 = vunpack.c.h.b16 %v139
    %v240 = vunpack.c.l.b16 %v140
    %v241 = vunpack.c.l.b16 %v141
    %v242 = vunpack.c.h.b16 %v141
    %v243 = vunpack.c.l.b16 %v142
    %v244 = vunpack.c.l.b16 %v143
    %v245 = vunpack.c.h.b16 %v143
    %v246 = vunpack.c.l.b16 %v144
    %v247 = vunpack.c.l.b16 %v145
    %v248 = vunpack.c.h.b16 %v145
    %v249 = vunpack.c.l.b16 %v146
    %v250 = vunpack.c.l.b16 %v147
    %v251 = vunpack.c.h.b16 %v147
    %v252 = vunpack.c.l.b16 %v148
    %v253 = vunpack.c.l.b16 %v149
    %v254 = vunpack.c.h.b16 %v149
    %v255 = vunpack.c.l.b16 %v150
    %v256 = vunpack.c.l.b16 %v151
    %v257 = vunpack.c.h.b16 %v151
    %v258 = vunpack.c.l.b16 %v152
    %v259 = vunpack.c.l.b16 %v153
    %v260 = vunpack.c.h.b16 %v153
    %v261 = vunpack.c.l.b16 %v154
    %v262 = vunpack.c.l.b16 %v155
    %v263 = vunpack.c.h.b16 %v155
    %v264 = vunpack.c.l.b16 %v156
    %v265 = vunpack.c.l.b16 %v157
    %v266 = vunpack.c.h.b16 %v157
    %v267 = vunpack.c.l.b16 %v158
    %v268 = vunpack.c.l.b16 %v159
    %v269 = vunpack.c.h.b16 %v159
    %v270 = vunpack.c.l.b16 %v160
    %v271 = vunpack.c.l.b16 %v161
    %v272 = vunpack.c.h.b16 %v161
    %v273 = vunpack.c.l.b16 %v162
    %v274 = vunpack.c.l.b16 %v163
    %v275 = vunpack.c.h.b16 %v163
    %v276 = vunpack.c.l.b16 %v164
    %v277 = vpack.c.b16 %v232, %v229
    %v278 = vpack.c.b16 %v233, %v230
    %v279 = vpack.c.b16 %v234, %v231
    %v280 = vpack.c.b16 %v238, %v235
    %v281 = vpack.c.b16 %v239, %v236
    %v282 = vpack.c.b16 %v240, %v237
    %v283 = vpack.c.b16 %v244, %v241
    %v284 = vpack.c.b16 %v245, %v242
    %v285 = vpack.c.b16 %v246, %v243
    %v286 = vpack.c.b16 %v250, %v247
    %v287 = vpack.c.b16 %v251, %v248
    %v288 = vpack.c.b16 %v252, %v249
    %v289 = vpack.c.b16 %v256, %v253
    %v290 = vpack.c.b16 %v257, %v254
    %v291 = vpack.c.b16 %v258, %v255
    %v292 = vpack.c.b16 %v262, %v259
    %v293 = vpack.c.b16 %v263, %v260
    %v294 = vpack.c.b16 %v264, %v261
    %v295 = vpack.c.b16 %v268, %v265
    %v296 = vpack.c.b16 %v269, %v266
    %v297 = vpack.c.b16 %v270, %v267
    %v298 = vpack.c.b16 %v274, %v271
    %v299 = vpack.c.b16 %v275, %v272
    %v300 = vpack.c.b16 %v276, %v273
    %325 = vmatpush.bf16.msra.mxu0 %v298
    %326 = vmatpush.bf16.msra.mxu0 %v295
    %327 = vmatpush.bf16.msra.mxu0 %v292
    %328 = vmatpush.bf16.msra.mxu0 %v289
    %329 = vmatpush.bf16.msra.mxu0 %v286
    %330 = vmatpush.bf16.msra.mxu0 %v283
    %331 = vmatpush.bf16.msra.mxu0 %v280
    %332 = vmatpush.bf16.msra.mxu0 %v277
    %333 = vmatmul.bf16.gmra.mxu0 %v189
    %v334 = vpop.f32.mrf.mxu0
    %v335 = vadd.f32 %v167, %v334
    %v336 = vpop.f32.mrf.mxu0
    %v337 = vadd.f32 %v167, %v336
    %338 = vmatmul.bf16.gmra.mxu0 %v190
    %v339 = vpop.f32.mrf.mxu0
    %v340 = vadd.f32 %v167, %v339
    %v341 = vpop.f32.mrf.mxu0
    %v342 = vadd.f32 %v167, %v341
    %343 = vmatmul.bf16.gmra.mxu0 %v191
    %v344 = vpop.f32.mrf.mxu0
    %v345 = vadd.f32 %v167, %v344
    %v346 = vpop.f32.mrf.mxu0
    %v347 = vadd.f32 %v167, %v346
    %348 = vmatmul.bf16.gmra.mxu0 %v192
    %v349 = vpop.f32.mrf.mxu0
    %v350 = vadd.f32 %v167, %v349
    %v351 = vpop.f32.mrf.mxu0
    %v352 = vadd.f32 %v167, %v351
    %353 = vdwg.mxu0
    %354 = vmatpush.bf16.msra.mxu0 %v299
    %355 = vmatpush.bf16.msra.mxu0 %v296
    %356 = vmatpush.bf16.msra.mxu0 %v293
    %357 = vmatpush.bf16.msra.mxu0 %v290
    %358 = vmatpush.bf16.msra.mxu0 %v287
    %359 = vmatpush.bf16.msra.mxu0 %v284
    %360 = vmatpush.bf16.msra.mxu0 %v281
    %361 = vmatpush.bf16.msra.mxu0 %v278
    %362 = vmatmul.bf16.gmra.mxu0 %v189
    %v363 = vpop.f32.mrf.mxu0
    %v364 = vadd.f32 %v168, %v363
    %v365 = vpop.f32.mrf.mxu0
    %v366 = vadd.f32 %v168, %v365
    %367 = vmatmul.bf16.gmra.mxu0 %v190
    %v368 = vpop.f32.mrf.mxu0
    %v369 = vadd.f32 %v168, %v368
    %v370 = vpop.f32.mrf.mxu0
    %v371 = vadd.f32 %v168, %v370
    %372 = vmatmul.bf16.gmra.mxu0 %v191
    %v373 = vpop.f32.mrf.mxu0
    %v374 = vadd.f32 %v168, %v373
    %v375 = vpop.f32.mrf.mxu0
    %v376 = vadd.f32 %v168, %v375
    %377 = vmatmul.bf16.gmra.mxu0 %v192
    %v378 = vpop.f32.mrf.mxu0
    %v379 = vadd.f32 %v168, %v378
    %v380 = vpop.f32.mrf.mxu0
    %v381 = vadd.f32 %v168, %v380
    %382 = vdwg.mxu0
    %383 = vmatpush.bf16.msra.mxu0 %v300
    %384 = vmatpush.bf16.msra.mxu0 %v297
    %385 = vmatpush.bf16.msra.mxu0 %v294
    %386 = vmatpush.bf16.msra.mxu0 %v291
    %387 = vmatpush.bf16.msra.mxu0 %v288
    %388 = vmatpush.bf16.msra.mxu0 %v285
    %389 = vmatpush.bf16.msra.mxu0 %v282
    %390 = vmatpush.bf16.msra.mxu0 %v279
    %391 = vmatmul.bf16.gmra.mxu0 %v189
    %v392 = vpop.f32.mrf.mxu0
    %v393 = vadd.f32 %v169, %v392
    %v394 = vpop.f32.mrf.mxu0
    %v395 = vadd.f32 %v169, %v394
    %396 = vmatmul.bf16.gmra.mxu0 %v190
    %v397 = vpop.f32.mrf.mxu0
    %v398 = vadd.f32 %v169, %v397
    %v399 = vpop.f32.mrf.mxu0
    %v400 = vadd.f32 %v169, %v399
    %401 = vmatmul.bf16.gmra.mxu0 %v191
    %v402 = vpop.f32.mrf.mxu0
    %v403 = vadd.f32 %v169, %v402
    %v404 = vpop.f32.mrf.mxu0
    %v405 = vadd.f32 %v169, %v404
    %406 = vmatmul.bf16.gmra.mxu0 %v192
    %v407 = vpop.f32.mrf.mxu0
    %v408 = vadd.f32 %v169, %v407
    %v409 = vpop.f32.mrf.mxu0
    %v410 = vadd.f32 %v169, %v409
    %411 = vdwg.mxu0
    %412 = vst [vmem:[#allocation4] sm:$0xff] %v335
    %413 = vst [vmem:[#allocation4 + $0x8] sm:$0xff] %v364
    %414 = vst [vmem:[#allocation4 + $0x10] sm:$0xff] %v393
    %415 = vst [vmem:[#allocation4 + $0x18] sm:$0xff] %v337
    %416 = vst [vmem:[#allocation4 + $0x20] sm:$0xff] %v366
    %417 = vst [vmem:[#allocation4 + $0x28] sm:$0xff] %v395
    %418 = vst [vmem:[#allocation4 + $0x30] sm:$0xff] %v340
    %419 = vst [vmem:[#allocation4 + $0x38] sm:$0xff] %v369
    %420 = vst [vmem:[#allocation4 + $0x40] sm:$0xff] %v398
    %421 = vst [vmem:[#allocation4 + $0x48] sm:$0xff] %v342
    %422 = vst [vmem:[#allocation4 + $0x50] sm:$0xff] %v371
    %423 = vst [vmem:[#allocation4 + $0x58] sm:$0xff] %v400
    %424 = vst [vmem:[#allocation4 + $0x60] sm:$0xff] %v345
    %425 = vst [vmem:[#allocation4 + $0x68] sm:$0xff] %v374
    %426 = vst [vmem:[#allocation4 + $0x70] sm:$0xff] %v403
    %427 = vst [vmem:[#allocation4 + $0x78] sm:$0xff] %v347
    %428 = vst [vmem:[#allocation4 + $0x80] sm:$0xff] %v376
    %429 = vst [vmem:[#allocation4 + $0x88] sm:$0xff] %v405
    %430 = vst [vmem:[#allocation4 + $0x90] sm:$0xff] %v350
    %431 = vst [vmem:[#allocation4 + $0x98] sm:$0xff] %v379
    %432 = vst [vmem:[#allocation4 + $0xa0] sm:$0xff] %v408
    %433 = vst [vmem:[#allocation4 + $0xa8] sm:$0xff] %v352
    %434 = vst [vmem:[#allocation4 + $0xb0] sm:$0xff] %v381
    %435 = vst [vmem:[#allocation4 + $0xb8] sm:$0xff] %v410
    %v436 = vld [vmem:[#allocation13] sm:$0xff]
    %v437 = vld [vmem:[#allocation13 + $0x8] sm:$0xf]
    %v438 = vld [vmem:[#allocation13 + $0xc] sm:$0xff]
    %v439 = vld [vmem:[#allocation13 + $0x14] sm:$0xf]
    %v440 = vld [vmem:[#allocation13 + $0x18] sm:$0xff]
    %v441 = vld [vmem:[#allocation13 + $0x20] sm:$0xf]
    %v442 = vld [vmem:[#allocation13 + $0x24] sm:$0xff]
    %v443 = vld [vmem:[#allocation13 + $0x2c] sm:$0xf]
    %v444 = vld [vmem:[#allocation13 + $0x30] sm:$0xff]
    %v445 = vld [vmem:[#allocation13 + $0x38] sm:$0xf]
    %v446 = vld [vmem:[#allocation13 + $0x3c] sm:$0xff]
    %v447 = vld [vmem:[#allocation13 + $0x44] sm:$0xf]
    %v448 = vld [vmem:[#allocation13 + $0x48] sm:$0xff]
    %v449 = vld [vmem:[#allocation13 + $0x50] sm:$0xf]
    %v450 = vld [vmem:[#allocation13 + $0x54] sm:$0xff]
    %v451 = vld [vmem:[#allocation13 + $0x5c] sm:$0xf]
    %v452 = vld [vmem:[#allocation13 + $0x60] sm:$0xff]
    %v453 = vld [vmem:[#allocation13 + $0x68] sm:$0xf]
    %v454 = vld [vmem:[#allocation13 + $0x6c] sm:$0xff]
    %v455 = vld [vmem:[#allocation13 + $0x74] sm:$0xf]
    %v456 = vld [vmem:[#allocation13 + $0x78] sm:$0xff]
    %v457 = vld [vmem:[#allocation13 + $0x80] sm:$0xf]
    %v458 = vld [vmem:[#allocation13 + $0x84] sm:$0xff]
    %v459 = vld [vmem:[#allocation13 + $0x8c] sm:$0xf]
    %v460 = vld [vmem:[#allocation13 + $0x90] sm:$0xff]
    %v461 = vld [vmem:[#allocation13 + $0x98] sm:$0xf]
    %v462 = vld [vmem:[#allocation13 + $0x9c] sm:$0xff]
    %v463 = vld [vmem:[#allocation13 + $0xa4] sm:$0xf]
    %v464 = vld [vmem:[#allocation13 + $0xa8] sm:$0xff]
    %v465 = vld [vmem:[#allocation13 + $0xb0] sm:$0xf]
    %v466 = vld [vmem:[#allocation13 + $0xb4] sm:$0xff]
    %v467 = vld [vmem:[#allocation13 + $0xbc] sm:$0xf]
    %v468 = vld [vmem:[#allocation14] sm:$0x7]
    %v470 = vperm.slane %v468, 0
    %v471 = vperm.slane %v468, 1
    %v472 = vperm.slane %v468, 2
    %v476 = vld [vmem:[#allocation2] sm:$0xff]
    %v477 = vld [vmem:[#allocation4] sm:$0xff]
    %v478 = vld [vmem:[#allocation4 + $0x8] sm:$0xff]
    %v479 = vld [vmem:[#allocation4 + $0x10] sm:$0xff]
    %v480 = vpack.c.bf16 %v476, %v476
    %v513 = vunpack.c.l.b16 %v436
    %v514 = vunpack.c.h.b16 %v436
    %v515 = vunpack.c.l.b16 %v437
    %v516 = vunpack.c.l.b16 %v438
    %v517 = vunpack.c.h.b16 %v438
    %v518 = vunpack.c.l.b16 %v439
    %v519 = vunpack.c.l.b16 %v440
    %v520 = vunpack.c.h.b16 %v440
    %v521 = vunpack.c.l.b16 %v441
    %v522 = vunpack.c.l.b16 %v442
    %v523 = vunpack.c.h.b16 %v442
    %v524 = vunpack.c.l.b16 %v443
    %v525 = vunpack.c.l.b16 %v444
    %v526 = vunpack.c.h.b16 %v444
    %v527 = vunpack.c.l.b16 %v445
    %v528 = vunpack.c.l.b16 %v446
    %v529 = vunpack.c.h.b16 %v446
    %v530 = vunpack.c.l.b16 %v447
    %v531 = vunpack.c.l.b16 %v448
    %v532 = vunpack.c.h.b16 %v448
    %v533 = vunpack.c.l.b16 %v449
    %v534 = vunpack.c.l.b16 %v450
    %v535 = vunpack.c.h.b16 %v450
    %v536 = vunpack.c.l.b16 %v451
    %v537 = vunpack.c.l.b16 %v452
    %v538 = vunpack.c.h.b16 %v452
    %v539 = vunpack.c.l.b16 %v453
    %v540 = vunpack.c.l.b16 %v454
    %v541 = vunpack.c.h.b16 %v454
    %v542 = vunpack.c.l.b16 %v455
    %v543 = vunpack.c.l.b16 %v456
    %v544 = vunpack.c.h.b16 %v456
    %v545 = vunpack.c.l.b16 %v457
    %v546 = vunpack.c.l.b16 %v458
    %v547 = vunpack.c.h.b16 %v458
    %v548 = vunpack.c.l.b16 %v459
    %v549 = vunpack.c.l.b16 %v460
    %v550 = vunpack.c.h.b16 %v460
    %v551 = vunpack.c.l.b16 %v461
    %v552 = vunpack.c.l.b16 %v462
    %v553 = vunpack.c.h.b16 %v462
    %v554 = vunpack.c.l.b16 %v463
    %v555 = vunpack.c.l.b16 %v464
    %v556 = vunpack.c.h.b16 %v464
    %v557 = vunpack.c.l.b16 %v465
    %v558 = vunpack.c.l.b16 %v466
    %v559 = vunpack.c.h.b16 %v466
    %v560 = vunpack.c.l.b16 %v467
    %v561 = vpack.c.b16 %v516, %v513
    %v562 = vpack.c.b16 %v517, %v514
    %v563 = vpack.c.b16 %v518, %v515
    %v564 = vpack.c.b16 %v522, %v519
    %v565 = vpack.c.b16 %v523, %v520
    %v566 = vpack.c.b16 %v524, %v521
    %v567 = vpack.c.b16 %v528, %v525
    %v568 = vpack.c.b16 %v529, %v526
    %v569 = vpack.c.b16 %v530, %v527
    %v570 = vpack.c.b16 %v534, %v531
    %v571 = vpack.c.b16 %v535, %v532
    %v572 = vpack.c.b16 %v536, %v533
    %v573 = vpack.c.b16 %v540, %v537
    %v574 = vpack.c.b16 %v541, %v538
    %v575 = vpack.c.b16 %v542, %v539
    %v576 = vpack.c.b16 %v546, %v543
    %v577 = vpack.c.b16 %v547, %v544
    %v578 = vpack.c.b16 %v548, %v545
    %v579 = vpack.c.b16 %v552, %v549
    %v580 = vpack.c.b16 %v553, %v550
    %v581 = vpack.c.b16 %v554, %v551
    %v582 = vpack.c.b16 %v558, %v555
    %v583 = vpack.c.b16 %v559, %v556
    %v584 = vpack.c.b16 %v560, %v557
    %609 = vmatpush.bf16.msra.mxu0 %v582
    %610 = vmatpush.bf16.msra.mxu0 %v579
    %611 = vmatpush.bf16.msra.mxu0 %v576
    %612 = vmatpush.bf16.msra.mxu0 %v573
    %613 = vmatpush.bf16.msra.mxu0 %v570
    %614 = vmatpush.bf16.msra.mxu0 %v567
    %615 = vmatpush.bf16.msra.mxu0 %v564
    %616 = vmatpush.bf16.msra.mxu0 %v561
    %617 = vmatmul.bf16.gmra.mxu0 %v480
    %v618 = vpop.f32.mrf.mxu0
    %v619 = vadd.f32 %v470, %v618
    %v620 = vpop.f32.mrf.mxu0
    %621 = vdwg.mxu0
    %622 = vmatpush.bf16.msra.mxu0 %v583
    %623 = vmatpush.bf16.msra.mxu0 %v580
    %624 = vmatpush.bf16.msra.mxu0 %v577
    %625 = vmatpush.bf16.msra.mxu0 %v574
    %626 = vmatpush.bf16.msra.mxu0 %v571
    %627 = vmatpush.bf16.msra.mxu0 %v568
    %628 = vmatpush.bf16.msra.mxu0 %v565
    %629 = vmatpush.bf16.msra.mxu0 %v562
    %630 = vmatmul.bf16.gmra.mxu0 %v480
    %v631 = vpop.f32.mrf.mxu0
    %v632 = vadd.f32 %v471, %v631
    %v633 = vpop.f32.mrf.mxu0
    %634 = vdwg.mxu0
    %635 = vmatpush.bf16.msra.mxu0 %v584
    %636 = vmatpush.bf16.msra.mxu0 %v581
    %637 = vmatpush.bf16.msra.mxu0 %v578
    %638 = vmatpush.bf16.msra.mxu0 %v575
    %639 = vmatpush.bf16.msra.mxu0 %v572
    %640 = vmatpush.bf16.msra.mxu0 %v569
    %641 = vmatpush.bf16.msra.mxu0 %v566
    %642 = vmatpush.bf16.msra.mxu0 %v563
    %643 = vmatmul.bf16.gmra.mxu0 %v480
    %v644 = vpop.f32.mrf.mxu0
    %v645 = vadd.f32 %v472, %v644
    %v646 = vpop.f32.mrf.mxu0
    %647 = vdwg.mxu0
    %v648 = vadd.f32 %v477, %v619
    %v649 = vxor.u32 %v648, 2147483648
    %v650 = vmul.f32 %v649, 1.442695
    %v651 = vpow.pop %v650
    %v652 = vadd.f32 %v651, 1.0
    %v653 = vrcp.pop %v652
    %v654 = vmul.f32 %v652, %v653
    %v655 = vsub.f32 1.0, %v654
    %v656 = vmul.f32 %v653, %v655
    %v657 = vadd.f32 %v653, %v656
    %vm658 = vweird.f32 %v652
    %vm659 = vweird.f32 %v653
    %vm660 = vmor %vm658, %vm659
    %v661 = vsel %vm660, %v653, %v657
    %v662 = vand.u32 2147483647, %v652
    %vm663 = vcmp.eq.f32.partialorder %v662, 8.507059e+37
    %v664 = vand.u32 %v652, 2147483648
    %v665 = vor.u32 1.1754944e-38, %v664
    %v666 = vsel %vm663, %v665, %v661
    %v667 = vmul.f32 1.0, %v666
    %v668 = vadd.f32 %v478, %v632
    %v669 = vxor.u32 %v668, 2147483648
    %v670 = vmul.f32 %v669, 1.442695
    %v671 = vpow.pop %v670
    %v672 = vadd.f32 %v671, 1.0
    %v673 = vrcp.pop %v672
    %v674 = vmul.f32 %v672, %v673
    %v675 = vsub.f32 1.0, %v674
    %v676 = vmul.f32 %v673, %v675
    %v677 = vadd.f32 %v673, %v676
    %vm678 = vweird.f32 %v672
    %vm679 = vweird.f32 %v673
    %vm680 = vmor %vm678, %vm679
    %v681 = vsel %vm680, %v673, %v677
    %v682 = vand.u32 2147483647, %v672
    %vm683 = vcmp.eq.f32.partialorder %v682, 8.507059e+37
    %v684 = vand.u32 %v672, 2147483648
    %v685 = vor.u32 1.1754944e-38, %v684
    %v686 = vsel %vm683, %v685, %v681
    %v687 = vmul.f32 1.0, %v686
    %v688 = vmul.f32 %v667, %v645
    %v689 = vadd.f32 %v479, %v688
    %v690 = vtanh.pop %v689
    %v691 = vsub.f32 1.0, %v687
    %v692 = vmul.f32 %v691, %v690
    %v693 = vmul.f32 %v687, %v476
    %v694 = vadd.f32 %v692, %v693
    %v695 = vpack.c.bf16 %v694, %v694
    %696 = vst [vmem:[#allocation3] sm:$0xf] %v695
    %s697 = scalar_lea.vmem [#allocation4], 24
    %v698 = vld [vmem:[%s697] sm:$0xff]
    %v699 = vld [vmem:[%s697 + $0x8] sm:$0xff]
    %v700 = vld [vmem:[%s697 + $0x10] sm:$0xff]
    %701 = vmatpush.bf16.msra.mxu0 %v582
    %702 = vmatpush.bf16.msra.mxu0 %v579
    %703 = vmatpush.bf16.msra.mxu0 %v576
    %704 = vmatpush.bf16.msra.mxu0 %v573
    %705 = vmatpush.bf16.msra.mxu0 %v570
    %706 = vmatpush.bf16.msra.mxu0 %v567
    %707 = vmatpush.bf16.msra.mxu0 %v564
    %708 = vmatpush.bf16.msra.mxu0 %v561
    %709 = vmatmul.bf16.gmra.mxu0 %v695
    %v710 = vpop.f32.mrf.mxu0
    %v711 = vadd.f32 %v470, %v710
    %v712 = vpop.f32.mrf.mxu0
    %713 = vdwg.mxu0
    %714 = vmatpush.bf16.msra.mxu0 %v583
    %715 = vmatpush.bf16.msra.mxu0 %v580
    %716 = vmatpush.bf16.msra.mxu0 %v577
    %717 = vmatpush.bf16.msra.mxu0 %v574
    %718 = vmatpush.bf16.msra.mxu0 %v571
    %719 = vmatpush.bf16.msra.mxu0 %v568
    %720 = vmatpush.bf16.msra.mxu0 %v565
    %721 = vmatpush.bf16.msra.mxu0 %v562
    %722 = vmatmul.bf16.gmra.mxu0 %v695
    %v723 = vpop.f32.mrf.mxu0
    %v724 = vadd.f32 %v471, %v723
    %v725 = vpop.f32.mrf.mxu0
    %726 = vdwg.mxu0
    %727 = vmatpush.bf16.msra.mxu0 %v584
    %728 = vmatpush.bf16.msra.mxu0 %v581
    %729 = vmatpush.bf16.msra.mxu0 %v578
    %730 = vmatpush.bf16.msra.mxu0 %v575
    %731 = vmatpush.bf16.msra.mxu0 %v572
    %732 = vmatpush.bf16.msra.mxu0 %v569
    %733 = vmatpush.bf16.msra.mxu0 %v566
    %734 = vmatpush.bf16.msra.mxu0 %v563
    %735 = vmatmul.bf16.gmra.mxu0 %v695
    %v736 = vpop.f32.mrf.mxu0
    %v737 = vadd.f32 %v472, %v736
    %v738 = vpop.f32.mrf.mxu0
    %739 = vdwg.mxu0
    %v740 = vadd.f32 %v698, %v711
    %v741 = vxor.u32 %v740, 2147483648
    %v742 = vmul.f32 %v741, 1.442695
    %v743 = vpow.pop %v742
    %v744 = vadd.f32 %v743, 1.0
    %v745 = vrcp.pop %v744
    %v746 = vmul.f32 %v744, %v745
    %v747 = vsub.f32 1.0, %v746
    %v748 = vmul.f32 %v745, %v747
    %v749 = vadd.f32 %v745, %v748
    %vm750 = vweird.f32 %v744
    %vm751 = vweird.f32 %v745
    %vm752 = vmor %vm750, %vm751
    %v753 = vsel %vm752, %v745, %v749
    %v754 = vand.u32 2147483647, %v744
    %vm755 = vcmp.eq.f32.partialorder %v754, 8.507059e+37
    %v756 = vand.u32 %v744, 2147483648
    %v757 = vor.u32 1.1754944e-38, %v756
    %v758 = vsel %vm755, %v757, %v753
    %v759 = vmul.f32 1.0, %v758
    %v760 = vadd.f32 %v699, %v724
    %v761 = vxor.u32 %v760, 2147483648
    %v762 = vmul.f32 %v761, 1.442695
    %v763 = vpow.pop %v762
    %v764 = vadd.f32 %v763, 1.0
    %v765 = vrcp.pop %v764
    %v766 = vmul.f32 %v764, %v765
    %v767 = vsub.f32 1.0, %v766
    %v768 = vmul.f32 %v765, %v767
    %v769 = vadd.f32 %v765, %v768
    %vm770 = vweird.f32 %v764
    %vm771 = vweird.f32 %v765
    %vm772 = vmor %vm770, %vm771
    %v773 = vsel %vm772, %v765, %v769
    %v774 = vand.u32 2147483647, %v764
    %vm775 = vcmp.eq.f32.partialorder %v774, 8.507059e+37
    %v776 = vand.u32 %v764, 2147483648
    %v777 = vor.u32 1.1754944e-38, %v776
    %v778 = vsel %vm775, %v777, %v773
    %v779 = vmul.f32 1.0, %v778
    %v780 = vmul.f32 %v759, %v737
    %v781 = vadd.f32 %v700, %v780
    %v782 = vtanh.pop %v781
    %v783 = vsub.f32 1.0, %v779
    %v784 = vmul.f32 %v783, %v782
    %v785 = vmul.f32 %v779, %v694
    %v786 = vadd.f32 %v784, %v785
    %v787 = vpack.c.bf16 %v786, %v786
    %s788 = scalar_lea.vmem [#allocation3], 4
    %789 = vst [vmem:[%s788] sm:$0xf] %v787
    %s790 = scalar_lea.vmem [#allocation4], 48
    %v791 = vld [vmem:[%s790] sm:$0xff]
    %v792 = vld [vmem:[%s790 + $0x8] sm:$0xff]
    %v793 = vld [vmem:[%s790 + $0x10] sm:$0xff]
    %794 = vmatpush.bf16.msra.mxu0 %v582
    %795 = vmatpush.bf16.msra.mxu0 %v579
    %796 = vmatpush.bf16.msra.mxu0 %v576
    %797 = vmatpush.bf16.msra.mxu0 %v573
    %798 = vmatpush.bf16.msra.mxu0 %v570
    %799 = vmatpush.bf16.msra.mxu0 %v567
    %800 = vmatpush.bf16.msra.mxu0 %v564
    %801 = vmatpush.bf16.msra.mxu0 %v561
    %802 = vmatmul.bf16.gmra.mxu0 %v787
    %v803 = vpop.f32.mrf.mxu0
    %v804 = vadd.f32 %v470, %v803
    %v805 = vpop.f32.mrf.mxu0
    %806 = vdwg.mxu0
    %807 = vmatpush.bf16.msra.mxu0 %v583
    %808 = vmatpush.bf16.msra.mxu0 %v580
    %809 = vmatpush.bf16.msra.mxu0 %v577
    %810 = vmatpush.bf16.msra.mxu0 %v574
    %811 = vmatpush.bf16.msra.mxu0 %v571
    %812 = vmatpush.bf16.msra.mxu0 %v568
    %813 = vmatpush.bf16.msra.mxu0 %v565
    %814 = vmatpush.bf16.msra.mxu0 %v562
    %815 = vmatmul.bf16.gmra.mxu0 %v787
    %v816 = vpop.f32.mrf.mxu0
    %v817 = vadd.f32 %v471, %v816
    %v818 = vpop.f32.mrf.mxu0
    %819 = vdwg.mxu0
    %820 = vmatpush.bf16.msra.mxu0 %v584
    %821 = vmatpush.bf16.msra.mxu0 %v581
    %822 = vmatpush.bf16.msra.mxu0 %v578
    %823 = vmatpush.bf16.msra.mxu0 %v575
    %824 = vmatpush.bf16.msra.mxu0 %v572
    %825 = vmatpush.bf16.msra.mxu0 %v569
    %826 = vmatpush.bf16.msra.mxu0 %v566
    %827 = vmatpush.bf16.msra.mxu0 %v563
    %828 = vmatmul.bf16.gmra.mxu0 %v787
    %v829 = vpop.f32.mrf.mxu0
    %v830 = vadd.f32 %v472, %v829
    %v831 = vpop.f32.mrf.mxu0
    %832 = vdwg.mxu0
    %v833 = vadd.f32 %v791, %v804
    %v834 = vxor.u32 %v833, 2147483648
    %v835 = vmul.f32 %v834, 1.442695
    %v836 = vpow.pop %v835
    %v837 = vadd.f32 %v836, 1.0
    %v838 = vrcp.pop %v837
    %v839 = vmul.f32 %v837, %v838
    %v840 = vsub.f32 1.0, %v839
    %v841 = vmul.f32 %v838, %v840
    %v842 = vadd.f32 %v838, %v841
    %vm843 = vweird.f32 %v837
    %vm844 = vweird.f32 %v838
    %vm845 = vmor %vm843, %vm844
    %v846 = vsel %vm845, %v838, %v842
    %v847 = vand.u32 2147483647, %v837
    %vm848 = vcmp.eq.f32.partialorder %v847, 8.507059e+37
    %v849 = vand.u32 %v837, 2147483648
    %v850 = vor.u32 1.1754944e-38, %v849
    %v851 = vsel %vm848, %v850, %v846
    %v852 = vmul.f32 1.0, %v851
    %v853 = vadd.f32 %v792, %v817
    %v854 = vxor.u32 %v853, 2147483648
    %v855 = vmul.f32 %v854, 1.442695
    %v856 = vpow.pop %v855
    %v857 = vadd.f32 %v856, 1.0
    %v858 = vrcp.pop %v857
    %v859 = vmul.f32 %v857, %v858
    %v860 = vsub.f32 1.0, %v859
    %v861 = vmul.f32 %v858, %v860
    %v862 = vadd.f32 %v858, %v861
    %vm863 = vweird.f32 %v857
    %vm864 = vweird.f32 %v858
    %vm865 = vmor %vm863, %vm864
    %v866 = vsel %vm865, %v858, %v862
    %v867 = vand.u32 2147483647, %v857
    %vm868 = vcmp.eq.f32.partialorder %v867, 8.507059e+37
    %v869 = vand.u32 %v857, 2147483648
    %v870 = vor.u32 1.1754944e-38, %v869
    %v871 = vsel %vm868, %v870, %v866
    %v872 = vmul.f32 1.0, %v871
    %v873 = vmul.f32 %v852, %v830
    %v874 = vadd.f32 %v793, %v873
    %v875 = vtanh.pop %v874
    %v876 = vsub.f32 1.0, %v872
    %v877 = vmul.f32 %v876, %v875
    %v878 = vmul.f32 %v872, %v786
    %v879 = vadd.f32 %v877, %v878
    %v880 = vpack.c.bf16 %v879, %v879
    %s881 = scalar_lea.vmem [#allocation3], 8
    %882 = vst [vmem:[%s881] sm:$0xf] %v880
    %s883 = scalar_lea.vmem [#allocation4], 72
    %v884 = vld [vmem:[%s883] sm:$0xff]
    %v885 = vld [vmem:[%s883 + $0x8] sm:$0xff]
    %v886 = vld [vmem:[%s883 + $0x10] sm:$0xff]
    %887 = vmatpush.bf16.msra.mxu0 %v582
    %888 = vmatpush.bf16.msra.mxu0 %v579
    %889 = vmatpush.bf16.msra.mxu0 %v576
    %890 = vmatpush.bf16.msra.mxu0 %v573
    %891 = vmatpush.bf16.msra.mxu0 %v570
    %892 = vmatpush.bf16.msra.mxu0 %v567
    %893 = vmatpush.bf16.msra.mxu0 %v564
    %894 = vmatpush.bf16.msra.mxu0 %v561
    %895 = vmatmul.bf16.gmra.mxu0 %v880
    %v896 = vpop.f32.mrf.mxu0
    %v897 = vadd.f32 %v470, %v896
    %v898 = vpop.f32.mrf.mxu0
    %899 = vdwg.mxu0
    %900 = vmatpush.bf16.msra.mxu0 %v583
    %901 = vmatpush.bf16.msra.mxu0 %v580
    %902 = vmatpush.bf16.msra.mxu0 %v577
    %903 = vmatpush.bf16.msra.mxu0 %v574
    %904 = vmatpush.bf16.msra.mxu0 %v571
    %905 = vmatpush.bf16.msra.mxu0 %v568
    %906 = vmatpush.bf16.msra.mxu0 %v565
    %907 = vmatpush.bf16.msra.mxu0 %v562
    %908 = vmatmul.bf16.gmra.mxu0 %v880
    %v909 = vpop.f32.mrf.mxu0
    %v910 = vadd.f32 %v471, %v909
    %v911 = vpop.f32.mrf.mxu0
    %912 = vdwg.mxu0
    %913 = vmatpush.bf16.msra.mxu0 %v584
    %914 = vmatpush.bf16.msra.mxu0 %v581
    %915 = vmatpush.bf16.msra.mxu0 %v578
    %916 = vmatpush.bf16.msra.mxu0 %v575
    %917 = vmatpush.bf16.msra.mxu0 %v572
    %918 = vmatpush.bf16.msra.mxu0 %v569
    %919 = vmatpush.bf16.msra.mxu0 %v566
    %920 = vmatpush.bf16.msra.mxu0 %v563
    %921 = vmatmul.bf16.gmra.mxu0 %v880
    %v922 = vpop.f32.mrf.mxu0
    %v923 = vadd.f32 %v472, %v922
    %v924 = vpop.f32.mrf.mxu0
    %925 = vdwg.mxu0
    %v926 = vadd.f32 %v884, %v897
    %v927 = vxor.u32 %v926, 2147483648
    %v928 = vmul.f32 %v927, 1.442695
    %v929 = vpow.pop %v928
    %v930 = vadd.f32 %v929, 1.0
    %v931 = vrcp.pop %v930
    %v932 = vmul.f32 %v930, %v931
    %v933 = vsub.f32 1.0, %v932
    %v934 = vmul.f32 %v931, %v933
    %v935 = vadd.f32 %v931, %v934
    %vm936 = vweird.f32 %v930
    %vm937 = vweird.f32 %v931
    %vm938 = vmor %vm936, %vm937
    %v939 = vsel %vm938, %v931, %v935
    %v940 = vand.u32 2147483647, %v930
    %vm941 = vcmp.eq.f32.partialorder %v940, 8.507059e+37
    %v942 = vand.u32 %v930, 2147483648
    %v943 = vor.u32 1.1754944e-38, %v942
    %v944 = vsel %vm941, %v943, %v939
    %v945 = vmul.f32 1.0, %v944
    %v946 = vadd.f32 %v885, %v910
    %v947 = vxor.u32 %v946, 2147483648
    %v948 = vmul.f32 %v947, 1.442695
    %v949 = vpow.pop %v948
    %v950 = vadd.f32 %v949, 1.0
    %v951 = vrcp.pop %v950
    %v952 = vmul.f32 %v950, %v951
    %v953 = vsub.f32 1.0, %v952
    %v954 = vmul.f32 %v951, %v953
    %v955 = vadd.f32 %v951, %v954
    %vm956 = vweird.f32 %v950
    %vm957 = vweird.f32 %v951
    %vm958 = vmor %vm956, %vm957
    %v959 = vsel %vm958, %v951, %v955
    %v960 = vand.u32 2147483647, %v950
    %vm961 = vcmp.eq.f32.partialorder %v960, 8.507059e+37
    %v962 = vand.u32 %v950, 2147483648
    %v963 = vor.u32 1.1754944e-38, %v962
    %v964 = vsel %vm961, %v963, %v959
    %v965 = vmul.f32 1.0, %v964
    %v966 = vmul.f32 %v945, %v923
    %v967 = vadd.f32 %v886, %v966
    %v968 = vtanh.pop %v967
    %v969 = vsub.f32 1.0, %v965
    %v970 = vmul.f32 %v969, %v968
    %v971 = vmul.f32 %v965, %v879
    %v972 = vadd.f32 %v970, %v971
    %v973 = vpack.c.bf16 %v972, %v972
    %s974 = scalar_lea.vmem [#allocation3], 12
    %975 = vst [vmem:[%s974] sm:$0xf] %v973
    %s976 = scalar_lea.vmem [#allocation4], 96
    %v977 = vld [vmem:[%s976] sm:$0xff]
    %v978 = vld [vmem:[%s976 + $0x8] sm:$0xff]
    %v979 = vld [vmem:[%s976 + $0x10] sm:$0xff]
    %980 = vmatpush.bf16.msra.mxu0 %v582
    %981 = vmatpush.bf16.msra.mxu0 %v579
    %982 = vmatpush.bf16.msra.mxu0 %v576
    %983 = vmatpush.bf16.msra.mxu0 %v573
    %984 = vmatpush.bf16.msra.mxu0 %v570
    %985 = vmatpush.bf16.msra.mxu0 %v567
    %986 = vmatpush.bf16.msra.mxu0 %v564
    %987 = vmatpush.bf16.msra.mxu0 %v561
    %988 = vmatmul.bf16.gmra.mxu0 %v973
    %v989 = vpop.f32.mrf.mxu0
    %v990 = vadd.f32 %v470, %v989
    %v991 = vpop.f32.mrf.mxu0
    %992 = vdwg.mxu0
    %993 = vmatpush.bf16.msra.mxu0 %v583
    %994 = vmatpush.bf16.msra.mxu0 %v580
    %995 = vmatpush.bf16.msra.mxu0 %v577
    %996 = vmatpush.bf16.msra.mxu0 %v574
    %997 = vmatpush.bf16.msra.mxu0 %v571
    %998 = vmatpush.bf16.msra.mxu0 %v568
    %999 = vmatpush.bf16.msra.mxu0 %v565
    %1000 = vmatpush.bf16.msra.mxu0 %v562
    %1001 = vmatmul.bf16.gmra.mxu0 %v973
    %v1002 = vpop.f32.mrf.mxu0
    %v1003 = vadd.f32 %v471, %v1002
    %v1004 = vpop.f32.mrf.mxu0
    %1005 = vdwg.mxu0
    %1006 = vmatpush.bf16.msra.mxu0 %v584
    %1007 = vmatpush.bf16.msra.mxu0 %v581
    %1008 = vmatpush.bf16.msra.mxu0 %v578
    %1009 = vmatpush.bf16.msra.mxu0 %v575
    %1010 = vmatpush.bf16.msra.mxu0 %v572
    %1011 = vmatpush.bf16.msra.mxu0 %v569
    %1012 = vmatpush.bf16.msra.mxu0 %v566
    %1013 = vmatpush.bf16.msra.mxu0 %v563
    %1014 = vmatmul.bf16.gmra.mxu0 %v973
    %v1015 = vpop.f32.mrf.mxu0
    %v1016 = vadd.f32 %v472, %v1015
    %v1017 = vpop.f32.mrf.mxu0
    %1018 = vdwg.mxu0
    %v1019 = vadd.f32 %v977, %v990
    %v1020 = vxor.u32 %v1019, 2147483648
    %v1021 = vmul.f32 %v1020, 1.442695
    %v1022 = vpow.pop %v1021
    %v1023 = vadd.f32 %v1022, 1.0
    %v1024 = vrcp.pop %v1023
    %v1025 = vmul.f32 %v1023, %v1024
    %v1026 = vsub.f32 1.0, %v1025
    %v1027 = vmul.f32 %v1024, %v1026
    %v1028 = vadd.f32 %v1024, %v1027
    %vm1029 = vweird.f32 %v1023
    %vm1030 = vweird.f32 %v1024
    %vm1031 = vmor %vm1029, %vm1030
    %v1032 = vsel %vm1031, %v1024, %v1028
    %v1033 = vand.u32 2147483647, %v1023
    %vm1034 = vcmp.eq.f32.partialorder %v1033, 8.507059e+37
    %v1035 = vand.u32 %v1023, 2147483648
    %v1036 = vor.u32 1.1754944e-38, %v1035
    %v1037 = vsel %vm1034, %v1036, %v1032
    %v1038 = vmul.f32 1.0, %v1037
    %v1039 = vadd.f32 %v978, %v1003
    %v1040 = vxor.u32 %v1039, 2147483648
    %v1041 = vmul.f32 %v1040, 1.442695
    %v1042 = vpow.pop %v1041
    %v1043 = vadd.f32 %v1042, 1.0
    %v1044 = vrcp.pop %v1043
    %v1045 = vmul.f32 %v1043, %v1044
    %v1046 = vsub.f32 1.0, %v1045
    %v1047 = vmul.f32 %v1044, %v1046
    %v1048 = vadd.f32 %v1044, %v1047
    %vm1049 = vweird.f32 %v1043
    %vm1050 = vweird.f32 %v1044
    %vm1051 = vmor %vm1049, %vm1050
    %v1052 = vsel %vm1051, %v1044, %v1048
    %v1053 = vand.u32 2147483647, %v1043
    %vm1054 = vcmp.eq.f32.partialorder %v1053, 8.507059e+37
    %v1055 = vand.u32 %v1043, 2147483648
    %v1056 = vor.u32 1.1754944e-38, %v1055
    %v1057 = vsel %vm1054, %v1056, %v1052
    %v1058 = vmul.f32 1.0, %v1057
    %v1059 = vmul.f32 %v1038, %v1016
    %v1060 = vadd.f32 %v979, %v1059
    %v1061 = vtanh.pop %v1060
    %v1062 = vsub.f32 1.0, %v1058
    %v1063 = vmul.f32 %v1062, %v1061
    %v1064 = vmul.f32 %v1058, %v972
    %v1065 = vadd.f32 %v1063, %v1064
    %v1066 = vpack.c.bf16 %v1065, %v1065
    %s1067 = scalar_lea.vmem [#allocation3], 16
    %1068 = vst [vmem:[%s1067] sm:$0xf] %v1066
    %s1069 = scalar_lea.vmem [#allocation4], 120
    %v1070 = vld [vmem:[%s1069] sm:$0xff]
    %v1071 = vld [vmem:[%s1069 + $0x8] sm:$0xff]
    %v1072 = vld [vmem:[%s1069 + $0x10] sm:$0xff]
    %1073 = vmatpush.bf16.msra.mxu0 %v582
    %1074 = vmatpush.bf16.msra.mxu0 %v579
    %1075 = vmatpush.bf16.msra.mxu0 %v576
    %1076 = vmatpush.bf16.msra.mxu0 %v573
    %1077 = vmatpush.bf16.msra.mxu0 %v570
    %1078 = vmatpush.bf16.msra.mxu0 %v567
    %1079 = vmatpush.bf16.msra.mxu0 %v564
    %1080 = vmatpush.bf16.msra.mxu0 %v561
    %1081 = vmatmul.bf16.gmra.mxu0 %v1066
    %v1082 = vpop.f32.mrf.mxu0
    %v1083 = vadd.f32 %v470, %v1082
    %v1084 = vpop.f32.mrf.mxu0
    %1085 = vdwg.mxu0
    %1086 = vmatpush.bf16.msra.mxu0 %v583
    %1087 = vmatpush.bf16.msra.mxu0 %v580
    %1088 = vmatpush.bf16.msra.mxu0 %v577
    %1089 = vmatpush.bf16.msra.mxu0 %v574
    %1090 = vmatpush.bf16.msra.mxu0 %v571
    %1091 = vmatpush.bf16.msra.mxu0 %v568
    %1092 = vmatpush.bf16.msra.mxu0 %v565
    %1093 = vmatpush.bf16.msra.mxu0 %v562
    %1094 = vmatmul.bf16.gmra.mxu0 %v1066
    %v1095 = vpop.f32.mrf.mxu0
    %v1096 = vadd.f32 %v471, %v1095
    %v1097 = vpop.f32.mrf.mxu0
    %1098 = vdwg.mxu0
    %1099 = vmatpush.bf16.msra.mxu0 %v584
    %1100 = vmatpush.bf16.msra.mxu0 %v581
    %1101 = vmatpush.bf16.msra.mxu0 %v578
    %1102 = vmatpush.bf16.msra.mxu0 %v575
    %1103 = vmatpush.bf16.msra.mxu0 %v572
    %1104 = vmatpush.bf16.msra.mxu0 %v569
    %1105 = vmatpush.bf16.msra.mxu0 %v566
    %1106 = vmatpush.bf16.msra.mxu0 %v563
    %1107 = vmatmul.bf16.gmra.mxu0 %v1066
    %v1108 = vpop.f32.mrf.mxu0
    %v1109 = vadd.f32 %v472, %v1108
    %v1110 = vpop.f32.mrf.mxu0
    %1111 = vdwg.mxu0
    %v1112 = vadd.f32 %v1070, %v1083
    %v1113 = vxor.u32 %v1112, 2147483648
    %v1114 = vmul.f32 %v1113, 1.442695
    %v1115 = vpow.pop %v1114
    %v1116 = vadd.f32 %v1115, 1.0
    %v1117 = vrcp.pop %v1116
    %v1118 = vmul.f32 %v1116, %v1117
    %v1119 = vsub.f32 1.0, %v1118
    %v1120 = vmul.f32 %v1117, %v1119
    %v1121 = vadd.f32 %v1117, %v1120
    %vm1122 = vweird.f32 %v1116
    %vm1123 = vweird.f32 %v1117
    %vm1124 = vmor %vm1122, %vm1123
    %v1125 = vsel %vm1124, %v1117, %v1121
    %v1126 = vand.u32 2147483647, %v1116
    %vm1127 = vcmp.eq.f32.partialorder %v1126, 8.507059e+37
    %v1128 = vand.u32 %v1116, 2147483648
    %v1129 = vor.u32 1.1754944e-38, %v1128
    %v1130 = vsel %vm1127, %v1129, %v1125
    %v1131 = vmul.f32 1.0, %v1130
    %v1132 = vadd.f32 %v1071, %v1096
    %v1133 = vxor.u32 %v1132, 2147483648
    %v1134 = vmul.f32 %v1133, 1.442695
    %v1135 = vpow.pop %v1134
    %v1136 = vadd.f32 %v1135, 1.0
    %v1137 = vrcp.pop %v1136
    %v1138 = vmul.f32 %v1136, %v1137
    %v1139 = vsub.f32 1.0, %v1138
    %v1140 = vmul.f32 %v1137, %v1139
    %v1141 = vadd.f32 %v1137, %v1140
    %vm1142 = vweird.f32 %v1136
    %vm1143 = vweird.f32 %v1137
    %vm1144 = vmor %vm1142, %vm1143
    %v1145 = vsel %vm1144, %v1137, %v1141
    %v1146 = vand.u32 2147483647, %v1136
    %vm1147 = vcmp.eq.f32.partialorder %v1146, 8.507059e+37
    %v1148 = vand.u32 %v1136, 2147483648
    %v1149 = vor.u32 1.1754944e-38, %v1148
    %v1150 = vsel %vm1147, %v1149, %v1145
    %v1151 = vmul.f32 1.0, %v1150
    %v1152 = vmul.f32 %v1131, %v1109
    %v1153 = vadd.f32 %v1072, %v1152
    %v1154 = vtanh.pop %v1153
    %v1155 = vsub.f32 1.0, %v1151
    %v1156 = vmul.f32 %v1155, %v1154
    %v1157 = vmul.f32 %v1151, %v1065
    %v1158 = vadd.f32 %v1156, %v1157
    %v1159 = vpack.c.bf16 %v1158, %v1158
    %s1160 = scalar_lea.vmem [#allocation3], 20
    %1161 = vst [vmem:[%s1160] sm:$0xf] %v1159
    %s1162 = scalar_lea.vmem [#allocation4], 144
    %v1163 = vld [vmem:[%s1162] sm:$0xff]
    %v1164 = vld [vmem:[%s1162 + $0x8] sm:$0xff]
    %v1165 = vld [vmem:[%s1162 + $0x10] sm:$0xff]
    %1166 = vmatpush.bf16.msra.mxu0 %v582
    %1167 = vmatpush.bf16.msra.mxu0 %v579
    %1168 = vmatpush.bf16.msra.mxu0 %v576
    %1169 = vmatpush.bf16.msra.mxu0 %v573
    %1170 = vmatpush.bf16.msra.mxu0 %v570
    %1171 = vmatpush.bf16.msra.mxu0 %v567
    %1172 = vmatpush.bf16.msra.mxu0 %v564
    %1173 = vmatpush.bf16.msra.mxu0 %v561
    %1174 = vmatmul.bf16.gmra.mxu0 %v1159
    %v1175 = vpop.f32.mrf.mxu0
    %v1176 = vadd.f32 %v470, %v1175
    %v1177 = vpop.f32.mrf.mxu0
    %1178 = vdwg.mxu0
    %1179 = vmatpush.bf16.msra.mxu0 %v583
    %1180 = vmatpush.bf16.msra.mxu0 %v580
    %1181 = vmatpush.bf16.msra.mxu0 %v577
    %1182 = vmatpush.bf16.msra.mxu0 %v574
    %1183 = vmatpush.bf16.msra.mxu0 %v571
    %1184 = vmatpush.bf16.msra.mxu0 %v568
    %1185 = vmatpush.bf16.msra.mxu0 %v565
    %1186 = vmatpush.bf16.msra.mxu0 %v562
    %1187 = vmatmul.bf16.gmra.mxu0 %v1159
    %v1188 = vpop.f32.mrf.mxu0
    %v1189 = vadd.f32 %v471, %v1188
    %v1190 = vpop.f32.mrf.mxu0
    %1191 = vdwg.mxu0
    %1192 = vmatpush.bf16.msra.mxu0 %v584
    %1193 = vmatpush.bf16.msra.mxu0 %v581
    %1194 = vmatpush.bf16.msra.mxu0 %v578
    %1195 = vmatpush.bf16.msra.mxu0 %v575
    %1196 = vmatpush.bf16.msra.mxu0 %v572
    %1197 = vmatpush.bf16.msra.mxu0 %v569
    %1198 = vmatpush.bf16.msra.mxu0 %v566
    %1199 = vmatpush.bf16.msra.mxu0 %v563
    %1200 = vmatmul.bf16.gmra.mxu0 %v1159
    %v1201 = vpop.f32.mrf.mxu0
    %v1202 = vadd.f32 %v472, %v1201
    %v1203 = vpop.f32.mrf.mxu0
    %1204 = vdwg.mxu0
    %v1205 = vadd.f32 %v1163, %v1176
    %v1206 = vxor.u32 %v1205, 2147483648
    %v1207 = vmul.f32 %v1206, 1.442695
    %v1208 = vpow.pop %v1207
    %v1209 = vadd.f32 %v1208, 1.0
    %v1210 = vrcp.pop %v1209
    %v1211 = vmul.f32 %v1209, %v1210
    %v1212 = vsub.f32 1.0, %v1211
    %v1213 = vmul.f32 %v1210, %v1212
    %v1214 = vadd.f32 %v1210, %v1213
    %vm1215 = vweird.f32 %v1209
    %vm1216 = vweird.f32 %v1210
    %vm1217 = vmor %vm1215, %vm1216
    %v1218 = vsel %vm1217, %v1210, %v1214
    %v1219 = vand.u32 2147483647, %v1209
    %vm1220 = vcmp.eq.f32.partialorder %v1219, 8.507059e+37
    %v1221 = vand.u32 %v1209, 2147483648
    %v1222 = vor.u32 1.1754944e-38, %v1221
    %v1223 = vsel %vm1220, %v1222, %v1218
    %v1224 = vmul.f32 1.0, %v1223
    %v1225 = vadd.f32 %v1164, %v1189
    %v1226 = vxor.u32 %v1225, 2147483648
    %v1227 = vmul.f32 %v1226, 1.442695
    %v1228 = vpow.pop %v1227
    %v1229 = vadd.f32 %v1228, 1.0
    %v1230 = vrcp.pop %v1229
    %v1231 = vmul.f32 %v1229, %v1230
    %v1232 = vsub.f32 1.0, %v1231
    %v1233 = vmul.f32 %v1230, %v1232
    %v1234 = vadd.f32 %v1230, %v1233
    %vm1235 = vweird.f32 %v1229
    %vm1236 = vweird.f32 %v1230
    %vm1237 = vmor %vm1235, %vm1236
    %v1238 = vsel %vm1237, %v1230, %v1234
    %v1239 = vand.u32 2147483647, %v1229
    %vm1240 = vcmp.eq.f32.partialorder %v1239, 8.507059e+37
    %v1241 = vand.u32 %v1229, 2147483648
    %v1242 = vor.u32 1.1754944e-38, %v1241
    %v1243 = vsel %vm1240, %v1242, %v1238
    %v1244 = vmul.f32 1.0, %v1243
    %v1245 = vmul.f32 %v1224, %v1202
    %v1246 = vadd.f32 %v1165, %v1245
    %v1247 = vtanh.pop %v1246
    %v1248 = vsub.f32 1.0, %v1244
    %v1249 = vmul.f32 %v1248, %v1247
    %v1250 = vmul.f32 %v1244, %v1158
    %v1251 = vadd.f32 %v1249, %v1250
    %v1252 = vpack.c.bf16 %v1251, %v1251
    %s1253 = scalar_lea.vmem [#allocation3], 24
    %1254 = vst [vmem:[%s1253] sm:$0xf] %v1252
    %s1255 = scalar_lea.vmem [#allocation4], 168
    %v1256 = vld [vmem:[%s1255] sm:$0xff]
    %v1257 = vld [vmem:[%s1255 + $0x8] sm:$0xff]
    %v1258 = vld [vmem:[%s1255 + $0x10] sm:$0xff]
    %1259 = vmatpush.bf16.msra.mxu0 %v582
    %1260 = vmatpush.bf16.msra.mxu0 %v579
    %1261 = vmatpush.bf16.msra.mxu0 %v576
    %1262 = vmatpush.bf16.msra.mxu0 %v573
    %1263 = vmatpush.bf16.msra.mxu0 %v570
    %1264 = vmatpush.bf16.msra.mxu0 %v567
    %1265 = vmatpush.bf16.msra.mxu0 %v564
    %1266 = vmatpush.bf16.msra.mxu0 %v561
    %1267 = vmatmul.bf16.gmra.mxu0 %v1252
    %v1268 = vpop.f32.mrf.mxu0
    %v1269 = vadd.f32 %v470, %v1268
    %v1270 = vpop.f32.mrf.mxu0
    %1271 = vdwg.mxu0
    %1272 = vmatpush.bf16.msra.mxu0 %v583
    %1273 = vmatpush.bf16.msra.mxu0 %v580
    %1274 = vmatpush.bf16.msra.mxu0 %v577
    %1275 = vmatpush.bf16.msra.mxu0 %v574
    %1276 = vmatpush.bf16.msra.mxu0 %v571
    %1277 = vmatpush.bf16.msra.mxu0 %v568
    %1278 = vmatpush.bf16.msra.mxu0 %v565
    %1279 = vmatpush.bf16.msra.mxu0 %v562
    %1280 = vmatmul.bf16.gmra.mxu0 %v1252
    %v1281 = vpop.f32.mrf.mxu0
    %v1282 = vadd.f32 %v471, %v1281
    %v1283 = vpop.f32.mrf.mxu0
    %1284 = vdwg.mxu0
    %1285 = vmatpush.bf16.msra.mxu0 %v584
    %1286 = vmatpush.bf16.msra.mxu0 %v581
    %1287 = vmatpush.bf16.msra.mxu0 %v578
    %1288 = vmatpush.bf16.msra.mxu0 %v575
    %1289 = vmatpush.bf16.msra.mxu0 %v572
    %1290 = vmatpush.bf16.msra.mxu0 %v569
    %1291 = vmatpush.bf16.msra.mxu0 %v566
    %1292 = vmatpush.bf16.msra.mxu0 %v563
    %1293 = vmatmul.bf16.gmra.mxu0 %v1252
    %v1294 = vpop.f32.mrf.mxu0
    %v1295 = vadd.f32 %v472, %v1294
    %v1296 = vpop.f32.mrf.mxu0
    %1297 = vdwg.mxu0
    %v1298 = vadd.f32 %v1256, %v1269
    %v1299 = vxor.u32 %v1298, 2147483648
    %v1300 = vmul.f32 %v1299, 1.442695
    %v1301 = vpow.pop %v1300
    %v1302 = vadd.f32 %v1301, 1.0
    %v1303 = vrcp.pop %v1302
    %v1304 = vmul.f32 %v1302, %v1303
    %v1305 = vsub.f32 1.0, %v1304
    %v1306 = vmul.f32 %v1303, %v1305
    %v1307 = vadd.f32 %v1303, %v1306
    %vm1308 = vweird.f32 %v1302
    %vm1309 = vweird.f32 %v1303
    %vm1310 = vmor %vm1308, %vm1309
    %v1311 = vsel %vm1310, %v1303, %v1307
    %v1312 = vand.u32 2147483647, %v1302
    %vm1313 = vcmp.eq.f32.partialorder %v1312, 8.507059e+37
    %v1314 = vand.u32 %v1302, 2147483648
    %v1315 = vor.u32 1.1754944e-38, %v1314
    %v1316 = vsel %vm1313, %v1315, %v1311
    %v1317 = vmul.f32 1.0, %v1316
    %v1318 = vadd.f32 %v1257, %v1282
    %v1319 = vxor.u32 %v1318, 2147483648
    %v1320 = vmul.f32 %v1319, 1.442695
    %v1321 = vpow.pop %v1320
    %v1322 = vadd.f32 %v1321, 1.0
    %v1323 = vrcp.pop %v1322
    %v1324 = vmul.f32 %v1322, %v1323
    %v1325 = vsub.f32 1.0, %v1324
    %v1326 = vmul.f32 %v1323, %v1325
    %v1327 = vadd.f32 %v1323, %v1326
    %vm1328 = vweird.f32 %v1322
    %vm1329 = vweird.f32 %v1323
    %vm1330 = vmor %vm1328, %vm1329
    %v1331 = vsel %vm1330, %v1323, %v1327
    %v1332 = vand.u32 2147483647, %v1322
    %vm1333 = vcmp.eq.f32.partialorder %v1332, 8.507059e+37
    %v1334 = vand.u32 %v1322, 2147483648
    %v1335 = vor.u32 1.1754944e-38, %v1334
    %v1336 = vsel %vm1333, %v1335, %v1331
    %v1337 = vmul.f32 1.0, %v1336
    %v1338 = vmul.f32 %v1317, %v1295
    %v1339 = vadd.f32 %v1258, %v1338
    %v1340 = vtanh.pop %v1339
    %v1341 = vsub.f32 1.0, %v1337
    %v1342 = vmul.f32 %v1341, %v1340
    %v1343 = vmul.f32 %v1337, %v1251
    %v1344 = vadd.f32 %v1342, %v1343
    %v1345 = vpack.c.bf16 %v1344, %v1344
    %s1346 = scalar_lea.vmem [#allocation3], 28
    %1347 = vst [vmem:[%s1346] sm:$0xf] %v1345
    %1348 = vst [vmem:[#allocation2] sm:$0xff] %v1344
    %v1349 = vld [vmem:[#allocation3] sm:$0xf]
    %v1350 = vld [vmem:[#allocation3 + $0x4] sm:$0xf]
    %v1351 = vld [vmem:[#allocation3 + $0x8] sm:$0xf]
    %v1352 = vld [vmem:[#allocation3 + $0xc] sm:$0xf]
    %v1353 = vld [vmem:[#allocation3 + $0x10] sm:$0xf]
    %v1354 = vld [vmem:[#allocation3 + $0x14] sm:$0xf]
    %v1355 = vld [vmem:[#allocation3 + $0x18] sm:$0xf]
    %v1356 = vld [vmem:[#allocation3 + $0x1c] sm:$0xf]
    %v1357 = vld [vmem:[#allocation11] sm:$0xff]
    %v1358 = vld [vmem:[#allocation11 + $0x8] sm:$0xf]
    %v1359 = vld [vmem:[#allocation11 + $0xc] sm:$0xff]
    %v1360 = vld [vmem:[#allocation11 + $0x14] sm:$0xf]
    %v1361 = vld [vmem:[#allocation11 + $0x18] sm:$0xff]
    %v1362 = vld [vmem:[#allocation11 + $0x20] sm:$0xf]
    %v1363 = vld [vmem:[#allocation11 + $0x24] sm:$0xff]
    %v1364 = vld [vmem:[#allocation11 + $0x2c] sm:$0xf]
    %v1365 = vld [vmem:[#allocation11 + $0x30] sm:$0xff]
    %v1366 = vld [vmem:[#allocation11 + $0x38] sm:$0xf]
    %v1367 = vld [vmem:[#allocation11 + $0x3c] sm:$0xff]
    %v1368 = vld [vmem:[#allocation11 + $0x44] sm:$0xf]
    %v1369 = vld [vmem:[#allocation11 + $0x48] sm:$0xff]
    %v1370 = vld [vmem:[#allocation11 + $0x50] sm:$0xf]
    %v1371 = vld [vmem:[#allocation11 + $0x54] sm:$0xff]
    %v1372 = vld [vmem:[#allocation11 + $0x5c] sm:$0xf]
    %v1373 = vld [vmem:[#allocation11 + $0x60] sm:$0xff]
    %v1374 = vld [vmem:[#allocation11 + $0x68] sm:$0xf]
    %v1375 = vld [vmem:[#allocation11 + $0x6c] sm:$0xff]
    %v1376 = vld [vmem:[#allocation11 + $0x74] sm:$0xf]
    %v1377 = vld [vmem:[#allocation11 + $0x78] sm:$0xff]
    %v1378 = vld [vmem:[#allocation11 + $0x80] sm:$0xf]
    %v1379 = vld [vmem:[#allocation11 + $0x84] sm:$0xff]
    %v1380 = vld [vmem:[#allocation11 + $0x8c] sm:$0xf]
    %v1381 = vld [vmem:[#allocation11 + $0x90] sm:$0xff]
    %v1382 = vld [vmem:[#allocation11 + $0x98] sm:$0xf]
    %v1383 = vld [vmem:[#allocation11 + $0x9c] sm:$0xff]
    %v1384 = vld [vmem:[#allocation11 + $0xa4] sm:$0xf]
    %v1385 = vld [vmem:[#allocation11 + $0xa8] sm:$0xff]
    %v1386 = vld [vmem:[#allocation11 + $0xb0] sm:$0xf]
    %v1387 = vld [vmem:[#allocation11 + $0xb4] sm:$0xff]
    %v1388 = vld [vmem:[#allocation11 + $0xbc] sm:$0xf]
    %v1389 = vld [vmem:[%s4] sm:$0x7]
    %v1391 = vperm.slane %v1389, 0
    %v1392 = vperm.slane %v1389, 1
    %v1393 = vperm.slane %v1389, 2
    %v1405 = vunpack.c.l.b16 %v1349
    %v1406 = vunpack.c.l.b16 %v1350
    %v1407 = vunpack.c.l.b16 %v1351
    %v1408 = vunpack.c.l.b16 %v1352
    %v1409 = vunpack.c.l.b16 %v1353
    %v1410 = vunpack.c.l.b16 %v1354
    %v1411 = vunpack.c.l.b16 %v1355
    %v1412 = vunpack.c.l.b16 %v1356
    %v1413 = vpack.c.b16 %v1406, %v1405
    %v1414 = vpack.c.b16 %v1408, %v1407
    %v1415 = vpack.c.b16 %v1410, %v1409
    %v1416 = vpack.c.b16 %v1412, %v1411
    %v1453 = vunpack.c.l.b16 %v1357
    %v1454 = vunpack.c.h.b16 %v1357
    %v1455 = vunpack.c.l.b16 %v1358
    %v1456 = vunpack.c.l.b16 %v1359
    %v1457 = vunpack.c.h.b16 %v1359
    %v1458 = vunpack.c.l.b16 %v1360
    %v1459 = vunpack.c.l.b16 %v1361
    %v1460 = vunpack.c.h.b16 %v1361
    %v1461 = vunpack.c.l.b16 %v1362
    %v1462 = vunpack.c.l.b16 %v1363
    %v1463 = vunpack.c.h.b16 %v1363
    %v1464 = vunpack.c.l.b16 %v1364
    %v1465 = vunpack.c.l.b16 %v1365
    %v1466 = vunpack.c.h.b16 %v1365
    %v1467 = vunpack.c.l.b16 %v1366
    %v1468 = vunpack.c.l.b16 %v1367
    %v1469 = vunpack.c.h.b16 %v1367
    %v1470 = vunpack.c.l.b16 %v1368
    %v1471 = vunpack.c.l.b16 %v1369
    %v1472 = vunpack.c.h.b16 %v1369
    %v1473 = vunpack.c.l.b16 %v1370
    %v1474 = vunpack.c.l.b16 %v1371
    %v1475 = vunpack.c.h.b16 %v1371
    %v1476 = vunpack.c.l.b16 %v1372
    %v1477 = vunpack.c.l.b16 %v1373
    %v1478 = vunpack.c.h.b16 %v1373
    %v1479 = vunpack.c.l.b16 %v1374
    %v1480 = vunpack.c.l.b16 %v1375
    %v1481 = vunpack.c.h.b16 %v1375
    %v1482 = vunpack.c.l.b16 %v1376
    %v1483 = vunpack.c.l.b16 %v1377
    %v1484 = vunpack.c.h.b16 %v1377
    %v1485 = vunpack.c.l.b16 %v1378
    %v1486 = vunpack.c.l.b16 %v1379
    %v1487 = vunpack.c.h.b16 %v1379
    %v1488 = vunpack.c.l.b16 %v1380
    %v1489 = vunpack.c.l.b16 %v1381
    %v1490 = vunpack.c.h.b16 %v1381
    %v1491 = vunpack.c.l.b16 %v1382
    %v1492 = vunpack.c.l.b16 %v1383
    %v1493 = vunpack.c.h.b16 %v1383
    %v1494 = vunpack.c.l.b16 %v1384
    %v1495 = vunpack.c.l.b16 %v1385
    %v1496 = vunpack.c.h.b16 %v1385
    %v1497 = vunpack.c.l.b16 %v1386
    %v1498 = vunpack.c.l.b16 %v1387
    %v1499 = vunpack.c.h.b16 %v1387
    %v1500 = vunpack.c.l.b16 %v1388
    %v1501 = vpack.c.b16 %v1456, %v1453
    %v1502 = vpack.c.b16 %v1457, %v1454
    %v1503 = vpack.c.b16 %v1458, %v1455
    %v1504 = vpack.c.b16 %v1462, %v1459
    %v1505 = vpack.c.b16 %v1463, %v1460
    %v1506 = vpack.c.b16 %v1464, %v1461
    %v1507 = vpack.c.b16 %v1468, %v1465
    %v1508 = vpack.c.b16 %v1469, %v1466
    %v1509 = vpack.c.b16 %v1470, %v1467
    %v1510 = vpack.c.b16 %v1474, %v1471
    %v1511 = vpack.c.b16 %v1475, %v1472
    %v1512 = vpack.c.b16 %v1476, %v1473
    %v1513 = vpack.c.b16 %v1480, %v1477
    %v1514 = vpack.c.b16 %v1481, %v1478
    %v1515 = vpack.c.b16 %v1482, %v1479
    %v1516 = vpack.c.b16 %v1486, %v1483
    %v1517 = vpack.c.b16 %v1487, %v1484
    %v1518 = vpack.c.b16 %v1488, %v1485
    %v1519 = vpack.c.b16 %v1492, %v1489
    %v1520 = vpack.c.b16 %v1493, %v1490
    %v1521 = vpack.c.b16 %v1494, %v1491
    %v1522 = vpack.c.b16 %v1498, %v1495
    %v1523 = vpack.c.b16 %v1499, %v1496
    %v1524 = vpack.c.b16 %v1500, %v1497
    %1549 = vmatpush.bf16.msra.mxu0 %v1522
    %1550 = vmatpush.bf16.msra.mxu0 %v1519
    %1551 = vmatpush.bf16.msra.mxu0 %v1516
    %1552 = vmatpush.bf16.msra.mxu0 %v1513
    %1553 = vmatpush.bf16.msra.mxu0 %v1510
    %1554 = vmatpush.bf16.msra.mxu0 %v1507
    %1555 = vmatpush.bf16.msra.mxu0 %v1504
    %1556 = vmatpush.bf16.msra.mxu0 %v1501
    %1557 = vmatmul.bf16.gmra.mxu0 %v1413
    %v1558 = vpop.f32.mrf.mxu0
    %v1559 = vadd.f32 %v1391, %v1558
    %v1560 = vpop.f32.mrf.mxu0
    %v1561 = vadd.f32 %v1391, %v1560
    %1562 = vmatmul.bf16.gmra.mxu0 %v1414
    %v1563 = vpop.f32.mrf.mxu0
    %v1564 = vadd.f32 %v1391, %v1563
    %v1565 = vpop.f32.mrf.mxu0
    %v1566 = vadd.f32 %v1391, %v1565
    %1567 = vmatmul.bf16.gmra.mxu0 %v1415
    %v1568 = vpop.f32.mrf.mxu0
    %v1569 = vadd.f32 %v1391, %v1568
    %v1570 = vpop.f32.mrf.mxu0
    %v1571 = vadd.f32 %v1391, %v1570
    %1572 = vmatmul.bf16.gmra.mxu0 %v1416
    %v1573 = vpop.f32.mrf.mxu0
    %v1574 = vadd.f32 %v1391, %v1573
    %v1575 = vpop.f32.mrf.mxu0
    %v1576 = vadd.f32 %v1391, %v1575
    %1577 = vdwg.mxu0
    %1578 = vmatpush.bf16.msra.mxu0 %v1523
    %1579 = vmatpush.bf16.msra.mxu0 %v1520
    %1580 = vmatpush.bf16.msra.mxu0 %v1517
    %1581 = vmatpush.bf16.msra.mxu0 %v1514
    %1582 = vmatpush.bf16.msra.mxu0 %v1511
    %1583 = vmatpush.bf16.msra.mxu0 %v1508
    %1584 = vmatpush.bf16.msra.mxu0 %v1505
    %1585 = vmatpush.bf16.msra.mxu0 %v1502
    %1586 = vmatmul.bf16.gmra.mxu0 %v1413
    %v1587 = vpop.f32.mrf.mxu0
    %v1588 = vadd.f32 %v1392, %v1587
    %v1589 = vpop.f32.mrf.mxu0
    %v1590 = vadd.f32 %v1392, %v1589
    %1591 = vmatmul.bf16.gmra.mxu0 %v1414
    %v1592 = vpop.f32.mrf.mxu0
    %v1593 = vadd.f32 %v1392, %v1592
    %v1594 = vpop.f32.mrf.mxu0
    %v1595 = vadd.f32 %v1392, %v1594
    %1596 = vmatmul.bf16.gmra.mxu0 %v1415
    %v1597 = vpop.f32.mrf.mxu0
    %v1598 = vadd.f32 %v1392, %v1597
    %v1599 = vpop.f32.mrf.mxu0
    %v1600 = vadd.f32 %v1392, %v1599
    %1601 = vmatmul.bf16.gmra.mxu0 %v1416
    %v1602 = vpop.f32.mrf.mxu0
    %v1603 = vadd.f32 %v1392, %v1602
    %v1604 = vpop.f32.mrf.mxu0
    %v1605 = vadd.f32 %v1392, %v1604
    %1606 = vdwg.mxu0
    %1607 = vmatpush.bf16.msra.mxu0 %v1524
    %1608 = vmatpush.bf16.msra.mxu0 %v1521
    %1609 = vmatpush.bf16.msra.mxu0 %v1518
    %1610 = vmatpush.bf16.msra.mxu0 %v1515
    %1611 = vmatpush.bf16.msra.mxu0 %v1512
    %1612 = vmatpush.bf16.msra.mxu0 %v1509
    %1613 = vmatpush.bf16.msra.mxu0 %v1506
    %1614 = vmatpush.bf16.msra.mxu0 %v1503
    %1615 = vmatmul.bf16.gmra.mxu0 %v1413
    %v1616 = vpop.f32.mrf.mxu0
    %v1617 = vadd.f32 %v1393, %v1616
    %v1618 = vpop.f32.mrf.mxu0
    %v1619 = vadd.f32 %v1393, %v1618
    %1620 = vmatmul.bf16.gmra.mxu0 %v1414
    %v1621 = vpop.f32.mrf.mxu0
    %v1622 = vadd.f32 %v1393, %v1621
    %v1623 = vpop.f32.mrf.mxu0
    %v1624 = vadd.f32 %v1393, %v1623
    %1625 = vmatmul.bf16.gmra.mxu0 %v1415
    %v1626 = vpop.f32.mrf.mxu0
    %v1627 = vadd.f32 %v1393, %v1626
    %v1628 = vpop.f32.mrf.mxu0
    %v1629 = vadd.f32 %v1393, %v1628
    %1630 = vmatmul.bf16.gmra.mxu0 %v1416
    %v1631 = vpop.f32.mrf.mxu0
    %v1632 = vadd.f32 %v1393, %v1631
    %v1633 = vpop.f32.mrf.mxu0
    %v1634 = vadd.f32 %v1393, %v1633
    %1635 = vdwg.mxu0
    %1636 = vst [vmem:[#allocation4] sm:$0xff] %v1559
    %1637 = vst [vmem:[#allocation4 + $0x8] sm:$0xff] %v1588
    %1638 = vst [vmem:[#allocation4 + $0x10] sm:$0xff] %v1617
    %1639 = vst [vmem:[#allocation4 + $0x18] sm:$0xff] %v1561
    %1640 = vst [vmem:[#allocation4 + $0x20] sm:$0xff] %v1590
    %1641 = vst [vmem:[#allocation4 + $0x28] sm:$0xff] %v1619
    %1642 = vst [vmem:[#allocation4 + $0x30] sm:$0xff] %v1564
    %1643 = vst [vmem:[#allocation4 + $0x38] sm:$0xff] %v1593
    %1644 = vst [vmem:[#allocation4 + $0x40] sm:$0xff] %v1622
    %1645 = vst [vmem:[#allocation4 + $0x48] sm:$0xff] %v1566
    %1646 = vst [vmem:[#allocation4 + $0x50] sm:$0xff] %v1595
    %1647 = vst [vmem:[#allocation4 + $0x58] sm:$0xff] %v1624
    %1648 = vst [vmem:[#allocation4 + $0x60] sm:$0xff] %v1569
    %1649 = vst [vmem:[#allocation4 + $0x68] sm:$0xff] %v1598
    %1650 = vst [vmem:[#allocation4 + $0x70] sm:$0xff] %v1627
    %1651 = vst [vmem:[#allocation4 + $0x78] sm:$0xff] %v1571
    %1652 = vst [vmem:[#allocation4 + $0x80] sm:$0xff] %v1600
    %1653 = vst [vmem:[#allocation4 + $0x88] sm:$0xff] %v1629
    %1654 = vst [vmem:[#allocation4 + $0x90] sm:$0xff] %v1574
    %1655 = vst [vmem:[#allocation4 + $0x98] sm:$0xff] %v1603
    %1656 = vst [vmem:[#allocation4 + $0xa0] sm:$0xff] %v1632
    %1657 = vst [vmem:[#allocation4 + $0xa8] sm:$0xff] %v1576
    %1658 = vst [vmem:[#allocation4 + $0xb0] sm:$0xff] %v1605
    %1659 = vst [vmem:[#allocation4 + $0xb8] sm:$0xff] %v1634
    %s1660 = scalar_lea.vmem [#allocation13], 192
    %v1661 = vld [vmem:[%s1660] sm:$0xff]
    %v1662 = vld [vmem:[%s1660 + $0x8] sm:$0xf]
    %v1663 = vld [vmem:[%s1660 + $0xc] sm:$0xff]
    %v1664 = vld [vmem:[%s1660 + $0x14] sm:$0xf]
    %v1665 = vld [vmem:[%s1660 + $0x18] sm:$0xff]
    %v1666 = vld [vmem:[%s1660 + $0x20] sm:$0xf]
    %v1667 = vld [vmem:[%s1660 + $0x24] sm:$0xff]
    %v1668 = vld [vmem:[%s1660 + $0x2c] sm:$0xf]
    %v1669 = vld [vmem:[%s1660 + $0x30] sm:$0xff]
    %v1670 = vld [vmem:[%s1660 + $0x38] sm:$0xf]
    %v1671 = vld [vmem:[%s1660 + $0x3c] sm:$0xff]
    %v1672 = vld [vmem:[%s1660 + $0x44] sm:$0xf]
    %v1673 = vld [vmem:[%s1660 + $0x48] sm:$0xff]
    %v1674 = vld [vmem:[%s1660 + $0x50] sm:$0xf]
    %v1675 = vld [vmem:[%s1660 + $0x54] sm:$0xff]
    %v1676 = vld [vmem:[%s1660 + $0x5c] sm:$0xf]
    %v1677 = vld [vmem:[%s1660 + $0x60] sm:$0xff]
    %v1678 = vld [vmem:[%s1660 + $0x68] sm:$0xf]
    %v1679 = vld [vmem:[%s1660 + $0x6c] sm:$0xff]
    %v1680 = vld [vmem:[%s1660 + $0x74] sm:$0xf]
    %v1681 = vld [vmem:[%s1660 + $0x78] sm:$0xff]
    %v1682 = vld [vmem:[%s1660 + $0x80] sm:$0xf]
    %v1683 = vld [vmem:[%s1660 + $0x84] sm:$0xff]
    %v1684 = vld [vmem:[%s1660 + $0x8c] sm:$0xf]
    %v1685 = vld [vmem:[%s1660 + $0x90] sm:$0xff]
    %v1686 = vld [vmem:[%s1660 + $0x98] sm:$0xf]
    %v1687 = vld [vmem:[%s1660 + $0x9c] sm:$0xff]
    %v1688 = vld [vmem:[%s1660 + $0xa4] sm:$0xf]
    %v1689 = vld [vmem:[%s1660 + $0xa8] sm:$0xff]
    %v1690 = vld [vmem:[%s1660 + $0xb0] sm:$0xf]
    %v1691 = vld [vmem:[%s1660 + $0xb4] sm:$0xff]
    %v1692 = vld [vmem:[%s1660 + $0xbc] sm:$0xf]
    %s1693 = scalar_lea.vmem [#allocation14], 3
    %v1694 = vld [vmem:[%s1693] sm:$0x7]
    %v1696 = vperm.slane %v1694, 0
    %v1697 = vperm.slane %v1694, 1
    %v1698 = vperm.slane %v1694, 2
    %s1702 = scalar_lea.vmem [#allocation2], 8
    %v1703 = vld [vmem:[%s1702] sm:$0xff]
    %v1704 = vld [vmem:[#allocation4] sm:$0xff]
    %v1705 = vld [vmem:[#allocation4 + $0x8] sm:$0xff]
    %v1706 = vld [vmem:[#allocation4 + $0x10] sm:$0xff]
    %v1707 = vpack.c.bf16 %v1703, %v1703
    %v1740 = vunpack.c.l.b16 %v1661
    %v1741 = vunpack.c.h.b16 %v1661
    %v1742 = vunpack.c.l.b16 %v1662
    %v1743 = vunpack.c.l.b16 %v1663
    %v1744 = vunpack.c.h.b16 %v1663
    %v1745 = vunpack.c.l.b16 %v1664
    %v1746 = vunpack.c.l.b16 %v1665
    %v1747 = vunpack.c.h.b16 %v1665
    %v1748 = vunpack.c.l.b16 %v1666
    %v1749 = vunpack.c.l.b16 %v1667
    %v1750 = vunpack.c.h.b16 %v1667
    %v1751 = vunpack.c.l.b16 %v1668
    %v1752 = vunpack.c.l.b16 %v1669
    %v1753 = vunpack.c.h.b16 %v1669
    %v1754 = vunpack.c.l.b16 %v1670
    %v1755 = vunpack.c.l.b16 %v1671
    %v1756 = vunpack.c.h.b16 %v1671
    %v1757 = vunpack.c.l.b16 %v1672
    %v1758 = vunpack.c.l.b16 %v1673
    %v1759 = vunpack.c.h.b16 %v1673
    %v1760 = vunpack.c.l.b16 %v1674
    %v1761 = vunpack.c.l.b16 %v1675
    %v1762 = vunpack.c.h.b16 %v1675
    %v1763 = vunpack.c.l.b16 %v1676
    %v1764 = vunpack.c.l.b16 %v1677
    %v1765 = vunpack.c.h.b16 %v1677
    %v1766 = vunpack.c.l.b16 %v1678
    %v1767 = vunpack.c.l.b16 %v1679
    %v1768 = vunpack.c.h.b16 %v1679
    %v1769 = vunpack.c.l.b16 %v1680
    %v1770 = vunpack.c.l.b16 %v1681
    %v1771 = vunpack.c.h.b16 %v1681
    %v1772 = vunpack.c.l.b16 %v1682
    %v1773 = vunpack.c.l.b16 %v1683
    %v1774 = vunpack.c.h.b16 %v1683
    %v1775 = vunpack.c.l.b16 %v1684
    %v1776 = vunpack.c.l.b16 %v1685
    %v1777 = vunpack.c.h.b16 %v1685
    %v1778 = vunpack.c.l.b16 %v1686
    %v1779 = vunpack.c.l.b16 %v1687
    %v1780 = vunpack.c.h.b16 %v1687
    %v1781 = vunpack.c.l.b16 %v1688
    %v1782 = vunpack.c.l.b16 %v1689
    %v1783 = vunpack.c.h.b16 %v1689
    %v1784 = vunpack.c.l.b16 %v1690
    %v1785 = vunpack.c.l.b16 %v1691
    %v1786 = vunpack.c.h.b16 %v1691
    %v1787 = vunpack.c.l.b16 %v1692
    %v1788 = vpack.c.b16 %v1743, %v1740
    %v1789 = vpack.c.b16 %v1744, %v1741
    %v1790 = vpack.c.b16 %v1745, %v1742
    %v1791 = vpack.c.b16 %v1749, %v1746
    %v1792 = vpack.c.b16 %v1750, %v1747
    %v1793 = vpack.c.b16 %v1751, %v1748
    %v1794 = vpack.c.b16 %v1755, %v1752
    %v1795 = vpack.c.b16 %v1756, %v1753
    %v1796 = vpack.c.b16 %v1757, %v1754
    %v1797 = vpack.c.b16 %v1761, %v1758
    %v1798 = vpack.c.b16 %v1762, %v1759
    %v1799 = vpack.c.b16 %v1763, %v1760
    %v1800 = vpack.c.b16 %v1767, %v1764
    %v1801 = vpack.c.b16 %v1768, %v1765
    %v1802 = vpack.c.b16 %v1769, %v1766
    %v1803 = vpack.c.b16 %v1773, %v1770
    %v1804 = vpack.c.b16 %v1774, %v1771
    %v1805 = vpack.c.b16 %v1775, %v1772
    %v1806 = vpack.c.b16 %v1779, %v1776
    %v1807 = vpack.c.b16 %v1780, %v1777
    %v1808 = vpack.c.b16 %v1781, %v1778
    %v1809 = vpack.c.b16 %v1785, %v1782
    %v1810 = vpack.c.b16 %v1786, %v1783
    %v1811 = vpack.c.b16 %v1787, %v1784
    %1836 = vmatpush.bf16.msra.mxu0 %v1809
    %1837 = vmatpush.bf16.msra.mxu0 %v1806
    %1838 = vmatpush.bf16.msra.mxu0 %v1803
    %1839 = vmatpush.bf16.msra.mxu0 %v1800
    %1840 = vmatpush.bf16.msra.mxu0 %v1797
    %1841 = vmatpush.bf16.msra.mxu0 %v1794
    %1842 = vmatpush.bf16.msra.mxu0 %v1791
    %1843 = vmatpush.bf16.msra.mxu0 %v1788
    %1844 = vmatmul.bf16.gmra.mxu0 %v1707
    %v1845 = vpop.f32.mrf.mxu0
    %v1846 = vadd.f32 %v1696, %v1845
    %v1847 = vpop.f32.mrf.mxu0
    %1848 = vdwg.mxu0
    %1849 = vmatpush.bf16.msra.mxu0 %v1810
    %1850 = vmatpush.bf16.msra.mxu0 %v1807
    %1851 = vmatpush.bf16.msra.mxu0 %v1804
    %1852 = vmatpush.bf16.msra.mxu0 %v1801
    %1853 = vmatpush.bf16.msra.mxu0 %v1798
    %1854 = vmatpush.bf16.msra.mxu0 %v1795
    %1855 = vmatpush.bf16.msra.mxu0 %v1792
    %1856 = vmatpush.bf16.msra.mxu0 %v1789
    %1857 = vmatmul.bf16.gmra.mxu0 %v1707
    %v1858 = vpop.f32.mrf.mxu0
    %v1859 = vadd.f32 %v1697, %v1858
    %v1860 = vpop.f32.mrf.mxu0
    %1861 = vdwg.mxu0
    %1862 = vmatpush.bf16.msra.mxu0 %v1811
    %1863 = vmatpush.bf16.msra.mxu0 %v1808
    %1864 = vmatpush.bf16.msra.mxu0 %v1805
    %1865 = vmatpush.bf16.msra.mxu0 %v1802
    %1866 = vmatpush.bf16.msra.mxu0 %v1799
    %1867 = vmatpush.bf16.msra.mxu0 %v1796
    %1868 = vmatpush.bf16.msra.mxu0 %v1793
    %1869 = vmatpush.bf16.msra.mxu0 %v1790
    %1870 = vmatmul.bf16.gmra.mxu0 %v1707
    %v1871 = vpop.f32.mrf.mxu0
    %v1872 = vadd.f32 %v1698, %v1871
    %v1873 = vpop.f32.mrf.mxu0
    %1874 = vdwg.mxu0
    %v1875 = vadd.f32 %v1704, %v1846
    %v1876 = vxor.u32 %v1875, 2147483648
    %v1877 = vmul.f32 %v1876, 1.442695
    %v1878 = vpow.pop %v1877
    %v1879 = vadd.f32 %v1878, 1.0
    %v1880 = vrcp.pop %v1879
    %v1881 = vmul.f32 %v1879, %v1880
    %v1882 = vsub.f32 1.0, %v1881
    %v1883 = vmul.f32 %v1880, %v1882
    %v1884 = vadd.f32 %v1880, %v1883
    %vm1885 = vweird.f32 %v1879
    %vm1886 = vweird.f32 %v1880
    %vm1887 = vmor %vm1885, %vm1886
    %v1888 = vsel %vm1887, %v1880, %v1884
    %v1889 = vand.u32 2147483647, %v1879
    %vm1890 = vcmp.eq.f32.partialorder %v1889, 8.507059e+37
    %v1891 = vand.u32 %v1879, 2147483648
    %v1892 = vor.u32 1.1754944e-38, %v1891
    %v1893 = vsel %vm1890, %v1892, %v1888
    %v1894 = vmul.f32 1.0, %v1893
    %v1895 = vadd.f32 %v1705, %v1859
    %v1896 = vxor.u32 %v1895, 2147483648
    %v1897 = vmul.f32 %v1896, 1.442695
    %v1898 = vpow.pop %v1897
    %v1899 = vadd.f32 %v1898, 1.0
    %v1900 = vrcp.pop %v1899
    %v1901 = vmul.f32 %v1899, %v1900
    %v1902 = vsub.f32 1.0, %v1901
    %v1903 = vmul.f32 %v1900, %v1902
    %v1904 = vadd.f32 %v1900, %v1903
    %vm1905 = vweird.f32 %v1899
    %vm1906 = vweird.f32 %v1900
    %vm1907 = vmor %vm1905, %vm1906
    %v1908 = vsel %vm1907, %v1900, %v1904
    %v1909 = vand.u32 2147483647, %v1899
    %vm1910 = vcmp.eq.f32.partialorder %v1909, 8.507059e+37
    %v1911 = vand.u32 %v1899, 2147483648
    %v1912 = vor.u32 1.1754944e-38, %v1911
    %v1913 = vsel %vm1910, %v1912, %v1908
    %v1914 = vmul.f32 1.0, %v1913
    %v1915 = vmul.f32 %v1894, %v1872
    %v1916 = vadd.f32 %v1706, %v1915
    %v1917 = vtanh.pop %v1916
    %v1918 = vsub.f32 1.0, %v1914
    %v1919 = vmul.f32 %v1918, %v1917
    %v1920 = vmul.f32 %v1914, %v1703
    %v1921 = vadd.f32 %v1919, %v1920
    %1922 = vst [vmem:[#allocation16] sm:$0xff] %v1921
    %v1923 = vld [vmem:[%s697] sm:$0xff]
    %v1924 = vld [vmem:[%s697 + $0x8] sm:$0xff]
    %v1925 = vld [vmem:[%s697 + $0x10] sm:$0xff]
    %v1926 = vpack.c.bf16 %v1921, %v1921
    %1927 = vmatpush.bf16.msra.mxu0 %v1809
    %1928 = vmatpush.bf16.msra.mxu0 %v1806
    %1929 = vmatpush.bf16.msra.mxu0 %v1803
    %1930 = vmatpush.bf16.msra.mxu0 %v1800
    %1931 = vmatpush.bf16.msra.mxu0 %v1797
    %1932 = vmatpush.bf16.msra.mxu0 %v1794
    %1933 = vmatpush.bf16.msra.mxu0 %v1791
    %1934 = vmatpush.bf16.msra.mxu0 %v1788
    %1935 = vmatmul.bf16.gmra.mxu0 %v1926
    %v1936 = vpop.f32.mrf.mxu0
    %v1937 = vadd.f32 %v1696, %v1936
    %v1938 = vpop.f32.mrf.mxu0
    %1939 = vdwg.mxu0
    %1940 = vmatpush.bf16.msra.mxu0 %v1810
    %1941 = vmatpush.bf16.msra.mxu0 %v1807
    %1942 = vmatpush.bf16.msra.mxu0 %v1804
    %1943 = vmatpush.bf16.msra.mxu0 %v1801
    %1944 = vmatpush.bf16.msra.mxu0 %v1798
    %1945 = vmatpush.bf16.msra.mxu0 %v1795
    %1946 = vmatpush.bf16.msra.mxu0 %v1792
    %1947 = vmatpush.bf16.msra.mxu0 %v1789
    %1948 = vmatmul.bf16.gmra.mxu0 %v1926
    %v1949 = vpop.f32.mrf.mxu0
    %v1950 = vadd.f32 %v1697, %v1949
    %v1951 = vpop.f32.mrf.mxu0
    %1952 = vdwg.mxu0
    %1953 = vmatpush.bf16.msra.mxu0 %v1811
    %1954 = vmatpush.bf16.msra.mxu0 %v1808
    %1955 = vmatpush.bf16.msra.mxu0 %v1805
    %1956 = vmatpush.bf16.msra.mxu0 %v1802
    %1957 = vmatpush.bf16.msra.mxu0 %v1799
    %1958 = vmatpush.bf16.msra.mxu0 %v1796
    %1959 = vmatpush.bf16.msra.mxu0 %v1793
    %1960 = vmatpush.bf16.msra.mxu0 %v1790
    %1961 = vmatmul.bf16.gmra.mxu0 %v1926
    %v1962 = vpop.f32.mrf.mxu0
    %v1963 = vadd.f32 %v1698, %v1962
    %v1964 = vpop.f32.mrf.mxu0
    %1965 = vdwg.mxu0
    %v1966 = vadd.f32 %v1923, %v1937
    %v1967 = vxor.u32 %v1966, 2147483648
    %v1968 = vmul.f32 %v1967, 1.442695
    %v1969 = vpow.pop %v1968
    %v1970 = vadd.f32 %v1969, 1.0
    %v1971 = vrcp.pop %v1970
    %v1972 = vmul.f32 %v1970, %v1971
    %v1973 = vsub.f32 1.0, %v1972
    %v1974 = vmul.f32 %v1971, %v1973
    %v1975 = vadd.f32 %v1971, %v1974
    %vm1976 = vweird.f32 %v1970
    %vm1977 = vweird.f32 %v1971
    %vm1978 = vmor %vm1976, %vm1977
    %v1979 = vsel %vm1978, %v1971, %v1975
    %v1980 = vand.u32 2147483647, %v1970
    %vm1981 = vcmp.eq.f32.partialorder %v1980, 8.507059e+37
    %v1982 = vand.u32 %v1970, 2147483648
    %v1983 = vor.u32 1.1754944e-38, %v1982
    %v1984 = vsel %vm1981, %v1983, %v1979
    %v1985 = vmul.f32 1.0, %v1984
    %v1986 = vadd.f32 %v1924, %v1950
    %v1987 = vxor.u32 %v1986, 2147483648
    %v1988 = vmul.f32 %v1987, 1.442695
    %v1989 = vpow.pop %v1988
    %v1990 = vadd.f32 %v1989, 1.0
    %v1991 = vrcp.pop %v1990
    %v1992 = vmul.f32 %v1990, %v1991
    %v1993 = vsub.f32 1.0, %v1992
    %v1994 = vmul.f32 %v1991, %v1993
    %v1995 = vadd.f32 %v1991, %v1994
    %vm1996 = vweird.f32 %v1990
    %vm1997 = vweird.f32 %v1991
    %vm1998 = vmor %vm1996, %vm1997
    %v1999 = vsel %vm1998, %v1991, %v1995
    %v2000 = vand.u32 2147483647, %v1990
    %vm2001 = vcmp.eq.f32.partialorder %v2000, 8.507059e+37
    %v2002 = vand.u32 %v1990, 2147483648
    %v2003 = vor.u32 1.1754944e-38, %v2002
    %v2004 = vsel %vm2001, %v2003, %v1999
    %v2005 = vmul.f32 1.0, %v2004
    %v2006 = vmul.f32 %v1985, %v1963
    %v2007 = vadd.f32 %v1925, %v2006
    %v2008 = vtanh.pop %v2007
    %v2009 = vsub.f32 1.0, %v2005
    %v2010 = vmul.f32 %v2009, %v2008
    %v2011 = vmul.f32 %v2005, %v1921
    %v2012 = vadd.f32 %v2010, %v2011
    %s2013 = scalar_lea.vmem [#allocation16], 8
    %2014 = vst [vmem:[%s2013] sm:$0xff] %v2012
    %v2015 = vld [vmem:[%s790] sm:$0xff]
    %v2016 = vld [vmem:[%s790 + $0x8] sm:$0xff]
    %v2017 = vld [vmem:[%s790 + $0x10] sm:$0xff]
    %v2018 = vpack.c.bf16 %v2012, %v2012
    %2019 = vmatpush.bf16.msra.mxu0 %v1809
    %2020 = vmatpush.bf16.msra.mxu0 %v1806
    %2021 = vmatpush.bf16.msra.mxu0 %v1803
    %2022 = vmatpush.bf16.msra.mxu0 %v1800
    %2023 = vmatpush.bf16.msra.mxu0 %v1797
    %2024 = vmatpush.bf16.msra.mxu0 %v1794
    %2025 = vmatpush.bf16.msra.mxu0 %v1791
    %2026 = vmatpush.bf16.msra.mxu0 %v1788
    %2027 = vmatmul.bf16.gmra.mxu0 %v2018
    %v2028 = vpop.f32.mrf.mxu0
    %v2029 = vadd.f32 %v1696, %v2028
    %v2030 = vpop.f32.mrf.mxu0
    %2031 = vdwg.mxu0
    %2032 = vmatpush.bf16.msra.mxu0 %v1810
    %2033 = vmatpush.bf16.msra.mxu0 %v1807
    %2034 = vmatpush.bf16.msra.mxu0 %v1804
    %2035 = vmatpush.bf16.msra.mxu0 %v1801
    %2036 = vmatpush.bf16.msra.mxu0 %v1798
    %2037 = vmatpush.bf16.msra.mxu0 %v1795
    %2038 = vmatpush.bf16.msra.mxu0 %v1792
    %2039 = vmatpush.bf16.msra.mxu0 %v1789
    %2040 = vmatmul.bf16.gmra.mxu0 %v2018
    %v2041 = vpop.f32.mrf.mxu0
    %v2042 = vadd.f32 %v1697, %v2041
    %v2043 = vpop.f32.mrf.mxu0
    %2044 = vdwg.mxu0
    %2045 = vmatpush.bf16.msra.mxu0 %v1811
    %2046 = vmatpush.bf16.msra.mxu0 %v1808
    %2047 = vmatpush.bf16.msra.mxu0 %v1805
    %2048 = vmatpush.bf16.msra.mxu0 %v1802
    %2049 = vmatpush.bf16.msra.mxu0 %v1799
    %2050 = vmatpush.bf16.msra.mxu0 %v1796
    %2051 = vmatpush.bf16.msra.mxu0 %v1793
    %2052 = vmatpush.bf16.msra.mxu0 %v1790
    %2053 = vmatmul.bf16.gmra.mxu0 %v2018
    %v2054 = vpop.f32.mrf.mxu0
    %v2055 = vadd.f32 %v1698, %v2054
    %v2056 = vpop.f32.mrf.mxu0
    %2057 = vdwg.mxu0
    %v2058 = vadd.f32 %v2015, %v2029
    %v2059 = vxor.u32 %v2058, 2147483648
    %v2060 = vmul.f32 %v2059, 1.442695
    %v2061 = vpow.pop %v2060
    %v2062 = vadd.f32 %v2061, 1.0
    %v2063 = vrcp.pop %v2062
    %v2064 = vmul.f32 %v2062, %v2063
    %v2065 = vsub.f32 1.0, %v2064
    %v2066 = vmul.f32 %v2063, %v2065
    %v2067 = vadd.f32 %v2063, %v2066
    %vm2068 = vweird.f32 %v2062
    %vm2069 = vweird.f32 %v2063
    %vm2070 = vmor %vm2068, %vm2069
    %v2071 = vsel %vm2070, %v2063, %v2067
    %v2072 = vand.u32 2147483647, %v2062
    %vm2073 = vcmp.eq.f32.partialorder %v2072, 8.507059e+37
    %v2074 = vand.u32 %v2062, 2147483648
    %v2075 = vor.u32 1.1754944e-38, %v2074
    %v2076 = vsel %vm2073, %v2075, %v2071
    %v2077 = vmul.f32 1.0, %v2076
    %v2078 = vadd.f32 %v2016, %v2042
    %v2079 = vxor.u32 %v2078, 2147483648
    %v2080 = vmul.f32 %v2079, 1.442695
    %v2081 = vpow.pop %v2080
    %v2082 = vadd.f32 %v2081, 1.0
    %v2083 = vrcp.pop %v2082
    %v2084 = vmul.f32 %v2082, %v2083
    %v2085 = vsub.f32 1.0, %v2084
    %v2086 = vmul.f32 %v2083, %v2085
    %v2087 = vadd.f32 %v2083, %v2086
    %vm2088 = vweird.f32 %v2082
    %vm2089 = vweird.f32 %v2083
    %vm2090 = vmor %vm2088, %vm2089
    %v2091 = vsel %vm2090, %v2083, %v2087
    %v2092 = vand.u32 2147483647, %v2082
    %vm2093 = vcmp.eq.f32.partialorder %v2092, 8.507059e+37
    %v2094 = vand.u32 %v2082, 2147483648
    %v2095 = vor.u32 1.1754944e-38, %v2094
    %v2096 = vsel %vm2093, %v2095, %v2091
    %v2097 = vmul.f32 1.0, %v2096
    %v2098 = vmul.f32 %v2077, %v2055
    %v2099 = vadd.f32 %v2017, %v2098
    %v2100 = vtanh.pop %v2099
    %v2101 = vsub.f32 1.0, %v2097
    %v2102 = vmul.f32 %v2101, %v2100
    %v2103 = vmul.f32 %v2097, %v2012
    %v2104 = vadd.f32 %v2102, %v2103
    %s2105 = scalar_lea.vmem [#allocation16], 16
    %2106 = vst [vmem:[%s2105] sm:$0xff] %v2104
    %v2107 = vld [vmem:[%s883] sm:$0xff]
    %v2108 = vld [vmem:[%s883 + $0x8] sm:$0xff]
    %v2109 = vld [vmem:[%s883 + $0x10] sm:$0xff]
    %v2110 = vpack.c.bf16 %v2104, %v2104
    %2111 = vmatpush.bf16.msra.mxu0 %v1809
    %2112 = vmatpush.bf16.msra.mxu0 %v1806
    %2113 = vmatpush.bf16.msra.mxu0 %v1803
    %2114 = vmatpush.bf16.msra.mxu0 %v1800
    %2115 = vmatpush.bf16.msra.mxu0 %v1797
    %2116 = vmatpush.bf16.msra.mxu0 %v1794
    %2117 = vmatpush.bf16.msra.mxu0 %v1791
    %2118 = vmatpush.bf16.msra.mxu0 %v1788
    %2119 = vmatmul.bf16.gmra.mxu0 %v2110
    %v2120 = vpop.f32.mrf.mxu0
    %v2121 = vadd.f32 %v1696, %v2120
    %v2122 = vpop.f32.mrf.mxu0
    %2123 = vdwg.mxu0
    %2124 = vmatpush.bf16.msra.mxu0 %v1810
    %2125 = vmatpush.bf16.msra.mxu0 %v1807
    %2126 = vmatpush.bf16.msra.mxu0 %v1804
    %2127 = vmatpush.bf16.msra.mxu0 %v1801
    %2128 = vmatpush.bf16.msra.mxu0 %v1798
    %2129 = vmatpush.bf16.msra.mxu0 %v1795
    %2130 = vmatpush.bf16.msra.mxu0 %v1792
    %2131 = vmatpush.bf16.msra.mxu0 %v1789
    %2132 = vmatmul.bf16.gmra.mxu0 %v2110
    %v2133 = vpop.f32.mrf.mxu0
    %v2134 = vadd.f32 %v1697, %v2133
    %v2135 = vpop.f32.mrf.mxu0
    %2136 = vdwg.mxu0
    %2137 = vmatpush.bf16.msra.mxu0 %v1811
    %2138 = vmatpush.bf16.msra.mxu0 %v1808
    %2139 = vmatpush.bf16.msra.mxu0 %v1805
    %2140 = vmatpush.bf16.msra.mxu0 %v1802
    %2141 = vmatpush.bf16.msra.mxu0 %v1799
    %2142 = vmatpush.bf16.msra.mxu0 %v1796
    %2143 = vmatpush.bf16.msra.mxu0 %v1793
    %2144 = vmatpush.bf16.msra.mxu0 %v1790
    %2145 = vmatmul.bf16.gmra.mxu0 %v2110
    %v2146 = vpop.f32.mrf.mxu0
    %v2147 = vadd.f32 %v1698, %v2146
    %v2148 = vpop.f32.mrf.mxu0
    %2149 = vdwg.mxu0
    %v2150 = vadd.f32 %v2107, %v2121
    %v2151 = vxor.u32 %v2150, 2147483648
    %v2152 = vmul.f32 %v2151, 1.442695
    %v2153 = vpow.pop %v2152
    %v2154 = vadd.f32 %v2153, 1.0
    %v2155 = vrcp.pop %v2154
    %v2156 = vmul.f32 %v2154, %v2155
    %v2157 = vsub.f32 1.0, %v2156
    %v2158 = vmul.f32 %v2155, %v2157
    %v2159 = vadd.f32 %v2155, %v2158
    %vm2160 = vweird.f32 %v2154
    %vm2161 = vweird.f32 %v2155
    %vm2162 = vmor %vm2160, %vm2161
    %v2163 = vsel %vm2162, %v2155, %v2159
    %v2164 = vand.u32 2147483647, %v2154
    %vm2165 = vcmp.eq.f32.partialorder %v2164, 8.507059e+37
    %v2166 = vand.u32 %v2154, 2147483648
    %v2167 = vor.u32 1.1754944e-38, %v2166
    %v2168 = vsel %vm2165, %v2167, %v2163
    %v2169 = vmul.f32 1.0, %v2168
    %v2170 = vadd.f32 %v2108, %v2134
    %v2171 = vxor.u32 %v2170, 2147483648
    %v2172 = vmul.f32 %v2171, 1.442695
    %v2173 = vpow.pop %v2172
    %v2174 = vadd.f32 %v2173, 1.0
    %v2175 = vrcp.pop %v2174
    %v2176 = vmul.f32 %v2174, %v2175
    %v2177 = vsub.f32 1.0, %v2176
    %v2178 = vmul.f32 %v2175, %v2177
    %v2179 = vadd.f32 %v2175, %v2178
    %vm2180 = vweird.f32 %v2174
    %vm2181 = vweird.f32 %v2175
    %vm2182 = vmor %vm2180, %vm2181
    %v2183 = vsel %vm2182, %v2175, %v2179
    %v2184 = vand.u32 2147483647, %v2174
    %vm2185 = vcmp.eq.f32.partialorder %v2184, 8.507059e+37
    %v2186 = vand.u32 %v2174, 2147483648
    %v2187 = vor.u32 1.1754944e-38, %v2186
    %v2188 = vsel %vm2185, %v2187, %v2183
    %v2189 = vmul.f32 1.0, %v2188
    %v2190 = vmul.f32 %v2169, %v2147
    %v2191 = vadd.f32 %v2109, %v2190
    %v2192 = vtanh.pop %v2191
    %v2193 = vsub.f32 1.0, %v2189
    %v2194 = vmul.f32 %v2193, %v2192
    %v2195 = vmul.f32 %v2189, %v2104
    %v2196 = vadd.f32 %v2194, %v2195
    %s2197 = scalar_lea.vmem [#allocation16], 24
    %2198 = vst [vmem:[%s2197] sm:$0xff] %v2196
    %v2199 = vld [vmem:[%s976] sm:$0xff]
    %v2200 = vld [vmem:[%s976 + $0x8] sm:$0xff]
    %v2201 = vld [vmem:[%s976 + $0x10] sm:$0xff]
    %v2202 = vpack.c.bf16 %v2196, %v2196
    %2203 = vmatpush.bf16.msra.mxu0 %v1809
    %2204 = vmatpush.bf16.msra.mxu0 %v1806
    %2205 = vmatpush.bf16.msra.mxu0 %v1803
    %2206 = vmatpush.bf16.msra.mxu0 %v1800
    %2207 = vmatpush.bf16.msra.mxu0 %v1797
    %2208 = vmatpush.bf16.msra.mxu0 %v1794
    %2209 = vmatpush.bf16.msra.mxu0 %v1791
    %2210 = vmatpush.bf16.msra.mxu0 %v1788
    %2211 = vmatmul.bf16.gmra.mxu0 %v2202
    %v2212 = vpop.f32.mrf.mxu0
    %v2213 = vadd.f32 %v1696, %v2212
    %v2214 = vpop.f32.mrf.mxu0
    %2215 = vdwg.mxu0
    %2216 = vmatpush.bf16.msra.mxu0 %v1810
    %2217 = vmatpush.bf16.msra.mxu0 %v1807
    %2218 = vmatpush.bf16.msra.mxu0 %v1804
    %2219 = vmatpush.bf16.msra.mxu0 %v1801
    %2220 = vmatpush.bf16.msra.mxu0 %v1798
    %2221 = vmatpush.bf16.msra.mxu0 %v1795
    %2222 = vmatpush.bf16.msra.mxu0 %v1792
    %2223 = vmatpush.bf16.msra.mxu0 %v1789
    %2224 = vmatmul.bf16.gmra.mxu0 %v2202
    %v2225 = vpop.f32.mrf.mxu0
    %v2226 = vadd.f32 %v1697, %v2225
    %v2227 = vpop.f32.mrf.mxu0
    %2228 = vdwg.mxu0
    %2229 = vmatpush.bf16.msra.mxu0 %v1811
    %2230 = vmatpush.bf16.msra.mxu0 %v1808
    %2231 = vmatpush.bf16.msra.mxu0 %v1805
    %2232 = vmatpush.bf16.msra.mxu0 %v1802
    %2233 = vmatpush.bf16.msra.mxu0 %v1799
    %2234 = vmatpush.bf16.msra.mxu0 %v1796
    %2235 = vmatpush.bf16.msra.mxu0 %v1793
    %2236 = vmatpush.bf16.msra.mxu0 %v1790
    %2237 = vmatmul.bf16.gmra.mxu0 %v2202
    %v2238 = vpop.f32.mrf.mxu0
    %v2239 = vadd.f32 %v1698, %v2238
    %v2240 = vpop.f32.mrf.mxu0
    %2241 = vdwg.mxu0
    %v2242 = vadd.f32 %v2199, %v2213
    %v2243 = vxor.u32 %v2242, 2147483648
    %v2244 = vmul.f32 %v2243, 1.442695
    %v2245 = vpow.pop %v2244
    %v2246 = vadd.f32 %v2245, 1.0
    %v2247 = vrcp.pop %v2246
    %v2248 = vmul.f32 %v2246, %v2247
    %v2249 = vsub.f32 1.0, %v2248
    %v2250 = vmul.f32 %v2247, %v2249
    %v2251 = vadd.f32 %v2247, %v2250
    %vm2252 = vweird.f32 %v2246
    %vm2253 = vweird.f32 %v2247
    %vm2254 = vmor %vm2252, %vm2253
    %v2255 = vsel %vm2254, %v2247, %v2251
    %v2256 = vand.u32 2147483647, %v2246
    %vm2257 = vcmp.eq.f32.partialorder %v2256, 8.507059e+37
    %v2258 = vand.u32 %v2246, 2147483648
    %v2259 = vor.u32 1.1754944e-38, %v2258
    %v2260 = vsel %vm2257, %v2259, %v2255
    %v2261 = vmul.f32 1.0, %v2260
    %v2262 = vadd.f32 %v2200, %v2226
    %v2263 = vxor.u32 %v2262, 2147483648
    %v2264 = vmul.f32 %v2263, 1.442695
    %v2265 = vpow.pop %v2264
    %v2266 = vadd.f32 %v2265, 1.0
    %v2267 = vrcp.pop %v2266
    %v2268 = vmul.f32 %v2266, %v2267
    %v2269 = vsub.f32 1.0, %v2268
    %v2270 = vmul.f32 %v2267, %v2269
    %v2271 = vadd.f32 %v2267, %v2270
    %vm2272 = vweird.f32 %v2266
    %vm2273 = vweird.f32 %v2267
    %vm2274 = vmor %vm2272, %vm2273
    %v2275 = vsel %vm2274, %v2267, %v2271
    %v2276 = vand.u32 2147483647, %v2266
    %vm2277 = vcmp.eq.f32.partialorder %v2276, 8.507059e+37
    %v2278 = vand.u32 %v2266, 2147483648
    %v2279 = vor.u32 1.1754944e-38, %v2278
    %v2280 = vsel %vm2277, %v2279, %v2275
    %v2281 = vmul.f32 1.0, %v2280
    %v2282 = vmul.f32 %v2261, %v2239
    %v2283 = vadd.f32 %v2201, %v2282
    %v2284 = vtanh.pop %v2283
    %v2285 = vsub.f32 1.0, %v2281
    %v2286 = vmul.f32 %v2285, %v2284
    %v2287 = vmul.f32 %v2281, %v2196
    %v2288 = vadd.f32 %v2286, %v2287
    %s2289 = scalar_lea.vmem [#allocation16], 32
    %2290 = vst [vmem:[%s2289] sm:$0xff] %v2288
    %v2291 = vld [vmem:[%s1069] sm:$0xff]
    %v2292 = vld [vmem:[%s1069 + $0x8] sm:$0xff]
    %v2293 = vld [vmem:[%s1069 + $0x10] sm:$0xff]
    %v2294 = vpack.c.bf16 %v2288, %v2288
    %2295 = vmatpush.bf16.msra.mxu0 %v1809
    %2296 = vmatpush.bf16.msra.mxu0 %v1806
    %2297 = vmatpush.bf16.msra.mxu0 %v1803
    %2298 = vmatpush.bf16.msra.mxu0 %v1800
    %2299 = vmatpush.bf16.msra.mxu0 %v1797
    %2300 = vmatpush.bf16.msra.mxu0 %v1794
    %2301 = vmatpush.bf16.msra.mxu0 %v1791
    %2302 = vmatpush.bf16.msra.mxu0 %v1788
    %2303 = vmatmul.bf16.gmra.mxu0 %v2294
    %v2304 = vpop.f32.mrf.mxu0
    %v2305 = vadd.f32 %v1696, %v2304
    %v2306 = vpop.f32.mrf.mxu0
    %2307 = vdwg.mxu0
    %2308 = vmatpush.bf16.msra.mxu0 %v1810
    %2309 = vmatpush.bf16.msra.mxu0 %v1807
    %2310 = vmatpush.bf16.msra.mxu0 %v1804
    %2311 = vmatpush.bf16.msra.mxu0 %v1801
    %2312 = vmatpush.bf16.msra.mxu0 %v1798
    %2313 = vmatpush.bf16.msra.mxu0 %v1795
    %2314 = vmatpush.bf16.msra.mxu0 %v1792
    %2315 = vmatpush.bf16.msra.mxu0 %v1789
    %2316 = vmatmul.bf16.gmra.mxu0 %v2294
    %v2317 = vpop.f32.mrf.mxu0
    %v2318 = vadd.f32 %v1697, %v2317
    %v2319 = vpop.f32.mrf.mxu0
    %2320 = vdwg.mxu0
    %2321 = vmatpush.bf16.msra.mxu0 %v1811
    %2322 = vmatpush.bf16.msra.mxu0 %v1808
    %2323 = vmatpush.bf16.msra.mxu0 %v1805
    %2324 = vmatpush.bf16.msra.mxu0 %v1802
    %2325 = vmatpush.bf16.msra.mxu0 %v1799
    %2326 = vmatpush.bf16.msra.mxu0 %v1796
    %2327 = vmatpush.bf16.msra.mxu0 %v1793
    %2328 = vmatpush.bf16.msra.mxu0 %v1790
    %2329 = vmatmul.bf16.gmra.mxu0 %v2294
    %v2330 = vpop.f32.mrf.mxu0
    %v2331 = vadd.f32 %v1698, %v2330
    %v2332 = vpop.f32.mrf.mxu0
    %2333 = vdwg.mxu0
    %v2334 = vadd.f32 %v2291, %v2305
    %v2335 = vxor.u32 %v2334, 2147483648
    %v2336 = vmul.f32 %v2335, 1.442695
    %v2337 = vpow.pop %v2336
    %v2338 = vadd.f32 %v2337, 1.0
    %v2339 = vrcp.pop %v2338
    %v2340 = vmul.f32 %v2338, %v2339
    %v2341 = vsub.f32 1.0, %v2340
    %v2342 = vmul.f32 %v2339, %v2341
    %v2343 = vadd.f32 %v2339, %v2342
    %vm2344 = vweird.f32 %v2338
    %vm2345 = vweird.f32 %v2339
    %vm2346 = vmor %vm2344, %vm2345
    %v2347 = vsel %vm2346, %v2339, %v2343
    %v2348 = vand.u32 2147483647, %v2338
    %vm2349 = vcmp.eq.f32.partialorder %v2348, 8.507059e+37
    %v2350 = vand.u32 %v2338, 2147483648
    %v2351 = vor.u32 1.1754944e-38, %v2350
    %v2352 = vsel %vm2349, %v2351, %v2347
    %v2353 = vmul.f32 1.0, %v2352
    %v2354 = vadd.f32 %v2292, %v2318
    %v2355 = vxor.u32 %v2354, 2147483648
    %v2356 = vmul.f32 %v2355, 1.442695
    %v2357 = vpow.pop %v2356
    %v2358 = vadd.f32 %v2357, 1.0
    %v2359 = vrcp.pop %v2358
    %v2360 = vmul.f32 %v2358, %v2359
    %v2361 = vsub.f32 1.0, %v2360
    %v2362 = vmul.f32 %v2359, %v2361
    %v2363 = vadd.f32 %v2359, %v2362
    %vm2364 = vweird.f32 %v2358
    %vm2365 = vweird.f32 %v2359
    %vm2366 = vmor %vm2364, %vm2365
    %v2367 = vsel %vm2366, %v2359, %v2363
    %v2368 = vand.u32 2147483647, %v2358
    %vm2369 = vcmp.eq.f32.partialorder %v2368, 8.507059e+37
    %v2370 = vand.u32 %v2358, 2147483648
    %v2371 = vor.u32 1.1754944e-38, %v2370
    %v2372 = vsel %vm2369, %v2371, %v2367
    %v2373 = vmul.f32 1.0, %v2372
    %v2374 = vmul.f32 %v2353, %v2331
    %v2375 = vadd.f32 %v2293, %v2374
    %v2376 = vtanh.pop %v2375
    %v2377 = vsub.f32 1.0, %v2373
    %v2378 = vmul.f32 %v2377, %v2376
    %v2379 = vmul.f32 %v2373, %v2288
    %v2380 = vadd.f32 %v2378, %v2379
    %s2381 = scalar_lea.vmem [#allocation16], 40
    %2382 = vst [vmem:[%s2381] sm:$0xff] %v2380
    %v2383 = vld [vmem:[%s1162] sm:$0xff]
    %v2384 = vld [vmem:[%s1162 + $0x8] sm:$0xff]
    %v2385 = vld [vmem:[%s1162 + $0x10] sm:$0xff]
    %v2386 = vpack.c.bf16 %v2380, %v2380
    %2387 = vmatpush.bf16.msra.mxu0 %v1809
    %2388 = vmatpush.bf16.msra.mxu0 %v1806
    %2389 = vmatpush.bf16.msra.mxu0 %v1803
    %2390 = vmatpush.bf16.msra.mxu0 %v1800
    %2391 = vmatpush.bf16.msra.mxu0 %v1797
    %2392 = vmatpush.bf16.msra.mxu0 %v1794
    %2393 = vmatpush.bf16.msra.mxu0 %v1791
    %2394 = vmatpush.bf16.msra.mxu0 %v1788
    %2395 = vmatmul.bf16.gmra.mxu0 %v2386
    %v2396 = vpop.f32.mrf.mxu0
    %v2397 = vadd.f32 %v1696, %v2396
    %v2398 = vpop.f32.mrf.mxu0
    %2399 = vdwg.mxu0
    %2400 = vmatpush.bf16.msra.mxu0 %v1810
    %2401 = vmatpush.bf16.msra.mxu0 %v1807
    %2402 = vmatpush.bf16.msra.mxu0 %v1804
    %2403 = vmatpush.bf16.msra.mxu0 %v1801
    %2404 = vmatpush.bf16.msra.mxu0 %v1798
    %2405 = vmatpush.bf16.msra.mxu0 %v1795
    %2406 = vmatpush.bf16.msra.mxu0 %v1792
    %2407 = vmatpush.bf16.msra.mxu0 %v1789
    %2408 = vmatmul.bf16.gmra.mxu0 %v2386
    %v2409 = vpop.f32.mrf.mxu0
    %v2410 = vadd.f32 %v1697, %v2409
    %v2411 = vpop.f32.mrf.mxu0
    %2412 = vdwg.mxu0
    %2413 = vmatpush.bf16.msra.mxu0 %v1811
    %2414 = vmatpush.bf16.msra.mxu0 %v1808
    %2415 = vmatpush.bf16.msra.mxu0 %v1805
    %2416 = vmatpush.bf16.msra.mxu0 %v1802
    %2417 = vmatpush.bf16.msra.mxu0 %v1799
    %2418 = vmatpush.bf16.msra.mxu0 %v1796
    %2419 = vmatpush.bf16.msra.mxu0 %v1793
    %2420 = vmatpush.bf16.msra.mxu0 %v1790
    %2421 = vmatmul.bf16.gmra.mxu0 %v2386
    %v2422 = vpop.f32.mrf.mxu0
    %v2423 = vadd.f32 %v1698, %v2422
    %v2424 = vpop.f32.mrf.mxu0
    %2425 = vdwg.mxu0
    %v2426 = vadd.f32 %v2383, %v2397
    %v2427 = vxor.u32 %v2426, 2147483648
    %v2428 = vmul.f32 %v2427, 1.442695
    %v2429 = vpow.pop %v2428
    %v2430 = vadd.f32 %v2429, 1.0
    %v2431 = vrcp.pop %v2430
    %v2432 = vmul.f32 %v2430, %v2431
    %v2433 = vsub.f32 1.0, %v2432
    %v2434 = vmul.f32 %v2431, %v2433
    %v2435 = vadd.f32 %v2431, %v2434
    %vm2436 = vweird.f32 %v2430
    %vm2437 = vweird.f32 %v2431
    %vm2438 = vmor %vm2436, %vm2437
    %v2439 = vsel %vm2438, %v2431, %v2435
    %v2440 = vand.u32 2147483647, %v2430
    %vm2441 = vcmp.eq.f32.partialorder %v2440, 8.507059e+37
    %v2442 = vand.u32 %v2430, 2147483648
    %v2443 = vor.u32 1.1754944e-38, %v2442
    %v2444 = vsel %vm2441, %v2443, %v2439
    %v2445 = vmul.f32 1.0, %v2444
    %v2446 = vadd.f32 %v2384, %v2410
    %v2447 = vxor.u32 %v2446, 2147483648
    %v2448 = vmul.f32 %v2447, 1.442695
    %v2449 = vpow.pop %v2448
    %v2450 = vadd.f32 %v2449, 1.0
    %v2451 = vrcp.pop %v2450
    %v2452 = vmul.f32 %v2450, %v2451
    %v2453 = vsub.f32 1.0, %v2452
    %v2454 = vmul.f32 %v2451, %v2453
    %v2455 = vadd.f32 %v2451, %v2454
    %vm2456 = vweird.f32 %v2450
    %vm2457 = vweird.f32 %v2451
    %vm2458 = vmor %vm2456, %vm2457
    %v2459 = vsel %vm2458, %v2451, %v2455
    %v2460 = vand.u32 2147483647, %v2450
    %vm2461 = vcmp.eq.f32.partialorder %v2460, 8.507059e+37
    %v2462 = vand.u32 %v2450, 2147483648
    %v2463 = vor.u32 1.1754944e-38, %v2462
    %v2464 = vsel %vm2461, %v2463, %v2459
    %v2465 = vmul.f32 1.0, %v2464
    %v2466 = vmul.f32 %v2445, %v2423
    %v2467 = vadd.f32 %v2385, %v2466
    %v2468 = vtanh.pop %v2467
    %v2469 = vsub.f32 1.0, %v2465
    %v2470 = vmul.f32 %v2469, %v2468
    %v2471 = vmul.f32 %v2465, %v2380
    %v2472 = vadd.f32 %v2470, %v2471
    %s2473 = scalar_lea.vmem [#allocation16], 48
    %2474 = vst [vmem:[%s2473] sm:$0xff] %v2472
    %v2475 = vld [vmem:[%s1255] sm:$0xff]
    %v2476 = vld [vmem:[%s1255 + $0x8] sm:$0xff]
    %v2477 = vld [vmem:[%s1255 + $0x10] sm:$0xff]
    %v2478 = vpack.c.bf16 %v2472, %v2472
    %2479 = vmatpush.bf16.msra.mxu0 %v1809
    %2480 = vmatpush.bf16.msra.mxu0 %v1806
    %2481 = vmatpush.bf16.msra.mxu0 %v1803
    %2482 = vmatpush.bf16.msra.mxu0 %v1800
    %2483 = vmatpush.bf16.msra.mxu0 %v1797
    %2484 = vmatpush.bf16.msra.mxu0 %v1794
    %2485 = vmatpush.bf16.msra.mxu0 %v1791
    %2486 = vmatpush.bf16.msra.mxu0 %v1788
    %2487 = vmatmul.bf16.gmra.mxu0 %v2478
    %v2488 = vpop.f32.mrf.mxu0
    %v2489 = vadd.f32 %v1696, %v2488
    %v2490 = vpop.f32.mrf.mxu0
    %2491 = vdwg.mxu0
    %2492 = vmatpush.bf16.msra.mxu0 %v1810
    %2493 = vmatpush.bf16.msra.mxu0 %v1807
    %2494 = vmatpush.bf16.msra.mxu0 %v1804
    %2495 = vmatpush.bf16.msra.mxu0 %v1801
    %2496 = vmatpush.bf16.msra.mxu0 %v1798
    %2497 = vmatpush.bf16.msra.mxu0 %v1795
    %2498 = vmatpush.bf16.msra.mxu0 %v1792
    %2499 = vmatpush.bf16.msra.mxu0 %v1789
    %2500 = vmatmul.bf16.gmra.mxu0 %v2478
    %v2501 = vpop.f32.mrf.mxu0
    %v2502 = vadd.f32 %v1697, %v2501
    %v2503 = vpop.f32.mrf.mxu0
    %2504 = vdwg.mxu0
    %2505 = vmatpush.bf16.msra.mxu0 %v1811
    %2506 = vmatpush.bf16.msra.mxu0 %v1808
    %2507 = vmatpush.bf16.msra.mxu0 %v1805
    %2508 = vmatpush.bf16.msra.mxu0 %v1802
    %2509 = vmatpush.bf16.msra.mxu0 %v1799
    %2510 = vmatpush.bf16.msra.mxu0 %v1796
    %2511 = vmatpush.bf16.msra.mxu0 %v1793
    %2512 = vmatpush.bf16.msra.mxu0 %v1790
    %2513 = vmatmul.bf16.gmra.mxu0 %v2478
    %v2514 = vpop.f32.mrf.mxu0
    %v2515 = vadd.f32 %v1698, %v2514
    %v2516 = vpop.f32.mrf.mxu0
    %2517 = vdwg.mxu0
    %v2518 = vadd.f32 %v2475, %v2489
    %v2519 = vxor.u32 %v2518, 2147483648
    %v2520 = vmul.f32 %v2519, 1.442695
    %v2521 = vpow.pop %v2520
    %v2522 = vadd.f32 %v2521, 1.0
    %v2523 = vrcp.pop %v2522
    %v2524 = vmul.f32 %v2522, %v2523
    %v2525 = vsub.f32 1.0, %v2524
    %v2526 = vmul.f32 %v2523, %v2525
    %v2527 = vadd.f32 %v2523, %v2526
    %vm2528 = vweird.f32 %v2522
    %vm2529 = vweird.f32 %v2523
    %vm2530 = vmor %vm2528, %vm2529
    %v2531 = vsel %vm2530, %v2523, %v2527
    %v2532 = vand.u32 2147483647, %v2522
    %vm2533 = vcmp.eq.f32.partialorder %v2532, 8.507059e+37
    %v2534 = vand.u32 %v2522, 2147483648
    %v2535 = vor.u32 1.1754944e-38, %v2534
    %v2536 = vsel %vm2533, %v2535, %v2531
    %v2537 = vmul.f32 1.0, %v2536
    %v2538 = vadd.f32 %v2476, %v2502
    %v2539 = vxor.u32 %v2538, 2147483648
    %v2540 = vmul.f32 %v2539, 1.442695
    %v2541 = vpow.pop %v2540
    %v2542 = vadd.f32 %v2541, 1.0
    %v2543 = vrcp.pop %v2542
    %v2544 = vmul.f32 %v2542, %v2543
    %v2545 = vsub.f32 1.0, %v2544
    %v2546 = vmul.f32 %v2543, %v2545
    %v2547 = vadd.f32 %v2543, %v2546
    %vm2548 = vweird.f32 %v2542
    %vm2549 = vweird.f32 %v2543
    %vm2550 = vmor %vm2548, %vm2549
    %v2551 = vsel %vm2550, %v2543, %v2547
    %v2552 = vand.u32 2147483647, %v2542
    %vm2553 = vcmp.eq.f32.partialorder %v2552, 8.507059e+37
    %v2554 = vand.u32 %v2542, 2147483648
    %v2555 = vor.u32 1.1754944e-38, %v2554
    %v2556 = vsel %vm2553, %v2555, %v2551
    %v2557 = vmul.f32 1.0, %v2556
    %v2558 = vmul.f32 %v2537, %v2515
    %v2559 = vadd.f32 %v2477, %v2558
    %v2560 = vtanh.pop %v2559
    %v2561 = vsub.f32 1.0, %v2557
    %v2562 = vmul.f32 %v2561, %v2560
    %v2563 = vmul.f32 %v2557, %v2472
    %v2564 = vadd.f32 %v2562, %v2563
    %s2565 = scalar_lea.vmem [#allocation16], 56
    %2566 = vst [vmem:[%s2565] sm:$0xff] %v2564
    %2567 = vst [vmem:[%s1702] sm:$0xff] %v2564
    // Predicated region
    $region58: #{tpu_custom_call.1} parent=1 // pred_check
      _
    $region59: #{tpu_custom_call.1} parent=1 // pred_check_branch
      %2569 = sbr.rel (0) target = $region61
    $region60: #{tpu_custom_call.1} parent=1 // pred_region
      %2571 = vsyncadd [#allocation7], 0
      %s2572 = sshll.u32 [#allocation16], 4
      %s2573 = int_to_ptr.vmem [resolvable:$true] %s2572
      %s2574 = sshll.u32 %s7, 4
      %s2575 = int_to_ptr.hbm [resolvable:$true] %s2574
      %2580 = dma.vmem_to_hbm [thread:$0]  %s2573, 1024, %s2575, [#allocation7], 128, 128, 8
    $region61: #{tpu_custom_call.1} parent=1 // pred_fallthru
      _
    // Predicated region
    $region62: #{tpu_custom_call.1} parent=1 // pred_check
      _
    $region63: #{tpu_custom_call.1} parent=1 // pred_check_branch
      %2582 = sbr.rel (0) target = $region65
    $region64: #{tpu_custom_call.1} parent=1 // pred_region
      %2584 = dma.done [#allocation7], 1024
    $region65: #{tpu_custom_call.1} parent=1 // pred_fallthru
      _
    %2585 = vsyncpa [#allocation6], 1
    %2586 = vsyncpa [#allocation9], 1
    %2587 = vsyncpa [#allocation12], 1
    %2588 = vsyncpa [#allocation15], 1
    %2589 = vsyncpa [#allocation7], 1

</llo_original>
